<compile_context>
chip_gen: v5e
topology: v5e:2x2
jax: 0.10.0
libtpu: 0.0.40
codegen_flags: <defaults>
</compile_context>

<pallas_src>
import numpy as np
import jax
import jax.numpy as jnp
from jax import lax
from jax.experimental import pallas as pl
from jax.experimental.pallas import tpu as pltpu

INPUT_DIM = 8
HIDDEN_DIM = 32            # PyTorch default is 512; small deterministic config
OUTPUT_DIM = 2
H = HIDDEN_DIM // 2        # per-direction LSTM hidden size (16)
SEQ_LEN = 16
BATCH = 2
LB = SEQ_LEN * BATCH       # token count (rows of the token-major layout)
BN_EPS = 1e-5

# torch gate row order is [i, f, g, o]; kernel column order is [i, f, o, g]
GATE_PERM = np.r_[0:H, H:2 * H, 3 * H:4 * H, 2 * H:3 * H]
# sigmoid gates (i, f, o) pre-scaled by 0.5 so sigmoid(z) = 0.5*tanh(z/2)+0.5
COL_SCALE = np.concatenate([np.full(3 * H, 0.5, np.float32),
                            np.ones(H, np.float32)])


def _sigmoid(v):
    return 1.0 / (1.0 + jnp.exp(-v))


# ----------------------------------------------------------------------------
# Fused kernel: conv(x3, BN folded, relu) -> 3-layer biLSTM -> fc1/relu/fc2/relu/fc3
# ----------------------------------------------------------------------------
def fused_kernel(x_ref,
                 cw1_ref, cb1_ref, cw2_ref, cb2_ref, cw3_ref, cb3_ref,
                 wih_ref, whh_ref, bias_ref,
                 fc1w_ref, fc1b_ref, fc2w_ref, fc2b_ref, fc3w_ref, fc3b_ref,
                 out_ref, lin_ref, g_ref):
    f32 = jnp.float32

    # ---- conv1d(k=3, pad=1) -> folded BN(eval) -> relu, all batches at once ----
    # Banded permutation matrices built ONCE for every conv layer:
    #   (s_prev @ v)[t*B+b] = v[(t-1)*B+b]  (zero row at t==0)
    #   (s_next @ v)[t*B+b] = v[(t+1)*B+b]  (zero row at t==L-1)
    rr = lax.broadcasted_iota(jnp.int32, (LB, LB), 0)
    cc = lax.broadcasted_iota(jnp.int32, (LB, LB), 1)
    s_prev = (cc == rr - BATCH).astype(f32)
    s_next = (cc == rr + BATCH).astype(f32)

    def conv_bn_relu(v, w_ref, b_ref):
        # w_ref: (3, C_in, C_out) with BN scale folded in; b_ref: (1, C_out)
        prev_t = jnp.dot(s_prev, v, preferred_element_type=f32)
        next_t = jnp.dot(s_next, v, preferred_element_type=f32)
        y = (jnp.dot(prev_t, w_ref[0], preferred_element_type=f32)
             + jnp.dot(v, w_ref[1], preferred_element_type=f32)
             + jnp.dot(next_t, w_ref[2], preferred_element_type=f32))
        return jnp.maximum(y + b_ref[...], 0.0)

    y = conv_bn_relu(x_ref[...], cw1_ref, cb1_ref)   # (LB, 8)
    y = conv_bn_relu(y, cw2_ref, cb2_ref)            # (LB, 32)
    y = conv_bn_relu(y, cw3_ref, cb3_ref)            # (LB, 8)

    # ---- per-column gate activation constants (built once) ----
    lane = lax.broadcasted_iota(jnp.int32, (1, 8 * H), 1)
    is_sig = (lane < 3 * H) | ((lane >= 4 * H) & (lane < 7 * H))
    alpha = jnp.where(is_sig, 0.5, 1.0)      # sigmoid = 0.5*tanh(0.5x)+0.5
    delta = jnp.where(is_sig, 0.5, 0.0)      # g-gate  = tanh(x)
    fwd_lane = lane < 4 * H                  # lanes 0:64 fwd, 64:128 rev

    feat_f = None
    feat_r = None
    layer_in = y                             # layer-0 input value (LB, 8)
    for layer in range(3):
        in_dim = layer_in.shape[1]
        wih_l = wih_ref[layer]               # (2H, 8H); layer 0 only rows 0:8 used
        # Hoisted input projection + bias for the whole sequence, both directions.
        g_ref[...] = (jnp.dot(layer_in, wih_l[:in_dim, :],
                              preferred_element_type=f32) + bias_ref[layer])
        whh_f = whh_ref[layer, 0]            # (H, 8H): cols 64:128 are zero
        whh_r = whh_ref[layer, 1]            # (H, 8H): cols 0:64   are zero

        h_f = jnp.zeros((BATCH, H), f32)
        h_r = jnp.zeros((BATCH, H), f32)
        c_f = jnp.zeros((BATCH, H), f32)
        c_r = jnp.zeros((BATCH, H), f32)
        last_layer = (layer == 2)

        # Fully unrolled time loop; fwd (time i) and rev (time L-1-i) interleaved.
        for i in range(SEQ_LEN):
            tr = SEQ_LEN - 1 - i
            gin = jnp.where(fwd_lane,
                            g_ref[i * BATCH:(i + 1) * BATCH, :],
                            g_ref[tr * BATCH:(tr + 1) * BATCH, :])
            gates = (gin
                     + jnp.dot(h_f, whh_f, preferred_element_type=f32)
                     + jnp.dot(h_r, whh_r, preferred_element_type=f32))
            act = alpha * jnp.tanh(gates) + delta          # one full-width tanh
            i_f = act[:, 0:H];          f_f = act[:, H:2 * H]
            o_f = act[:, 2 * H:3 * H];  g_f = act[:, 3 * H:4 * H]
            i_r = act[:, 4 * H:5 * H];  f_r = act[:, 5 * H:6 * H]
            o_r = act[:, 6 * H:7 * H];  g_r = act[:, 7 * H:8 * H]
            c_f = f_f * c_f + i_f * g_f
            c_r = f_r * c_r + i_r * g_r
            h_f = o_f * jnp.tanh(c_f)
            h_r = o_r * jnp.tanh(c_r)
            if not last_layer:
                # write the layer output straight into the next layer's input
                lin_ref[i * BATCH:(i + 1) * BATCH, 0:H] = h_f
                lin_ref[tr * BATCH:(tr + 1) * BATCH, H:2 * H] = h_r
            elif i == 0:
                feat_r = h_r             # reverse-direction hidden at time L-1

        if last_layer:
            feat_f = h_f                 # forward hidden at time L-1
        else:
            layer_in = lin_ref[...]      # (LB, 2H) input for the next layer

    # ---- MLP head on output[:, -1, :] ----
    fc1w = fc1w_ref[...]
    h1 = jnp.maximum(jnp.dot(feat_f, fc1w[0:H, :], preferred_element_type=f32)
                     + jnp.dot(feat_r, fc1w[H:2 * H, :], preferred_element_type=f32)
                     + fc1b_ref[...], 0.0)
    h2 = jnp.maximum(jnp.dot(h1, fc2w_ref[...], preferred_element_type=f32)
                     + fc2b_ref[...], 0.0)
    out_ref[...] = (jnp.dot(h2, fc3w_ref[...], preferred_element_type=f32)
                    + fc3b_ref[...])


def attention_lstm_cnn3_forward(x, params):
    conv_params, lstm_params, fc_params = params
    B_, C, L_ = x.shape
    # token-major layout: row = t*B + b, channels on lanes (1 KiB transpose of
    # the raw input; all intermediates stay inside the single fused kernel).
    x_tm = jnp.transpose(x, (2, 0, 1)).reshape(L_ * B_, C)
    (cw1, cb1), (cw2, cb2), (cw3, cb3) = conv_params
    wih, whh, bias = lstm_params
    fc1w, fc1b, fc2w, fc2b, fc3w, fc3b = fc_params
    full = lambda a: pl.BlockSpec(a.shape, lambda i, nd=a.ndim: (0,) * nd)
    return pl.pallas_call(
        fused_kernel,
        out_shape=jax.ShapeDtypeStruct((B_, OUTPUT_DIM), jnp.float32),
        grid=(1,),
        in_specs=[full(x_tm),
                  full(cw1), full(cb1), full(cw2), full(cb2), full(cw3), full(cb3),
                  full(wih), full(whh), full(bias),
                  full(fc1w), full(fc1b), full(fc2w), full(fc2b),
                  full(fc3w), full(fc3b)],
        out_specs=pl.BlockSpec((B_, OUTPUT_DIM), lambda i: (0, 0)),
        scratch_shapes=[pltpu.VMEM((L_ * B_, 2 * H), jnp.float32),   # lin
                        pltpu.VMEM((L_ * B_, 8 * H), jnp.float32)],  # gate inputs
        compiler_params=pltpu.CompilerParams(dimension_semantics=("arbitrary",)),
    )(x_tm, cw1, cb1, cw2, cb2, cw3, cb3, wih, whh, bias,
      fc1w, fc1b, fc2w, fc2b, fc3w, fc3b)


# ----------------------------------------------------------------------------
# Deterministic parameter init (shapes from the module's __init__).
# ----------------------------------------------------------------------------
def init_params(key):
    ks = iter(jax.random.split(key, 64))

    def xavier(shape, fan_in, fan_out, gain=1.0):
        std = gain * np.sqrt(2.0 / (fan_in + fan_out))
        return std * jax.random.normal(next(ks), shape, jnp.float32)

    def uniform(shape, bound):
        return jax.random.uniform(next(ks), shape, jnp.float32, -bound, bound)

    def conv_layer(c_in, c_out):
        w = xavier((c_out, c_in, 3), c_in * 3, c_out * 3)   # torch (Cout, Cin, K)
        b = uniform((c_out,), 1.0 / np.sqrt(c_in * 3))
        return w, b

    conv_raw = [conv_layer(INPUT_DIM, 8), conv_layer(8, 32), conv_layer(32, INPUT_DIM)]
    bn_raw = []
    for nfeat in (INPUT_DIM, 32, INPUT_DIM):
        bn_raw.append((jnp.ones((nfeat,), jnp.float32), jnp.zeros((nfeat,), jnp.float32),
                       jnp.zeros((nfeat,), jnp.float32), jnp.ones((nfeat,), jnp.float32)))

    lstm_raw = []
    bound = 1.0 / np.sqrt(H)
    for layer in range(3):
        in_size = INPUT_DIM if layer == 0 else 2 * H
        per_dir = []
        for _d in range(2):
            per_dir.append(dict(wih=uniform((4 * H, in_size), bound),
                                whh=uniform((4 * H, H), bound),
                                bih=uniform((4 * H,), bound),
                                bhh=uniform((4 * H,), bound)))
        lstm_raw.append(per_dir)

    relu_gain = np.sqrt(2.0)
    fc_raw = dict(
        fc1_w=xavier((64, HIDDEN_DIM), HIDDEN_DIM, 64, relu_gain),
        fc1_b=uniform((64,), 1.0 / np.sqrt(HIDDEN_DIM)),
        fc2_w=xavier((16, 64), 64, 16, relu_gain),
        fc2_b=uniform((16,), 1.0 / np.sqrt(64)),
        fc3_w=xavier((OUTPUT_DIM, 16), 16, OUTPUT_DIM, relu_gain),
        fc3_b=uniform((OUTPUT_DIM,), 1.0 / np.sqrt(16)))
    return conv_raw, bn_raw, lstm_raw, fc_raw


def pack_for_kernels(conv_raw, bn_raw, lstm_raw, fc_raw):
    # conv: fold eval-mode BN (scale s, shift t) into the weights and bias;
    # repack torch (Cout, Cin, K) -> (K, Cin, Cout).
    conv_params = []
    for (w, b), (gamma, beta, rmean, rvar) in zip(conv_raw, bn_raw):
        w = np.asarray(w); b = np.asarray(b)
        s = np.asarray(gamma) / np.sqrt(np.asarray(rvar) + BN_EPS)
        t = np.asarray(beta) - np.asarray(rmean) * s
        wk = np.transpose(w * s[:, None, None], (2, 1, 0)).astype(np.float32)
        bk = ((b * s + t)[None, :]).astype(np.float32)
        conv_params.append((jnp.asarray(wk), jnp.asarray(bk)))

    # LSTM: per layer (2H, 8H) input weights (fwd cols 0:4H, rev cols 4H:8H),
    # gate order [i, f, o, g], sigmoid columns pre-scaled by 0.5; Whh is stored
    # per direction padded to 8H columns (other half zero).
    wih = np.zeros((3, 2 * H, 8 * H), np.float32)
    whh = np.zeros((3, 2, H, 8 * H), np.float32)
    bias = np.zeros((3, 1, 8 * H), np.float32)
    for layer in range(3):
        for d in range(2):
            p = lstm_raw[layer][d]
            w_ih = np.asarray(p['wih'])[GATE_PERM, :]          # (4H, Fin)
            w_hh = np.asarray(p['whh'])[GATE_PERM, :]          # (4H, H)
            bvec = np.asarray(p['bih'] + p['bhh'])[GATE_PERM]  # (4H,)
            lo = d * 4 * H
            in_size = w_ih.shape[1]
            wih[layer, :in_size, lo:lo + 4 * H] = w_ih.T * COL_SCALE[None, :]
            whh[layer, d, :, lo:lo + 4 * H] = w_hh.T * COL_SCALE[None, :]
            bias[layer, 0, lo:lo + 4 * H] = bvec * COL_SCALE
    # layer-0 padded rows must stay zero (never read in-kernel, but assert anyway)
    assert not np.any(wih[0, INPUT_DIM:, :])
    lstm_params = (jnp.asarray(wih), jnp.asarray(whh), jnp.asarray(bias))

    fc_params = (jnp.asarray(np.asarray(fc_raw['fc1_w']).T),
                 jnp.asarray(np.asarray(fc_raw['fc1_b'])[None, :]),
                 jnp.asarray(np.asarray(fc_raw['fc2_w']).T),
                 jnp.asarray(np.asarray(fc_raw['fc2_b'])[None, :]),
                 jnp.asarray(np.asarray(fc_raw['fc3_w']).T),
                 jnp.asarray(np.asarray(fc_raw['fc3_b'])[None, :]))
    return conv_params, lstm_params, fc_params


# ----------------------------------------------------------------------------
# Pure-JAX reference (same eval semantics) for verification.
# ----------------------------------------------------------------------------
def reference_forward(x, conv_raw, bn_raw, lstm_raw, fc_raw):
    B, _, L = x.shape
    y = x
    for (w, b), (gamma, beta, rmean, rvar) in zip(conv_raw, bn_raw):
        xp = jnp.pad(y, ((0, 0), (0, 0), (1, 1)))
        y = (jnp.einsum('oi,bil->bol', w[:, :, 0], xp[:, :, 0:L])
             + jnp.einsum('oi,bil->bol', w[:, :, 1], xp[:, :, 1:L + 1])
             + jnp.einsum('oi,bil->bol', w[:, :, 2], xp[:, :, 2:L + 2])
             + b[None, :, None])
        scale = gamma / jnp.sqrt(rvar + BN_EPS)
        shift = beta - rmean * scale
        y = jnp.maximum(y * scale[None, :, None] + shift[None, :, None], 0.0)
    seq = jnp.transpose(y, (0, 2, 1))                    # (B, L, 8)
    for layer in range(3):
        outs = []
        for d in range(2):
            p = lstm_raw[layer][d]
            bvec = p['bih'] + p['bhh']
            h = jnp.zeros((B, H), jnp.float32)
            c = jnp.zeros((B, H), jnp.float32)
            hs = [None] * L
            order = range(L) if d == 0 else range(L - 1, -1, -1)
            for t in order:
                gates = seq[:, t, :] @ p['wih'].T + h @ p['whh'].T + bvec[None, :]
                i_g = _sigmoid(gates[:, 0:H])
                f_g = _sigmoid(gates[:, H:2 * H])
                g_g = jnp.tanh(gates[:, 2 * H:3 * H])
                o_g = _sigmoid(gates[:, 3 * H:4 * H])
                c = f_g * c + i_g * g_g
                h = o_g * jnp.tanh(c)
                hs[t] = h
            outs.append(jnp.stack(hs, axis=1))
        seq = jnp.concatenate(outs, axis=-1)
    feat = seq[:, -1, :]
    h1 = jnp.maximum(feat @ fc_raw['fc1_w'].T + fc_raw['fc1_b'][None, :], 0.0)
    h2 = jnp.maximum(h1 @ fc_raw['fc2_w'].T + fc_raw['fc2_b'][None, :], 0.0)
    return h2 @ fc_raw['fc3_w'].T + fc_raw['fc3_b'][None, :]


if __name__ == "__main__":
    key = jax.random.PRNGKey(0)
    pkey, xkey = jax.random.split(key)
    conv_raw, bn_raw, lstm_raw, fc_raw = init_params(pkey)
    params = pack_for_kernels(conv_raw, bn_raw, lstm_raw, fc_raw)

    x = jax.random.normal(xkey, (BATCH, INPUT_DIM, SEQ_LEN), jnp.float32)

    out = jax.block_until_ready(attention_lstm_cnn3_forward(x, params))
    assert out.shape == (BATCH, OUTPUT_DIM)

    ref = jax.block_until_ready(reference_forward(x, conv_raw, bn_raw, lstm_raw, fc_raw))
    np.testing.assert_allclose(np.asarray(out), np.asarray(ref), rtol=2e-2, atol=2e-2)

    print("KERNEL_OK")
</pallas_src>

<mosaic_0001>
module attributes {stable_mosaic.version = 11 : i64} {
  func.func @fused_kernel(%arg0: i32, %arg1: memref<32x8xf32, #tpu.memory_space<vmem>>, %arg2: memref<3x8x8xf32, #tpu.memory_space<vmem>>, %arg3: memref<1x8xf32, #tpu.memory_space<vmem>>, %arg4: memref<3x8x32xf32, #tpu.memory_space<vmem>>, %arg5: memref<1x32xf32, #tpu.memory_space<vmem>>, %arg6: memref<3x32x8xf32, #tpu.memory_space<vmem>>, %arg7: memref<1x8xf32, #tpu.memory_space<vmem>>, %arg8: memref<3x32x128xf32, #tpu.memory_space<vmem>>, %arg9: memref<3x2x16x128xf32, #tpu.memory_space<vmem>>, %arg10: memref<3x1x128xf32, #tpu.memory_space<vmem>>, %arg11: memref<32x64xf32, #tpu.memory_space<vmem>>, %arg12: memref<1x64xf32, #tpu.memory_space<vmem>>, %arg13: memref<64x16xf32, #tpu.memory_space<vmem>>, %arg14: memref<1x16xf32, #tpu.memory_space<vmem>>, %arg15: memref<16x2xf32, #tpu.memory_space<vmem>>, %arg16: memref<1x2xf32, #tpu.memory_space<vmem>>, %arg17: memref<2x2xf32, #tpu.memory_space<vmem>>, %arg18: memref<32x32xf32, #tpu.memory_space<vmem>>, %arg19: memref<32x128xf32, #tpu.memory_space<vmem>>) attributes {dimension_semantics = [#tpu.dimension_semantics<arbitrary>], iteration_bounds = array<i64: 1>, scalar_prefetch = 0 : i64, scratch_operands = 2 : i64, tpu.core_type = #tpu.core_type<tc>, window_params = [{pipeline_mode = #tpu.pipeline_mode<synchronous>, transform_indices = @transform_0, window_bounds = array<i64: 32, 8>}, {pipeline_mode = #tpu.pipeline_mode<synchronous>, transform_indices = @transform_1, window_bounds = array<i64: 3, 8, 8>}, {pipeline_mode = #tpu.pipeline_mode<synchronous>, transform_indices = @transform_2, window_bounds = array<i64: 1, 8>}, {pipeline_mode = #tpu.pipeline_mode<synchronous>, transform_indices = @transform_3, window_bounds = array<i64: 3, 8, 32>}, {pipeline_mode = #tpu.pipeline_mode<synchronous>, transform_indices = @transform_4, window_bounds = array<i64: 1, 32>}, {pipeline_mode = #tpu.pipeline_mode<synchronous>, transform_indices = @transform_5, window_bounds = array<i64: 3, 32, 8>}, {pipeline_mode = #tpu.pipeline_mode<synchronous>, transform_indices = @transform_6, window_bounds = array<i64: 1, 8>}, {pipeline_mode = #tpu.pipeline_mode<synchronous>, transform_indices = @transform_7, window_bounds = array<i64: 3, 32, 128>}, {pipeline_mode = #tpu.pipeline_mode<synchronous>, transform_indices = @transform_8, window_bounds = array<i64: 3, 2, 16, 128>}, {pipeline_mode = #tpu.pipeline_mode<synchronous>, transform_indices = @transform_9, window_bounds = array<i64: 3, 1, 128>}, {pipeline_mode = #tpu.pipeline_mode<synchronous>, transform_indices = @transform_10, window_bounds = array<i64: 32, 64>}, {pipeline_mode = #tpu.pipeline_mode<synchronous>, transform_indices = @transform_11, window_bounds = array<i64: 1, 64>}, {pipeline_mode = #tpu.pipeline_mode<synchronous>, transform_indices = @transform_12, window_bounds = array<i64: 64, 16>}, {pipeline_mode = #tpu.pipeline_mode<synchronous>, transform_indices = @transform_13, window_bounds = array<i64: 1, 16>}, {pipeline_mode = #tpu.pipeline_mode<synchronous>, transform_indices = @transform_14, window_bounds = array<i64: 16, 2>}, {pipeline_mode = #tpu.pipeline_mode<synchronous>, transform_indices = @transform_15, window_bounds = array<i64: 1, 2>}, {pipeline_mode = #tpu.pipeline_mode<synchronous>, transform_indices = @transform_16, window_bounds = array<i64: 2, 2>}]} {
    %0 = tpu.iota {dimensions = array<i32: 0>} : vector<32x32xi32>
    %1 = tpu.iota {dimensions = array<i32: 1>} : vector<32x32xi32>
    %c2_i32 = arith.constant 2 : i32
    %2 = vector.broadcast %c2_i32 : i32 to vector<32x32xi32>
    %3 = arith.subi %0, %2 : vector<32x32xi32>
    %4 = arith.cmpi eq, %1, %3 : vector<32x32xi32>
    %5 = arith.extui %4 : vector<32x32xi1> to vector<32x32xi32>
    %6 = arith.sitofp %5 : vector<32x32xi32> to vector<32x32xf32>
    %c2_i32_0 = arith.constant 2 : i32
    %7 = vector.broadcast %c2_i32_0 : i32 to vector<32x32xi32>
    %8 = arith.addi %0, %7 : vector<32x32xi32>
    %9 = arith.cmpi eq, %1, %8 : vector<32x32xi32>
    %10 = arith.extui %9 : vector<32x32xi1> to vector<32x32xi32>
    %11 = arith.sitofp %10 : vector<32x32xi32> to vector<32x32xf32>
    %c0 = arith.constant 0 : index
    %c0_1 = arith.constant 0 : index
    %12 = vector.load %arg1[%c0, %c0_1] : memref<32x8xf32, #tpu.memory_space<vmem>>, vector<32x8xf32>
    %cst = arith.constant dense<0.000000e+00> : vector<32x8xf32>
    %13 = tpu.matmul %6, %12, %cst {dimension_numbers = #tpu.dot_dimension_numbers<[1], [0], [0], [1], [0, 0, 1, 1], [], []>} : vector<32x32xf32>, vector<32x8xf32>, vector<32x8xf32> -> vector<32x8xf32>
    %cst_2 = arith.constant dense<0.000000e+00> : vector<32x8xf32>
    %14 = tpu.matmul %11, %12, %cst_2 {dimension_numbers = #tpu.dot_dimension_numbers<[1], [0], [0], [1], [0, 0, 1, 1], [], []>} : vector<32x32xf32>, vector<32x8xf32>, vector<32x8xf32> -> vector<32x8xf32>
    %c0_3 = arith.constant 0 : index
    %c0_4 = arith.constant 0 : index
    %c0_5 = arith.constant 0 : index
    %15 = vector.load %arg2[%c0_3, %c0_4, %c0_5] : memref<3x8x8xf32, #tpu.memory_space<vmem>>, vector<1x8x8xf32>
    %16 = vector.shape_cast %15 : vector<1x8x8xf32> to vector<8x8xf32>
    %cst_6 = arith.constant dense<0.000000e+00> : vector<32x8xf32>
    %17 = tpu.matmul %13, %16, %cst_6 {dimension_numbers = #tpu.dot_dimension_numbers<[1], [0], [0], [1], [0, 0, 1, 1], [], []>} : vector<32x8xf32>, vector<8x8xf32>, vector<32x8xf32> -> vector<32x8xf32>
    %c1 = arith.constant 1 : index
    %c0_7 = arith.constant 0 : index
    %c0_8 = arith.constant 0 : index
    %18 = vector.load %arg2[%c1, %c0_7, %c0_8] : memref<3x8x8xf32, #tpu.memory_space<vmem>>, vector<1x8x8xf32>
    %19 = vector.shape_cast %18 : vector<1x8x8xf32> to vector<8x8xf32>
    %cst_9 = arith.constant dense<0.000000e+00> : vector<32x8xf32>
    %20 = tpu.matmul %12, %19, %cst_9 {dimension_numbers = #tpu.dot_dimension_numbers<[1], [0], [0], [1], [0, 0, 1, 1], [], []>} : vector<32x8xf32>, vector<8x8xf32>, vector<32x8xf32> -> vector<32x8xf32>
    %21 = arith.addf %17, %20 : vector<32x8xf32>
    %c2 = arith.constant 2 : index
    %c0_10 = arith.constant 0 : index
    %c0_11 = arith.constant 0 : index
    %22 = vector.load %arg2[%c2, %c0_10, %c0_11] : memref<3x8x8xf32, #tpu.memory_space<vmem>>, vector<1x8x8xf32>
    %23 = vector.shape_cast %22 : vector<1x8x8xf32> to vector<8x8xf32>
    %cst_12 = arith.constant dense<0.000000e+00> : vector<32x8xf32>
    %24 = tpu.matmul %14, %23, %cst_12 {dimension_numbers = #tpu.dot_dimension_numbers<[1], [0], [0], [1], [0, 0, 1, 1], [], []>} : vector<32x8xf32>, vector<8x8xf32>, vector<32x8xf32> -> vector<32x8xf32>
    %25 = arith.addf %21, %24 : vector<32x8xf32>
    %c0_13 = arith.constant 0 : index
    %c0_14 = arith.constant 0 : index
    %26 = vector.load %arg3[%c0_13, %c0_14] : memref<1x8xf32, #tpu.memory_space<vmem>>, vector<1x8xf32>
    %27 = vector.broadcast %26 : vector<1x8xf32> to vector<32x8xf32>
    %28 = arith.addf %25, %27 : vector<32x8xf32>
    %cst_15 = arith.constant 0.000000e+00 : f32
    %29 = vector.broadcast %cst_15 : f32 to vector<32x8xf32>
    %30 = arith.maximumf %28, %29 : vector<32x8xf32>
    %cst_16 = arith.constant dense<0.000000e+00> : vector<32x8xf32>
    %31 = tpu.matmul %6, %30, %cst_16 {dimension_numbers = #tpu.dot_dimension_numbers<[1], [0], [0], [1], [0, 0, 1, 1], [], []>} : vector<32x32xf32>, vector<32x8xf32>, vector<32x8xf32> -> vector<32x8xf32>
    %cst_17 = arith.constant dense<0.000000e+00> : vector<32x8xf32>
    %32 = tpu.matmul %11, %30, %cst_17 {dimension_numbers = #tpu.dot_dimension_numbers<[1], [0], [0], [1], [0, 0, 1, 1], [], []>} : vector<32x32xf32>, vector<32x8xf32>, vector<32x8xf32> -> vector<32x8xf32>
    %c0_18 = arith.constant 0 : index
    %c0_19 = arith.constant 0 : index
    %c0_20 = arith.constant 0 : index
    %33 = vector.load %arg4[%c0_18, %c0_19, %c0_20] : memref<3x8x32xf32, #tpu.memory_space<vmem>>, vector<1x8x32xf32>
    %34 = vector.shape_cast %33 : vector<1x8x32xf32> to vector<8x32xf32>
    %cst_21 = arith.constant dense<0.000000e+00> : vector<32x32xf32>
    %35 = tpu.matmul %31, %34, %cst_21 {dimension_numbers = #tpu.dot_dimension_numbers<[1], [0], [0], [1], [0, 0, 1, 1], [], []>} : vector<32x8xf32>, vector<8x32xf32>, vector<32x32xf32> -> vector<32x32xf32>
    %c1_22 = arith.constant 1 : index
    %c0_23 = arith.constant 0 : index
    %c0_24 = arith.constant 0 : index
    %36 = vector.load %arg4[%c1_22, %c0_23, %c0_24] : memref<3x8x32xf32, #tpu.memory_space<vmem>>, vector<1x8x32xf32>
    %37 = vector.shape_cast %36 : vector<1x8x32xf32> to vector<8x32xf32>
    %cst_25 = arith.constant dense<0.000000e+00> : vector<32x32xf32>
    %38 = tpu.matmul %30, %37, %cst_25 {dimension_numbers = #tpu.dot_dimension_numbers<[1], [0], [0], [1], [0, 0, 1, 1], [], []>} : vector<32x8xf32>, vector<8x32xf32>, vector<32x32xf32> -> vector<32x32xf32>
    %39 = arith.addf %35, %38 : vector<32x32xf32>
    %c2_26 = arith.constant 2 : index
    %c0_27 = arith.constant 0 : index
    %c0_28 = arith.constant 0 : index
    %40 = vector.load %arg4[%c2_26, %c0_27, %c0_28] : memref<3x8x32xf32, #tpu.memory_space<vmem>>, vector<1x8x32xf32>
    %41 = vector.shape_cast %40 : vector<1x8x32xf32> to vector<8x32xf32>
    %cst_29 = arith.constant dense<0.000000e+00> : vector<32x32xf32>
    %42 = tpu.matmul %32, %41, %cst_29 {dimension_numbers = #tpu.dot_dimension_numbers<[1], [0], [0], [1], [0, 0, 1, 1], [], []>} : vector<32x8xf32>, vector<8x32xf32>, vector<32x32xf32> -> vector<32x32xf32>
    %43 = arith.addf %39, %42 : vector<32x32xf32>
    %c0_30 = arith.constant 0 : index
    %c0_31 = arith.constant 0 : index
    %44 = vector.load %arg5[%c0_30, %c0_31] : memref<1x32xf32, #tpu.memory_space<vmem>>, vector<1x32xf32>
    %45 = vector.broadcast %44 : vector<1x32xf32> to vector<32x32xf32>
    %46 = arith.addf %43, %45 : vector<32x32xf32>
    %cst_32 = arith.constant 0.000000e+00 : f32
    %47 = vector.broadcast %cst_32 : f32 to vector<32x32xf32>
    %48 = arith.maximumf %46, %47 : vector<32x32xf32>
    %cst_33 = arith.constant dense<0.000000e+00> : vector<32x32xf32>
    %49 = tpu.matmul %6, %48, %cst_33 {dimension_numbers = #tpu.dot_dimension_numbers<[1], [0], [0], [1], [0, 0, 1, 1], [], []>} : vector<32x32xf32>, vector<32x32xf32>, vector<32x32xf32> -> vector<32x32xf32>
    %cst_34 = arith.constant dense<0.000000e+00> : vector<32x32xf32>
    %50 = tpu.matmul %11, %48, %cst_34 {dimension_numbers = #tpu.dot_dimension_numbers<[1], [0], [0], [1], [0, 0, 1, 1], [], []>} : vector<32x32xf32>, vector<32x32xf32>, vector<32x32xf32> -> vector<32x32xf32>
    %c0_35 = arith.constant 0 : index
    %c0_36 = arith.constant 0 : index
    %c0_37 = arith.constant 0 : index
    %51 = vector.load %arg6[%c0_35, %c0_36, %c0_37] : memref<3x32x8xf32, #tpu.memory_space<vmem>>, vector<1x32x8xf32>
    %52 = vector.shape_cast %51 : vector<1x32x8xf32> to vector<32x8xf32>
    %cst_38 = arith.constant dense<0.000000e+00> : vector<32x8xf32>
    %53 = tpu.matmul %49, %52, %cst_38 {dimension_numbers = #tpu.dot_dimension_numbers<[1], [0], [0], [1], [0, 0, 1, 1], [], []>} : vector<32x32xf32>, vector<32x8xf32>, vector<32x8xf32> -> vector<32x8xf32>
    %c1_39 = arith.constant 1 : index
    %c0_40 = arith.constant 0 : index
    %c0_41 = arith.constant 0 : index
    %54 = vector.load %arg6[%c1_39, %c0_40, %c0_41] : memref<3x32x8xf32, #tpu.memory_space<vmem>>, vector<1x32x8xf32>
    %55 = vector.shape_cast %54 : vector<1x32x8xf32> to vector<32x8xf32>
    %cst_42 = arith.constant dense<0.000000e+00> : vector<32x8xf32>
    %56 = tpu.matmul %48, %55, %cst_42 {dimension_numbers = #tpu.dot_dimension_numbers<[1], [0], [0], [1], [0, 0, 1, 1], [], []>} : vector<32x32xf32>, vector<32x8xf32>, vector<32x8xf32> -> vector<32x8xf32>
    %57 = arith.addf %53, %56 : vector<32x8xf32>
    %c2_43 = arith.constant 2 : index
    %c0_44 = arith.constant 0 : index
    %c0_45 = arith.constant 0 : index
    %58 = vector.load %arg6[%c2_43, %c0_44, %c0_45] : memref<3x32x8xf32, #tpu.memory_space<vmem>>, vector<1x32x8xf32>
    %59 = vector.shape_cast %58 : vector<1x32x8xf32> to vector<32x8xf32>
    %cst_46 = arith.constant dense<0.000000e+00> : vector<32x8xf32>
    %60 = tpu.matmul %50, %59, %cst_46 {dimension_numbers = #tpu.dot_dimension_numbers<[1], [0], [0], [1], [0, 0, 1, 1], [], []>} : vector<32x32xf32>, vector<32x8xf32>, vector<32x8xf32> -> vector<32x8xf32>
    %61 = arith.addf %57, %60 : vector<32x8xf32>
    %c0_47 = arith.constant 0 : index
    %c0_48 = arith.constant 0 : index
    %62 = vector.load %arg7[%c0_47, %c0_48] : memref<1x8xf32, #tpu.memory_space<vmem>>, vector<1x8xf32>
    %63 = vector.broadcast %62 : vector<1x8xf32> to vector<32x8xf32>
    %64 = arith.addf %61, %63 : vector<32x8xf32>
    %cst_49 = arith.constant 0.000000e+00 : f32
    %65 = vector.broadcast %cst_49 : f32 to vector<32x8xf32>
    %66 = arith.maximumf %64, %65 : vector<32x8xf32>
    %67 = tpu.iota {dimensions = array<i32: 1>} : vector<1x128xi32>
    %c48_i32 = arith.constant 48 : i32
    %68 = vector.broadcast %c48_i32 : i32 to vector<1x128xi32>
    %69 = arith.cmpi slt, %67, %68 : vector<1x128xi32>
    %c64_i32 = arith.constant 64 : i32
    %70 = vector.broadcast %c64_i32 : i32 to vector<1x128xi32>
    %71 = arith.cmpi sge, %67, %70 : vector<1x128xi32>
    %c112_i32 = arith.constant 112 : i32
    %72 = vector.broadcast %c112_i32 : i32 to vector<1x128xi32>
    %73 = arith.cmpi slt, %67, %72 : vector<1x128xi32>
    %74 = arith.andi %71, %73 : vector<1x128xi1>
    %75 = arith.ori %69, %74 : vector<1x128xi1>
    %cst_50 = arith.constant 5.000000e-01 : f32
    %cst_51 = arith.constant 1.000000e+00 : f32
    %76 = vector.broadcast %cst_50 : f32 to vector<1x128xf32>
    %77 = vector.broadcast %cst_51 : f32 to vector<1x128xf32>
    %78 = arith.select %75, %76, %77 : vector<1x128xi1>, vector<1x128xf32>
    %cst_52 = arith.constant 5.000000e-01 : f32
    %cst_53 = arith.constant 0.000000e+00 : f32
    %79 = vector.broadcast %cst_52 : f32 to vector<1x128xf32>
    %80 = vector.broadcast %cst_53 : f32 to vector<1x128xf32>
    %81 = arith.select %75, %79, %80 : vector<1x128xi1>, vector<1x128xf32>
    %c64_i32_54 = arith.constant 64 : i32
    %82 = vector.broadcast %c64_i32_54 : i32 to vector<1x128xi32>
    %83 = arith.cmpi slt, %67, %82 : vector<1x128xi32>
    %c0_55 = arith.constant 0 : index
    %c0_56 = arith.constant 0 : index
    %c0_57 = arith.constant 0 : index
    %84 = vector.load %arg8[%c0_55, %c0_56, %c0_57] : memref<3x32x128xf32, #tpu.memory_space<vmem>>, vector<1x32x128xf32>
    %85 = vector.shape_cast %84 : vector<1x32x128xf32> to vector<32x128xf32>
    %86 = vector.extract_strided_slice %85 {offsets = [0, 0], sizes = [8, 128], strides = [1, 1]} : vector<32x128xf32> to vector<8x128xf32>
    %cst_58 = arith.constant dense<0.000000e+00> : vector<32x128xf32>
    %87 = tpu.matmul %66, %86, %cst_58 {dimension_numbers = #tpu.dot_dimension_numbers<[1], [0], [0], [1], [0, 0, 1, 1], [], []>} : vector<32x8xf32>, vector<8x128xf32>, vector<32x128xf32> -> vector<32x128xf32>
    %c0_59 = arith.constant 0 : index
    %c0_60 = arith.constant 0 : index
    %c0_61 = arith.constant 0 : index
    %88 = vector.load %arg10[%c0_59, %c0_60, %c0_61] : memref<3x1x128xf32, #tpu.memory_space<vmem>>, vector<1x1x128xf32>
    %89 = vector.shape_cast %88 : vector<1x1x128xf32> to vector<1x128xf32>
    %90 = vector.broadcast %89 : vector<1x128xf32> to vector<32x128xf32>
    %91 = arith.addf %87, %90 : vector<32x128xf32>
    %c0_62 = arith.constant 0 : index
    %c0_63 = arith.constant 0 : index
    %92 = vector.load %arg19[%c0_62, %c0_63] : memref<32x128xf32, #tpu.memory_space<vmem>>, vector<32x128xf32>
    tpu.vector_store %arg19[%c0_62, %c0_63], %91 {strides = array<i32>} : memref<32x128xf32, #tpu.memory_space<vmem>>, vector<32x128xf32>,
    %c0_64 = arith.constant 0 : index
    %c0_65 = arith.constant 0 : index
    %c0_66 = arith.constant 0 : index
    %c0_67 = arith.constant 0 : index
    %93 = vector.load %arg9[%c0_64, %c0_65, %c0_66, %c0_67] : memref<3x2x16x128xf32, #tpu.memory_space<vmem>>, vector<1x1x16x128xf32>
    %94 = vector.shape_cast %93 : vector<1x1x16x128xf32> to vector<16x128xf32>
    %c0_68 = arith.constant 0 : index
    %c1_69 = arith.constant 1 : index
    %c0_70 = arith.constant 0 : index
    %c0_71 = arith.constant 0 : index
    %95 = vector.load %arg9[%c0_68, %c1_69, %c0_70, %c0_71] : memref<3x2x16x128xf32, #tpu.memory_space<vmem>>, vector<1x1x16x128xf32>
    %96 = vector.shape_cast %95 : vector<1x1x16x128xf32> to vector<16x128xf32>
    %cst_72 = arith.constant 0.000000e+00 : f32
    %97 = vector.broadcast %cst_72 : f32 to vector<2x16xf32>
    %cst_73 = arith.constant 0.000000e+00 : f32
    %98 = vector.broadcast %cst_73 : f32 to vector<2x16xf32>
    %cst_74 = arith.constant 0.000000e+00 : f32
    %99 = vector.broadcast %cst_74 : f32 to vector<2x16xf32>
    %cst_75 = arith.constant 0.000000e+00 : f32
    %100 = vector.broadcast %cst_75 : f32 to vector<2x16xf32>
    %c0_76 = arith.constant 0 : index
    %c0_77 = arith.constant 0 : index
    %101 = vector.load %arg19[%c0_76, %c0_77] : memref<32x128xf32, #tpu.memory_space<vmem>>, vector<2x128xf32>
    %c30 = arith.constant 30 : index
    %c0_78 = arith.constant 0 : index
    %102 = vector.load %arg19[%c30, %c0_78] : memref<32x128xf32, #tpu.memory_space<vmem>>, vector<2x128xf32>
    %103 = vector.shape_cast %83 : vector<1x128xi1> to vector<1x128xi1>
    %104 = vector.broadcast %103 : vector<1x128xi1> to vector<2x128xi1>
    %105 = arith.select %104, %101, %102 : vector<2x128xi1>, vector<2x128xf32>
    %cst_79 = arith.constant dense<0.000000e+00> : vector<2x128xf32>
    %106 = tpu.matmul %97, %94, %cst_79 {dimension_numbers = #tpu.dot_dimension_numbers<[1], [0], [0], [1], [0, 0, 1, 1], [], []>} : vector<2x16xf32>, vector<16x128xf32>, vector<2x128xf32> -> vector<2x128xf32>
    %107 = arith.addf %105, %106 : vector<2x128xf32>
    %cst_80 = arith.constant dense<0.000000e+00> : vector<2x128xf32>
    %108 = tpu.matmul %98, %96, %cst_80 {dimension_numbers = #tpu.dot_dimension_numbers<[1], [0], [0], [1], [0, 0, 1, 1], [], []>} : vector<2x16xf32>, vector<16x128xf32>, vector<2x128xf32> -> vector<2x128xf32>
    %109 = arith.addf %107, %108 : vector<2x128xf32>
    %110 = math.tanh %109 : vector<2x128xf32>
    %111 = vector.broadcast %78 : vector<1x128xf32> to vector<2x128xf32>
    %112 = arith.mulf %111, %110 : vector<2x128xf32>
    %113 = vector.broadcast %81 : vector<1x128xf32> to vector<2x128xf32>
    %114 = arith.addf %112, %113 : vector<2x128xf32>
    %115 = vector.extract_strided_slice %114 {offsets = [0, 0], sizes = [2, 16], strides = [1, 1]} : vector<2x128xf32> to vector<2x16xf32>
    %116 = vector.extract_strided_slice %114 {offsets = [0, 16], sizes = [2, 16], strides = [1, 1]} : vector<2x128xf32> to vector<2x16xf32>
    %117 = vector.extract_strided_slice %114 {offsets = [0, 32], sizes = [2, 16], strides = [1, 1]} : vector<2x128xf32> to vector<2x16xf32>
    %118 = vector.extract_strided_slice %114 {offsets = [0, 48], sizes = [2, 16], strides = [1, 1]} : vector<2x128xf32> to vector<2x16xf32>
    %119 = vector.extract_strided_slice %114 {offsets = [0, 64], sizes = [2, 16], strides = [1, 1]} : vector<2x128xf32> to vector<2x16xf32>
    %120 = vector.extract_strided_slice %114 {offsets = [0, 80], sizes = [2, 16], strides = [1, 1]} : vector<2x128xf32> to vector<2x16xf32>
    %121 = vector.extract_strided_slice %114 {offsets = [0, 96], sizes = [2, 16], strides = [1, 1]} : vector<2x128xf32> to vector<2x16xf32>
    %122 = vector.extract_strided_slice %114 {offsets = [0, 112], sizes = [2, 16], strides = [1, 1]} : vector<2x128xf32> to vector<2x16xf32>
    %123 = arith.mulf %116, %99 : vector<2x16xf32>
    %124 = arith.mulf %115, %118 : vector<2x16xf32>
    %125 = arith.addf %123, %124 : vector<2x16xf32>
    %126 = arith.mulf %120, %100 : vector<2x16xf32>
    %127 = arith.mulf %119, %122 : vector<2x16xf32>
    %128 = arith.addf %126, %127 : vector<2x16xf32>
    %129 = math.tanh %125 : vector<2x16xf32>
    %130 = arith.mulf %117, %129 : vector<2x16xf32>
    %131 = math.tanh %128 : vector<2x16xf32>
    %132 = arith.mulf %121, %131 : vector<2x16xf32>
    %c0_81 = arith.constant 0 : index
    %c0_82 = arith.constant 0 : index
    %133 = vector.load %arg18[%c0_81, %c0_82] : memref<32x32xf32, #tpu.memory_space<vmem>>, vector<2x16xf32>
    tpu.vector_store %arg18[%c0_81, %c0_82], %130 {strides = array<i32>} : memref<32x32xf32, #tpu.memory_space<vmem>>, vector<2x16xf32>,
    %c30_83 = arith.constant 30 : index
    %c16 = arith.constant 16 : index
    %134 = vector.load %arg18[%c30_83, %c16] : memref<32x32xf32, #tpu.memory_space<vmem>>, vector<2x16xf32>
    tpu.vector_store %arg18[%c30_83, %c16], %132 {strides = array<i32>} : memref<32x32xf32, #tpu.memory_space<vmem>>, vector<2x16xf32>,
    %c2_84 = arith.constant 2 : index
    %c0_85 = arith.constant 0 : index
    %135 = vector.load %arg19[%c2_84, %c0_85] : memref<32x128xf32, #tpu.memory_space<vmem>>, vector<2x128xf32>
    %c28 = arith.constant 28 : index
    %c0_86 = arith.constant 0 : index
    %136 = vector.load %arg19[%c28, %c0_86] : memref<32x128xf32, #tpu.memory_space<vmem>>, vector<2x128xf32>
    %137 = vector.shape_cast %83 : vector<1x128xi1> to vector<1x128xi1>
    %138 = vector.broadcast %137 : vector<1x128xi1> to vector<2x128xi1>
    %139 = arith.select %138, %135, %136 : vector<2x128xi1>, vector<2x128xf32>
    %cst_87 = arith.constant dense<0.000000e+00> : vector<2x128xf32>
    %140 = tpu.matmul %130, %94, %cst_87 {dimension_numbers = #tpu.dot_dimension_numbers<[1], [0], [0], [1], [0, 0, 1, 1], [], []>} : vector<2x16xf32>, vector<16x128xf32>, vector<2x128xf32> -> vector<2x128xf32>
    %141 = arith.addf %139, %140 : vector<2x128xf32>
    %cst_88 = arith.constant dense<0.000000e+00> : vector<2x128xf32>
    %142 = tpu.matmul %132, %96, %cst_88 {dimension_numbers = #tpu.dot_dimension_numbers<[1], [0], [0], [1], [0, 0, 1, 1], [], []>} : vector<2x16xf32>, vector<16x128xf32>, vector<2x128xf32> -> vector<2x128xf32>
    %143 = arith.addf %141, %142 : vector<2x128xf32>
    %144 = math.tanh %143 : vector<2x128xf32>
    %145 = vector.broadcast %78 : vector<1x128xf32> to vector<2x128xf32>
    %146 = arith.mulf %145, %144 : vector<2x128xf32>
    %147 = vector.broadcast %81 : vector<1x128xf32> to vector<2x128xf32>
    %148 = arith.addf %146, %147 : vector<2x128xf32>
    %149 = vector.extract_strided_slice %148 {offsets = [0, 0], sizes = [2, 16], strides = [1, 1]} : vector<2x128xf32> to vector<2x16xf32>
    %150 = vector.extract_strided_slice %148 {offsets = [0, 16], sizes = [2, 16], strides = [1, 1]} : vector<2x128xf32> to vector<2x16xf32>
    %151 = vector.extract_strided_slice %148 {offsets = [0, 32], sizes = [2, 16], strides = [1, 1]} : vector<2x128xf32> to vector<2x16xf32>
    %152 = vector.extract_strided_slice %148 {offsets = [0, 48], sizes = [2, 16], strides = [1, 1]} : vector<2x128xf32> to vector<2x16xf32>
    %153 = vector.extract_strided_slice %148 {offsets = [0, 64], sizes = [2, 16], strides = [1, 1]} : vector<2x128xf32> to vector<2x16xf32>
    %154 = vector.extract_strided_slice %148 {offsets = [0, 80], sizes = [2, 16], strides = [1, 1]} : vector<2x128xf32> to vector<2x16xf32>
    %155 = vector.extract_strided_slice %148 {offsets = [0, 96], sizes = [2, 16], strides = [1, 1]} : vector<2x128xf32> to vector<2x16xf32>
    %156 = vector.extract_strided_slice %148 {offsets = [0, 112], sizes = [2, 16], strides = [1, 1]} : vector<2x128xf32> to vector<2x16xf32>
    %157 = arith.mulf %150, %125 : vector<2x16xf32>
    %158 = arith.mulf %149, %152 : vector<2x16xf32>
    %159 = arith.addf %157, %158 : vector<2x16xf32>
    %160 = arith.mulf %154, %128 : vector<2x16xf32>
    %161 = arith.mulf %153, %156 : vector<2x16xf32>
    %162 = arith.addf %160, %161 : vector<2x16xf32>
    %163 = math.tanh %159 : vector<2x16xf32>
    %164 = arith.mulf %151, %163 : vector<2x16xf32>
    %165 = math.tanh %162 : vector<2x16xf32>
    %166 = arith.mulf %155, %165 : vector<2x16xf32>
    %c2_89 = arith.constant 2 : index
    %c0_90 = arith.constant 0 : index
    %167 = vector.load %arg18[%c2_89, %c0_90] : memref<32x32xf32, #tpu.memory_space<vmem>>, vector<2x16xf32>
    tpu.vector_store %arg18[%c2_89, %c0_90], %164 {strides = array<i32>} : memref<32x32xf32, #tpu.memory_space<vmem>>, vector<2x16xf32>,
    %c28_91 = arith.constant 28 : index
    %c16_92 = arith.constant 16 : index
    %168 = vector.load %arg18[%c28_91, %c16_92] : memref<32x32xf32, #tpu.memory_space<vmem>>, vector<2x16xf32>
    tpu.vector_store %arg18[%c28_91, %c16_92], %166 {strides = array<i32>} : memref<32x32xf32, #tpu.memory_space<vmem>>, vector<2x16xf32>,
    %c4 = arith.constant 4 : index
    %c0_93 = arith.constant 0 : index
    %169 = vector.load %arg19[%c4, %c0_93] : memref<32x128xf32, #tpu.memory_space<vmem>>, vector<2x128xf32>
    %c26 = arith.constant 26 : index
    %c0_94 = arith.constant 0 : index
    %170 = vector.load %arg19[%c26, %c0_94] : memref<32x128xf32, #tpu.memory_space<vmem>>, vector<2x128xf32>
    %171 = vector.shape_cast %83 : vector<1x128xi1> to vector<1x128xi1>
    %172 = vector.broadcast %171 : vector<1x128xi1> to vector<2x128xi1>
    %173 = arith.select %172, %169, %170 : vector<2x128xi1>, vector<2x128xf32>
    %cst_95 = arith.constant dense<0.000000e+00> : vector<2x128xf32>
    %174 = tpu.matmul %164, %94, %cst_95 {dimension_numbers = #tpu.dot_dimension_numbers<[1], [0], [0], [1], [0, 0, 1, 1], [], []>} : vector<2x16xf32>, vector<16x128xf32>, vector<2x128xf32> -> vector<2x128xf32>
    %175 = arith.addf %173, %174 : vector<2x128xf32>
    %cst_96 = arith.constant dense<0.000000e+00> : vector<2x128xf32>
    %176 = tpu.matmul %166, %96, %cst_96 {dimension_numbers = #tpu.dot_dimension_numbers<[1], [0], [0], [1], [0, 0, 1, 1], [], []>} : vector<2x16xf32>, vector<16x128xf32>, vector<2x128xf32> -> vector<2x128xf32>
    %177 = arith.addf %175, %176 : vector<2x128xf32>
    %178 = math.tanh %177 : vector<2x128xf32>
    %179 = vector.broadcast %78 : vector<1x128xf32> to vector<2x128xf32>
    %180 = arith.mulf %179, %178 : vector<2x128xf32>
    %181 = vector.broadcast %81 : vector<1x128xf32> to vector<2x128xf32>
    %182 = arith.addf %180, %181 : vector<2x128xf32>
    %183 = vector.extract_strided_slice %182 {offsets = [0, 0], sizes = [2, 16], strides = [1, 1]} : vector<2x128xf32> to vector<2x16xf32>
    %184 = vector.extract_strided_slice %182 {offsets = [0, 16], sizes = [2, 16], strides = [1, 1]} : vector<2x128xf32> to vector<2x16xf32>
    %185 = vector.extract_strided_slice %182 {offsets = [0, 32], sizes = [2, 16], strides = [1, 1]} : vector<2x128xf32> to vector<2x16xf32>
    %186 = vector.extract_strided_slice %182 {offsets = [0, 48], sizes = [2, 16], strides = [1, 1]} : vector<2x128xf32> to vector<2x16xf32>
    %187 = vector.extract_strided_slice %182 {offsets = [0, 64], sizes = [2, 16], strides = [1, 1]} : vector<2x128xf32> to vector<2x16xf32>
    %188 = vector.extract_strided_slice %182 {offsets = [0, 80], sizes = [2, 16], strides = [1, 1]} : vector<2x128xf32> to vector<2x16xf32>
    %189 = vector.extract_strided_slice %182 {offsets = [0, 96], sizes = [2, 16], strides = [1, 1]} : vector<2x128xf32> to vector<2x16xf32>
    %190 = vector.extract_strided_slice %182 {offsets = [0, 112], sizes = [2, 16], strides = [1, 1]} : vector<2x128xf32> to vector<2x16xf32>
    %191 = arith.mulf %184, %159 : vector<2x16xf32>
    %192 = arith.mulf %183, %186 : vector<2x16xf32>
    %193 = arith.addf %191, %192 : vector<2x16xf32>
    %194 = arith.mulf %188, %162 : vector<2x16xf32>
    %195 = arith.mulf %187, %190 : vector<2x16xf32>
    %196 = arith.addf %194, %195 : vector<2x16xf32>
    %197 = math.tanh %193 : vector<2x16xf32>
    %198 = arith.mulf %185, %197 : vector<2x16xf32>
    %199 = math.tanh %196 : vector<2x16xf32>
    %200 = arith.mulf %189, %199 : vector<2x16xf32>
    %c4_97 = arith.constant 4 : index
    %c0_98 = arith.constant 0 : index
    %201 = vector.load %arg18[%c4_97, %c0_98] : memref<32x32xf32, #tpu.memory_space<vmem>>, vector<2x16xf32>
    tpu.vector_store %arg18[%c4_97, %c0_98], %198 {strides = array<i32>} : memref<32x32xf32, #tpu.memory_space<vmem>>, vector<2x16xf32>,
    %c26_99 = arith.constant 26 : index
    %c16_100 = arith.constant 16 : index
    %202 = vector.load %arg18[%c26_99, %c16_100] : memref<32x32xf32, #tpu.memory_space<vmem>>, vector<2x16xf32>
    tpu.vector_store %arg18[%c26_99, %c16_100], %200 {strides = array<i32>} : memref<32x32xf32, #tpu.memory_space<vmem>>, vector<2x16xf32>,
    %c6 = arith.constant 6 : index
    %c0_101 = arith.constant 0 : index
    %203 = vector.load %arg19[%c6, %c0_101] : memref<32x128xf32, #tpu.memory_space<vmem>>, vector<2x128xf32>
    %c24 = arith.constant 24 : index
    %c0_102 = arith.constant 0 : index
    %204 = vector.load %arg19[%c24, %c0_102] : memref<32x128xf32, #tpu.memory_space<vmem>>, vector<2x128xf32>
    %205 = vector.shape_cast %83 : vector<1x128xi1> to vector<1x128xi1>
    %206 = vector.broadcast %205 : vector<1x128xi1> to vector<2x128xi1>
    %207 = arith.select %206, %203, %204 : vector<2x128xi1>, vector<2x128xf32>
    %cst_103 = arith.constant dense<0.000000e+00> : vector<2x128xf32>
    %208 = tpu.matmul %198, %94, %cst_103 {dimension_numbers = #tpu.dot_dimension_numbers<[1], [0], [0], [1], [0, 0, 1, 1], [], []>} : vector<2x16xf32>, vector<16x128xf32>, vector<2x128xf32> -> vector<2x128xf32>
    %209 = arith.addf %207, %208 : vector<2x128xf32>
    %cst_104 = arith.constant dense<0.000000e+00> : vector<2x128xf32>
    %210 = tpu.matmul %200, %96, %cst_104 {dimension_numbers = #tpu.dot_dimension_numbers<[1], [0], [0], [1], [0, 0, 1, 1], [], []>} : vector<2x16xf32>, vector<16x128xf32>, vector<2x128xf32> -> vector<2x128xf32>
    %211 = arith.addf %209, %210 : vector<2x128xf32>
    %212 = math.tanh %211 : vector<2x128xf32>
    %213 = vector.broadcast %78 : vector<1x128xf32> to vector<2x128xf32>
    %214 = arith.mulf %213, %212 : vector<2x128xf32>
    %215 = vector.broadcast %81 : vector<1x128xf32> to vector<2x128xf32>
    %216 = arith.addf %214, %215 : vector<2x128xf32>
    %217 = vector.extract_strided_slice %216 {offsets = [0, 0], sizes = [2, 16], strides = [1, 1]} : vector<2x128xf32> to vector<2x16xf32>
    %218 = vector.extract_strided_slice %216 {offsets = [0, 16], sizes = [2, 16], strides = [1, 1]} : vector<2x128xf32> to vector<2x16xf32>
    %219 = vector.extract_strided_slice %216 {offsets = [0, 32], sizes = [2, 16], strides = [1, 1]} : vector<2x128xf32> to vector<2x16xf32>
    %220 = vector.extract_strided_slice %216 {offsets = [0, 48], sizes = [2, 16], strides = [1, 1]} : vector<2x128xf32> to vector<2x16xf32>
    %221 = vector.extract_strided_slice %216 {offsets = [0, 64], sizes = [2, 16], strides = [1, 1]} : vector<2x128xf32> to vector<2x16xf32>
    %222 = vector.extract_strided_slice %216 {offsets = [0, 80], sizes = [2, 16], strides = [1, 1]} : vector<2x128xf32> to vector<2x16xf32>
    %223 = vector.extract_strided_slice %216 {offsets = [0, 96], sizes = [2, 16], strides = [1, 1]} : vector<2x128xf32> to vector<2x16xf32>
    %224 = vector.extract_strided_slice %216 {offsets = [0, 112], sizes = [2, 16], strides = [1, 1]} : vector<2x128xf32> to vector<2x16xf32>
    %225 = arith.mulf %218, %193 : vector<2x16xf32>
    %226 = arith.mulf %217, %220 : vector<2x16xf32>
    %227 = arith.addf %225, %226 : vector<2x16xf32>
    %228 = arith.mulf %222, %196 : vector<2x16xf32>
    %229 = arith.mulf %221, %224 : vector<2x16xf32>
    %230 = arith.addf %228, %229 : vector<2x16xf32>
    %231 = math.tanh %227 : vector<2x16xf32>
    %232 = arith.mulf %219, %231 : vector<2x16xf32>
    %233 = math.tanh %230 : vector<2x16xf32>
    %234 = arith.mulf %223, %233 : vector<2x16xf32>
    %c6_105 = arith.constant 6 : index
    %c0_106 = arith.constant 0 : index
    %235 = vector.load %arg18[%c6_105, %c0_106] : memref<32x32xf32, #tpu.memory_space<vmem>>, vector<2x16xf32>
    tpu.vector_store %arg18[%c6_105, %c0_106], %232 {strides = array<i32>} : memref<32x32xf32, #tpu.memory_space<vmem>>, vector<2x16xf32>,
    %c24_107 = arith.constant 24 : index
    %c16_108 = arith.constant 16 : index
    %236 = vector.load %arg18[%c24_107, %c16_108] : memref<32x32xf32, #tpu.memory_space<vmem>>, vector<2x16xf32>
    tpu.vector_store %arg18[%c24_107, %c16_108], %234 {strides = array<i32>} : memref<32x32xf32, #tpu.memory_space<vmem>>, vector<2x16xf32>,
    %c8 = arith.constant 8 : index
    %c0_109 = arith.constant 0 : index
    %237 = vector.load %arg19[%c8, %c0_109] : memref<32x128xf32, #tpu.memory_space<vmem>>, vector<2x128xf32>
    %c22 = arith.constant 22 : index
    %c0_110 = arith.constant 0 : index
    %238 = vector.load %arg19[%c22, %c0_110] : memref<32x128xf32, #tpu.memory_space<vmem>>, vector<2x128xf32>
    %239 = vector.shape_cast %83 : vector<1x128xi1> to vector<1x128xi1>
    %240 = vector.broadcast %239 : vector<1x128xi1> to vector<2x128xi1>
    %241 = arith.select %240, %237, %238 : vector<2x128xi1>, vector<2x128xf32>
    %cst_111 = arith.constant dense<0.000000e+00> : vector<2x128xf32>
    %242 = tpu.matmul %232, %94, %cst_111 {dimension_numbers = #tpu.dot_dimension_numbers<[1], [0], [0], [1], [0, 0, 1, 1], [], []>} : vector<2x16xf32>, vector<16x128xf32>, vector<2x128xf32> -> vector<2x128xf32>
    %243 = arith.addf %241, %242 : vector<2x128xf32>
    %cst_112 = arith.constant dense<0.000000e+00> : vector<2x128xf32>
    %244 = tpu.matmul %234, %96, %cst_112 {dimension_numbers = #tpu.dot_dimension_numbers<[1], [0], [0], [1], [0, 0, 1, 1], [], []>} : vector<2x16xf32>, vector<16x128xf32>, vector<2x128xf32> -> vector<2x128xf32>
    %245 = arith.addf %243, %244 : vector<2x128xf32>
    %246 = math.tanh %245 : vector<2x128xf32>
    %247 = vector.broadcast %78 : vector<1x128xf32> to vector<2x128xf32>
    %248 = arith.mulf %247, %246 : vector<2x128xf32>
    %249 = vector.broadcast %81 : vector<1x128xf32> to vector<2x128xf32>
    %250 = arith.addf %248, %249 : vector<2x128xf32>
    %251 = vector.extract_strided_slice %250 {offsets = [0, 0], sizes = [2, 16], strides = [1, 1]} : vector<2x128xf32> to vector<2x16xf32>
    %252 = vector.extract_strided_slice %250 {offsets = [0, 16], sizes = [2, 16], strides = [1, 1]} : vector<2x128xf32> to vector<2x16xf32>
    %253 = vector.extract_strided_slice %250 {offsets = [0, 32], sizes = [2, 16], strides = [1, 1]} : vector<2x128xf32> to vector<2x16xf32>
    %254 = vector.extract_strided_slice %250 {offsets = [0, 48], sizes = [2, 16], strides = [1, 1]} : vector<2x128xf32> to vector<2x16xf32>
    %255 = vector.extract_strided_slice %250 {offsets = [0, 64], sizes = [2, 16], strides = [1, 1]} : vector<2x128xf32> to vector<2x16xf32>
    %256 = vector.extract_strided_slice %250 {offsets = [0, 80], sizes = [2, 16], strides = [1, 1]} : vector<2x128xf32> to vector<2x16xf32>
    %257 = vector.extract_strided_slice %250 {offsets = [0, 96], sizes = [2, 16], strides = [1, 1]} : vector<2x128xf32> to vector<2x16xf32>
    %258 = vector.extract_strided_slice %250 {offsets = [0, 112], sizes = [2, 16], strides = [1, 1]} : vector<2x128xf32> to vector<2x16xf32>
    %259 = arith.mulf %252, %227 : vector<2x16xf32>
    %260 = arith.mulf %251, %254 : vector<2x16xf32>
    %261 = arith.addf %259, %260 : vector<2x16xf32>
    %262 = arith.mulf %256, %230 : vector<2x16xf32>
    %263 = arith.mulf %255, %258 : vector<2x16xf32>
    %264 = arith.addf %262, %263 : vector<2x16xf32>
    %265 = math.tanh %261 : vector<2x16xf32>
    %266 = arith.mulf %253, %265 : vector<2x16xf32>
    %267 = math.tanh %264 : vector<2x16xf32>
    %268 = arith.mulf %257, %267 : vector<2x16xf32>
    %c8_113 = arith.constant 8 : index
    %c0_114 = arith.constant 0 : index
    %269 = vector.load %arg18[%c8_113, %c0_114] : memref<32x32xf32, #tpu.memory_space<vmem>>, vector<2x16xf32>
    tpu.vector_store %arg18[%c8_113, %c0_114], %266 {strides = array<i32>} : memref<32x32xf32, #tpu.memory_space<vmem>>, vector<2x16xf32>,
    %c22_115 = arith.constant 22 : index
    %c16_116 = arith.constant 16 : index
    %270 = vector.load %arg18[%c22_115, %c16_116] : memref<32x32xf32, #tpu.memory_space<vmem>>, vector<2x16xf32>
    tpu.vector_store %arg18[%c22_115, %c16_116], %268 {strides = array<i32>} : memref<32x32xf32, #tpu.memory_space<vmem>>, vector<2x16xf32>,
    %c10 = arith.constant 10 : index
    %c0_117 = arith.constant 0 : index
    %271 = vector.load %arg19[%c10, %c0_117] : memref<32x128xf32, #tpu.memory_space<vmem>>, vector<2x128xf32>
    %c20 = arith.constant 20 : index
    %c0_118 = arith.constant 0 : index
    %272 = vector.load %arg19[%c20, %c0_118] : memref<32x128xf32, #tpu.memory_space<vmem>>, vector<2x128xf32>
    %273 = vector.shape_cast %83 : vector<1x128xi1> to vector<1x128xi1>
    %274 = vector.broadcast %273 : vector<1x128xi1> to vector<2x128xi1>
    %275 = arith.select %274, %271, %272 : vector<2x128xi1>, vector<2x128xf32>
    %cst_119 = arith.constant dense<0.000000e+00> : vector<2x128xf32>
    %276 = tpu.matmul %266, %94, %cst_119 {dimension_numbers = #tpu.dot_dimension_numbers<[1], [0], [0], [1], [0, 0, 1, 1], [], []>} : vector<2x16xf32>, vector<16x128xf32>, vector<2x128xf32> -> vector<2x128xf32>
    %277 = arith.addf %275, %276 : vector<2x128xf32>
    %cst_120 = arith.constant dense<0.000000e+00> : vector<2x128xf32>
    %278 = tpu.matmul %268, %96, %cst_120 {dimension_numbers = #tpu.dot_dimension_numbers<[1], [0], [0], [1], [0, 0, 1, 1], [], []>} : vector<2x16xf32>, vector<16x128xf32>, vector<2x128xf32> -> vector<2x128xf32>
    %279 = arith.addf %277, %278 : vector<2x128xf32>
    %280 = math.tanh %279 : vector<2x128xf32>
    %281 = vector.broadcast %78 : vector<1x128xf32> to vector<2x128xf32>
    %282 = arith.mulf %281, %280 : vector<2x128xf32>
    %283 = vector.broadcast %81 : vector<1x128xf32> to vector<2x128xf32>
    %284 = arith.addf %282, %283 : vector<2x128xf32>
    %285 = vector.extract_strided_slice %284 {offsets = [0, 0], sizes = [2, 16], strides = [1, 1]} : vector<2x128xf32> to vector<2x16xf32>
    %286 = vector.extract_strided_slice %284 {offsets = [0, 16], sizes = [2, 16], strides = [1, 1]} : vector<2x128xf32> to vector<2x16xf32>
    %287 = vector.extract_strided_slice %284 {offsets = [0, 32], sizes = [2, 16], strides = [1, 1]} : vector<2x128xf32> to vector<2x16xf32>
    %288 = vector.extract_strided_slice %284 {offsets = [0, 48], sizes = [2, 16], strides = [1, 1]} : vector<2x128xf32> to vector<2x16xf32>
    %289 = vector.extract_strided_slice %284 {offsets = [0, 64], sizes = [2, 16], strides = [1, 1]} : vector<2x128xf32> to vector<2x16xf32>
    %290 = vector.extract_strided_slice %284 {offsets = [0, 80], sizes = [2, 16], strides = [1, 1]} : vector<2x128xf32> to vector<2x16xf32>
    %291 = vector.extract_strided_slice %284 {offsets = [0, 96], sizes = [2, 16], strides = [1, 1]} : vector<2x128xf32> to vector<2x16xf32>
    %292 = vector.extract_strided_slice %284 {offsets = [0, 112], sizes = [2, 16], strides = [1, 1]} : vector<2x128xf32> to vector<2x16xf32>
    %293 = arith.mulf %286, %261 : vector<2x16xf32>
    %294 = arith.mulf %285, %288 : vector<2x16xf32>
    %295 = arith.addf %293, %294 : vector<2x16xf32>
    %296 = arith.mulf %290, %264 : vector<2x16xf32>
    %297 = arith.mulf %289, %292 : vector<2x16xf32>
    %298 = arith.addf %296, %297 : vector<2x16xf32>
    %299 = math.tanh %295 : vector<2x16xf32>
    %300 = arith.mulf %287, %299 : vector<2x16xf32>
    %301 = math.tanh %298 : vector<2x16xf32>
    %302 = arith.mulf %291, %301 : vector<2x16xf32>
    %c10_121 = arith.constant 10 : index
    %c0_122 = arith.constant 0 : index
    %303 = vector.load %arg18[%c10_121, %c0_122] : memref<32x32xf32, #tpu.memory_space<vmem>>, vector<2x16xf32>
    tpu.vector_store %arg18[%c10_121, %c0_122], %300 {strides = array<i32>} : memref<32x32xf32, #tpu.memory_space<vmem>>, vector<2x16xf32>,
    %c20_123 = arith.constant 20 : index
    %c16_124 = arith.constant 16 : index
    %304 = vector.load %arg18[%c20_123, %c16_124] : memref<32x32xf32, #tpu.memory_space<vmem>>, vector<2x16xf32>
    tpu.vector_store %arg18[%c20_123, %c16_124], %302 {strides = array<i32>} : memref<32x32xf32, #tpu.memory_space<vmem>>, vector<2x16xf32>,
    %c12 = arith.constant 12 : index
    %c0_125 = arith.constant 0 : index
    %305 = vector.load %arg19[%c12, %c0_125] : memref<32x128xf32, #tpu.memory_space<vmem>>, vector<2x128xf32>
    %c18 = arith.constant 18 : index
    %c0_126 = arith.constant 0 : index
    %306 = vector.load %arg19[%c18, %c0_126] : memref<32x128xf32, #tpu.memory_space<vmem>>, vector<2x128xf32>
    %307 = vector.shape_cast %83 : vector<1x128xi1> to vector<1x128xi1>
    %308 = vector.broadcast %307 : vector<1x128xi1> to vector<2x128xi1>
    %309 = arith.select %308, %305, %306 : vector<2x128xi1>, vector<2x128xf32>
    %cst_127 = arith.constant dense<0.000000e+00> : vector<2x128xf32>
    %310 = tpu.matmul %300, %94, %cst_127 {dimension_numbers = #tpu.dot_dimension_numbers<[1], [0], [0], [1], [0, 0, 1, 1], [], []>} : vector<2x16xf32>, vector<16x128xf32>, vector<2x128xf32> -> vector<2x128xf32>
    %311 = arith.addf %309, %310 : vector<2x128xf32>
    %cst_128 = arith.constant dense<0.000000e+00> : vector<2x128xf32>
    %312 = tpu.matmul %302, %96, %cst_128 {dimension_numbers = #tpu.dot_dimension_numbers<[1], [0], [0], [1], [0, 0, 1, 1], [], []>} : vector<2x16xf32>, vector<16x128xf32>, vector<2x128xf32> -> vector<2x128xf32>
    %313 = arith.addf %311, %312 : vector<2x128xf32>
    %314 = math.tanh %313 : vector<2x128xf32>
    %315 = vector.broadcast %78 : vector<1x128xf32> to vector<2x128xf32>
    %316 = arith.mulf %315, %314 : vector<2x128xf32>
    %317 = vector.broadcast %81 : vector<1x128xf32> to vector<2x128xf32>
    %318 = arith.addf %316, %317 : vector<2x128xf32>
    %319 = vector.extract_strided_slice %318 {offsets = [0, 0], sizes = [2, 16], strides = [1, 1]} : vector<2x128xf32> to vector<2x16xf32>
    %320 = vector.extract_strided_slice %318 {offsets = [0, 16], sizes = [2, 16], strides = [1, 1]} : vector<2x128xf32> to vector<2x16xf32>
    %321 = vector.extract_strided_slice %318 {offsets = [0, 32], sizes = [2, 16], strides = [1, 1]} : vector<2x128xf32> to vector<2x16xf32>
    %322 = vector.extract_strided_slice %318 {offsets = [0, 48], sizes = [2, 16], strides = [1, 1]} : vector<2x128xf32> to vector<2x16xf32>
    %323 = vector.extract_strided_slice %318 {offsets = [0, 64], sizes = [2, 16], strides = [1, 1]} : vector<2x128xf32> to vector<2x16xf32>
    %324 = vector.extract_strided_slice %318 {offsets = [0, 80], sizes = [2, 16], strides = [1, 1]} : vector<2x128xf32> to vector<2x16xf32>
    %325 = vector.extract_strided_slice %318 {offsets = [0, 96], sizes = [2, 16], strides = [1, 1]} : vector<2x128xf32> to vector<2x16xf32>
    %326 = vector.extract_strided_slice %318 {offsets = [0, 112], sizes = [2, 16], strides = [1, 1]} : vector<2x128xf32> to vector<2x16xf32>
    %327 = arith.mulf %320, %295 : vector<2x16xf32>
    %328 = arith.mulf %319, %322 : vector<2x16xf32>
    %329 = arith.addf %327, %328 : vector<2x16xf32>
    %330 = arith.mulf %324, %298 : vector<2x16xf32>
    %331 = arith.mulf %323, %326 : vector<2x16xf32>
    %332 = arith.addf %330, %331 : vector<2x16xf32>
    %333 = math.tanh %329 : vector<2x16xf32>
    %334 = arith.mulf %321, %333 : vector<2x16xf32>
    %335 = math.tanh %332 : vector<2x16xf32>
    %336 = arith.mulf %325, %335 : vector<2x16xf32>
    %c12_129 = arith.constant 12 : index
    %c0_130 = arith.constant 0 : index
    %337 = vector.load %arg18[%c12_129, %c0_130] : memref<32x32xf32, #tpu.memory_space<vmem>>, vector<2x16xf32>
    tpu.vector_store %arg18[%c12_129, %c0_130], %334 {strides = array<i32>} : memref<32x32xf32, #tpu.memory_space<vmem>>, vector<2x16xf32>,
    %c18_131 = arith.constant 18 : index
    %c16_132 = arith.constant 16 : index
    %338 = vector.load %arg18[%c18_131, %c16_132] : memref<32x32xf32, #tpu.memory_space<vmem>>, vector<2x16xf32>
    tpu.vector_store %arg18[%c18_131, %c16_132], %336 {strides = array<i32>} : memref<32x32xf32, #tpu.memory_space<vmem>>, vector<2x16xf32>,
    %c14 = arith.constant 14 : index
    %c0_133 = arith.constant 0 : index
    %339 = vector.load %arg19[%c14, %c0_133] : memref<32x128xf32, #tpu.memory_space<vmem>>, vector<2x128xf32>
    %c16_134 = arith.constant 16 : index
    %c0_135 = arith.constant 0 : index
    %340 = vector.load %arg19[%c16_134, %c0_135] : memref<32x128xf32, #tpu.memory_space<vmem>>, vector<2x128xf32>
    %341 = vector.shape_cast %83 : vector<1x128xi1> to vector<1x128xi1>
    %342 = vector.broadcast %341 : vector<1x128xi1> to vector<2x128xi1>
    %343 = arith.select %342, %339, %340 : vector<2x128xi1>, vector<2x128xf32>
    %cst_136 = arith.constant dense<0.000000e+00> : vector<2x128xf32>
    %344 = tpu.matmul %334, %94, %cst_136 {dimension_numbers = #tpu.dot_dimension_numbers<[1], [0], [0], [1], [0, 0, 1, 1], [], []>} : vector<2x16xf32>, vector<16x128xf32>, vector<2x128xf32> -> vector<2x128xf32>
    %345 = arith.addf %343, %344 : vector<2x128xf32>
    %cst_137 = arith.constant dense<0.000000e+00> : vector<2x128xf32>
    %346 = tpu.matmul %336, %96, %cst_137 {dimension_numbers = #tpu.dot_dimension_numbers<[1], [0], [0], [1], [0, 0, 1, 1], [], []>} : vector<2x16xf32>, vector<16x128xf32>, vector<2x128xf32> -> vector<2x128xf32>
    %347 = arith.addf %345, %346 : vector<2x128xf32>
    %348 = math.tanh %347 : vector<2x128xf32>
    %349 = vector.broadcast %78 : vector<1x128xf32> to vector<2x128xf32>
    %350 = arith.mulf %349, %348 : vector<2x128xf32>
    %351 = vector.broadcast %81 : vector<1x128xf32> to vector<2x128xf32>
    %352 = arith.addf %350, %351 : vector<2x128xf32>
    %353 = vector.extract_strided_slice %352 {offsets = [0, 0], sizes = [2, 16], strides = [1, 1]} : vector<2x128xf32> to vector<2x16xf32>
    %354 = vector.extract_strided_slice %352 {offsets = [0, 16], sizes = [2, 16], strides = [1, 1]} : vector<2x128xf32> to vector<2x16xf32>
    %355 = vector.extract_strided_slice %352 {offsets = [0, 32], sizes = [2, 16], strides = [1, 1]} : vector<2x128xf32> to vector<2x16xf32>
    %356 = vector.extract_strided_slice %352 {offsets = [0, 48], sizes = [2, 16], strides = [1, 1]} : vector<2x128xf32> to vector<2x16xf32>
    %357 = vector.extract_strided_slice %352 {offsets = [0, 64], sizes = [2, 16], strides = [1, 1]} : vector<2x128xf32> to vector<2x16xf32>
    %358 = vector.extract_strided_slice %352 {offsets = [0, 80], sizes = [2, 16], strides = [1, 1]} : vector<2x128xf32> to vector<2x16xf32>
    %359 = vector.extract_strided_slice %352 {offsets = [0, 96], sizes = [2, 16], strides = [1, 1]} : vector<2x128xf32> to vector<2x16xf32>
    %360 = vector.extract_strided_slice %352 {offsets = [0, 112], sizes = [2, 16], strides = [1, 1]} : vector<2x128xf32> to vector<2x16xf32>
    %361 = arith.mulf %354, %329 : vector<2x16xf32>
    %362 = arith.mulf %353, %356 : vector<2x16xf32>
    %363 = arith.addf %361, %362 : vector<2x16xf32>
    %364 = arith.mulf %358, %332 : vector<2x16xf32>
    %365 = arith.mulf %357, %360 : vector<2x16xf32>
    %366 = arith.addf %364, %365 : vector<2x16xf32>
    %367 = math.tanh %363 : vector<2x16xf32>
    %368 = arith.mulf %355, %367 : vector<2x16xf32>
    %369 = math.tanh %366 : vector<2x16xf32>
    %370 = arith.mulf %359, %369 : vector<2x16xf32>
    %c14_138 = arith.constant 14 : index
    %c0_139 = arith.constant 0 : index
    %371 = vector.load %arg18[%c14_138, %c0_139] : memref<32x32xf32, #tpu.memory_space<vmem>>, vector<2x16xf32>
    tpu.vector_store %arg18[%c14_138, %c0_139], %368 {strides = array<i32>} : memref<32x32xf32, #tpu.memory_space<vmem>>, vector<2x16xf32>,
    %c16_140 = arith.constant 16 : index
    %c16_141 = arith.constant 16 : index
    %372 = vector.load %arg18[%c16_140, %c16_141] : memref<32x32xf32, #tpu.memory_space<vmem>>, vector<2x16xf32>
    tpu.vector_store %arg18[%c16_140, %c16_141], %370 {strides = array<i32>} : memref<32x32xf32, #tpu.memory_space<vmem>>, vector<2x16xf32>,
    %c16_142 = arith.constant 16 : index
    %c0_143 = arith.constant 0 : index
    %373 = vector.load %arg19[%c16_142, %c0_143] : memref<32x128xf32, #tpu.memory_space<vmem>>, vector<2x128xf32>
    %c14_144 = arith.constant 14 : index
    %c0_145 = arith.constant 0 : index
    %374 = vector.load %arg19[%c14_144, %c0_145] : memref<32x128xf32, #tpu.memory_space<vmem>>, vector<2x128xf32>
    %375 = vector.shape_cast %83 : vector<1x128xi1> to vector<1x128xi1>
    %376 = vector.broadcast %375 : vector<1x128xi1> to vector<2x128xi1>
    %377 = arith.select %376, %373, %374 : vector<2x128xi1>, vector<2x128xf32>
    %cst_146 = arith.constant dense<0.000000e+00> : vector<2x128xf32>
    %378 = tpu.matmul %368, %94, %cst_146 {dimension_numbers = #tpu.dot_dimension_numbers<[1], [0], [0], [1], [0, 0, 1, 1], [], []>} : vector<2x16xf32>, vector<16x128xf32>, vector<2x128xf32> -> vector<2x128xf32>
    %379 = arith.addf %377, %378 : vector<2x128xf32>
    %cst_147 = arith.constant dense<0.000000e+00> : vector<2x128xf32>
    %380 = tpu.matmul %370, %96, %cst_147 {dimension_numbers = #tpu.dot_dimension_numbers<[1], [0], [0], [1], [0, 0, 1, 1], [], []>} : vector<2x16xf32>, vector<16x128xf32>, vector<2x128xf32> -> vector<2x128xf32>
    %381 = arith.addf %379, %380 : vector<2x128xf32>
    %382 = math.tanh %381 : vector<2x128xf32>
    %383 = vector.broadcast %78 : vector<1x128xf32> to vector<2x128xf32>
    %384 = arith.mulf %383, %382 : vector<2x128xf32>
    %385 = vector.broadcast %81 : vector<1x128xf32> to vector<2x128xf32>
    %386 = arith.addf %384, %385 : vector<2x128xf32>
    %387 = vector.extract_strided_slice %386 {offsets = [0, 0], sizes = [2, 16], strides = [1, 1]} : vector<2x128xf32> to vector<2x16xf32>
    %388 = vector.extract_strided_slice %386 {offsets = [0, 16], sizes = [2, 16], strides = [1, 1]} : vector<2x128xf32> to vector<2x16xf32>
    %389 = vector.extract_strided_slice %386 {offsets = [0, 32], sizes = [2, 16], strides = [1, 1]} : vector<2x128xf32> to vector<2x16xf32>
    %390 = vector.extract_strided_slice %386 {offsets = [0, 48], sizes = [2, 16], strides = [1, 1]} : vector<2x128xf32> to vector<2x16xf32>
    %391 = vector.extract_strided_slice %386 {offsets = [0, 64], sizes = [2, 16], strides = [1, 1]} : vector<2x128xf32> to vector<2x16xf32>
    %392 = vector.extract_strided_slice %386 {offsets = [0, 80], sizes = [2, 16], strides = [1, 1]} : vector<2x128xf32> to vector<2x16xf32>
    %393 = vector.extract_strided_slice %386 {offsets = [0, 96], sizes = [2, 16], strides = [1, 1]} : vector<2x128xf32> to vector<2x16xf32>
    %394 = vector.extract_strided_slice %386 {offsets = [0, 112], sizes = [2, 16], strides = [1, 1]} : vector<2x128xf32> to vector<2x16xf32>
    %395 = arith.mulf %388, %363 : vector<2x16xf32>
    %396 = arith.mulf %387, %390 : vector<2x16xf32>
    %397 = arith.addf %395, %396 : vector<2x16xf32>
    %398 = arith.mulf %392, %366 : vector<2x16xf32>
    %399 = arith.mulf %391, %394 : vector<2x16xf32>
    %400 = arith.addf %398, %399 : vector<2x16xf32>
    %401 = math.tanh %397 : vector<2x16xf32>
    %402 = arith.mulf %389, %401 : vector<2x16xf32>
    %403 = math.tanh %400 : vector<2x16xf32>
    %404 = arith.mulf %393, %403 : vector<2x16xf32>
    %c16_148 = arith.constant 16 : index
    %c0_149 = arith.constant 0 : index
    %405 = vector.load %arg18[%c16_148, %c0_149] : memref<32x32xf32, #tpu.memory_space<vmem>>, vector<2x16xf32>
    tpu.vector_store %arg18[%c16_148, %c0_149], %402 {strides = array<i32>} : memref<32x32xf32, #tpu.memory_space<vmem>>, vector<2x16xf32>,
    %c14_150 = arith.constant 14 : index
    %c16_151 = arith.constant 16 : index
    %406 = vector.load %arg18[%c14_150, %c16_151] : memref<32x32xf32, #tpu.memory_space<vmem>>, vector<2x16xf32>
    tpu.vector_store %arg18[%c14_150, %c16_151], %404 {strides = array<i32>} : memref<32x32xf32, #tpu.memory_space<vmem>>, vector<2x16xf32>,
    %c18_152 = arith.constant 18 : index
    %c0_153 = arith.constant 0 : index
    %407 = vector.load %arg19[%c18_152, %c0_153] : memref<32x128xf32, #tpu.memory_space<vmem>>, vector<2x128xf32>
    %c12_154 = arith.constant 12 : index
    %c0_155 = arith.constant 0 : index
    %408 = vector.load %arg19[%c12_154, %c0_155] : memref<32x128xf32, #tpu.memory_space<vmem>>, vector<2x128xf32>
    %409 = vector.shape_cast %83 : vector<1x128xi1> to vector<1x128xi1>
    %410 = vector.broadcast %409 : vector<1x128xi1> to vector<2x128xi1>
    %411 = arith.select %410, %407, %408 : vector<2x128xi1>, vector<2x128xf32>
    %cst_156 = arith.constant dense<0.000000e+00> : vector<2x128xf32>
    %412 = tpu.matmul %402, %94, %cst_156 {dimension_numbers = #tpu.dot_dimension_numbers<[1], [0], [0], [1], [0, 0, 1, 1], [], []>} : vector<2x16xf32>, vector<16x128xf32>, vector<2x128xf32> -> vector<2x128xf32>
    %413 = arith.addf %411, %412 : vector<2x128xf32>
    %cst_157 = arith.constant dense<0.000000e+00> : vector<2x128xf32>
    %414 = tpu.matmul %404, %96, %cst_157 {dimension_numbers = #tpu.dot_dimension_numbers<[1], [0], [0], [1], [0, 0, 1, 1], [], []>} : vector<2x16xf32>, vector<16x128xf32>, vector<2x128xf32> -> vector<2x128xf32>
    %415 = arith.addf %413, %414 : vector<2x128xf32>
    %416 = math.tanh %415 : vector<2x128xf32>
    %417 = vector.broadcast %78 : vector<1x128xf32> to vector<2x128xf32>
    %418 = arith.mulf %417, %416 : vector<2x128xf32>
    %419 = vector.broadcast %81 : vector<1x128xf32> to vector<2x128xf32>
    %420 = arith.addf %418, %419 : vector<2x128xf32>
    %421 = vector.extract_strided_slice %420 {offsets = [0, 0], sizes = [2, 16], strides = [1, 1]} : vector<2x128xf32> to vector<2x16xf32>
    %422 = vector.extract_strided_slice %420 {offsets = [0, 16], sizes = [2, 16], strides = [1, 1]} : vector<2x128xf32> to vector<2x16xf32>
    %423 = vector.extract_strided_slice %420 {offsets = [0, 32], sizes = [2, 16], strides = [1, 1]} : vector<2x128xf32> to vector<2x16xf32>
    %424 = vector.extract_strided_slice %420 {offsets = [0, 48], sizes = [2, 16], strides = [1, 1]} : vector<2x128xf32> to vector<2x16xf32>
    %425 = vector.extract_strided_slice %420 {offsets = [0, 64], sizes = [2, 16], strides = [1, 1]} : vector<2x128xf32> to vector<2x16xf32>
    %426 = vector.extract_strided_slice %420 {offsets = [0, 80], sizes = [2, 16], strides = [1, 1]} : vector<2x128xf32> to vector<2x16xf32>
    %427 = vector.extract_strided_slice %420 {offsets = [0, 96], sizes = [2, 16], strides = [1, 1]} : vector<2x128xf32> to vector<2x16xf32>
    %428 = vector.extract_strided_slice %420 {offsets = [0, 112], sizes = [2, 16], strides = [1, 1]} : vector<2x128xf32> to vector<2x16xf32>
    %429 = arith.mulf %422, %397 : vector<2x16xf32>
    %430 = arith.mulf %421, %424 : vector<2x16xf32>
    %431 = arith.addf %429, %430 : vector<2x16xf32>
    %432 = arith.mulf %426, %400 : vector<2x16xf32>
    %433 = arith.mulf %425, %428 : vector<2x16xf32>
    %434 = arith.addf %432, %433 : vector<2x16xf32>
    %435 = math.tanh %431 : vector<2x16xf32>
    %436 = arith.mulf %423, %435 : vector<2x16xf32>
    %437 = math.tanh %434 : vector<2x16xf32>
    %438 = arith.mulf %427, %437 : vector<2x16xf32>
    %c18_158 = arith.constant 18 : index
    %c0_159 = arith.constant 0 : index
    %439 = vector.load %arg18[%c18_158, %c0_159] : memref<32x32xf32, #tpu.memory_space<vmem>>, vector<2x16xf32>
    tpu.vector_store %arg18[%c18_158, %c0_159], %436 {strides = array<i32>} : memref<32x32xf32, #tpu.memory_space<vmem>>, vector<2x16xf32>,
    %c12_160 = arith.constant 12 : index
    %c16_161 = arith.constant 16 : index
    %440 = vector.load %arg18[%c12_160, %c16_161] : memref<32x32xf32, #tpu.memory_space<vmem>>, vector<2x16xf32>
    tpu.vector_store %arg18[%c12_160, %c16_161], %438 {strides = array<i32>} : memref<32x32xf32, #tpu.memory_space<vmem>>, vector<2x16xf32>,
    %c20_162 = arith.constant 20 : index
    %c0_163 = arith.constant 0 : index
    %441 = vector.load %arg19[%c20_162, %c0_163] : memref<32x128xf32, #tpu.memory_space<vmem>>, vector<2x128xf32>
    %c10_164 = arith.constant 10 : index
    %c0_165 = arith.constant 0 : index
    %442 = vector.load %arg19[%c10_164, %c0_165] : memref<32x128xf32, #tpu.memory_space<vmem>>, vector<2x128xf32>
    %443 = vector.shape_cast %83 : vector<1x128xi1> to vector<1x128xi1>
    %444 = vector.broadcast %443 : vector<1x128xi1> to vector<2x128xi1>
    %445 = arith.select %444, %441, %442 : vector<2x128xi1>, vector<2x128xf32>
    %cst_166 = arith.constant dense<0.000000e+00> : vector<2x128xf32>
    %446 = tpu.matmul %436, %94, %cst_166 {dimension_numbers = #tpu.dot_dimension_numbers<[1], [0], [0], [1], [0, 0, 1, 1], [], []>} : vector<2x16xf32>, vector<16x128xf32>, vector<2x128xf32> -> vector<2x128xf32>
    %447 = arith.addf %445, %446 : vector<2x128xf32>
    %cst_167 = arith.constant dense<0.000000e+00> : vector<2x128xf32>
    %448 = tpu.matmul %438, %96, %cst_167 {dimension_numbers = #tpu.dot_dimension_numbers<[1], [0], [0], [1], [0, 0, 1, 1], [], []>} : vector<2x16xf32>, vector<16x128xf32>, vector<2x128xf32> -> vector<2x128xf32>
    %449 = arith.addf %447, %448 : vector<2x128xf32>
    %450 = math.tanh %449 : vector<2x128xf32>
    %451 = vector.broadcast %78 : vector<1x128xf32> to vector<2x128xf32>
    %452 = arith.mulf %451, %450 : vector<2x128xf32>
    %453 = vector.broadcast %81 : vector<1x128xf32> to vector<2x128xf32>
    %454 = arith.addf %452, %453 : vector<2x128xf32>
    %455 = vector.extract_strided_slice %454 {offsets = [0, 0], sizes = [2, 16], strides = [1, 1]} : vector<2x128xf32> to vector<2x16xf32>
    %456 = vector.extract_strided_slice %454 {offsets = [0, 16], sizes = [2, 16], strides = [1, 1]} : vector<2x128xf32> to vector<2x16xf32>
    %457 = vector.extract_strided_slice %454 {offsets = [0, 32], sizes = [2, 16], strides = [1, 1]} : vector<2x128xf32> to vector<2x16xf32>
    %458 = vector.extract_strided_slice %454 {offsets = [0, 48], sizes = [2, 16], strides = [1, 1]} : vector<2x128xf32> to vector<2x16xf32>
    %459 = vector.extract_strided_slice %454 {offsets = [0, 64], sizes = [2, 16], strides = [1, 1]} : vector<2x128xf32> to vector<2x16xf32>
    %460 = vector.extract_strided_slice %454 {offsets = [0, 80], sizes = [2, 16], strides = [1, 1]} : vector<2x128xf32> to vector<2x16xf32>
    %461 = vector.extract_strided_slice %454 {offsets = [0, 96], sizes = [2, 16], strides = [1, 1]} : vector<2x128xf32> to vector<2x16xf32>
    %462 = vector.extract_strided_slice %454 {offsets = [0, 112], sizes = [2, 16], strides = [1, 1]} : vector<2x128xf32> to vector<2x16xf32>
    %463 = arith.mulf %456, %431 : vector<2x16xf32>
    %464 = arith.mulf %455, %458 : vector<2x16xf32>
    %465 = arith.addf %463, %464 : vector<2x16xf32>
    %466 = arith.mulf %460, %434 : vector<2x16xf32>
    %467 = arith.mulf %459, %462 : vector<2x16xf32>
    %468 = arith.addf %466, %467 : vector<2x16xf32>
    %469 = math.tanh %465 : vector<2x16xf32>
    %470 = arith.mulf %457, %469 : vector<2x16xf32>
    %471 = math.tanh %468 : vector<2x16xf32>
    %472 = arith.mulf %461, %471 : vector<2x16xf32>
    %c20_168 = arith.constant 20 : index
    %c0_169 = arith.constant 0 : index
    %473 = vector.load %arg18[%c20_168, %c0_169] : memref<32x32xf32, #tpu.memory_space<vmem>>, vector<2x16xf32>
    tpu.vector_store %arg18[%c20_168, %c0_169], %470 {strides = array<i32>} : memref<32x32xf32, #tpu.memory_space<vmem>>, vector<2x16xf32>,
    %c10_170 = arith.constant 10 : index
    %c16_171 = arith.constant 16 : index
    %474 = vector.load %arg18[%c10_170, %c16_171] : memref<32x32xf32, #tpu.memory_space<vmem>>, vector<2x16xf32>
    tpu.vector_store %arg18[%c10_170, %c16_171], %472 {strides = array<i32>} : memref<32x32xf32, #tpu.memory_space<vmem>>, vector<2x16xf32>,
    %c22_172 = arith.constant 22 : index
    %c0_173 = arith.constant 0 : index
    %475 = vector.load %arg19[%c22_172, %c0_173] : memref<32x128xf32, #tpu.memory_space<vmem>>, vector<2x128xf32>
    %c8_174 = arith.constant 8 : index
    %c0_175 = arith.constant 0 : index
    %476 = vector.load %arg19[%c8_174, %c0_175] : memref<32x128xf32, #tpu.memory_space<vmem>>, vector<2x128xf32>
    %477 = vector.shape_cast %83 : vector<1x128xi1> to vector<1x128xi1>
    %478 = vector.broadcast %477 : vector<1x128xi1> to vector<2x128xi1>
    %479 = arith.select %478, %475, %476 : vector<2x128xi1>, vector<2x128xf32>
    %cst_176 = arith.constant dense<0.000000e+00> : vector<2x128xf32>
    %480 = tpu.matmul %470, %94, %cst_176 {dimension_numbers = #tpu.dot_dimension_numbers<[1], [0], [0], [1], [0, 0, 1, 1], [], []>} : vector<2x16xf32>, vector<16x128xf32>, vector<2x128xf32> -> vector<2x128xf32>
    %481 = arith.addf %479, %480 : vector<2x128xf32>
    %cst_177 = arith.constant dense<0.000000e+00> : vector<2x128xf32>
    %482 = tpu.matmul %472, %96, %cst_177 {dimension_numbers = #tpu.dot_dimension_numbers<[1], [0], [0], [1], [0, 0, 1, 1], [], []>} : vector<2x16xf32>, vector<16x128xf32>, vector<2x128xf32> -> vector<2x128xf32>
    %483 = arith.addf %481, %482 : vector<2x128xf32>
    %484 = math.tanh %483 : vector<2x128xf32>
    %485 = vector.broadcast %78 : vector<1x128xf32> to vector<2x128xf32>
    %486 = arith.mulf %485, %484 : vector<2x128xf32>
    %487 = vector.broadcast %81 : vector<1x128xf32> to vector<2x128xf32>
    %488 = arith.addf %486, %487 : vector<2x128xf32>
    %489 = vector.extract_strided_slice %488 {offsets = [0, 0], sizes = [2, 16], strides = [1, 1]} : vector<2x128xf32> to vector<2x16xf32>
    %490 = vector.extract_strided_slice %488 {offsets = [0, 16], sizes = [2, 16], strides = [1, 1]} : vector<2x128xf32> to vector<2x16xf32>
    %491 = vector.extract_strided_slice %488 {offsets = [0, 32], sizes = [2, 16], strides = [1, 1]} : vector<2x128xf32> to vector<2x16xf32>
    %492 = vector.extract_strided_slice %488 {offsets = [0, 48], sizes = [2, 16], strides = [1, 1]} : vector<2x128xf32> to vector<2x16xf32>
    %493 = vector.extract_strided_slice %488 {offsets = [0, 64], sizes = [2, 16], strides = [1, 1]} : vector<2x128xf32> to vector<2x16xf32>
    %494 = vector.extract_strided_slice %488 {offsets = [0, 80], sizes = [2, 16], strides = [1, 1]} : vector<2x128xf32> to vector<2x16xf32>
    %495 = vector.extract_strided_slice %488 {offsets = [0, 96], sizes = [2, 16], strides = [1, 1]} : vector<2x128xf32> to vector<2x16xf32>
    %496 = vector.extract_strided_slice %488 {offsets = [0, 112], sizes = [2, 16], strides = [1, 1]} : vector<2x128xf32> to vector<2x16xf32>
    %497 = arith.mulf %490, %465 : vector<2x16xf32>
    %498 = arith.mulf %489, %492 : vector<2x16xf32>
    %499 = arith.addf %497, %498 : vector<2x16xf32>
    %500 = arith.mulf %494, %468 : vector<2x16xf32>
    %501 = arith.mulf %493, %496 : vector<2x16xf32>
    %502 = arith.addf %500, %501 : vector<2x16xf32>
    %503 = math.tanh %499 : vector<2x16xf32>
    %504 = arith.mulf %491, %503 : vector<2x16xf32>
    %505 = math.tanh %502 : vector<2x16xf32>
    %506 = arith.mulf %495, %505 : vector<2x16xf32>
    %c22_178 = arith.constant 22 : index
    %c0_179 = arith.constant 0 : index
    %507 = vector.load %arg18[%c22_178, %c0_179] : memref<32x32xf32, #tpu.memory_space<vmem>>, vector<2x16xf32>
    tpu.vector_store %arg18[%c22_178, %c0_179], %504 {strides = array<i32>} : memref<32x32xf32, #tpu.memory_space<vmem>>, vector<2x16xf32>,
    %c8_180 = arith.constant 8 : index
    %c16_181 = arith.constant 16 : index
    %508 = vector.load %arg18[%c8_180, %c16_181] : memref<32x32xf32, #tpu.memory_space<vmem>>, vector<2x16xf32>
    tpu.vector_store %arg18[%c8_180, %c16_181], %506 {strides = array<i32>} : memref<32x32xf32, #tpu.memory_space<vmem>>, vector<2x16xf32>,
    %c24_182 = arith.constant 24 : index
    %c0_183 = arith.constant 0 : index
    %509 = vector.load %arg19[%c24_182, %c0_183] : memref<32x128xf32, #tpu.memory_space<vmem>>, vector<2x128xf32>
    %c6_184 = arith.constant 6 : index
    %c0_185 = arith.constant 0 : index
    %510 = vector.load %arg19[%c6_184, %c0_185] : memref<32x128xf32, #tpu.memory_space<vmem>>, vector<2x128xf32>
    %511 = vector.shape_cast %83 : vector<1x128xi1> to vector<1x128xi1>
    %512 = vector.broadcast %511 : vector<1x128xi1> to vector<2x128xi1>
    %513 = arith.select %512, %509, %510 : vector<2x128xi1>, vector<2x128xf32>
    %cst_186 = arith.constant dense<0.000000e+00> : vector<2x128xf32>
    %514 = tpu.matmul %504, %94, %cst_186 {dimension_numbers = #tpu.dot_dimension_numbers<[1], [0], [0], [1], [0, 0, 1, 1], [], []>} : vector<2x16xf32>, vector<16x128xf32>, vector<2x128xf32> -> vector<2x128xf32>
    %515 = arith.addf %513, %514 : vector<2x128xf32>
    %cst_187 = arith.constant dense<0.000000e+00> : vector<2x128xf32>
    %516 = tpu.matmul %506, %96, %cst_187 {dimension_numbers = #tpu.dot_dimension_numbers<[1], [0], [0], [1], [0, 0, 1, 1], [], []>} : vector<2x16xf32>, vector<16x128xf32>, vector<2x128xf32> -> vector<2x128xf32>
    %517 = arith.addf %515, %516 : vector<2x128xf32>
    %518 = math.tanh %517 : vector<2x128xf32>
    %519 = vector.broadcast %78 : vector<1x128xf32> to vector<2x128xf32>
    %520 = arith.mulf %519, %518 : vector<2x128xf32>
    %521 = vector.broadcast %81 : vector<1x128xf32> to vector<2x128xf32>
    %522 = arith.addf %520, %521 : vector<2x128xf32>
    %523 = vector.extract_strided_slice %522 {offsets = [0, 0], sizes = [2, 16], strides = [1, 1]} : vector<2x128xf32> to vector<2x16xf32>
    %524 = vector.extract_strided_slice %522 {offsets = [0, 16], sizes = [2, 16], strides = [1, 1]} : vector<2x128xf32> to vector<2x16xf32>
    %525 = vector.extract_strided_slice %522 {offsets = [0, 32], sizes = [2, 16], strides = [1, 1]} : vector<2x128xf32> to vector<2x16xf32>
    %526 = vector.extract_strided_slice %522 {offsets = [0, 48], sizes = [2, 16], strides = [1, 1]} : vector<2x128xf32> to vector<2x16xf32>
    %527 = vector.extract_strided_slice %522 {offsets = [0, 64], sizes = [2, 16], strides = [1, 1]} : vector<2x128xf32> to vector<2x16xf32>
    %528 = vector.extract_strided_slice %522 {offsets = [0, 80], sizes = [2, 16], strides = [1, 1]} : vector<2x128xf32> to vector<2x16xf32>
    %529 = vector.extract_strided_slice %522 {offsets = [0, 96], sizes = [2, 16], strides = [1, 1]} : vector<2x128xf32> to vector<2x16xf32>
    %530 = vector.extract_strided_slice %522 {offsets = [0, 112], sizes = [2, 16], strides = [1, 1]} : vector<2x128xf32> to vector<2x16xf32>
    %531 = arith.mulf %524, %499 : vector<2x16xf32>
    %532 = arith.mulf %523, %526 : vector<2x16xf32>
    %533 = arith.addf %531, %532 : vector<2x16xf32>
    %534 = arith.mulf %528, %502 : vector<2x16xf32>
    %535 = arith.mulf %527, %530 : vector<2x16xf32>
    %536 = arith.addf %534, %535 : vector<2x16xf32>
    %537 = math.tanh %533 : vector<2x16xf32>
    %538 = arith.mulf %525, %537 : vector<2x16xf32>
    %539 = math.tanh %536 : vector<2x16xf32>
    %540 = arith.mulf %529, %539 : vector<2x16xf32>
    %c24_188 = arith.constant 24 : index
    %c0_189 = arith.constant 0 : index
    %541 = vector.load %arg18[%c24_188, %c0_189] : memref<32x32xf32, #tpu.memory_space<vmem>>, vector<2x16xf32>
    tpu.vector_store %arg18[%c24_188, %c0_189], %538 {strides = array<i32>} : memref<32x32xf32, #tpu.memory_space<vmem>>, vector<2x16xf32>,
    %c6_190 = arith.constant 6 : index
    %c16_191 = arith.constant 16 : index
    %542 = vector.load %arg18[%c6_190, %c16_191] : memref<32x32xf32, #tpu.memory_space<vmem>>, vector<2x16xf32>
    tpu.vector_store %arg18[%c6_190, %c16_191], %540 {strides = array<i32>} : memref<32x32xf32, #tpu.memory_space<vmem>>, vector<2x16xf32>,
    %c26_192 = arith.constant 26 : index
    %c0_193 = arith.constant 0 : index
    %543 = vector.load %arg19[%c26_192, %c0_193] : memref<32x128xf32, #tpu.memory_space<vmem>>, vector<2x128xf32>
    %c4_194 = arith.constant 4 : index
    %c0_195 = arith.constant 0 : index
    %544 = vector.load %arg19[%c4_194, %c0_195] : memref<32x128xf32, #tpu.memory_space<vmem>>, vector<2x128xf32>
    %545 = vector.shape_cast %83 : vector<1x128xi1> to vector<1x128xi1>
    %546 = vector.broadcast %545 : vector<1x128xi1> to vector<2x128xi1>
    %547 = arith.select %546, %543, %544 : vector<2x128xi1>, vector<2x128xf32>
    %cst_196 = arith.constant dense<0.000000e+00> : vector<2x128xf32>
    %548 = tpu.matmul %538, %94, %cst_196 {dimension_numbers = #tpu.dot_dimension_numbers<[1], [0], [0], [1], [0, 0, 1, 1], [], []>} : vector<2x16xf32>, vector<16x128xf32>, vector<2x128xf32> -> vector<2x128xf32>
    %549 = arith.addf %547, %548 : vector<2x128xf32>
    %cst_197 = arith.constant dense<0.000000e+00> : vector<2x128xf32>
    %550 = tpu.matmul %540, %96, %cst_197 {dimension_numbers = #tpu.dot_dimension_numbers<[1], [0], [0], [1], [0, 0, 1, 1], [], []>} : vector<2x16xf32>, vector<16x128xf32>, vector<2x128xf32> -> vector<2x128xf32>
    %551 = arith.addf %549, %550 : vector<2x128xf32>
    %552 = math.tanh %551 : vector<2x128xf32>
    %553 = vector.broadcast %78 : vector<1x128xf32> to vector<2x128xf32>
    %554 = arith.mulf %553, %552 : vector<2x128xf32>
    %555 = vector.broadcast %81 : vector<1x128xf32> to vector<2x128xf32>
    %556 = arith.addf %554, %555 : vector<2x128xf32>
    %557 = vector.extract_strided_slice %556 {offsets = [0, 0], sizes = [2, 16], strides = [1, 1]} : vector<2x128xf32> to vector<2x16xf32>
    %558 = vector.extract_strided_slice %556 {offsets = [0, 16], sizes = [2, 16], strides = [1, 1]} : vector<2x128xf32> to vector<2x16xf32>
    %559 = vector.extract_strided_slice %556 {offsets = [0, 32], sizes = [2, 16], strides = [1, 1]} : vector<2x128xf32> to vector<2x16xf32>
    %560 = vector.extract_strided_slice %556 {offsets = [0, 48], sizes = [2, 16], strides = [1, 1]} : vector<2x128xf32> to vector<2x16xf32>
    %561 = vector.extract_strided_slice %556 {offsets = [0, 64], sizes = [2, 16], strides = [1, 1]} : vector<2x128xf32> to vector<2x16xf32>
    %562 = vector.extract_strided_slice %556 {offsets = [0, 80], sizes = [2, 16], strides = [1, 1]} : vector<2x128xf32> to vector<2x16xf32>
    %563 = vector.extract_strided_slice %556 {offsets = [0, 96], sizes = [2, 16], strides = [1, 1]} : vector<2x128xf32> to vector<2x16xf32>
    %564 = vector.extract_strided_slice %556 {offsets = [0, 112], sizes = [2, 16], strides = [1, 1]} : vector<2x128xf32> to vector<2x16xf32>
    %565 = arith.mulf %558, %533 : vector<2x16xf32>
    %566 = arith.mulf %557, %560 : vector<2x16xf32>
    %567 = arith.addf %565, %566 : vector<2x16xf32>
    %568 = arith.mulf %562, %536 : vector<2x16xf32>
    %569 = arith.mulf %561, %564 : vector<2x16xf32>
    %570 = arith.addf %568, %569 : vector<2x16xf32>
    %571 = math.tanh %567 : vector<2x16xf32>
    %572 = arith.mulf %559, %571 : vector<2x16xf32>
    %573 = math.tanh %570 : vector<2x16xf32>
    %574 = arith.mulf %563, %573 : vector<2x16xf32>
    %c26_198 = arith.constant 26 : index
    %c0_199 = arith.constant 0 : index
    %575 = vector.load %arg18[%c26_198, %c0_199] : memref<32x32xf32, #tpu.memory_space<vmem>>, vector<2x16xf32>
    tpu.vector_store %arg18[%c26_198, %c0_199], %572 {strides = array<i32>} : memref<32x32xf32, #tpu.memory_space<vmem>>, vector<2x16xf32>,
    %c4_200 = arith.constant 4 : index
    %c16_201 = arith.constant 16 : index
    %576 = vector.load %arg18[%c4_200, %c16_201] : memref<32x32xf32, #tpu.memory_space<vmem>>, vector<2x16xf32>
    tpu.vector_store %arg18[%c4_200, %c16_201], %574 {strides = array<i32>} : memref<32x32xf32, #tpu.memory_space<vmem>>, vector<2x16xf32>,
    %c28_202 = arith.constant 28 : index
    %c0_203 = arith.constant 0 : index
    %577 = vector.load %arg19[%c28_202, %c0_203] : memref<32x128xf32, #tpu.memory_space<vmem>>, vector<2x128xf32>
    %c2_204 = arith.constant 2 : index
    %c0_205 = arith.constant 0 : index
    %578 = vector.load %arg19[%c2_204, %c0_205] : memref<32x128xf32, #tpu.memory_space<vmem>>, vector<2x128xf32>
    %579 = vector.shape_cast %83 : vector<1x128xi1> to vector<1x128xi1>
    %580 = vector.broadcast %579 : vector<1x128xi1> to vector<2x128xi1>
    %581 = arith.select %580, %577, %578 : vector<2x128xi1>, vector<2x128xf32>
    %cst_206 = arith.constant dense<0.000000e+00> : vector<2x128xf32>
    %582 = tpu.matmul %572, %94, %cst_206 {dimension_numbers = #tpu.dot_dimension_numbers<[1], [0], [0], [1], [0, 0, 1, 1], [], []>} : vector<2x16xf32>, vector<16x128xf32>, vector<2x128xf32> -> vector<2x128xf32>
    %583 = arith.addf %581, %582 : vector<2x128xf32>
    %cst_207 = arith.constant dense<0.000000e+00> : vector<2x128xf32>
    %584 = tpu.matmul %574, %96, %cst_207 {dimension_numbers = #tpu.dot_dimension_numbers<[1], [0], [0], [1], [0, 0, 1, 1], [], []>} : vector<2x16xf32>, vector<16x128xf32>, vector<2x128xf32> -> vector<2x128xf32>
    %585 = arith.addf %583, %584 : vector<2x128xf32>
    %586 = math.tanh %585 : vector<2x128xf32>
    %587 = vector.broadcast %78 : vector<1x128xf32> to vector<2x128xf32>
    %588 = arith.mulf %587, %586 : vector<2x128xf32>
    %589 = vector.broadcast %81 : vector<1x128xf32> to vector<2x128xf32>
    %590 = arith.addf %588, %589 : vector<2x128xf32>
    %591 = vector.extract_strided_slice %590 {offsets = [0, 0], sizes = [2, 16], strides = [1, 1]} : vector<2x128xf32> to vector<2x16xf32>
    %592 = vector.extract_strided_slice %590 {offsets = [0, 16], sizes = [2, 16], strides = [1, 1]} : vector<2x128xf32> to vector<2x16xf32>
    %593 = vector.extract_strided_slice %590 {offsets = [0, 32], sizes = [2, 16], strides = [1, 1]} : vector<2x128xf32> to vector<2x16xf32>
    %594 = vector.extract_strided_slice %590 {offsets = [0, 48], sizes = [2, 16], strides = [1, 1]} : vector<2x128xf32> to vector<2x16xf32>
    %595 = vector.extract_strided_slice %590 {offsets = [0, 64], sizes = [2, 16], strides = [1, 1]} : vector<2x128xf32> to vector<2x16xf32>
    %596 = vector.extract_strided_slice %590 {offsets = [0, 80], sizes = [2, 16], strides = [1, 1]} : vector<2x128xf32> to vector<2x16xf32>
    %597 = vector.extract_strided_slice %590 {offsets = [0, 96], sizes = [2, 16], strides = [1, 1]} : vector<2x128xf32> to vector<2x16xf32>
    %598 = vector.extract_strided_slice %590 {offsets = [0, 112], sizes = [2, 16], strides = [1, 1]} : vector<2x128xf32> to vector<2x16xf32>
    %599 = arith.mulf %592, %567 : vector<2x16xf32>
    %600 = arith.mulf %591, %594 : vector<2x16xf32>
    %601 = arith.addf %599, %600 : vector<2x16xf32>
    %602 = arith.mulf %596, %570 : vector<2x16xf32>
    %603 = arith.mulf %595, %598 : vector<2x16xf32>
    %604 = arith.addf %602, %603 : vector<2x16xf32>
    %605 = math.tanh %601 : vector<2x16xf32>
    %606 = arith.mulf %593, %605 : vector<2x16xf32>
    %607 = math.tanh %604 : vector<2x16xf32>
    %608 = arith.mulf %597, %607 : vector<2x16xf32>
    %c28_208 = arith.constant 28 : index
    %c0_209 = arith.constant 0 : index
    %609 = vector.load %arg18[%c28_208, %c0_209] : memref<32x32xf32, #tpu.memory_space<vmem>>, vector<2x16xf32>
    tpu.vector_store %arg18[%c28_208, %c0_209], %606 {strides = array<i32>} : memref<32x32xf32, #tpu.memory_space<vmem>>, vector<2x16xf32>,
    %c2_210 = arith.constant 2 : index
    %c16_211 = arith.constant 16 : index
    %610 = vector.load %arg18[%c2_210, %c16_211] : memref<32x32xf32, #tpu.memory_space<vmem>>, vector<2x16xf32>
    tpu.vector_store %arg18[%c2_210, %c16_211], %608 {strides = array<i32>} : memref<32x32xf32, #tpu.memory_space<vmem>>, vector<2x16xf32>,
    %c30_212 = arith.constant 30 : index
    %c0_213 = arith.constant 0 : index
    %611 = vector.load %arg19[%c30_212, %c0_213] : memref<32x128xf32, #tpu.memory_space<vmem>>, vector<2x128xf32>
    %c0_214 = arith.constant 0 : index
    %c0_215 = arith.constant 0 : index
    %612 = vector.load %arg19[%c0_214, %c0_215] : memref<32x128xf32, #tpu.memory_space<vmem>>, vector<2x128xf32>
    %613 = vector.shape_cast %83 : vector<1x128xi1> to vector<1x128xi1>
    %614 = vector.broadcast %613 : vector<1x128xi1> to vector<2x128xi1>
    %615 = arith.select %614, %611, %612 : vector<2x128xi1>, vector<2x128xf32>
    %cst_216 = arith.constant dense<0.000000e+00> : vector<2x128xf32>
    %616 = tpu.matmul %606, %94, %cst_216 {dimension_numbers = #tpu.dot_dimension_numbers<[1], [0], [0], [1], [0, 0, 1, 1], [], []>} : vector<2x16xf32>, vector<16x128xf32>, vector<2x128xf32> -> vector<2x128xf32>
    %617 = arith.addf %615, %616 : vector<2x128xf32>
    %cst_217 = arith.constant dense<0.000000e+00> : vector<2x128xf32>
    %618 = tpu.matmul %608, %96, %cst_217 {dimension_numbers = #tpu.dot_dimension_numbers<[1], [0], [0], [1], [0, 0, 1, 1], [], []>} : vector<2x16xf32>, vector<16x128xf32>, vector<2x128xf32> -> vector<2x128xf32>
    %619 = arith.addf %617, %618 : vector<2x128xf32>
    %620 = math.tanh %619 : vector<2x128xf32>
    %621 = vector.broadcast %78 : vector<1x128xf32> to vector<2x128xf32>
    %622 = arith.mulf %621, %620 : vector<2x128xf32>
    %623 = vector.broadcast %81 : vector<1x128xf32> to vector<2x128xf32>
    %624 = arith.addf %622, %623 : vector<2x128xf32>
    %625 = vector.extract_strided_slice %624 {offsets = [0, 0], sizes = [2, 16], strides = [1, 1]} : vector<2x128xf32> to vector<2x16xf32>
    %626 = vector.extract_strided_slice %624 {offsets = [0, 16], sizes = [2, 16], strides = [1, 1]} : vector<2x128xf32> to vector<2x16xf32>
    %627 = vector.extract_strided_slice %624 {offsets = [0, 32], sizes = [2, 16], strides = [1, 1]} : vector<2x128xf32> to vector<2x16xf32>
    %628 = vector.extract_strided_slice %624 {offsets = [0, 48], sizes = [2, 16], strides = [1, 1]} : vector<2x128xf32> to vector<2x16xf32>
    %629 = vector.extract_strided_slice %624 {offsets = [0, 64], sizes = [2, 16], strides = [1, 1]} : vector<2x128xf32> to vector<2x16xf32>
    %630 = vector.extract_strided_slice %624 {offsets = [0, 80], sizes = [2, 16], strides = [1, 1]} : vector<2x128xf32> to vector<2x16xf32>
    %631 = vector.extract_strided_slice %624 {offsets = [0, 96], sizes = [2, 16], strides = [1, 1]} : vector<2x128xf32> to vector<2x16xf32>
    %632 = vector.extract_strided_slice %624 {offsets = [0, 112], sizes = [2, 16], strides = [1, 1]} : vector<2x128xf32> to vector<2x16xf32>
    %633 = arith.mulf %626, %601 : vector<2x16xf32>
    %634 = arith.mulf %625, %628 : vector<2x16xf32>
    %635 = arith.addf %633, %634 : vector<2x16xf32>
    %636 = arith.mulf %630, %604 : vector<2x16xf32>
    %637 = arith.mulf %629, %632 : vector<2x16xf32>
    %638 = arith.addf %636, %637 : vector<2x16xf32>
    %639 = math.tanh %635 : vector<2x16xf32>
    %640 = arith.mulf %627, %639 : vector<2x16xf32>
    %641 = math.tanh %638 : vector<2x16xf32>
    %642 = arith.mulf %631, %641 : vector<2x16xf32>
    %c30_218 = arith.constant 30 : index
    %c0_219 = arith.constant 0 : index
    %643 = vector.load %arg18[%c30_218, %c0_219] : memref<32x32xf32, #tpu.memory_space<vmem>>, vector<2x16xf32>
    tpu.vector_store %arg18[%c30_218, %c0_219], %640 {strides = array<i32>} : memref<32x32xf32, #tpu.memory_space<vmem>>, vector<2x16xf32>,
    %c0_220 = arith.constant 0 : index
    %c16_221 = arith.constant 16 : index
    %644 = vector.load %arg18[%c0_220, %c16_221] : memref<32x32xf32, #tpu.memory_space<vmem>>, vector<2x16xf32>
    tpu.vector_store %arg18[%c0_220, %c16_221], %642 {strides = array<i32>} : memref<32x32xf32, #tpu.memory_space<vmem>>, vector<2x16xf32>,
    %c0_222 = arith.constant 0 : index
    %c0_223 = arith.constant 0 : index
    %645 = vector.load %arg18[%c0_222, %c0_223] : memref<32x32xf32, #tpu.memory_space<vmem>>, vector<32x32xf32>
    %c1_224 = arith.constant 1 : index
    %c0_225 = arith.constant 0 : index
    %c0_226 = arith.constant 0 : index
    %646 = vector.load %arg8[%c1_224, %c0_225, %c0_226] : memref<3x32x128xf32, #tpu.memory_space<vmem>>, vector<1x32x128xf32>
    %647 = vector.shape_cast %646 : vector<1x32x128xf32> to vector<32x128xf32>
    %cst_227 = arith.constant dense<0.000000e+00> : vector<32x128xf32>
    %648 = tpu.matmul %645, %647, %cst_227 {dimension_numbers = #tpu.dot_dimension_numbers<[1], [0], [0], [1], [0, 0, 1, 1], [], []>} : vector<32x32xf32>, vector<32x128xf32>, vector<32x128xf32> -> vector<32x128xf32>
    %c1_228 = arith.constant 1 : index
    %c0_229 = arith.constant 0 : index
    %c0_230 = arith.constant 0 : index
    %649 = vector.load %arg10[%c1_228, %c0_229, %c0_230] : memref<3x1x128xf32, #tpu.memory_space<vmem>>, vector<1x1x128xf32>
    %650 = vector.shape_cast %649 : vector<1x1x128xf32> to vector<1x128xf32>
    %651 = vector.broadcast %650 : vector<1x128xf32> to vector<32x128xf32>
    %652 = arith.addf %648, %651 : vector<32x128xf32>
    %c0_231 = arith.constant 0 : index
    %c0_232 = arith.constant 0 : index
    %653 = vector.load %arg19[%c0_231, %c0_232] : memref<32x128xf32, #tpu.memory_space<vmem>>, vector<32x128xf32>
    tpu.vector_store %arg19[%c0_231, %c0_232], %652 {strides = array<i32>} : memref<32x128xf32, #tpu.memory_space<vmem>>, vector<32x128xf32>,
    %c1_233 = arith.constant 1 : index
    %c0_234 = arith.constant 0 : index
    %c0_235 = arith.constant 0 : index
    %c0_236 = arith.constant 0 : index
    %654 = vector.load %arg9[%c1_233, %c0_234, %c0_235, %c0_236] : memref<3x2x16x128xf32, #tpu.memory_space<vmem>>, vector<1x1x16x128xf32>
    %655 = vector.shape_cast %654 : vector<1x1x16x128xf32> to vector<16x128xf32>
    %c1_237 = arith.constant 1 : index
    %c1_238 = arith.constant 1 : index
    %c0_239 = arith.constant 0 : index
    %c0_240 = arith.constant 0 : index
    %656 = vector.load %arg9[%c1_237, %c1_238, %c0_239, %c0_240] : memref<3x2x16x128xf32, #tpu.memory_space<vmem>>, vector<1x1x16x128xf32>
    %657 = vector.shape_cast %656 : vector<1x1x16x128xf32> to vector<16x128xf32>
    %cst_241 = arith.constant 0.000000e+00 : f32
    %658 = vector.broadcast %cst_241 : f32 to vector<2x16xf32>
    %cst_242 = arith.constant 0.000000e+00 : f32
    %659 = vector.broadcast %cst_242 : f32 to vector<2x16xf32>
    %cst_243 = arith.constant 0.000000e+00 : f32
    %660 = vector.broadcast %cst_243 : f32 to vector<2x16xf32>
    %cst_244 = arith.constant 0.000000e+00 : f32
    %661 = vector.broadcast %cst_244 : f32 to vector<2x16xf32>
    %c0_245 = arith.constant 0 : index
    %c0_246 = arith.constant 0 : index
    %662 = vector.load %arg19[%c0_245, %c0_246] : memref<32x128xf32, #tpu.memory_space<vmem>>, vector<2x128xf32>
    %c30_247 = arith.constant 30 : index
    %c0_248 = arith.constant 0 : index
    %663 = vector.load %arg19[%c30_247, %c0_248] : memref<32x128xf32, #tpu.memory_space<vmem>>, vector<2x128xf32>
    %664 = vector.shape_cast %83 : vector<1x128xi1> to vector<1x128xi1>
    %665 = vector.broadcast %664 : vector<1x128xi1> to vector<2x128xi1>
    %666 = arith.select %665, %662, %663 : vector<2x128xi1>, vector<2x128xf32>
    %cst_249 = arith.constant dense<0.000000e+00> : vector<2x128xf32>
    %667 = tpu.matmul %658, %655, %cst_249 {dimension_numbers = #tpu.dot_dimension_numbers<[1], [0], [0], [1], [0, 0, 1, 1], [], []>} : vector<2x16xf32>, vector<16x128xf32>, vector<2x128xf32> -> vector<2x128xf32>
    %668 = arith.addf %666, %667 : vector<2x128xf32>
    %cst_250 = arith.constant dense<0.000000e+00> : vector<2x128xf32>
    %669 = tpu.matmul %659, %657, %cst_250 {dimension_numbers = #tpu.dot_dimension_numbers<[1], [0], [0], [1], [0, 0, 1, 1], [], []>} : vector<2x16xf32>, vector<16x128xf32>, vector<2x128xf32> -> vector<2x128xf32>
    %670 = arith.addf %668, %669 : vector<2x128xf32>
    %671 = math.tanh %670 : vector<2x128xf32>
    %672 = vector.broadcast %78 : vector<1x128xf32> to vector<2x128xf32>
    %673 = arith.mulf %672, %671 : vector<2x128xf32>
    %674 = vector.broadcast %81 : vector<1x128xf32> to vector<2x128xf32>
    %675 = arith.addf %673, %674 : vector<2x128xf32>
    %676 = vector.extract_strided_slice %675 {offsets = [0, 0], sizes = [2, 16], strides = [1, 1]} : vector<2x128xf32> to vector<2x16xf32>
    %677 = vector.extract_strided_slice %675 {offsets = [0, 16], sizes = [2, 16], strides = [1, 1]} : vector<2x128xf32> to vector<2x16xf32>
    %678 = vector.extract_strided_slice %675 {offsets = [0, 32], sizes = [2, 16], strides = [1, 1]} : vector<2x128xf32> to vector<2x16xf32>
    %679 = vector.extract_strided_slice %675 {offsets = [0, 48], sizes = [2, 16], strides = [1, 1]} : vector<2x128xf32> to vector<2x16xf32>
    %680 = vector.extract_strided_slice %675 {offsets = [0, 64], sizes = [2, 16], strides = [1, 1]} : vector<2x128xf32> to vector<2x16xf32>
    %681 = vector.extract_strided_slice %675 {offsets = [0, 80], sizes = [2, 16], strides = [1, 1]} : vector<2x128xf32> to vector<2x16xf32>
    %682 = vector.extract_strided_slice %675 {offsets = [0, 96], sizes = [2, 16], strides = [1, 1]} : vector<2x128xf32> to vector<2x16xf32>
    %683 = vector.extract_strided_slice %675 {offsets = [0, 112], sizes = [2, 16], strides = [1, 1]} : vector<2x128xf32> to vector<2x16xf32>
    %684 = arith.mulf %677, %660 : vector<2x16xf32>
    %685 = arith.mulf %676, %679 : vector<2x16xf32>
    %686 = arith.addf %684, %685 : vector<2x16xf32>
    %687 = arith.mulf %681, %661 : vector<2x16xf32>
    %688 = arith.mulf %680, %683 : vector<2x16xf32>
    %689 = arith.addf %687, %688 : vector<2x16xf32>
    %690 = math.tanh %686 : vector<2x16xf32>
    %691 = arith.mulf %678, %690 : vector<2x16xf32>
    %692 = math.tanh %689 : vector<2x16xf32>
    %693 = arith.mulf %682, %692 : vector<2x16xf32>
    %c0_251 = arith.constant 0 : index
    %c0_252 = arith.constant 0 : index
    %694 = vector.load %arg18[%c0_251, %c0_252] : memref<32x32xf32, #tpu.memory_space<vmem>>, vector<2x16xf32>
    tpu.vector_store %arg18[%c0_251, %c0_252], %691 {strides = array<i32>} : memref<32x32xf32, #tpu.memory_space<vmem>>, vector<2x16xf32>,
    %c30_253 = arith.constant 30 : index
    %c16_254 = arith.constant 16 : index
    %695 = vector.load %arg18[%c30_253, %c16_254] : memref<32x32xf32, #tpu.memory_space<vmem>>, vector<2x16xf32>
    tpu.vector_store %arg18[%c30_253, %c16_254], %693 {strides = array<i32>} : memref<32x32xf32, #tpu.memory_space<vmem>>, vector<2x16xf32>,
    %c2_255 = arith.constant 2 : index
    %c0_256 = arith.constant 0 : index
    %696 = vector.load %arg19[%c2_255, %c0_256] : memref<32x128xf32, #tpu.memory_space<vmem>>, vector<2x128xf32>
    %c28_257 = arith.constant 28 : index
    %c0_258 = arith.constant 0 : index
    %697 = vector.load %arg19[%c28_257, %c0_258] : memref<32x128xf32, #tpu.memory_space<vmem>>, vector<2x128xf32>
    %698 = vector.shape_cast %83 : vector<1x128xi1> to vector<1x128xi1>
    %699 = vector.broadcast %698 : vector<1x128xi1> to vector<2x128xi1>
    %700 = arith.select %699, %696, %697 : vector<2x128xi1>, vector<2x128xf32>
    %cst_259 = arith.constant dense<0.000000e+00> : vector<2x128xf32>
    %701 = tpu.matmul %691, %655, %cst_259 {dimension_numbers = #tpu.dot_dimension_numbers<[1], [0], [0], [1], [0, 0, 1, 1], [], []>} : vector<2x16xf32>, vector<16x128xf32>, vector<2x128xf32> -> vector<2x128xf32>
    %702 = arith.addf %700, %701 : vector<2x128xf32>
    %cst_260 = arith.constant dense<0.000000e+00> : vector<2x128xf32>
    %703 = tpu.matmul %693, %657, %cst_260 {dimension_numbers = #tpu.dot_dimension_numbers<[1], [0], [0], [1], [0, 0, 1, 1], [], []>} : vector<2x16xf32>, vector<16x128xf32>, vector<2x128xf32> -> vector<2x128xf32>
    %704 = arith.addf %702, %703 : vector<2x128xf32>
    %705 = math.tanh %704 : vector<2x128xf32>
    %706 = vector.broadcast %78 : vector<1x128xf32> to vector<2x128xf32>
    %707 = arith.mulf %706, %705 : vector<2x128xf32>
    %708 = vector.broadcast %81 : vector<1x128xf32> to vector<2x128xf32>
    %709 = arith.addf %707, %708 : vector<2x128xf32>
    %710 = vector.extract_strided_slice %709 {offsets = [0, 0], sizes = [2, 16], strides = [1, 1]} : vector<2x128xf32> to vector<2x16xf32>
    %711 = vector.extract_strided_slice %709 {offsets = [0, 16], sizes = [2, 16], strides = [1, 1]} : vector<2x128xf32> to vector<2x16xf32>
    %712 = vector.extract_strided_slice %709 {offsets = [0, 32], sizes = [2, 16], strides = [1, 1]} : vector<2x128xf32> to vector<2x16xf32>
    %713 = vector.extract_strided_slice %709 {offsets = [0, 48], sizes = [2, 16], strides = [1, 1]} : vector<2x128xf32> to vector<2x16xf32>
    %714 = vector.extract_strided_slice %709 {offsets = [0, 64], sizes = [2, 16], strides = [1, 1]} : vector<2x128xf32> to vector<2x16xf32>
    %715 = vector.extract_strided_slice %709 {offsets = [0, 80], sizes = [2, 16], strides = [1, 1]} : vector<2x128xf32> to vector<2x16xf32>
    %716 = vector.extract_strided_slice %709 {offsets = [0, 96], sizes = [2, 16], strides = [1, 1]} : vector<2x128xf32> to vector<2x16xf32>
    %717 = vector.extract_strided_slice %709 {offsets = [0, 112], sizes = [2, 16], strides = [1, 1]} : vector<2x128xf32> to vector<2x16xf32>
    %718 = arith.mulf %711, %686 : vector<2x16xf32>
    %719 = arith.mulf %710, %713 : vector<2x16xf32>
    %720 = arith.addf %718, %719 : vector<2x16xf32>
    %721 = arith.mulf %715, %689 : vector<2x16xf32>
    %722 = arith.mulf %714, %717 : vector<2x16xf32>
    %723 = arith.addf %721, %722 : vector<2x16xf32>
    %724 = math.tanh %720 : vector<2x16xf32>
    %725 = arith.mulf %712, %724 : vector<2x16xf32>
    %726 = math.tanh %723 : vector<2x16xf32>
    %727 = arith.mulf %716, %726 : vector<2x16xf32>
    %c2_261 = arith.constant 2 : index
    %c0_262 = arith.constant 0 : index
    %728 = vector.load %arg18[%c2_261, %c0_262] : memref<32x32xf32, #tpu.memory_space<vmem>>, vector<2x16xf32>
    tpu.vector_store %arg18[%c2_261, %c0_262], %725 {strides = array<i32>} : memref<32x32xf32, #tpu.memory_space<vmem>>, vector<2x16xf32>,
    %c28_263 = arith.constant 28 : index
    %c16_264 = arith.constant 16 : index
    %729 = vector.load %arg18[%c28_263, %c16_264] : memref<32x32xf32, #tpu.memory_space<vmem>>, vector<2x16xf32>
    tpu.vector_store %arg18[%c28_263, %c16_264], %727 {strides = array<i32>} : memref<32x32xf32, #tpu.memory_space<vmem>>, vector<2x16xf32>,
    %c4_265 = arith.constant 4 : index
    %c0_266 = arith.constant 0 : index
    %730 = vector.load %arg19[%c4_265, %c0_266] : memref<32x128xf32, #tpu.memory_space<vmem>>, vector<2x128xf32>
    %c26_267 = arith.constant 26 : index
    %c0_268 = arith.constant 0 : index
    %731 = vector.load %arg19[%c26_267, %c0_268] : memref<32x128xf32, #tpu.memory_space<vmem>>, vector<2x128xf32>
    %732 = vector.shape_cast %83 : vector<1x128xi1> to vector<1x128xi1>
    %733 = vector.broadcast %732 : vector<1x128xi1> to vector<2x128xi1>
    %734 = arith.select %733, %730, %731 : vector<2x128xi1>, vector<2x128xf32>
    %cst_269 = arith.constant dense<0.000000e+00> : vector<2x128xf32>
    %735 = tpu.matmul %725, %655, %cst_269 {dimension_numbers = #tpu.dot_dimension_numbers<[1], [0], [0], [1], [0, 0, 1, 1], [], []>} : vector<2x16xf32>, vector<16x128xf32>, vector<2x128xf32> -> vector<2x128xf32>
    %736 = arith.addf %734, %735 : vector<2x128xf32>
    %cst_270 = arith.constant dense<0.000000e+00> : vector<2x128xf32>
    %737 = tpu.matmul %727, %657, %cst_270 {dimension_numbers = #tpu.dot_dimension_numbers<[1], [0], [0], [1], [0, 0, 1, 1], [], []>} : vector<2x16xf32>, vector<16x128xf32>, vector<2x128xf32> -> vector<2x128xf32>
    %738 = arith.addf %736, %737 : vector<2x128xf32>
    %739 = math.tanh %738 : vector<2x128xf32>
    %740 = vector.broadcast %78 : vector<1x128xf32> to vector<2x128xf32>
    %741 = arith.mulf %740, %739 : vector<2x128xf32>
    %742 = vector.broadcast %81 : vector<1x128xf32> to vector<2x128xf32>
    %743 = arith.addf %741, %742 : vector<2x128xf32>
    %744 = vector.extract_strided_slice %743 {offsets = [0, 0], sizes = [2, 16], strides = [1, 1]} : vector<2x128xf32> to vector<2x16xf32>
    %745 = vector.extract_strided_slice %743 {offsets = [0, 16], sizes = [2, 16], strides = [1, 1]} : vector<2x128xf32> to vector<2x16xf32>
    %746 = vector.extract_strided_slice %743 {offsets = [0, 32], sizes = [2, 16], strides = [1, 1]} : vector<2x128xf32> to vector<2x16xf32>
    %747 = vector.extract_strided_slice %743 {offsets = [0, 48], sizes = [2, 16], strides = [1, 1]} : vector<2x128xf32> to vector<2x16xf32>
    %748 = vector.extract_strided_slice %743 {offsets = [0, 64], sizes = [2, 16], strides = [1, 1]} : vector<2x128xf32> to vector<2x16xf32>
    %749 = vector.extract_strided_slice %743 {offsets = [0, 80], sizes = [2, 16], strides = [1, 1]} : vector<2x128xf32> to vector<2x16xf32>
    %750 = vector.extract_strided_slice %743 {offsets = [0, 96], sizes = [2, 16], strides = [1, 1]} : vector<2x128xf32> to vector<2x16xf32>
    %751 = vector.extract_strided_slice %743 {offsets = [0, 112], sizes = [2, 16], strides = [1, 1]} : vector<2x128xf32> to vector<2x16xf32>
    %752 = arith.mulf %745, %720 : vector<2x16xf32>
    %753 = arith.mulf %744, %747 : vector<2x16xf32>
    %754 = arith.addf %752, %753 : vector<2x16xf32>
    %755 = arith.mulf %749, %723 : vector<2x16xf32>
    %756 = arith.mulf %748, %751 : vector<2x16xf32>
    %757 = arith.addf %755, %756 : vector<2x16xf32>
    %758 = math.tanh %754 : vector<2x16xf32>
    %759 = arith.mulf %746, %758 : vector<2x16xf32>
    %760 = math.tanh %757 : vector<2x16xf32>
    %761 = arith.mulf %750, %760 : vector<2x16xf32>
    %c4_271 = arith.constant 4 : index
    %c0_272 = arith.constant 0 : index
    %762 = vector.load %arg18[%c4_271, %c0_272] : memref<32x32xf32, #tpu.memory_space<vmem>>, vector<2x16xf32>
    tpu.vector_store %arg18[%c4_271, %c0_272], %759 {strides = array<i32>} : memref<32x32xf32, #tpu.memory_space<vmem>>, vector<2x16xf32>,
    %c26_273 = arith.constant 26 : index
    %c16_274 = arith.constant 16 : index
    %763 = vector.load %arg18[%c26_273, %c16_274] : memref<32x32xf32, #tpu.memory_space<vmem>>, vector<2x16xf32>
    tpu.vector_store %arg18[%c26_273, %c16_274], %761 {strides = array<i32>} : memref<32x32xf32, #tpu.memory_space<vmem>>, vector<2x16xf32>,
    %c6_275 = arith.constant 6 : index
    %c0_276 = arith.constant 0 : index
    %764 = vector.load %arg19[%c6_275, %c0_276] : memref<32x128xf32, #tpu.memory_space<vmem>>, vector<2x128xf32>
    %c24_277 = arith.constant 24 : index
    %c0_278 = arith.constant 0 : index
    %765 = vector.load %arg19[%c24_277, %c0_278] : memref<32x128xf32, #tpu.memory_space<vmem>>, vector<2x128xf32>
    %766 = vector.shape_cast %83 : vector<1x128xi1> to vector<1x128xi1>
    %767 = vector.broadcast %766 : vector<1x128xi1> to vector<2x128xi1>
    %768 = arith.select %767, %764, %765 : vector<2x128xi1>, vector<2x128xf32>
    %cst_279 = arith.constant dense<0.000000e+00> : vector<2x128xf32>
    %769 = tpu.matmul %759, %655, %cst_279 {dimension_numbers = #tpu.dot_dimension_numbers<[1], [0], [0], [1], [0, 0, 1, 1], [], []>} : vector<2x16xf32>, vector<16x128xf32>, vector<2x128xf32> -> vector<2x128xf32>
    %770 = arith.addf %768, %769 : vector<2x128xf32>
    %cst_280 = arith.constant dense<0.000000e+00> : vector<2x128xf32>
    %771 = tpu.matmul %761, %657, %cst_280 {dimension_numbers = #tpu.dot_dimension_numbers<[1], [0], [0], [1], [0, 0, 1, 1], [], []>} : vector<2x16xf32>, vector<16x128xf32>, vector<2x128xf32> -> vector<2x128xf32>
    %772 = arith.addf %770, %771 : vector<2x128xf32>
    %773 = math.tanh %772 : vector<2x128xf32>
    %774 = vector.broadcast %78 : vector<1x128xf32> to vector<2x128xf32>
    %775 = arith.mulf %774, %773 : vector<2x128xf32>
    %776 = vector.broadcast %81 : vector<1x128xf32> to vector<2x128xf32>
    %777 = arith.addf %775, %776 : vector<2x128xf32>
    %778 = vector.extract_strided_slice %777 {offsets = [0, 0], sizes = [2, 16], strides = [1, 1]} : vector<2x128xf32> to vector<2x16xf32>
    %779 = vector.extract_strided_slice %777 {offsets = [0, 16], sizes = [2, 16], strides = [1, 1]} : vector<2x128xf32> to vector<2x16xf32>
    %780 = vector.extract_strided_slice %777 {offsets = [0, 32], sizes = [2, 16], strides = [1, 1]} : vector<2x128xf32> to vector<2x16xf32>
    %781 = vector.extract_strided_slice %777 {offsets = [0, 48], sizes = [2, 16], strides = [1, 1]} : vector<2x128xf32> to vector<2x16xf32>
    %782 = vector.extract_strided_slice %777 {offsets = [0, 64], sizes = [2, 16], strides = [1, 1]} : vector<2x128xf32> to vector<2x16xf32>
    %783 = vector.extract_strided_slice %777 {offsets = [0, 80], sizes = [2, 16], strides = [1, 1]} : vector<2x128xf32> to vector<2x16xf32>
    %784 = vector.extract_strided_slice %777 {offsets = [0, 96], sizes = [2, 16], strides = [1, 1]} : vector<2x128xf32> to vector<2x16xf32>
    %785 = vector.extract_strided_slice %777 {offsets = [0, 112], sizes = [2, 16], strides = [1, 1]} : vector<2x128xf32> to vector<2x16xf32>
    %786 = arith.mulf %779, %754 : vector<2x16xf32>
    %787 = arith.mulf %778, %781 : vector<2x16xf32>
    %788 = arith.addf %786, %787 : vector<2x16xf32>
    %789 = arith.mulf %783, %757 : vector<2x16xf32>
    %790 = arith.mulf %782, %785 : vector<2x16xf32>
    %791 = arith.addf %789, %790 : vector<2x16xf32>
    %792 = math.tanh %788 : vector<2x16xf32>
    %793 = arith.mulf %780, %792 : vector<2x16xf32>
    %794 = math.tanh %791 : vector<2x16xf32>
    %795 = arith.mulf %784, %794 : vector<2x16xf32>
    %c6_281 = arith.constant 6 : index
    %c0_282 = arith.constant 0 : index
    %796 = vector.load %arg18[%c6_281, %c0_282] : memref<32x32xf32, #tpu.memory_space<vmem>>, vector<2x16xf32>
    tpu.vector_store %arg18[%c6_281, %c0_282], %793 {strides = array<i32>} : memref<32x32xf32, #tpu.memory_space<vmem>>, vector<2x16xf32>,
    %c24_283 = arith.constant 24 : index
    %c16_284 = arith.constant 16 : index
    %797 = vector.load %arg18[%c24_283, %c16_284] : memref<32x32xf32, #tpu.memory_space<vmem>>, vector<2x16xf32>
    tpu.vector_store %arg18[%c24_283, %c16_284], %795 {strides = array<i32>} : memref<32x32xf32, #tpu.memory_space<vmem>>, vector<2x16xf32>,
    %c8_285 = arith.constant 8 : index
    %c0_286 = arith.constant 0 : index
    %798 = vector.load %arg19[%c8_285, %c0_286] : memref<32x128xf32, #tpu.memory_space<vmem>>, vector<2x128xf32>
    %c22_287 = arith.constant 22 : index
    %c0_288 = arith.constant 0 : index
    %799 = vector.load %arg19[%c22_287, %c0_288] : memref<32x128xf32, #tpu.memory_space<vmem>>, vector<2x128xf32>
    %800 = vector.shape_cast %83 : vector<1x128xi1> to vector<1x128xi1>
    %801 = vector.broadcast %800 : vector<1x128xi1> to vector<2x128xi1>
    %802 = arith.select %801, %798, %799 : vector<2x128xi1>, vector<2x128xf32>
    %cst_289 = arith.constant dense<0.000000e+00> : vector<2x128xf32>
    %803 = tpu.matmul %793, %655, %cst_289 {dimension_numbers = #tpu.dot_dimension_numbers<[1], [0], [0], [1], [0, 0, 1, 1], [], []>} : vector<2x16xf32>, vector<16x128xf32>, vector<2x128xf32> -> vector<2x128xf32>
    %804 = arith.addf %802, %803 : vector<2x128xf32>
    %cst_290 = arith.constant dense<0.000000e+00> : vector<2x128xf32>
    %805 = tpu.matmul %795, %657, %cst_290 {dimension_numbers = #tpu.dot_dimension_numbers<[1], [0], [0], [1], [0, 0, 1, 1], [], []>} : vector<2x16xf32>, vector<16x128xf32>, vector<2x128xf32> -> vector<2x128xf32>
    %806 = arith.addf %804, %805 : vector<2x128xf32>
    %807 = math.tanh %806 : vector<2x128xf32>
    %808 = vector.broadcast %78 : vector<1x128xf32> to vector<2x128xf32>
    %809 = arith.mulf %808, %807 : vector<2x128xf32>
    %810 = vector.broadcast %81 : vector<1x128xf32> to vector<2x128xf32>
    %811 = arith.addf %809, %810 : vector<2x128xf32>
    %812 = vector.extract_strided_slice %811 {offsets = [0, 0], sizes = [2, 16], strides = [1, 1]} : vector<2x128xf32> to vector<2x16xf32>
    %813 = vector.extract_strided_slice %811 {offsets = [0, 16], sizes = [2, 16], strides = [1, 1]} : vector<2x128xf32> to vector<2x16xf32>
    %814 = vector.extract_strided_slice %811 {offsets = [0, 32], sizes = [2, 16], strides = [1, 1]} : vector<2x128xf32> to vector<2x16xf32>
    %815 = vector.extract_strided_slice %811 {offsets = [0, 48], sizes = [2, 16], strides = [1, 1]} : vector<2x128xf32> to vector<2x16xf32>
    %816 = vector.extract_strided_slice %811 {offsets = [0, 64], sizes = [2, 16], strides = [1, 1]} : vector<2x128xf32> to vector<2x16xf32>
    %817 = vector.extract_strided_slice %811 {offsets = [0, 80], sizes = [2, 16], strides = [1, 1]} : vector<2x128xf32> to vector<2x16xf32>
    %818 = vector.extract_strided_slice %811 {offsets = [0, 96], sizes = [2, 16], strides = [1, 1]} : vector<2x128xf32> to vector<2x16xf32>
    %819 = vector.extract_strided_slice %811 {offsets = [0, 112], sizes = [2, 16], strides = [1, 1]} : vector<2x128xf32> to vector<2x16xf32>
    %820 = arith.mulf %813, %788 : vector<2x16xf32>
    %821 = arith.mulf %812, %815 : vector<2x16xf32>
    %822 = arith.addf %820, %821 : vector<2x16xf32>
    %823 = arith.mulf %817, %791 : vector<2x16xf32>
    %824 = arith.mulf %816, %819 : vector<2x16xf32>
    %825 = arith.addf %823, %824 : vector<2x16xf32>
    %826 = math.tanh %822 : vector<2x16xf32>
    %827 = arith.mulf %814, %826 : vector<2x16xf32>
    %828 = math.tanh %825 : vector<2x16xf32>
    %829 = arith.mulf %818, %828 : vector<2x16xf32>
    %c8_291 = arith.constant 8 : index
    %c0_292 = arith.constant 0 : index
    %830 = vector.load %arg18[%c8_291, %c0_292] : memref<32x32xf32, #tpu.memory_space<vmem>>, vector<2x16xf32>
    tpu.vector_store %arg18[%c8_291, %c0_292], %827 {strides = array<i32>} : memref<32x32xf32, #tpu.memory_space<vmem>>, vector<2x16xf32>,
    %c22_293 = arith.constant 22 : index
    %c16_294 = arith.constant 16 : index
    %831 = vector.load %arg18[%c22_293, %c16_294] : memref<32x32xf32, #tpu.memory_space<vmem>>, vector<2x16xf32>
    tpu.vector_store %arg18[%c22_293, %c16_294], %829 {strides = array<i32>} : memref<32x32xf32, #tpu.memory_space<vmem>>, vector<2x16xf32>,
    %c10_295 = arith.constant 10 : index
    %c0_296 = arith.constant 0 : index
    %832 = vector.load %arg19[%c10_295, %c0_296] : memref<32x128xf32, #tpu.memory_space<vmem>>, vector<2x128xf32>
    %c20_297 = arith.constant 20 : index
    %c0_298 = arith.constant 0 : index
    %833 = vector.load %arg19[%c20_297, %c0_298] : memref<32x128xf32, #tpu.memory_space<vmem>>, vector<2x128xf32>
    %834 = vector.shape_cast %83 : vector<1x128xi1> to vector<1x128xi1>
    %835 = vector.broadcast %834 : vector<1x128xi1> to vector<2x128xi1>
    %836 = arith.select %835, %832, %833 : vector<2x128xi1>, vector<2x128xf32>
    %cst_299 = arith.constant dense<0.000000e+00> : vector<2x128xf32>
    %837 = tpu.matmul %827, %655, %cst_299 {dimension_numbers = #tpu.dot_dimension_numbers<[1], [0], [0], [1], [0, 0, 1, 1], [], []>} : vector<2x16xf32>, vector<16x128xf32>, vector<2x128xf32> -> vector<2x128xf32>
    %838 = arith.addf %836, %837 : vector<2x128xf32>
    %cst_300 = arith.constant dense<0.000000e+00> : vector<2x128xf32>
    %839 = tpu.matmul %829, %657, %cst_300 {dimension_numbers = #tpu.dot_dimension_numbers<[1], [0], [0], [1], [0, 0, 1, 1], [], []>} : vector<2x16xf32>, vector<16x128xf32>, vector<2x128xf32> -> vector<2x128xf32>
    %840 = arith.addf %838, %839 : vector<2x128xf32>
    %841 = math.tanh %840 : vector<2x128xf32>
    %842 = vector.broadcast %78 : vector<1x128xf32> to vector<2x128xf32>
    %843 = arith.mulf %842, %841 : vector<2x128xf32>
    %844 = vector.broadcast %81 : vector<1x128xf32> to vector<2x128xf32>
    %845 = arith.addf %843, %844 : vector<2x128xf32>
    %846 = vector.extract_strided_slice %845 {offsets = [0, 0], sizes = [2, 16], strides = [1, 1]} : vector<2x128xf32> to vector<2x16xf32>
    %847 = vector.extract_strided_slice %845 {offsets = [0, 16], sizes = [2, 16], strides = [1, 1]} : vector<2x128xf32> to vector<2x16xf32>
    %848 = vector.extract_strided_slice %845 {offsets = [0, 32], sizes = [2, 16], strides = [1, 1]} : vector<2x128xf32> to vector<2x16xf32>
    %849 = vector.extract_strided_slice %845 {offsets = [0, 48], sizes = [2, 16], strides = [1, 1]} : vector<2x128xf32> to vector<2x16xf32>
    %850 = vector.extract_strided_slice %845 {offsets = [0, 64], sizes = [2, 16], strides = [1, 1]} : vector<2x128xf32> to vector<2x16xf32>
    %851 = vector.extract_strided_slice %845 {offsets = [0, 80], sizes = [2, 16], strides = [1, 1]} : vector<2x128xf32> to vector<2x16xf32>
    %852 = vector.extract_strided_slice %845 {offsets = [0, 96], sizes = [2, 16], strides = [1, 1]} : vector<2x128xf32> to vector<2x16xf32>
    %853 = vector.extract_strided_slice %845 {offsets = [0, 112], sizes = [2, 16], strides = [1, 1]} : vector<2x128xf32> to vector<2x16xf32>
    %854 = arith.mulf %847, %822 : vector<2x16xf32>
    %855 = arith.mulf %846, %849 : vector<2x16xf32>
    %856 = arith.addf %854, %855 : vector<2x16xf32>
    %857 = arith.mulf %851, %825 : vector<2x16xf32>
    %858 = arith.mulf %850, %853 : vector<2x16xf32>
    %859 = arith.addf %857, %858 : vector<2x16xf32>
    %860 = math.tanh %856 : vector<2x16xf32>
    %861 = arith.mulf %848, %860 : vector<2x16xf32>
    %862 = math.tanh %859 : vector<2x16xf32>
    %863 = arith.mulf %852, %862 : vector<2x16xf32>
    %c10_301 = arith.constant 10 : index
    %c0_302 = arith.constant 0 : index
    %864 = vector.load %arg18[%c10_301, %c0_302] : memref<32x32xf32, #tpu.memory_space<vmem>>, vector<2x16xf32>
    tpu.vector_store %arg18[%c10_301, %c0_302], %861 {strides = array<i32>} : memref<32x32xf32, #tpu.memory_space<vmem>>, vector<2x16xf32>,
    %c20_303 = arith.constant 20 : index
    %c16_304 = arith.constant 16 : index
    %865 = vector.load %arg18[%c20_303, %c16_304] : memref<32x32xf32, #tpu.memory_space<vmem>>, vector<2x16xf32>
    tpu.vector_store %arg18[%c20_303, %c16_304], %863 {strides = array<i32>} : memref<32x32xf32, #tpu.memory_space<vmem>>, vector<2x16xf32>,
    %c12_305 = arith.constant 12 : index
    %c0_306 = arith.constant 0 : index
    %866 = vector.load %arg19[%c12_305, %c0_306] : memref<32x128xf32, #tpu.memory_space<vmem>>, vector<2x128xf32>
    %c18_307 = arith.constant 18 : index
    %c0_308 = arith.constant 0 : index
    %867 = vector.load %arg19[%c18_307, %c0_308] : memref<32x128xf32, #tpu.memory_space<vmem>>, vector<2x128xf32>
    %868 = vector.shape_cast %83 : vector<1x128xi1> to vector<1x128xi1>
    %869 = vector.broadcast %868 : vector<1x128xi1> to vector<2x128xi1>
    %870 = arith.select %869, %866, %867 : vector<2x128xi1>, vector<2x128xf32>
    %cst_309 = arith.constant dense<0.000000e+00> : vector<2x128xf32>
    %871 = tpu.matmul %861, %655, %cst_309 {dimension_numbers = #tpu.dot_dimension_numbers<[1], [0], [0], [1], [0, 0, 1, 1], [], []>} : vector<2x16xf32>, vector<16x128xf32>, vector<2x128xf32> -> vector<2x128xf32>
    %872 = arith.addf %870, %871 : vector<2x128xf32>
    %cst_310 = arith.constant dense<0.000000e+00> : vector<2x128xf32>
    %873 = tpu.matmul %863, %657, %cst_310 {dimension_numbers = #tpu.dot_dimension_numbers<[1], [0], [0], [1], [0, 0, 1, 1], [], []>} : vector<2x16xf32>, vector<16x128xf32>, vector<2x128xf32> -> vector<2x128xf32>
    %874 = arith.addf %872, %873 : vector<2x128xf32>
    %875 = math.tanh %874 : vector<2x128xf32>
    %876 = vector.broadcast %78 : vector<1x128xf32> to vector<2x128xf32>
    %877 = arith.mulf %876, %875 : vector<2x128xf32>
    %878 = vector.broadcast %81 : vector<1x128xf32> to vector<2x128xf32>
    %879 = arith.addf %877, %878 : vector<2x128xf32>
    %880 = vector.extract_strided_slice %879 {offsets = [0, 0], sizes = [2, 16], strides = [1, 1]} : vector<2x128xf32> to vector<2x16xf32>
    %881 = vector.extract_strided_slice %879 {offsets = [0, 16], sizes = [2, 16], strides = [1, 1]} : vector<2x128xf32> to vector<2x16xf32>
    %882 = vector.extract_strided_slice %879 {offsets = [0, 32], sizes = [2, 16], strides = [1, 1]} : vector<2x128xf32> to vector<2x16xf32>
    %883 = vector.extract_strided_slice %879 {offsets = [0, 48], sizes = [2, 16], strides = [1, 1]} : vector<2x128xf32> to vector<2x16xf32>
    %884 = vector.extract_strided_slice %879 {offsets = [0, 64], sizes = [2, 16], strides = [1, 1]} : vector<2x128xf32> to vector<2x16xf32>
    %885 = vector.extract_strided_slice %879 {offsets = [0, 80], sizes = [2, 16], strides = [1, 1]} : vector<2x128xf32> to vector<2x16xf32>
    %886 = vector.extract_strided_slice %879 {offsets = [0, 96], sizes = [2, 16], strides = [1, 1]} : vector<2x128xf32> to vector<2x16xf32>
    %887 = vector.extract_strided_slice %879 {offsets = [0, 112], sizes = [2, 16], strides = [1, 1]} : vector<2x128xf32> to vector<2x16xf32>
    %888 = arith.mulf %881, %856 : vector<2x16xf32>
    %889 = arith.mulf %880, %883 : vector<2x16xf32>
    %890 = arith.addf %888, %889 : vector<2x16xf32>
    %891 = arith.mulf %885, %859 : vector<2x16xf32>
    %892 = arith.mulf %884, %887 : vector<2x16xf32>
    %893 = arith.addf %891, %892 : vector<2x16xf32>
    %894 = math.tanh %890 : vector<2x16xf32>
    %895 = arith.mulf %882, %894 : vector<2x16xf32>
    %896 = math.tanh %893 : vector<2x16xf32>
    %897 = arith.mulf %886, %896 : vector<2x16xf32>
    %c12_311 = arith.constant 12 : index
    %c0_312 = arith.constant 0 : index
    %898 = vector.load %arg18[%c12_311, %c0_312] : memref<32x32xf32, #tpu.memory_space<vmem>>, vector<2x16xf32>
    tpu.vector_store %arg18[%c12_311, %c0_312], %895 {strides = array<i32>} : memref<32x32xf32, #tpu.memory_space<vmem>>, vector<2x16xf32>,
    %c18_313 = arith.constant 18 : index
    %c16_314 = arith.constant 16 : index
    %899 = vector.load %arg18[%c18_313, %c16_314] : memref<32x32xf32, #tpu.memory_space<vmem>>, vector<2x16xf32>
    tpu.vector_store %arg18[%c18_313, %c16_314], %897 {strides = array<i32>} : memref<32x32xf32, #tpu.memory_space<vmem>>, vector<2x16xf32>,
    %c14_315 = arith.constant 14 : index
    %c0_316 = arith.constant 0 : index
    %900 = vector.load %arg19[%c14_315, %c0_316] : memref<32x128xf32, #tpu.memory_space<vmem>>, vector<2x128xf32>
    %c16_317 = arith.constant 16 : index
    %c0_318 = arith.constant 0 : index
    %901 = vector.load %arg19[%c16_317, %c0_318] : memref<32x128xf32, #tpu.memory_space<vmem>>, vector<2x128xf32>
    %902 = vector.shape_cast %83 : vector<1x128xi1> to vector<1x128xi1>
    %903 = vector.broadcast %902 : vector<1x128xi1> to vector<2x128xi1>
    %904 = arith.select %903, %900, %901 : vector<2x128xi1>, vector<2x128xf32>
    %cst_319 = arith.constant dense<0.000000e+00> : vector<2x128xf32>
    %905 = tpu.matmul %895, %655, %cst_319 {dimension_numbers = #tpu.dot_dimension_numbers<[1], [0], [0], [1], [0, 0, 1, 1], [], []>} : vector<2x16xf32>, vector<16x128xf32>, vector<2x128xf32> -> vector<2x128xf32>
    %906 = arith.addf %904, %905 : vector<2x128xf32>
    %cst_320 = arith.constant dense<0.000000e+00> : vector<2x128xf32>
    %907 = tpu.matmul %897, %657, %cst_320 {dimension_numbers = #tpu.dot_dimension_numbers<[1], [0], [0], [1], [0, 0, 1, 1], [], []>} : vector<2x16xf32>, vector<16x128xf32>, vector<2x128xf32> -> vector<2x128xf32>
    %908 = arith.addf %906, %907 : vector<2x128xf32>
    %909 = math.tanh %908 : vector<2x128xf32>
    %910 = vector.broadcast %78 : vector<1x128xf32> to vector<2x128xf32>
    %911 = arith.mulf %910, %909 : vector<2x128xf32>
    %912 = vector.broadcast %81 : vector<1x128xf32> to vector<2x128xf32>
    %913 = arith.addf %911, %912 : vector<2x128xf32>
    %914 = vector.extract_strided_slice %913 {offsets = [0, 0], sizes = [2, 16], strides = [1, 1]} : vector<2x128xf32> to vector<2x16xf32>
    %915 = vector.extract_strided_slice %913 {offsets = [0, 16], sizes = [2, 16], strides = [1, 1]} : vector<2x128xf32> to vector<2x16xf32>
    %916 = vector.extract_strided_slice %913 {offsets = [0, 32], sizes = [2, 16], strides = [1, 1]} : vector<2x128xf32> to vector<2x16xf32>
    %917 = vector.extract_strided_slice %913 {offsets = [0, 48], sizes = [2, 16], strides = [1, 1]} : vector<2x128xf32> to vector<2x16xf32>
    %918 = vector.extract_strided_slice %913 {offsets = [0, 64], sizes = [2, 16], strides = [1, 1]} : vector<2x128xf32> to vector<2x16xf32>
    %919 = vector.extract_strided_slice %913 {offsets = [0, 80], sizes = [2, 16], strides = [1, 1]} : vector<2x128xf32> to vector<2x16xf32>
    %920 = vector.extract_strided_slice %913 {offsets = [0, 96], sizes = [2, 16], strides = [1, 1]} : vector<2x128xf32> to vector<2x16xf32>
    %921 = vector.extract_strided_slice %913 {offsets = [0, 112], sizes = [2, 16], strides = [1, 1]} : vector<2x128xf32> to vector<2x16xf32>
    %922 = arith.mulf %915, %890 : vector<2x16xf32>
    %923 = arith.mulf %914, %917 : vector<2x16xf32>
    %924 = arith.addf %922, %923 : vector<2x16xf32>
    %925 = arith.mulf %919, %893 : vector<2x16xf32>
    %926 = arith.mulf %918, %921 : vector<2x16xf32>
    %927 = arith.addf %925, %926 : vector<2x16xf32>
    %928 = math.tanh %924 : vector<2x16xf32>
    %929 = arith.mulf %916, %928 : vector<2x16xf32>
    %930 = math.tanh %927 : vector<2x16xf32>
    %931 = arith.mulf %920, %930 : vector<2x16xf32>
    %c14_321 = arith.constant 14 : index
    %c0_322 = arith.constant 0 : index
    %932 = vector.load %arg18[%c14_321, %c0_322] : memref<32x32xf32, #tpu.memory_space<vmem>>, vector<2x16xf32>
    tpu.vector_store %arg18[%c14_321, %c0_322], %929 {strides = array<i32>} : memref<32x32xf32, #tpu.memory_space<vmem>>, vector<2x16xf32>,
    %c16_323 = arith.constant 16 : index
    %c16_324 = arith.constant 16 : index
    %933 = vector.load %arg18[%c16_323, %c16_324] : memref<32x32xf32, #tpu.memory_space<vmem>>, vector<2x16xf32>
    tpu.vector_store %arg18[%c16_323, %c16_324], %931 {strides = array<i32>} : memref<32x32xf32, #tpu.memory_space<vmem>>, vector<2x16xf32>,
    %c16_325 = arith.constant 16 : index
    %c0_326 = arith.constant 0 : index
    %934 = vector.load %arg19[%c16_325, %c0_326] : memref<32x128xf32, #tpu.memory_space<vmem>>, vector<2x128xf32>
    %c14_327 = arith.constant 14 : index
    %c0_328 = arith.constant 0 : index
    %935 = vector.load %arg19[%c14_327, %c0_328] : memref<32x128xf32, #tpu.memory_space<vmem>>, vector<2x128xf32>
    %936 = vector.shape_cast %83 : vector<1x128xi1> to vector<1x128xi1>
    %937 = vector.broadcast %936 : vector<1x128xi1> to vector<2x128xi1>
    %938 = arith.select %937, %934, %935 : vector<2x128xi1>, vector<2x128xf32>
    %cst_329 = arith.constant dense<0.000000e+00> : vector<2x128xf32>
    %939 = tpu.matmul %929, %655, %cst_329 {dimension_numbers = #tpu.dot_dimension_numbers<[1], [0], [0], [1], [0, 0, 1, 1], [], []>} : vector<2x16xf32>, vector<16x128xf32>, vector<2x128xf32> -> vector<2x128xf32>
    %940 = arith.addf %938, %939 : vector<2x128xf32>
    %cst_330 = arith.constant dense<0.000000e+00> : vector<2x128xf32>
    %941 = tpu.matmul %931, %657, %cst_330 {dimension_numbers = #tpu.dot_dimension_numbers<[1], [0], [0], [1], [0, 0, 1, 1], [], []>} : vector<2x16xf32>, vector<16x128xf32>, vector<2x128xf32> -> vector<2x128xf32>
    %942 = arith.addf %940, %941 : vector<2x128xf32>
    %943 = math.tanh %942 : vector<2x128xf32>
    %944 = vector.broadcast %78 : vector<1x128xf32> to vector<2x128xf32>
    %945 = arith.mulf %944, %943 : vector<2x128xf32>
    %946 = vector.broadcast %81 : vector<1x128xf32> to vector<2x128xf32>
    %947 = arith.addf %945, %946 : vector<2x128xf32>
    %948 = vector.extract_strided_slice %947 {offsets = [0, 0], sizes = [2, 16], strides = [1, 1]} : vector<2x128xf32> to vector<2x16xf32>
    %949 = vector.extract_strided_slice %947 {offsets = [0, 16], sizes = [2, 16], strides = [1, 1]} : vector<2x128xf32> to vector<2x16xf32>
    %950 = vector.extract_strided_slice %947 {offsets = [0, 32], sizes = [2, 16], strides = [1, 1]} : vector<2x128xf32> to vector<2x16xf32>
    %951 = vector.extract_strided_slice %947 {offsets = [0, 48], sizes = [2, 16], strides = [1, 1]} : vector<2x128xf32> to vector<2x16xf32>
    %952 = vector.extract_strided_slice %947 {offsets = [0, 64], sizes = [2, 16], strides = [1, 1]} : vector<2x128xf32> to vector<2x16xf32>
    %953 = vector.extract_strided_slice %947 {offsets = [0, 80], sizes = [2, 16], strides = [1, 1]} : vector<2x128xf32> to vector<2x16xf32>
    %954 = vector.extract_strided_slice %947 {offsets = [0, 96], sizes = [2, 16], strides = [1, 1]} : vector<2x128xf32> to vector<2x16xf32>
    %955 = vector.extract_strided_slice %947 {offsets = [0, 112], sizes = [2, 16], strides = [1, 1]} : vector<2x128xf32> to vector<2x16xf32>
    %956 = arith.mulf %949, %924 : vector<2x16xf32>
    %957 = arith.mulf %948, %951 : vector<2x16xf32>
    %958 = arith.addf %956, %957 : vector<2x16xf32>
    %959 = arith.mulf %953, %927 : vector<2x16xf32>
    %960 = arith.mulf %952, %955 : vector<2x16xf32>
    %961 = arith.addf %959, %960 : vector<2x16xf32>
    %962 = math.tanh %958 : vector<2x16xf32>
    %963 = arith.mulf %950, %962 : vector<2x16xf32>
    %964 = math.tanh %961 : vector<2x16xf32>
    %965 = arith.mulf %954, %964 : vector<2x16xf32>
    %c16_331 = arith.constant 16 : index
    %c0_332 = arith.constant 0 : index
    %966 = vector.load %arg18[%c16_331, %c0_332] : memref<32x32xf32, #tpu.memory_space<vmem>>, vector<2x16xf32>
    tpu.vector_store %arg18[%c16_331, %c0_332], %963 {strides = array<i32>} : memref<32x32xf32, #tpu.memory_space<vmem>>, vector<2x16xf32>,
    %c14_333 = arith.constant 14 : index
    %c16_334 = arith.constant 16 : index
    %967 = vector.load %arg18[%c14_333, %c16_334] : memref<32x32xf32, #tpu.memory_space<vmem>>, vector<2x16xf32>
    tpu.vector_store %arg18[%c14_333, %c16_334], %965 {strides = array<i32>} : memref<32x32xf32, #tpu.memory_space<vmem>>, vector<2x16xf32>,
    %c18_335 = arith.constant 18 : index
    %c0_336 = arith.constant 0 : index
    %968 = vector.load %arg19[%c18_335, %c0_336] : memref<32x128xf32, #tpu.memory_space<vmem>>, vector<2x128xf32>
    %c12_337 = arith.constant 12 : index
    %c0_338 = arith.constant 0 : index
    %969 = vector.load %arg19[%c12_337, %c0_338] : memref<32x128xf32, #tpu.memory_space<vmem>>, vector<2x128xf32>
    %970 = vector.shape_cast %83 : vector<1x128xi1> to vector<1x128xi1>
    %971 = vector.broadcast %970 : vector<1x128xi1> to vector<2x128xi1>
    %972 = arith.select %971, %968, %969 : vector<2x128xi1>, vector<2x128xf32>
    %cst_339 = arith.constant dense<0.000000e+00> : vector<2x128xf32>
    %973 = tpu.matmul %963, %655, %cst_339 {dimension_numbers = #tpu.dot_dimension_numbers<[1], [0], [0], [1], [0, 0, 1, 1], [], []>} : vector<2x16xf32>, vector<16x128xf32>, vector<2x128xf32> -> vector<2x128xf32>
    %974 = arith.addf %972, %973 : vector<2x128xf32>
    %cst_340 = arith.constant dense<0.000000e+00> : vector<2x128xf32>
    %975 = tpu.matmul %965, %657, %cst_340 {dimension_numbers = #tpu.dot_dimension_numbers<[1], [0], [0], [1], [0, 0, 1, 1], [], []>} : vector<2x16xf32>, vector<16x128xf32>, vector<2x128xf32> -> vector<2x128xf32>
    %976 = arith.addf %974, %975 : vector<2x128xf32>
    %977 = math.tanh %976 : vector<2x128xf32>
    %978 = vector.broadcast %78 : vector<1x128xf32> to vector<2x128xf32>
    %979 = arith.mulf %978, %977 : vector<2x128xf32>
    %980 = vector.broadcast %81 : vector<1x128xf32> to vector<2x128xf32>
    %981 = arith.addf %979, %980 : vector<2x128xf32>
    %982 = vector.extract_strided_slice %981 {offsets = [0, 0], sizes = [2, 16], strides = [1, 1]} : vector<2x128xf32> to vector<2x16xf32>
    %983 = vector.extract_strided_slice %981 {offsets = [0, 16], sizes = [2, 16], strides = [1, 1]} : vector<2x128xf32> to vector<2x16xf32>
    %984 = vector.extract_strided_slice %981 {offsets = [0, 32], sizes = [2, 16], strides = [1, 1]} : vector<2x128xf32> to vector<2x16xf32>
    %985 = vector.extract_strided_slice %981 {offsets = [0, 48], sizes = [2, 16], strides = [1, 1]} : vector<2x128xf32> to vector<2x16xf32>
    %986 = vector.extract_strided_slice %981 {offsets = [0, 64], sizes = [2, 16], strides = [1, 1]} : vector<2x128xf32> to vector<2x16xf32>
    %987 = vector.extract_strided_slice %981 {offsets = [0, 80], sizes = [2, 16], strides = [1, 1]} : vector<2x128xf32> to vector<2x16xf32>
    %988 = vector.extract_strided_slice %981 {offsets = [0, 96], sizes = [2, 16], strides = [1, 1]} : vector<2x128xf32> to vector<2x16xf32>
    %989 = vector.extract_strided_slice %981 {offsets = [0, 112], sizes = [2, 16], strides = [1, 1]} : vector<2x128xf32> to vector<2x16xf32>
    %990 = arith.mulf %983, %958 : vector<2x16xf32>
    %991 = arith.mulf %982, %985 : vector<2x16xf32>
    %992 = arith.addf %990, %991 : vector<2x16xf32>
    %993 = arith.mulf %987, %961 : vector<2x16xf32>
    %994 = arith.mulf %986, %989 : vector<2x16xf32>
    %995 = arith.addf %993, %994 : vector<2x16xf32>
    %996 = math.tanh %992 : vector<2x16xf32>
    %997 = arith.mulf %984, %996 : vector<2x16xf32>
    %998 = math.tanh %995 : vector<2x16xf32>
    %999 = arith.mulf %988, %998 : vector<2x16xf32>
    %c18_341 = arith.constant 18 : index
    %c0_342 = arith.constant 0 : index
    %1000 = vector.load %arg18[%c18_341, %c0_342] : memref<32x32xf32, #tpu.memory_space<vmem>>, vector<2x16xf32>
    tpu.vector_store %arg18[%c18_341, %c0_342], %997 {strides = array<i32>} : memref<32x32xf32, #tpu.memory_space<vmem>>, vector<2x16xf32>,
    %c12_343 = arith.constant 12 : index
    %c16_344 = arith.constant 16 : index
    %1001 = vector.load %arg18[%c12_343, %c16_344] : memref<32x32xf32, #tpu.memory_space<vmem>>, vector<2x16xf32>
    tpu.vector_store %arg18[%c12_343, %c16_344], %999 {strides = array<i32>} : memref<32x32xf32, #tpu.memory_space<vmem>>, vector<2x16xf32>,
    %c20_345 = arith.constant 20 : index
    %c0_346 = arith.constant 0 : index
    %1002 = vector.load %arg19[%c20_345, %c0_346] : memref<32x128xf32, #tpu.memory_space<vmem>>, vector<2x128xf32>
    %c10_347 = arith.constant 10 : index
    %c0_348 = arith.constant 0 : index
    %1003 = vector.load %arg19[%c10_347, %c0_348] : memref<32x128xf32, #tpu.memory_space<vmem>>, vector<2x128xf32>
    %1004 = vector.shape_cast %83 : vector<1x128xi1> to vector<1x128xi1>
    %1005 = vector.broadcast %1004 : vector<1x128xi1> to vector<2x128xi1>
    %1006 = arith.select %1005, %1002, %1003 : vector<2x128xi1>, vector<2x128xf32>
    %cst_349 = arith.constant dense<0.000000e+00> : vector<2x128xf32>
    %1007 = tpu.matmul %997, %655, %cst_349 {dimension_numbers = #tpu.dot_dimension_numbers<[1], [0], [0], [1], [0, 0, 1, 1], [], []>} : vector<2x16xf32>, vector<16x128xf32>, vector<2x128xf32> -> vector<2x128xf32>
    %1008 = arith.addf %1006, %1007 : vector<2x128xf32>
    %cst_350 = arith.constant dense<0.000000e+00> : vector<2x128xf32>
    %1009 = tpu.matmul %999, %657, %cst_350 {dimension_numbers = #tpu.dot_dimension_numbers<[1], [0], [0], [1], [0, 0, 1, 1], [], []>} : vector<2x16xf32>, vector<16x128xf32>, vector<2x128xf32> -> vector<2x128xf32>
    %1010 = arith.addf %1008, %1009 : vector<2x128xf32>
    %1011 = math.tanh %1010 : vector<2x128xf32>
    %1012 = vector.broadcast %78 : vector<1x128xf32> to vector<2x128xf32>
    %1013 = arith.mulf %1012, %1011 : vector<2x128xf32>
    %1014 = vector.broadcast %81 : vector<1x128xf32> to vector<2x128xf32>
    %1015 = arith.addf %1013, %1014 : vector<2x128xf32>
    %1016 = vector.extract_strided_slice %1015 {offsets = [0, 0], sizes = [2, 16], strides = [1, 1]} : vector<2x128xf32> to vector<2x16xf32>
    %1017 = vector.extract_strided_slice %1015 {offsets = [0, 16], sizes = [2, 16], strides = [1, 1]} : vector<2x128xf32> to vector<2x16xf32>
    %1018 = vector.extract_strided_slice %1015 {offsets = [0, 32], sizes = [2, 16], strides = [1, 1]} : vector<2x128xf32> to vector<2x16xf32>
    %1019 = vector.extract_strided_slice %1015 {offsets = [0, 48], sizes = [2, 16], strides = [1, 1]} : vector<2x128xf32> to vector<2x16xf32>
    %1020 = vector.extract_strided_slice %1015 {offsets = [0, 64], sizes = [2, 16], strides = [1, 1]} : vector<2x128xf32> to vector<2x16xf32>
    %1021 = vector.extract_strided_slice %1015 {offsets = [0, 80], sizes = [2, 16], strides = [1, 1]} : vector<2x128xf32> to vector<2x16xf32>
    %1022 = vector.extract_strided_slice %1015 {offsets = [0, 96], sizes = [2, 16], strides = [1, 1]} : vector<2x128xf32> to vector<2x16xf32>
    %1023 = vector.extract_strided_slice %1015 {offsets = [0, 112], sizes = [2, 16], strides = [1, 1]} : vector<2x128xf32> to vector<2x16xf32>
    %1024 = arith.mulf %1017, %992 : vector<2x16xf32>
    %1025 = arith.mulf %1016, %1019 : vector<2x16xf32>
    %1026 = arith.addf %1024, %1025 : vector<2x16xf32>
    %1027 = arith.mulf %1021, %995 : vector<2x16xf32>
    %1028 = arith.mulf %1020, %1023 : vector<2x16xf32>
    %1029 = arith.addf %1027, %1028 : vector<2x16xf32>
    %1030 = math.tanh %1026 : vector<2x16xf32>
    %1031 = arith.mulf %1018, %1030 : vector<2x16xf32>
    %1032 = math.tanh %1029 : vector<2x16xf32>
    %1033 = arith.mulf %1022, %1032 : vector<2x16xf32>
    %c20_351 = arith.constant 20 : index
    %c0_352 = arith.constant 0 : index
    %1034 = vector.load %arg18[%c20_351, %c0_352] : memref<32x32xf32, #tpu.memory_space<vmem>>, vector<2x16xf32>
    tpu.vector_store %arg18[%c20_351, %c0_352], %1031 {strides = array<i32>} : memref<32x32xf32, #tpu.memory_space<vmem>>, vector<2x16xf32>,
    %c10_353 = arith.constant 10 : index
    %c16_354 = arith.constant 16 : index
    %1035 = vector.load %arg18[%c10_353, %c16_354] : memref<32x32xf32, #tpu.memory_space<vmem>>, vector<2x16xf32>
    tpu.vector_store %arg18[%c10_353, %c16_354], %1033 {strides = array<i32>} : memref<32x32xf32, #tpu.memory_space<vmem>>, vector<2x16xf32>,
    %c22_355 = arith.constant 22 : index
    %c0_356 = arith.constant 0 : index
    %1036 = vector.load %arg19[%c22_355, %c0_356] : memref<32x128xf32, #tpu.memory_space<vmem>>, vector<2x128xf32>
    %c8_357 = arith.constant 8 : index
    %c0_358 = arith.constant 0 : index
    %1037 = vector.load %arg19[%c8_357, %c0_358] : memref<32x128xf32, #tpu.memory_space<vmem>>, vector<2x128xf32>
    %1038 = vector.shape_cast %83 : vector<1x128xi1> to vector<1x128xi1>
    %1039 = vector.broadcast %1038 : vector<1x128xi1> to vector<2x128xi1>
    %1040 = arith.select %1039, %1036, %1037 : vector<2x128xi1>, vector<2x128xf32>
    %cst_359 = arith.constant dense<0.000000e+00> : vector<2x128xf32>
    %1041 = tpu.matmul %1031, %655, %cst_359 {dimension_numbers = #tpu.dot_dimension_numbers<[1], [0], [0], [1], [0, 0, 1, 1], [], []>} : vector<2x16xf32>, vector<16x128xf32>, vector<2x128xf32> -> vector<2x128xf32>
    %1042 = arith.addf %1040, %1041 : vector<2x128xf32>
    %cst_360 = arith.constant dense<0.000000e+00> : vector<2x128xf32>
    %1043 = tpu.matmul %1033, %657, %cst_360 {dimension_numbers = #tpu.dot_dimension_numbers<[1], [0], [0], [1], [0, 0, 1, 1], [], []>} : vector<2x16xf32>, vector<16x128xf32>, vector<2x128xf32> -> vector<2x128xf32>
    %1044 = arith.addf %1042, %1043 : vector<2x128xf32>
    %1045 = math.tanh %1044 : vector<2x128xf32>
    %1046 = vector.broadcast %78 : vector<1x128xf32> to vector<2x128xf32>
    %1047 = arith.mulf %1046, %1045 : vector<2x128xf32>
    %1048 = vector.broadcast %81 : vector<1x128xf32> to vector<2x128xf32>
    %1049 = arith.addf %1047, %1048 : vector<2x128xf32>
    %1050 = vector.extract_strided_slice %1049 {offsets = [0, 0], sizes = [2, 16], strides = [1, 1]} : vector<2x128xf32> to vector<2x16xf32>
    %1051 = vector.extract_strided_slice %1049 {offsets = [0, 16], sizes = [2, 16], strides = [1, 1]} : vector<2x128xf32> to vector<2x16xf32>
    %1052 = vector.extract_strided_slice %1049 {offsets = [0, 32], sizes = [2, 16], strides = [1, 1]} : vector<2x128xf32> to vector<2x16xf32>
    %1053 = vector.extract_strided_slice %1049 {offsets = [0, 48], sizes = [2, 16], strides = [1, 1]} : vector<2x128xf32> to vector<2x16xf32>
    %1054 = vector.extract_strided_slice %1049 {offsets = [0, 64], sizes = [2, 16], strides = [1, 1]} : vector<2x128xf32> to vector<2x16xf32>
    %1055 = vector.extract_strided_slice %1049 {offsets = [0, 80], sizes = [2, 16], strides = [1, 1]} : vector<2x128xf32> to vector<2x16xf32>
    %1056 = vector.extract_strided_slice %1049 {offsets = [0, 96], sizes = [2, 16], strides = [1, 1]} : vector<2x128xf32> to vector<2x16xf32>
    %1057 = vector.extract_strided_slice %1049 {offsets = [0, 112], sizes = [2, 16], strides = [1, 1]} : vector<2x128xf32> to vector<2x16xf32>
    %1058 = arith.mulf %1051, %1026 : vector<2x16xf32>
    %1059 = arith.mulf %1050, %1053 : vector<2x16xf32>
    %1060 = arith.addf %1058, %1059 : vector<2x16xf32>
    %1061 = arith.mulf %1055, %1029 : vector<2x16xf32>
    %1062 = arith.mulf %1054, %1057 : vector<2x16xf32>
    %1063 = arith.addf %1061, %1062 : vector<2x16xf32>
    %1064 = math.tanh %1060 : vector<2x16xf32>
    %1065 = arith.mulf %1052, %1064 : vector<2x16xf32>
    %1066 = math.tanh %1063 : vector<2x16xf32>
    %1067 = arith.mulf %1056, %1066 : vector<2x16xf32>
    %c22_361 = arith.constant 22 : index
    %c0_362 = arith.constant 0 : index
    %1068 = vector.load %arg18[%c22_361, %c0_362] : memref<32x32xf32, #tpu.memory_space<vmem>>, vector<2x16xf32>
    tpu.vector_store %arg18[%c22_361, %c0_362], %1065 {strides = array<i32>} : memref<32x32xf32, #tpu.memory_space<vmem>>, vector<2x16xf32>,
    %c8_363 = arith.constant 8 : index
    %c16_364 = arith.constant 16 : index
    %1069 = vector.load %arg18[%c8_363, %c16_364] : memref<32x32xf32, #tpu.memory_space<vmem>>, vector<2x16xf32>
    tpu.vector_store %arg18[%c8_363, %c16_364], %1067 {strides = array<i32>} : memref<32x32xf32, #tpu.memory_space<vmem>>, vector<2x16xf32>,
    %c24_365 = arith.constant 24 : index
    %c0_366 = arith.constant 0 : index
    %1070 = vector.load %arg19[%c24_365, %c0_366] : memref<32x128xf32, #tpu.memory_space<vmem>>, vector<2x128xf32>
    %c6_367 = arith.constant 6 : index
    %c0_368 = arith.constant 0 : index
    %1071 = vector.load %arg19[%c6_367, %c0_368] : memref<32x128xf32, #tpu.memory_space<vmem>>, vector<2x128xf32>
    %1072 = vector.shape_cast %83 : vector<1x128xi1> to vector<1x128xi1>
    %1073 = vector.broadcast %1072 : vector<1x128xi1> to vector<2x128xi1>
    %1074 = arith.select %1073, %1070, %1071 : vector<2x128xi1>, vector<2x128xf32>
    %cst_369 = arith.constant dense<0.000000e+00> : vector<2x128xf32>
    %1075 = tpu.matmul %1065, %655, %cst_369 {dimension_numbers = #tpu.dot_dimension_numbers<[1], [0], [0], [1], [0, 0, 1, 1], [], []>} : vector<2x16xf32>, vector<16x128xf32>, vector<2x128xf32> -> vector<2x128xf32>
    %1076 = arith.addf %1074, %1075 : vector<2x128xf32>
    %cst_370 = arith.constant dense<0.000000e+00> : vector<2x128xf32>
    %1077 = tpu.matmul %1067, %657, %cst_370 {dimension_numbers = #tpu.dot_dimension_numbers<[1], [0], [0], [1], [0, 0, 1, 1], [], []>} : vector<2x16xf32>, vector<16x128xf32>, vector<2x128xf32> -> vector<2x128xf32>
    %1078 = arith.addf %1076, %1077 : vector<2x128xf32>
    %1079 = math.tanh %1078 : vector<2x128xf32>
    %1080 = vector.broadcast %78 : vector<1x128xf32> to vector<2x128xf32>
    %1081 = arith.mulf %1080, %1079 : vector<2x128xf32>
    %1082 = vector.broadcast %81 : vector<1x128xf32> to vector<2x128xf32>
    %1083 = arith.addf %1081, %1082 : vector<2x128xf32>
    %1084 = vector.extract_strided_slice %1083 {offsets = [0, 0], sizes = [2, 16], strides = [1, 1]} : vector<2x128xf32> to vector<2x16xf32>
    %1085 = vector.extract_strided_slice %1083 {offsets = [0, 16], sizes = [2, 16], strides = [1, 1]} : vector<2x128xf32> to vector<2x16xf32>
    %1086 = vector.extract_strided_slice %1083 {offsets = [0, 32], sizes = [2, 16], strides = [1, 1]} : vector<2x128xf32> to vector<2x16xf32>
    %1087 = vector.extract_strided_slice %1083 {offsets = [0, 48], sizes = [2, 16], strides = [1, 1]} : vector<2x128xf32> to vector<2x16xf32>
    %1088 = vector.extract_strided_slice %1083 {offsets = [0, 64], sizes = [2, 16], strides = [1, 1]} : vector<2x128xf32> to vector<2x16xf32>
    %1089 = vector.extract_strided_slice %1083 {offsets = [0, 80], sizes = [2, 16], strides = [1, 1]} : vector<2x128xf32> to vector<2x16xf32>
    %1090 = vector.extract_strided_slice %1083 {offsets = [0, 96], sizes = [2, 16], strides = [1, 1]} : vector<2x128xf32> to vector<2x16xf32>
    %1091 = vector.extract_strided_slice %1083 {offsets = [0, 112], sizes = [2, 16], strides = [1, 1]} : vector<2x128xf32> to vector<2x16xf32>
    %1092 = arith.mulf %1085, %1060 : vector<2x16xf32>
    %1093 = arith.mulf %1084, %1087 : vector<2x16xf32>
    %1094 = arith.addf %1092, %1093 : vector<2x16xf32>
    %1095 = arith.mulf %1089, %1063 : vector<2x16xf32>
    %1096 = arith.mulf %1088, %1091 : vector<2x16xf32>
    %1097 = arith.addf %1095, %1096 : vector<2x16xf32>
    %1098 = math.tanh %1094 : vector<2x16xf32>
    %1099 = arith.mulf %1086, %1098 : vector<2x16xf32>
    %1100 = math.tanh %1097 : vector<2x16xf32>
    %1101 = arith.mulf %1090, %1100 : vector<2x16xf32>
    %c24_371 = arith.constant 24 : index
    %c0_372 = arith.constant 0 : index
    %1102 = vector.load %arg18[%c24_371, %c0_372] : memref<32x32xf32, #tpu.memory_space<vmem>>, vector<2x16xf32>
    tpu.vector_store %arg18[%c24_371, %c0_372], %1099 {strides = array<i32>} : memref<32x32xf32, #tpu.memory_space<vmem>>, vector<2x16xf32>,
    %c6_373 = arith.constant 6 : index
    %c16_374 = arith.constant 16 : index
    %1103 = vector.load %arg18[%c6_373, %c16_374] : memref<32x32xf32, #tpu.memory_space<vmem>>, vector<2x16xf32>
    tpu.vector_store %arg18[%c6_373, %c16_374], %1101 {strides = array<i32>} : memref<32x32xf32, #tpu.memory_space<vmem>>, vector<2x16xf32>,
    %c26_375 = arith.constant 26 : index
    %c0_376 = arith.constant 0 : index
    %1104 = vector.load %arg19[%c26_375, %c0_376] : memref<32x128xf32, #tpu.memory_space<vmem>>, vector<2x128xf32>
    %c4_377 = arith.constant 4 : index
    %c0_378 = arith.constant 0 : index
    %1105 = vector.load %arg19[%c4_377, %c0_378] : memref<32x128xf32, #tpu.memory_space<vmem>>, vector<2x128xf32>
    %1106 = vector.shape_cast %83 : vector<1x128xi1> to vector<1x128xi1>
    %1107 = vector.broadcast %1106 : vector<1x128xi1> to vector<2x128xi1>
    %1108 = arith.select %1107, %1104, %1105 : vector<2x128xi1>, vector<2x128xf32>
    %cst_379 = arith.constant dense<0.000000e+00> : vector<2x128xf32>
    %1109 = tpu.matmul %1099, %655, %cst_379 {dimension_numbers = #tpu.dot_dimension_numbers<[1], [0], [0], [1], [0, 0, 1, 1], [], []>} : vector<2x16xf32>, vector<16x128xf32>, vector<2x128xf32> -> vector<2x128xf32>
    %1110 = arith.addf %1108, %1109 : vector<2x128xf32>
    %cst_380 = arith.constant dense<0.000000e+00> : vector<2x128xf32>
    %1111 = tpu.matmul %1101, %657, %cst_380 {dimension_numbers = #tpu.dot_dimension_numbers<[1], [0], [0], [1], [0, 0, 1, 1], [], []>} : vector<2x16xf32>, vector<16x128xf32>, vector<2x128xf32> -> vector<2x128xf32>
    %1112 = arith.addf %1110, %1111 : vector<2x128xf32>
    %1113 = math.tanh %1112 : vector<2x128xf32>
    %1114 = vector.broadcast %78 : vector<1x128xf32> to vector<2x128xf32>
    %1115 = arith.mulf %1114, %1113 : vector<2x128xf32>
    %1116 = vector.broadcast %81 : vector<1x128xf32> to vector<2x128xf32>
    %1117 = arith.addf %1115, %1116 : vector<2x128xf32>
    %1118 = vector.extract_strided_slice %1117 {offsets = [0, 0], sizes = [2, 16], strides = [1, 1]} : vector<2x128xf32> to vector<2x16xf32>
    %1119 = vector.extract_strided_slice %1117 {offsets = [0, 16], sizes = [2, 16], strides = [1, 1]} : vector<2x128xf32> to vector<2x16xf32>
    %1120 = vector.extract_strided_slice %1117 {offsets = [0, 32], sizes = [2, 16], strides = [1, 1]} : vector<2x128xf32> to vector<2x16xf32>
    %1121 = vector.extract_strided_slice %1117 {offsets = [0, 48], sizes = [2, 16], strides = [1, 1]} : vector<2x128xf32> to vector<2x16xf32>
    %1122 = vector.extract_strided_slice %1117 {offsets = [0, 64], sizes = [2, 16], strides = [1, 1]} : vector<2x128xf32> to vector<2x16xf32>
    %1123 = vector.extract_strided_slice %1117 {offsets = [0, 80], sizes = [2, 16], strides = [1, 1]} : vector<2x128xf32> to vector<2x16xf32>
    %1124 = vector.extract_strided_slice %1117 {offsets = [0, 96], sizes = [2, 16], strides = [1, 1]} : vector<2x128xf32> to vector<2x16xf32>
    %1125 = vector.extract_strided_slice %1117 {offsets = [0, 112], sizes = [2, 16], strides = [1, 1]} : vector<2x128xf32> to vector<2x16xf32>
    %1126 = arith.mulf %1119, %1094 : vector<2x16xf32>
    %1127 = arith.mulf %1118, %1121 : vector<2x16xf32>
    %1128 = arith.addf %1126, %1127 : vector<2x16xf32>
    %1129 = arith.mulf %1123, %1097 : vector<2x16xf32>
    %1130 = arith.mulf %1122, %1125 : vector<2x16xf32>
    %1131 = arith.addf %1129, %1130 : vector<2x16xf32>
    %1132 = math.tanh %1128 : vector<2x16xf32>
    %1133 = arith.mulf %1120, %1132 : vector<2x16xf32>
    %1134 = math.tanh %1131 : vector<2x16xf32>
    %1135 = arith.mulf %1124, %1134 : vector<2x16xf32>
    %c26_381 = arith.constant 26 : index
    %c0_382 = arith.constant 0 : index
    %1136 = vector.load %arg18[%c26_381, %c0_382] : memref<32x32xf32, #tpu.memory_space<vmem>>, vector<2x16xf32>
    tpu.vector_store %arg18[%c26_381, %c0_382], %1133 {strides = array<i32>} : memref<32x32xf32, #tpu.memory_space<vmem>>, vector<2x16xf32>,
    %c4_383 = arith.constant 4 : index
    %c16_384 = arith.constant 16 : index
    %1137 = vector.load %arg18[%c4_383, %c16_384] : memref<32x32xf32, #tpu.memory_space<vmem>>, vector<2x16xf32>
    tpu.vector_store %arg18[%c4_383, %c16_384], %1135 {strides = array<i32>} : memref<32x32xf32, #tpu.memory_space<vmem>>, vector<2x16xf32>,
    %c28_385 = arith.constant 28 : index
    %c0_386 = arith.constant 0 : index
    %1138 = vector.load %arg19[%c28_385, %c0_386] : memref<32x128xf32, #tpu.memory_space<vmem>>, vector<2x128xf32>
    %c2_387 = arith.constant 2 : index
    %c0_388 = arith.constant 0 : index
    %1139 = vector.load %arg19[%c2_387, %c0_388] : memref<32x128xf32, #tpu.memory_space<vmem>>, vector<2x128xf32>
    %1140 = vector.shape_cast %83 : vector<1x128xi1> to vector<1x128xi1>
    %1141 = vector.broadcast %1140 : vector<1x128xi1> to vector<2x128xi1>
    %1142 = arith.select %1141, %1138, %1139 : vector<2x128xi1>, vector<2x128xf32>
    %cst_389 = arith.constant dense<0.000000e+00> : vector<2x128xf32>
    %1143 = tpu.matmul %1133, %655, %cst_389 {dimension_numbers = #tpu.dot_dimension_numbers<[1], [0], [0], [1], [0, 0, 1, 1], [], []>} : vector<2x16xf32>, vector<16x128xf32>, vector<2x128xf32> -> vector<2x128xf32>
    %1144 = arith.addf %1142, %1143 : vector<2x128xf32>
    %cst_390 = arith.constant dense<0.000000e+00> : vector<2x128xf32>
    %1145 = tpu.matmul %1135, %657, %cst_390 {dimension_numbers = #tpu.dot_dimension_numbers<[1], [0], [0], [1], [0, 0, 1, 1], [], []>} : vector<2x16xf32>, vector<16x128xf32>, vector<2x128xf32> -> vector<2x128xf32>
    %1146 = arith.addf %1144, %1145 : vector<2x128xf32>
    %1147 = math.tanh %1146 : vector<2x128xf32>
    %1148 = vector.broadcast %78 : vector<1x128xf32> to vector<2x128xf32>
    %1149 = arith.mulf %1148, %1147 : vector<2x128xf32>
    %1150 = vector.broadcast %81 : vector<1x128xf32> to vector<2x128xf32>
    %1151 = arith.addf %1149, %1150 : vector<2x128xf32>
    %1152 = vector.extract_strided_slice %1151 {offsets = [0, 0], sizes = [2, 16], strides = [1, 1]} : vector<2x128xf32> to vector<2x16xf32>
    %1153 = vector.extract_strided_slice %1151 {offsets = [0, 16], sizes = [2, 16], strides = [1, 1]} : vector<2x128xf32> to vector<2x16xf32>
    %1154 = vector.extract_strided_slice %1151 {offsets = [0, 32], sizes = [2, 16], strides = [1, 1]} : vector<2x128xf32> to vector<2x16xf32>
    %1155 = vector.extract_strided_slice %1151 {offsets = [0, 48], sizes = [2, 16], strides = [1, 1]} : vector<2x128xf32> to vector<2x16xf32>
    %1156 = vector.extract_strided_slice %1151 {offsets = [0, 64], sizes = [2, 16], strides = [1, 1]} : vector<2x128xf32> to vector<2x16xf32>
    %1157 = vector.extract_strided_slice %1151 {offsets = [0, 80], sizes = [2, 16], strides = [1, 1]} : vector<2x128xf32> to vector<2x16xf32>
    %1158 = vector.extract_strided_slice %1151 {offsets = [0, 96], sizes = [2, 16], strides = [1, 1]} : vector<2x128xf32> to vector<2x16xf32>
    %1159 = vector.extract_strided_slice %1151 {offsets = [0, 112], sizes = [2, 16], strides = [1, 1]} : vector<2x128xf32> to vector<2x16xf32>
    %1160 = arith.mulf %1153, %1128 : vector<2x16xf32>
    %1161 = arith.mulf %1152, %1155 : vector<2x16xf32>
    %1162 = arith.addf %1160, %1161 : vector<2x16xf32>
    %1163 = arith.mulf %1157, %1131 : vector<2x16xf32>
    %1164 = arith.mulf %1156, %1159 : vector<2x16xf32>
    %1165 = arith.addf %1163, %1164 : vector<2x16xf32>
    %1166 = math.tanh %1162 : vector<2x16xf32>
    %1167 = arith.mulf %1154, %1166 : vector<2x16xf32>
    %1168 = math.tanh %1165 : vector<2x16xf32>
    %1169 = arith.mulf %1158, %1168 : vector<2x16xf32>
    %c28_391 = arith.constant 28 : index
    %c0_392 = arith.constant 0 : index
    %1170 = vector.load %arg18[%c28_391, %c0_392] : memref<32x32xf32, #tpu.memory_space<vmem>>, vector<2x16xf32>
    tpu.vector_store %arg18[%c28_391, %c0_392], %1167 {strides = array<i32>} : memref<32x32xf32, #tpu.memory_space<vmem>>, vector<2x16xf32>,
    %c2_393 = arith.constant 2 : index
    %c16_394 = arith.constant 16 : index
    %1171 = vector.load %arg18[%c2_393, %c16_394] : memref<32x32xf32, #tpu.memory_space<vmem>>, vector<2x16xf32>
    tpu.vector_store %arg18[%c2_393, %c16_394], %1169 {strides = array<i32>} : memref<32x32xf32, #tpu.memory_space<vmem>>, vector<2x16xf32>,
    %c30_395 = arith.constant 30 : index
    %c0_396 = arith.constant 0 : index
    %1172 = vector.load %arg19[%c30_395, %c0_396] : memref<32x128xf32, #tpu.memory_space<vmem>>, vector<2x128xf32>
    %c0_397 = arith.constant 0 : index
    %c0_398 = arith.constant 0 : index
    %1173 = vector.load %arg19[%c0_397, %c0_398] : memref<32x128xf32, #tpu.memory_space<vmem>>, vector<2x128xf32>
    %1174 = vector.shape_cast %83 : vector<1x128xi1> to vector<1x128xi1>
    %1175 = vector.broadcast %1174 : vector<1x128xi1> to vector<2x128xi1>
    %1176 = arith.select %1175, %1172, %1173 : vector<2x128xi1>, vector<2x128xf32>
    %cst_399 = arith.constant dense<0.000000e+00> : vector<2x128xf32>
    %1177 = tpu.matmul %1167, %655, %cst_399 {dimension_numbers = #tpu.dot_dimension_numbers<[1], [0], [0], [1], [0, 0, 1, 1], [], []>} : vector<2x16xf32>, vector<16x128xf32>, vector<2x128xf32> -> vector<2x128xf32>
    %1178 = arith.addf %1176, %1177 : vector<2x128xf32>
    %cst_400 = arith.constant dense<0.000000e+00> : vector<2x128xf32>
    %1179 = tpu.matmul %1169, %657, %cst_400 {dimension_numbers = #tpu.dot_dimension_numbers<[1], [0], [0], [1], [0, 0, 1, 1], [], []>} : vector<2x16xf32>, vector<16x128xf32>, vector<2x128xf32> -> vector<2x128xf32>
    %1180 = arith.addf %1178, %1179 : vector<2x128xf32>
    %1181 = math.tanh %1180 : vector<2x128xf32>
    %1182 = vector.broadcast %78 : vector<1x128xf32> to vector<2x128xf32>
    %1183 = arith.mulf %1182, %1181 : vector<2x128xf32>
    %1184 = vector.broadcast %81 : vector<1x128xf32> to vector<2x128xf32>
    %1185 = arith.addf %1183, %1184 : vector<2x128xf32>
    %1186 = vector.extract_strided_slice %1185 {offsets = [0, 0], sizes = [2, 16], strides = [1, 1]} : vector<2x128xf32> to vector<2x16xf32>
    %1187 = vector.extract_strided_slice %1185 {offsets = [0, 16], sizes = [2, 16], strides = [1, 1]} : vector<2x128xf32> to vector<2x16xf32>
    %1188 = vector.extract_strided_slice %1185 {offsets = [0, 32], sizes = [2, 16], strides = [1, 1]} : vector<2x128xf32> to vector<2x16xf32>
    %1189 = vector.extract_strided_slice %1185 {offsets = [0, 48], sizes = [2, 16], strides = [1, 1]} : vector<2x128xf32> to vector<2x16xf32>
    %1190 = vector.extract_strided_slice %1185 {offsets = [0, 64], sizes = [2, 16], strides = [1, 1]} : vector<2x128xf32> to vector<2x16xf32>
    %1191 = vector.extract_strided_slice %1185 {offsets = [0, 80], sizes = [2, 16], strides = [1, 1]} : vector<2x128xf32> to vector<2x16xf32>
    %1192 = vector.extract_strided_slice %1185 {offsets = [0, 96], sizes = [2, 16], strides = [1, 1]} : vector<2x128xf32> to vector<2x16xf32>
    %1193 = vector.extract_strided_slice %1185 {offsets = [0, 112], sizes = [2, 16], strides = [1, 1]} : vector<2x128xf32> to vector<2x16xf32>
    %1194 = arith.mulf %1187, %1162 : vector<2x16xf32>
    %1195 = arith.mulf %1186, %1189 : vector<2x16xf32>
    %1196 = arith.addf %1194, %1195 : vector<2x16xf32>
    %1197 = arith.mulf %1191, %1165 : vector<2x16xf32>
    %1198 = arith.mulf %1190, %1193 : vector<2x16xf32>
    %1199 = arith.addf %1197, %1198 : vector<2x16xf32>
    %1200 = math.tanh %1196 : vector<2x16xf32>
    %1201 = arith.mulf %1188, %1200 : vector<2x16xf32>
    %1202 = math.tanh %1199 : vector<2x16xf32>
    %1203 = arith.mulf %1192, %1202 : vector<2x16xf32>
    %c30_401 = arith.constant 30 : index
    %c0_402 = arith.constant 0 : index
    %1204 = vector.load %arg18[%c30_401, %c0_402] : memref<32x32xf32, #tpu.memory_space<vmem>>, vector<2x16xf32>
    tpu.vector_store %arg18[%c30_401, %c0_402], %1201 {strides = array<i32>} : memref<32x32xf32, #tpu.memory_space<vmem>>, vector<2x16xf32>,
    %c0_403 = arith.constant 0 : index
    %c16_404 = arith.constant 16 : index
    %1205 = vector.load %arg18[%c0_403, %c16_404] : memref<32x32xf32, #tpu.memory_space<vmem>>, vector<2x16xf32>
    tpu.vector_store %arg18[%c0_403, %c16_404], %1203 {strides = array<i32>} : memref<32x32xf32, #tpu.memory_space<vmem>>, vector<2x16xf32>,
    %c0_405 = arith.constant 0 : index
    %c0_406 = arith.constant 0 : index
    %1206 = vector.load %arg18[%c0_405, %c0_406] : memref<32x32xf32, #tpu.memory_space<vmem>>, vector<32x32xf32>
    %c2_407 = arith.constant 2 : index
    %c0_408 = arith.constant 0 : index
    %c0_409 = arith.constant 0 : index
    %1207 = vector.load %arg8[%c2_407, %c0_408, %c0_409] : memref<3x32x128xf32, #tpu.memory_space<vmem>>, vector<1x32x128xf32>
    %1208 = vector.shape_cast %1207 : vector<1x32x128xf32> to vector<32x128xf32>
    %cst_410 = arith.constant dense<0.000000e+00> : vector<32x128xf32>
    %1209 = tpu.matmul %1206, %1208, %cst_410 {dimension_numbers = #tpu.dot_dimension_numbers<[1], [0], [0], [1], [0, 0, 1, 1], [], []>} : vector<32x32xf32>, vector<32x128xf32>, vector<32x128xf32> -> vector<32x128xf32>
    %c2_411 = arith.constant 2 : index
    %c0_412 = arith.constant 0 : index
    %c0_413 = arith.constant 0 : index
    %1210 = vector.load %arg10[%c2_411, %c0_412, %c0_413] : memref<3x1x128xf32, #tpu.memory_space<vmem>>, vector<1x1x128xf32>
    %1211 = vector.shape_cast %1210 : vector<1x1x128xf32> to vector<1x128xf32>
    %1212 = vector.broadcast %1211 : vector<1x128xf32> to vector<32x128xf32>
    %1213 = arith.addf %1209, %1212 : vector<32x128xf32>
    %c0_414 = arith.constant 0 : index
    %c0_415 = arith.constant 0 : index
    %1214 = vector.load %arg19[%c0_414, %c0_415] : memref<32x128xf32, #tpu.memory_space<vmem>>, vector<32x128xf32>
    tpu.vector_store %arg19[%c0_414, %c0_415], %1213 {strides = array<i32>} : memref<32x128xf32, #tpu.memory_space<vmem>>, vector<32x128xf32>,
    %c2_416 = arith.constant 2 : index
    %c0_417 = arith.constant 0 : index
    %c0_418 = arith.constant 0 : index
    %c0_419 = arith.constant 0 : index
    %1215 = vector.load %arg9[%c2_416, %c0_417, %c0_418, %c0_419] : memref<3x2x16x128xf32, #tpu.memory_space<vmem>>, vector<1x1x16x128xf32>
    %1216 = vector.shape_cast %1215 : vector<1x1x16x128xf32> to vector<16x128xf32>
    %c2_420 = arith.constant 2 : index
    %c1_421 = arith.constant 1 : index
    %c0_422 = arith.constant 0 : index
    %c0_423 = arith.constant 0 : index
    %1217 = vector.load %arg9[%c2_420, %c1_421, %c0_422, %c0_423] : memref<3x2x16x128xf32, #tpu.memory_space<vmem>>, vector<1x1x16x128xf32>
    %1218 = vector.shape_cast %1217 : vector<1x1x16x128xf32> to vector<16x128xf32>
    %cst_424 = arith.constant 0.000000e+00 : f32
    %1219 = vector.broadcast %cst_424 : f32 to vector<2x16xf32>
    %cst_425 = arith.constant 0.000000e+00 : f32
    %1220 = vector.broadcast %cst_425 : f32 to vector<2x16xf32>
    %cst_426 = arith.constant 0.000000e+00 : f32
    %1221 = vector.broadcast %cst_426 : f32 to vector<2x16xf32>
    %cst_427 = arith.constant 0.000000e+00 : f32
    %1222 = vector.broadcast %cst_427 : f32 to vector<2x16xf32>
    %c0_428 = arith.constant 0 : index
    %c0_429 = arith.constant 0 : index
    %1223 = vector.load %arg19[%c0_428, %c0_429] : memref<32x128xf32, #tpu.memory_space<vmem>>, vector<2x128xf32>
    %c30_430 = arith.constant 30 : index
    %c0_431 = arith.constant 0 : index
    %1224 = vector.load %arg19[%c30_430, %c0_431] : memref<32x128xf32, #tpu.memory_space<vmem>>, vector<2x128xf32>
    %1225 = vector.shape_cast %83 : vector<1x128xi1> to vector<1x128xi1>
    %1226 = vector.broadcast %1225 : vector<1x128xi1> to vector<2x128xi1>
    %1227 = arith.select %1226, %1223, %1224 : vector<2x128xi1>, vector<2x128xf32>
    %cst_432 = arith.constant dense<0.000000e+00> : vector<2x128xf32>
    %1228 = tpu.matmul %1219, %1216, %cst_432 {dimension_numbers = #tpu.dot_dimension_numbers<[1], [0], [0], [1], [0, 0, 1, 1], [], []>} : vector<2x16xf32>, vector<16x128xf32>, vector<2x128xf32> -> vector<2x128xf32>
    %1229 = arith.addf %1227, %1228 : vector<2x128xf32>
    %cst_433 = arith.constant dense<0.000000e+00> : vector<2x128xf32>
    %1230 = tpu.matmul %1220, %1218, %cst_433 {dimension_numbers = #tpu.dot_dimension_numbers<[1], [0], [0], [1], [0, 0, 1, 1], [], []>} : vector<2x16xf32>, vector<16x128xf32>, vector<2x128xf32> -> vector<2x128xf32>
    %1231 = arith.addf %1229, %1230 : vector<2x128xf32>
    %1232 = math.tanh %1231 : vector<2x128xf32>
    %1233 = vector.broadcast %78 : vector<1x128xf32> to vector<2x128xf32>
    %1234 = arith.mulf %1233, %1232 : vector<2x128xf32>
    %1235 = vector.broadcast %81 : vector<1x128xf32> to vector<2x128xf32>
    %1236 = arith.addf %1234, %1235 : vector<2x128xf32>
    %1237 = vector.extract_strided_slice %1236 {offsets = [0, 0], sizes = [2, 16], strides = [1, 1]} : vector<2x128xf32> to vector<2x16xf32>
    %1238 = vector.extract_strided_slice %1236 {offsets = [0, 16], sizes = [2, 16], strides = [1, 1]} : vector<2x128xf32> to vector<2x16xf32>
    %1239 = vector.extract_strided_slice %1236 {offsets = [0, 32], sizes = [2, 16], strides = [1, 1]} : vector<2x128xf32> to vector<2x16xf32>
    %1240 = vector.extract_strided_slice %1236 {offsets = [0, 48], sizes = [2, 16], strides = [1, 1]} : vector<2x128xf32> to vector<2x16xf32>
    %1241 = vector.extract_strided_slice %1236 {offsets = [0, 64], sizes = [2, 16], strides = [1, 1]} : vector<2x128xf32> to vector<2x16xf32>
    %1242 = vector.extract_strided_slice %1236 {offsets = [0, 80], sizes = [2, 16], strides = [1, 1]} : vector<2x128xf32> to vector<2x16xf32>
    %1243 = vector.extract_strided_slice %1236 {offsets = [0, 96], sizes = [2, 16], strides = [1, 1]} : vector<2x128xf32> to vector<2x16xf32>
    %1244 = vector.extract_strided_slice %1236 {offsets = [0, 112], sizes = [2, 16], strides = [1, 1]} : vector<2x128xf32> to vector<2x16xf32>
    %1245 = arith.mulf %1238, %1221 : vector<2x16xf32>
    %1246 = arith.mulf %1237, %1240 : vector<2x16xf32>
    %1247 = arith.addf %1245, %1246 : vector<2x16xf32>
    %1248 = arith.mulf %1242, %1222 : vector<2x16xf32>
    %1249 = arith.mulf %1241, %1244 : vector<2x16xf32>
    %1250 = arith.addf %1248, %1249 : vector<2x16xf32>
    %1251 = math.tanh %1247 : vector<2x16xf32>
    %1252 = arith.mulf %1239, %1251 : vector<2x16xf32>
    %1253 = math.tanh %1250 : vector<2x16xf32>
    %1254 = arith.mulf %1243, %1253 : vector<2x16xf32>
    %c2_434 = arith.constant 2 : index
    %c0_435 = arith.constant 0 : index
    %1255 = vector.load %arg19[%c2_434, %c0_435] : memref<32x128xf32, #tpu.memory_space<vmem>>, vector<2x128xf32>
    %c28_436 = arith.constant 28 : index
    %c0_437 = arith.constant 0 : index
    %1256 = vector.load %arg19[%c28_436, %c0_437] : memref<32x128xf32, #tpu.memory_space<vmem>>, vector<2x128xf32>
    %1257 = vector.shape_cast %83 : vector<1x128xi1> to vector<1x128xi1>
    %1258 = vector.broadcast %1257 : vector<1x128xi1> to vector<2x128xi1>
    %1259 = arith.select %1258, %1255, %1256 : vector<2x128xi1>, vector<2x128xf32>
    %cst_438 = arith.constant dense<0.000000e+00> : vector<2x128xf32>
    %1260 = tpu.matmul %1252, %1216, %cst_438 {dimension_numbers = #tpu.dot_dimension_numbers<[1], [0], [0], [1], [0, 0, 1, 1], [], []>} : vector<2x16xf32>, vector<16x128xf32>, vector<2x128xf32> -> vector<2x128xf32>
    %1261 = arith.addf %1259, %1260 : vector<2x128xf32>
    %cst_439 = arith.constant dense<0.000000e+00> : vector<2x128xf32>
    %1262 = tpu.matmul %1254, %1218, %cst_439 {dimension_numbers = #tpu.dot_dimension_numbers<[1], [0], [0], [1], [0, 0, 1, 1], [], []>} : vector<2x16xf32>, vector<16x128xf32>, vector<2x128xf32> -> vector<2x128xf32>
    %1263 = arith.addf %1261, %1262 : vector<2x128xf32>
    %1264 = math.tanh %1263 : vector<2x128xf32>
    %1265 = vector.broadcast %78 : vector<1x128xf32> to vector<2x128xf32>
    %1266 = arith.mulf %1265, %1264 : vector<2x128xf32>
    %1267 = vector.broadcast %81 : vector<1x128xf32> to vector<2x128xf32>
    %1268 = arith.addf %1266, %1267 : vector<2x128xf32>
    %1269 = vector.extract_strided_slice %1268 {offsets = [0, 0], sizes = [2, 16], strides = [1, 1]} : vector<2x128xf32> to vector<2x16xf32>
    %1270 = vector.extract_strided_slice %1268 {offsets = [0, 16], sizes = [2, 16], strides = [1, 1]} : vector<2x128xf32> to vector<2x16xf32>
    %1271 = vector.extract_strided_slice %1268 {offsets = [0, 32], sizes = [2, 16], strides = [1, 1]} : vector<2x128xf32> to vector<2x16xf32>
    %1272 = vector.extract_strided_slice %1268 {offsets = [0, 48], sizes = [2, 16], strides = [1, 1]} : vector<2x128xf32> to vector<2x16xf32>
    %1273 = vector.extract_strided_slice %1268 {offsets = [0, 64], sizes = [2, 16], strides = [1, 1]} : vector<2x128xf32> to vector<2x16xf32>
    %1274 = vector.extract_strided_slice %1268 {offsets = [0, 80], sizes = [2, 16], strides = [1, 1]} : vector<2x128xf32> to vector<2x16xf32>
    %1275 = vector.extract_strided_slice %1268 {offsets = [0, 96], sizes = [2, 16], strides = [1, 1]} : vector<2x128xf32> to vector<2x16xf32>
    %1276 = vector.extract_strided_slice %1268 {offsets = [0, 112], sizes = [2, 16], strides = [1, 1]} : vector<2x128xf32> to vector<2x16xf32>
    %1277 = arith.mulf %1270, %1247 : vector<2x16xf32>
    %1278 = arith.mulf %1269, %1272 : vector<2x16xf32>
    %1279 = arith.addf %1277, %1278 : vector<2x16xf32>
    %1280 = arith.mulf %1274, %1250 : vector<2x16xf32>
    %1281 = arith.mulf %1273, %1276 : vector<2x16xf32>
    %1282 = arith.addf %1280, %1281 : vector<2x16xf32>
    %1283 = math.tanh %1279 : vector<2x16xf32>
    %1284 = arith.mulf %1271, %1283 : vector<2x16xf32>
    %1285 = math.tanh %1282 : vector<2x16xf32>
    %1286 = arith.mulf %1275, %1285 : vector<2x16xf32>
    %c4_440 = arith.constant 4 : index
    %c0_441 = arith.constant 0 : index
    %1287 = vector.load %arg19[%c4_440, %c0_441] : memref<32x128xf32, #tpu.memory_space<vmem>>, vector<2x128xf32>
    %c26_442 = arith.constant 26 : index
    %c0_443 = arith.constant 0 : index
    %1288 = vector.load %arg19[%c26_442, %c0_443] : memref<32x128xf32, #tpu.memory_space<vmem>>, vector<2x128xf32>
    %1289 = vector.shape_cast %83 : vector<1x128xi1> to vector<1x128xi1>
    %1290 = vector.broadcast %1289 : vector<1x128xi1> to vector<2x128xi1>
    %1291 = arith.select %1290, %1287, %1288 : vector<2x128xi1>, vector<2x128xf32>
    %cst_444 = arith.constant dense<0.000000e+00> : vector<2x128xf32>
    %1292 = tpu.matmul %1284, %1216, %cst_444 {dimension_numbers = #tpu.dot_dimension_numbers<[1], [0], [0], [1], [0, 0, 1, 1], [], []>} : vector<2x16xf32>, vector<16x128xf32>, vector<2x128xf32> -> vector<2x128xf32>
    %1293 = arith.addf %1291, %1292 : vector<2x128xf32>
    %cst_445 = arith.constant dense<0.000000e+00> : vector<2x128xf32>
    %1294 = tpu.matmul %1286, %1218, %cst_445 {dimension_numbers = #tpu.dot_dimension_numbers<[1], [0], [0], [1], [0, 0, 1, 1], [], []>} : vector<2x16xf32>, vector<16x128xf32>, vector<2x128xf32> -> vector<2x128xf32>
    %1295 = arith.addf %1293, %1294 : vector<2x128xf32>
    %1296 = math.tanh %1295 : vector<2x128xf32>
    %1297 = vector.broadcast %78 : vector<1x128xf32> to vector<2x128xf32>
    %1298 = arith.mulf %1297, %1296 : vector<2x128xf32>
    %1299 = vector.broadcast %81 : vector<1x128xf32> to vector<2x128xf32>
    %1300 = arith.addf %1298, %1299 : vector<2x128xf32>
    %1301 = vector.extract_strided_slice %1300 {offsets = [0, 0], sizes = [2, 16], strides = [1, 1]} : vector<2x128xf32> to vector<2x16xf32>
    %1302 = vector.extract_strided_slice %1300 {offsets = [0, 16], sizes = [2, 16], strides = [1, 1]} : vector<2x128xf32> to vector<2x16xf32>
    %1303 = vector.extract_strided_slice %1300 {offsets = [0, 32], sizes = [2, 16], strides = [1, 1]} : vector<2x128xf32> to vector<2x16xf32>
    %1304 = vector.extract_strided_slice %1300 {offsets = [0, 48], sizes = [2, 16], strides = [1, 1]} : vector<2x128xf32> to vector<2x16xf32>
    %1305 = vector.extract_strided_slice %1300 {offsets = [0, 64], sizes = [2, 16], strides = [1, 1]} : vector<2x128xf32> to vector<2x16xf32>
    %1306 = vector.extract_strided_slice %1300 {offsets = [0, 80], sizes = [2, 16], strides = [1, 1]} : vector<2x128xf32> to vector<2x16xf32>
    %1307 = vector.extract_strided_slice %1300 {offsets = [0, 96], sizes = [2, 16], strides = [1, 1]} : vector<2x128xf32> to vector<2x16xf32>
    %1308 = vector.extract_strided_slice %1300 {offsets = [0, 112], sizes = [2, 16], strides = [1, 1]} : vector<2x128xf32> to vector<2x16xf32>
    %1309 = arith.mulf %1302, %1279 : vector<2x16xf32>
    %1310 = arith.mulf %1301, %1304 : vector<2x16xf32>
    %1311 = arith.addf %1309, %1310 : vector<2x16xf32>
    %1312 = arith.mulf %1306, %1282 : vector<2x16xf32>
    %1313 = arith.mulf %1305, %1308 : vector<2x16xf32>
    %1314 = arith.addf %1312, %1313 : vector<2x16xf32>
    %1315 = math.tanh %1311 : vector<2x16xf32>
    %1316 = arith.mulf %1303, %1315 : vector<2x16xf32>
    %1317 = math.tanh %1314 : vector<2x16xf32>
    %1318 = arith.mulf %1307, %1317 : vector<2x16xf32>
    %c6_446 = arith.constant 6 : index
    %c0_447 = arith.constant 0 : index
    %1319 = vector.load %arg19[%c6_446, %c0_447] : memref<32x128xf32, #tpu.memory_space<vmem>>, vector<2x128xf32>
    %c24_448 = arith.constant 24 : index
    %c0_449 = arith.constant 0 : index
    %1320 = vector.load %arg19[%c24_448, %c0_449] : memref<32x128xf32, #tpu.memory_space<vmem>>, vector<2x128xf32>
    %1321 = vector.shape_cast %83 : vector<1x128xi1> to vector<1x128xi1>
    %1322 = vector.broadcast %1321 : vector<1x128xi1> to vector<2x128xi1>
    %1323 = arith.select %1322, %1319, %1320 : vector<2x128xi1>, vector<2x128xf32>
    %cst_450 = arith.constant dense<0.000000e+00> : vector<2x128xf32>
    %1324 = tpu.matmul %1316, %1216, %cst_450 {dimension_numbers = #tpu.dot_dimension_numbers<[1], [0], [0], [1], [0, 0, 1, 1], [], []>} : vector<2x16xf32>, vector<16x128xf32>, vector<2x128xf32> -> vector<2x128xf32>
    %1325 = arith.addf %1323, %1324 : vector<2x128xf32>
    %cst_451 = arith.constant dense<0.000000e+00> : vector<2x128xf32>
    %1326 = tpu.matmul %1318, %1218, %cst_451 {dimension_numbers = #tpu.dot_dimension_numbers<[1], [0], [0], [1], [0, 0, 1, 1], [], []>} : vector<2x16xf32>, vector<16x128xf32>, vector<2x128xf32> -> vector<2x128xf32>
    %1327 = arith.addf %1325, %1326 : vector<2x128xf32>
    %1328 = math.tanh %1327 : vector<2x128xf32>
    %1329 = vector.broadcast %78 : vector<1x128xf32> to vector<2x128xf32>
    %1330 = arith.mulf %1329, %1328 : vector<2x128xf32>
    %1331 = vector.broadcast %81 : vector<1x128xf32> to vector<2x128xf32>
    %1332 = arith.addf %1330, %1331 : vector<2x128xf32>
    %1333 = vector.extract_strided_slice %1332 {offsets = [0, 0], sizes = [2, 16], strides = [1, 1]} : vector<2x128xf32> to vector<2x16xf32>
    %1334 = vector.extract_strided_slice %1332 {offsets = [0, 16], sizes = [2, 16], strides = [1, 1]} : vector<2x128xf32> to vector<2x16xf32>
    %1335 = vector.extract_strided_slice %1332 {offsets = [0, 32], sizes = [2, 16], strides = [1, 1]} : vector<2x128xf32> to vector<2x16xf32>
    %1336 = vector.extract_strided_slice %1332 {offsets = [0, 48], sizes = [2, 16], strides = [1, 1]} : vector<2x128xf32> to vector<2x16xf32>
    %1337 = vector.extract_strided_slice %1332 {offsets = [0, 64], sizes = [2, 16], strides = [1, 1]} : vector<2x128xf32> to vector<2x16xf32>
    %1338 = vector.extract_strided_slice %1332 {offsets = [0, 80], sizes = [2, 16], strides = [1, 1]} : vector<2x128xf32> to vector<2x16xf32>
    %1339 = vector.extract_strided_slice %1332 {offsets = [0, 96], sizes = [2, 16], strides = [1, 1]} : vector<2x128xf32> to vector<2x16xf32>
    %1340 = vector.extract_strided_slice %1332 {offsets = [0, 112], sizes = [2, 16], strides = [1, 1]} : vector<2x128xf32> to vector<2x16xf32>
    %1341 = arith.mulf %1334, %1311 : vector<2x16xf32>
    %1342 = arith.mulf %1333, %1336 : vector<2x16xf32>
    %1343 = arith.addf %1341, %1342 : vector<2x16xf32>
    %1344 = arith.mulf %1338, %1314 : vector<2x16xf32>
    %1345 = arith.mulf %1337, %1340 : vector<2x16xf32>
    %1346 = arith.addf %1344, %1345 : vector<2x16xf32>
    %1347 = math.tanh %1343 : vector<2x16xf32>
    %1348 = arith.mulf %1335, %1347 : vector<2x16xf32>
    %1349 = math.tanh %1346 : vector<2x16xf32>
    %1350 = arith.mulf %1339, %1349 : vector<2x16xf32>
    %c8_452 = arith.constant 8 : index
    %c0_453 = arith.constant 0 : index
    %1351 = vector.load %arg19[%c8_452, %c0_453] : memref<32x128xf32, #tpu.memory_space<vmem>>, vector<2x128xf32>
    %c22_454 = arith.constant 22 : index
    %c0_455 = arith.constant 0 : index
    %1352 = vector.load %arg19[%c22_454, %c0_455] : memref<32x128xf32, #tpu.memory_space<vmem>>, vector<2x128xf32>
    %1353 = vector.shape_cast %83 : vector<1x128xi1> to vector<1x128xi1>
    %1354 = vector.broadcast %1353 : vector<1x128xi1> to vector<2x128xi1>
    %1355 = arith.select %1354, %1351, %1352 : vector<2x128xi1>, vector<2x128xf32>
    %cst_456 = arith.constant dense<0.000000e+00> : vector<2x128xf32>
    %1356 = tpu.matmul %1348, %1216, %cst_456 {dimension_numbers = #tpu.dot_dimension_numbers<[1], [0], [0], [1], [0, 0, 1, 1], [], []>} : vector<2x16xf32>, vector<16x128xf32>, vector<2x128xf32> -> vector<2x128xf32>
    %1357 = arith.addf %1355, %1356 : vector<2x128xf32>
    %cst_457 = arith.constant dense<0.000000e+00> : vector<2x128xf32>
    %1358 = tpu.matmul %1350, %1218, %cst_457 {dimension_numbers = #tpu.dot_dimension_numbers<[1], [0], [0], [1], [0, 0, 1, 1], [], []>} : vector<2x16xf32>, vector<16x128xf32>, vector<2x128xf32> -> vector<2x128xf32>
    %1359 = arith.addf %1357, %1358 : vector<2x128xf32>
    %1360 = math.tanh %1359 : vector<2x128xf32>
    %1361 = vector.broadcast %78 : vector<1x128xf32> to vector<2x128xf32>
    %1362 = arith.mulf %1361, %1360 : vector<2x128xf32>
    %1363 = vector.broadcast %81 : vector<1x128xf32> to vector<2x128xf32>
    %1364 = arith.addf %1362, %1363 : vector<2x128xf32>
    %1365 = vector.extract_strided_slice %1364 {offsets = [0, 0], sizes = [2, 16], strides = [1, 1]} : vector<2x128xf32> to vector<2x16xf32>
    %1366 = vector.extract_strided_slice %1364 {offsets = [0, 16], sizes = [2, 16], strides = [1, 1]} : vector<2x128xf32> to vector<2x16xf32>
    %1367 = vector.extract_strided_slice %1364 {offsets = [0, 32], sizes = [2, 16], strides = [1, 1]} : vector<2x128xf32> to vector<2x16xf32>
    %1368 = vector.extract_strided_slice %1364 {offsets = [0, 48], sizes = [2, 16], strides = [1, 1]} : vector<2x128xf32> to vector<2x16xf32>
    %1369 = vector.extract_strided_slice %1364 {offsets = [0, 64], sizes = [2, 16], strides = [1, 1]} : vector<2x128xf32> to vector<2x16xf32>
    %1370 = vector.extract_strided_slice %1364 {offsets = [0, 80], sizes = [2, 16], strides = [1, 1]} : vector<2x128xf32> to vector<2x16xf32>
    %1371 = vector.extract_strided_slice %1364 {offsets = [0, 96], sizes = [2, 16], strides = [1, 1]} : vector<2x128xf32> to vector<2x16xf32>
    %1372 = vector.extract_strided_slice %1364 {offsets = [0, 112], sizes = [2, 16], strides = [1, 1]} : vector<2x128xf32> to vector<2x16xf32>
    %1373 = arith.mulf %1366, %1343 : vector<2x16xf32>
    %1374 = arith.mulf %1365, %1368 : vector<2x16xf32>
    %1375 = arith.addf %1373, %1374 : vector<2x16xf32>
    %1376 = arith.mulf %1370, %1346 : vector<2x16xf32>
    %1377 = arith.mulf %1369, %1372 : vector<2x16xf32>
    %1378 = arith.addf %1376, %1377 : vector<2x16xf32>
    %1379 = math.tanh %1375 : vector<2x16xf32>
    %1380 = arith.mulf %1367, %1379 : vector<2x16xf32>
    %1381 = math.tanh %1378 : vector<2x16xf32>
    %1382 = arith.mulf %1371, %1381 : vector<2x16xf32>
    %c10_458 = arith.constant 10 : index
    %c0_459 = arith.constant 0 : index
    %1383 = vector.load %arg19[%c10_458, %c0_459] : memref<32x128xf32, #tpu.memory_space<vmem>>, vector<2x128xf32>
    %c20_460 = arith.constant 20 : index
    %c0_461 = arith.constant 0 : index
    %1384 = vector.load %arg19[%c20_460, %c0_461] : memref<32x128xf32, #tpu.memory_space<vmem>>, vector<2x128xf32>
    %1385 = vector.shape_cast %83 : vector<1x128xi1> to vector<1x128xi1>
    %1386 = vector.broadcast %1385 : vector<1x128xi1> to vector<2x128xi1>
    %1387 = arith.select %1386, %1383, %1384 : vector<2x128xi1>, vector<2x128xf32>
    %cst_462 = arith.constant dense<0.000000e+00> : vector<2x128xf32>
    %1388 = tpu.matmul %1380, %1216, %cst_462 {dimension_numbers = #tpu.dot_dimension_numbers<[1], [0], [0], [1], [0, 0, 1, 1], [], []>} : vector<2x16xf32>, vector<16x128xf32>, vector<2x128xf32> -> vector<2x128xf32>
    %1389 = arith.addf %1387, %1388 : vector<2x128xf32>
    %cst_463 = arith.constant dense<0.000000e+00> : vector<2x128xf32>
    %1390 = tpu.matmul %1382, %1218, %cst_463 {dimension_numbers = #tpu.dot_dimension_numbers<[1], [0], [0], [1], [0, 0, 1, 1], [], []>} : vector<2x16xf32>, vector<16x128xf32>, vector<2x128xf32> -> vector<2x128xf32>
    %1391 = arith.addf %1389, %1390 : vector<2x128xf32>
    %1392 = math.tanh %1391 : vector<2x128xf32>
    %1393 = vector.broadcast %78 : vector<1x128xf32> to vector<2x128xf32>
    %1394 = arith.mulf %1393, %1392 : vector<2x128xf32>
    %1395 = vector.broadcast %81 : vector<1x128xf32> to vector<2x128xf32>
    %1396 = arith.addf %1394, %1395 : vector<2x128xf32>
    %1397 = vector.extract_strided_slice %1396 {offsets = [0, 0], sizes = [2, 16], strides = [1, 1]} : vector<2x128xf32> to vector<2x16xf32>
    %1398 = vector.extract_strided_slice %1396 {offsets = [0, 16], sizes = [2, 16], strides = [1, 1]} : vector<2x128xf32> to vector<2x16xf32>
    %1399 = vector.extract_strided_slice %1396 {offsets = [0, 32], sizes = [2, 16], strides = [1, 1]} : vector<2x128xf32> to vector<2x16xf32>
    %1400 = vector.extract_strided_slice %1396 {offsets = [0, 48], sizes = [2, 16], strides = [1, 1]} : vector<2x128xf32> to vector<2x16xf32>
    %1401 = vector.extract_strided_slice %1396 {offsets = [0, 64], sizes = [2, 16], strides = [1, 1]} : vector<2x128xf32> to vector<2x16xf32>
    %1402 = vector.extract_strided_slice %1396 {offsets = [0, 80], sizes = [2, 16], strides = [1, 1]} : vector<2x128xf32> to vector<2x16xf32>
    %1403 = vector.extract_strided_slice %1396 {offsets = [0, 96], sizes = [2, 16], strides = [1, 1]} : vector<2x128xf32> to vector<2x16xf32>
    %1404 = vector.extract_strided_slice %1396 {offsets = [0, 112], sizes = [2, 16], strides = [1, 1]} : vector<2x128xf32> to vector<2x16xf32>
    %1405 = arith.mulf %1398, %1375 : vector<2x16xf32>
    %1406 = arith.mulf %1397, %1400 : vector<2x16xf32>
    %1407 = arith.addf %1405, %1406 : vector<2x16xf32>
    %1408 = arith.mulf %1402, %1378 : vector<2x16xf32>
    %1409 = arith.mulf %1401, %1404 : vector<2x16xf32>
    %1410 = arith.addf %1408, %1409 : vector<2x16xf32>
    %1411 = math.tanh %1407 : vector<2x16xf32>
    %1412 = arith.mulf %1399, %1411 : vector<2x16xf32>
    %1413 = math.tanh %1410 : vector<2x16xf32>
    %1414 = arith.mulf %1403, %1413 : vector<2x16xf32>
    %c12_464 = arith.constant 12 : index
    %c0_465 = arith.constant 0 : index
    %1415 = vector.load %arg19[%c12_464, %c0_465] : memref<32x128xf32, #tpu.memory_space<vmem>>, vector<2x128xf32>
    %c18_466 = arith.constant 18 : index
    %c0_467 = arith.constant 0 : index
    %1416 = vector.load %arg19[%c18_466, %c0_467] : memref<32x128xf32, #tpu.memory_space<vmem>>, vector<2x128xf32>
    %1417 = vector.shape_cast %83 : vector<1x128xi1> to vector<1x128xi1>
    %1418 = vector.broadcast %1417 : vector<1x128xi1> to vector<2x128xi1>
    %1419 = arith.select %1418, %1415, %1416 : vector<2x128xi1>, vector<2x128xf32>
    %cst_468 = arith.constant dense<0.000000e+00> : vector<2x128xf32>
    %1420 = tpu.matmul %1412, %1216, %cst_468 {dimension_numbers = #tpu.dot_dimension_numbers<[1], [0], [0], [1], [0, 0, 1, 1], [], []>} : vector<2x16xf32>, vector<16x128xf32>, vector<2x128xf32> -> vector<2x128xf32>
    %1421 = arith.addf %1419, %1420 : vector<2x128xf32>
    %cst_469 = arith.constant dense<0.000000e+00> : vector<2x128xf32>
    %1422 = tpu.matmul %1414, %1218, %cst_469 {dimension_numbers = #tpu.dot_dimension_numbers<[1], [0], [0], [1], [0, 0, 1, 1], [], []>} : vector<2x16xf32>, vector<16x128xf32>, vector<2x128xf32> -> vector<2x128xf32>
    %1423 = arith.addf %1421, %1422 : vector<2x128xf32>
    %1424 = math.tanh %1423 : vector<2x128xf32>
    %1425 = vector.broadcast %78 : vector<1x128xf32> to vector<2x128xf32>
    %1426 = arith.mulf %1425, %1424 : vector<2x128xf32>
    %1427 = vector.broadcast %81 : vector<1x128xf32> to vector<2x128xf32>
    %1428 = arith.addf %1426, %1427 : vector<2x128xf32>
    %1429 = vector.extract_strided_slice %1428 {offsets = [0, 0], sizes = [2, 16], strides = [1, 1]} : vector<2x128xf32> to vector<2x16xf32>
    %1430 = vector.extract_strided_slice %1428 {offsets = [0, 16], sizes = [2, 16], strides = [1, 1]} : vector<2x128xf32> to vector<2x16xf32>
    %1431 = vector.extract_strided_slice %1428 {offsets = [0, 32], sizes = [2, 16], strides = [1, 1]} : vector<2x128xf32> to vector<2x16xf32>
    %1432 = vector.extract_strided_slice %1428 {offsets = [0, 48], sizes = [2, 16], strides = [1, 1]} : vector<2x128xf32> to vector<2x16xf32>
    %1433 = vector.extract_strided_slice %1428 {offsets = [0, 64], sizes = [2, 16], strides = [1, 1]} : vector<2x128xf32> to vector<2x16xf32>
    %1434 = vector.extract_strided_slice %1428 {offsets = [0, 80], sizes = [2, 16], strides = [1, 1]} : vector<2x128xf32> to vector<2x16xf32>
    %1435 = vector.extract_strided_slice %1428 {offsets = [0, 96], sizes = [2, 16], strides = [1, 1]} : vector<2x128xf32> to vector<2x16xf32>
    %1436 = vector.extract_strided_slice %1428 {offsets = [0, 112], sizes = [2, 16], strides = [1, 1]} : vector<2x128xf32> to vector<2x16xf32>
    %1437 = arith.mulf %1430, %1407 : vector<2x16xf32>
    %1438 = arith.mulf %1429, %1432 : vector<2x16xf32>
    %1439 = arith.addf %1437, %1438 : vector<2x16xf32>
    %1440 = arith.mulf %1434, %1410 : vector<2x16xf32>
    %1441 = arith.mulf %1433, %1436 : vector<2x16xf32>
    %1442 = arith.addf %1440, %1441 : vector<2x16xf32>
    %1443 = math.tanh %1439 : vector<2x16xf32>
    %1444 = arith.mulf %1431, %1443 : vector<2x16xf32>
    %1445 = math.tanh %1442 : vector<2x16xf32>
    %1446 = arith.mulf %1435, %1445 : vector<2x16xf32>
    %c14_470 = arith.constant 14 : index
    %c0_471 = arith.constant 0 : index
    %1447 = vector.load %arg19[%c14_470, %c0_471] : memref<32x128xf32, #tpu.memory_space<vmem>>, vector<2x128xf32>
    %c16_472 = arith.constant 16 : index
    %c0_473 = arith.constant 0 : index
    %1448 = vector.load %arg19[%c16_472, %c0_473] : memref<32x128xf32, #tpu.memory_space<vmem>>, vector<2x128xf32>
    %1449 = vector.shape_cast %83 : vector<1x128xi1> to vector<1x128xi1>
    %1450 = vector.broadcast %1449 : vector<1x128xi1> to vector<2x128xi1>
    %1451 = arith.select %1450, %1447, %1448 : vector<2x128xi1>, vector<2x128xf32>
    %cst_474 = arith.constant dense<0.000000e+00> : vector<2x128xf32>
    %1452 = tpu.matmul %1444, %1216, %cst_474 {dimension_numbers = #tpu.dot_dimension_numbers<[1], [0], [0], [1], [0, 0, 1, 1], [], []>} : vector<2x16xf32>, vector<16x128xf32>, vector<2x128xf32> -> vector<2x128xf32>
    %1453 = arith.addf %1451, %1452 : vector<2x128xf32>
    %cst_475 = arith.constant dense<0.000000e+00> : vector<2x128xf32>
    %1454 = tpu.matmul %1446, %1218, %cst_475 {dimension_numbers = #tpu.dot_dimension_numbers<[1], [0], [0], [1], [0, 0, 1, 1], [], []>} : vector<2x16xf32>, vector<16x128xf32>, vector<2x128xf32> -> vector<2x128xf32>
    %1455 = arith.addf %1453, %1454 : vector<2x128xf32>
    %1456 = math.tanh %1455 : vector<2x128xf32>
    %1457 = vector.broadcast %78 : vector<1x128xf32> to vector<2x128xf32>
    %1458 = arith.mulf %1457, %1456 : vector<2x128xf32>
    %1459 = vector.broadcast %81 : vector<1x128xf32> to vector<2x128xf32>
    %1460 = arith.addf %1458, %1459 : vector<2x128xf32>
    %1461 = vector.extract_strided_slice %1460 {offsets = [0, 0], sizes = [2, 16], strides = [1, 1]} : vector<2x128xf32> to vector<2x16xf32>
    %1462 = vector.extract_strided_slice %1460 {offsets = [0, 16], sizes = [2, 16], strides = [1, 1]} : vector<2x128xf32> to vector<2x16xf32>
    %1463 = vector.extract_strided_slice %1460 {offsets = [0, 32], sizes = [2, 16], strides = [1, 1]} : vector<2x128xf32> to vector<2x16xf32>
    %1464 = vector.extract_strided_slice %1460 {offsets = [0, 48], sizes = [2, 16], strides = [1, 1]} : vector<2x128xf32> to vector<2x16xf32>
    %1465 = vector.extract_strided_slice %1460 {offsets = [0, 64], sizes = [2, 16], strides = [1, 1]} : vector<2x128xf32> to vector<2x16xf32>
    %1466 = vector.extract_strided_slice %1460 {offsets = [0, 80], sizes = [2, 16], strides = [1, 1]} : vector<2x128xf32> to vector<2x16xf32>
    %1467 = vector.extract_strided_slice %1460 {offsets = [0, 96], sizes = [2, 16], strides = [1, 1]} : vector<2x128xf32> to vector<2x16xf32>
    %1468 = vector.extract_strided_slice %1460 {offsets = [0, 112], sizes = [2, 16], strides = [1, 1]} : vector<2x128xf32> to vector<2x16xf32>
    %1469 = arith.mulf %1462, %1439 : vector<2x16xf32>
    %1470 = arith.mulf %1461, %1464 : vector<2x16xf32>
    %1471 = arith.addf %1469, %1470 : vector<2x16xf32>
    %1472 = arith.mulf %1466, %1442 : vector<2x16xf32>
    %1473 = arith.mulf %1465, %1468 : vector<2x16xf32>
    %1474 = arith.addf %1472, %1473 : vector<2x16xf32>
    %1475 = math.tanh %1471 : vector<2x16xf32>
    %1476 = arith.mulf %1463, %1475 : vector<2x16xf32>
    %1477 = math.tanh %1474 : vector<2x16xf32>
    %1478 = arith.mulf %1467, %1477 : vector<2x16xf32>
    %c16_476 = arith.constant 16 : index
    %c0_477 = arith.constant 0 : index
    %1479 = vector.load %arg19[%c16_476, %c0_477] : memref<32x128xf32, #tpu.memory_space<vmem>>, vector<2x128xf32>
    %c14_478 = arith.constant 14 : index
    %c0_479 = arith.constant 0 : index
    %1480 = vector.load %arg19[%c14_478, %c0_479] : memref<32x128xf32, #tpu.memory_space<vmem>>, vector<2x128xf32>
    %1481 = vector.shape_cast %83 : vector<1x128xi1> to vector<1x128xi1>
    %1482 = vector.broadcast %1481 : vector<1x128xi1> to vector<2x128xi1>
    %1483 = arith.select %1482, %1479, %1480 : vector<2x128xi1>, vector<2x128xf32>
    %cst_480 = arith.constant dense<0.000000e+00> : vector<2x128xf32>
    %1484 = tpu.matmul %1476, %1216, %cst_480 {dimension_numbers = #tpu.dot_dimension_numbers<[1], [0], [0], [1], [0, 0, 1, 1], [], []>} : vector<2x16xf32>, vector<16x128xf32>, vector<2x128xf32> -> vector<2x128xf32>
    %1485 = arith.addf %1483, %1484 : vector<2x128xf32>
    %cst_481 = arith.constant dense<0.000000e+00> : vector<2x128xf32>
    %1486 = tpu.matmul %1478, %1218, %cst_481 {dimension_numbers = #tpu.dot_dimension_numbers<[1], [0], [0], [1], [0, 0, 1, 1], [], []>} : vector<2x16xf32>, vector<16x128xf32>, vector<2x128xf32> -> vector<2x128xf32>
    %1487 = arith.addf %1485, %1486 : vector<2x128xf32>
    %1488 = math.tanh %1487 : vector<2x128xf32>
    %1489 = vector.broadcast %78 : vector<1x128xf32> to vector<2x128xf32>
    %1490 = arith.mulf %1489, %1488 : vector<2x128xf32>
    %1491 = vector.broadcast %81 : vector<1x128xf32> to vector<2x128xf32>
    %1492 = arith.addf %1490, %1491 : vector<2x128xf32>
    %1493 = vector.extract_strided_slice %1492 {offsets = [0, 0], sizes = [2, 16], strides = [1, 1]} : vector<2x128xf32> to vector<2x16xf32>
    %1494 = vector.extract_strided_slice %1492 {offsets = [0, 16], sizes = [2, 16], strides = [1, 1]} : vector<2x128xf32> to vector<2x16xf32>
    %1495 = vector.extract_strided_slice %1492 {offsets = [0, 32], sizes = [2, 16], strides = [1, 1]} : vector<2x128xf32> to vector<2x16xf32>
    %1496 = vector.extract_strided_slice %1492 {offsets = [0, 48], sizes = [2, 16], strides = [1, 1]} : vector<2x128xf32> to vector<2x16xf32>
    %1497 = vector.extract_strided_slice %1492 {offsets = [0, 64], sizes = [2, 16], strides = [1, 1]} : vector<2x128xf32> to vector<2x16xf32>
    %1498 = vector.extract_strided_slice %1492 {offsets = [0, 80], sizes = [2, 16], strides = [1, 1]} : vector<2x128xf32> to vector<2x16xf32>
    %1499 = vector.extract_strided_slice %1492 {offsets = [0, 96], sizes = [2, 16], strides = [1, 1]} : vector<2x128xf32> to vector<2x16xf32>
    %1500 = vector.extract_strided_slice %1492 {offsets = [0, 112], sizes = [2, 16], strides = [1, 1]} : vector<2x128xf32> to vector<2x16xf32>
    %1501 = arith.mulf %1494, %1471 : vector<2x16xf32>
    %1502 = arith.mulf %1493, %1496 : vector<2x16xf32>
    %1503 = arith.addf %1501, %1502 : vector<2x16xf32>
    %1504 = arith.mulf %1498, %1474 : vector<2x16xf32>
    %1505 = arith.mulf %1497, %1500 : vector<2x16xf32>
    %1506 = arith.addf %1504, %1505 : vector<2x16xf32>
    %1507 = math.tanh %1503 : vector<2x16xf32>
    %1508 = arith.mulf %1495, %1507 : vector<2x16xf32>
    %1509 = math.tanh %1506 : vector<2x16xf32>
    %1510 = arith.mulf %1499, %1509 : vector<2x16xf32>
    %c18_482 = arith.constant 18 : index
    %c0_483 = arith.constant 0 : index
    %1511 = vector.load %arg19[%c18_482, %c0_483] : memref<32x128xf32, #tpu.memory_space<vmem>>, vector<2x128xf32>
    %c12_484 = arith.constant 12 : index
    %c0_485 = arith.constant 0 : index
    %1512 = vector.load %arg19[%c12_484, %c0_485] : memref<32x128xf32, #tpu.memory_space<vmem>>, vector<2x128xf32>
    %1513 = vector.shape_cast %83 : vector<1x128xi1> to vector<1x128xi1>
    %1514 = vector.broadcast %1513 : vector<1x128xi1> to vector<2x128xi1>
    %1515 = arith.select %1514, %1511, %1512 : vector<2x128xi1>, vector<2x128xf32>
    %cst_486 = arith.constant dense<0.000000e+00> : vector<2x128xf32>
    %1516 = tpu.matmul %1508, %1216, %cst_486 {dimension_numbers = #tpu.dot_dimension_numbers<[1], [0], [0], [1], [0, 0, 1, 1], [], []>} : vector<2x16xf32>, vector<16x128xf32>, vector<2x128xf32> -> vector<2x128xf32>
    %1517 = arith.addf %1515, %1516 : vector<2x128xf32>
    %cst_487 = arith.constant dense<0.000000e+00> : vector<2x128xf32>
    %1518 = tpu.matmul %1510, %1218, %cst_487 {dimension_numbers = #tpu.dot_dimension_numbers<[1], [0], [0], [1], [0, 0, 1, 1], [], []>} : vector<2x16xf32>, vector<16x128xf32>, vector<2x128xf32> -> vector<2x128xf32>
    %1519 = arith.addf %1517, %1518 : vector<2x128xf32>
    %1520 = math.tanh %1519 : vector<2x128xf32>
    %1521 = vector.broadcast %78 : vector<1x128xf32> to vector<2x128xf32>
    %1522 = arith.mulf %1521, %1520 : vector<2x128xf32>
    %1523 = vector.broadcast %81 : vector<1x128xf32> to vector<2x128xf32>
    %1524 = arith.addf %1522, %1523 : vector<2x128xf32>
    %1525 = vector.extract_strided_slice %1524 {offsets = [0, 0], sizes = [2, 16], strides = [1, 1]} : vector<2x128xf32> to vector<2x16xf32>
    %1526 = vector.extract_strided_slice %1524 {offsets = [0, 16], sizes = [2, 16], strides = [1, 1]} : vector<2x128xf32> to vector<2x16xf32>
    %1527 = vector.extract_strided_slice %1524 {offsets = [0, 32], sizes = [2, 16], strides = [1, 1]} : vector<2x128xf32> to vector<2x16xf32>
    %1528 = vector.extract_strided_slice %1524 {offsets = [0, 48], sizes = [2, 16], strides = [1, 1]} : vector<2x128xf32> to vector<2x16xf32>
    %1529 = vector.extract_strided_slice %1524 {offsets = [0, 64], sizes = [2, 16], strides = [1, 1]} : vector<2x128xf32> to vector<2x16xf32>
    %1530 = vector.extract_strided_slice %1524 {offsets = [0, 80], sizes = [2, 16], strides = [1, 1]} : vector<2x128xf32> to vector<2x16xf32>
    %1531 = vector.extract_strided_slice %1524 {offsets = [0, 96], sizes = [2, 16], strides = [1, 1]} : vector<2x128xf32> to vector<2x16xf32>
    %1532 = vector.extract_strided_slice %1524 {offsets = [0, 112], sizes = [2, 16], strides = [1, 1]} : vector<2x128xf32> to vector<2x16xf32>
    %1533 = arith.mulf %1526, %1503 : vector<2x16xf32>
    %1534 = arith.mulf %1525, %1528 : vector<2x16xf32>
    %1535 = arith.addf %1533, %1534 : vector<2x16xf32>
    %1536 = arith.mulf %1530, %1506 : vector<2x16xf32>
    %1537 = arith.mulf %1529, %1532 : vector<2x16xf32>
    %1538 = arith.addf %1536, %1537 : vector<2x16xf32>
    %1539 = math.tanh %1535 : vector<2x16xf32>
    %1540 = arith.mulf %1527, %1539 : vector<2x16xf32>
    %1541 = math.tanh %1538 : vector<2x16xf32>
    %1542 = arith.mulf %1531, %1541 : vector<2x16xf32>
    %c20_488 = arith.constant 20 : index
    %c0_489 = arith.constant 0 : index
    %1543 = vector.load %arg19[%c20_488, %c0_489] : memref<32x128xf32, #tpu.memory_space<vmem>>, vector<2x128xf32>
    %c10_490 = arith.constant 10 : index
    %c0_491 = arith.constant 0 : index
    %1544 = vector.load %arg19[%c10_490, %c0_491] : memref<32x128xf32, #tpu.memory_space<vmem>>, vector<2x128xf32>
    %1545 = vector.shape_cast %83 : vector<1x128xi1> to vector<1x128xi1>
    %1546 = vector.broadcast %1545 : vector<1x128xi1> to vector<2x128xi1>
    %1547 = arith.select %1546, %1543, %1544 : vector<2x128xi1>, vector<2x128xf32>
    %cst_492 = arith.constant dense<0.000000e+00> : vector<2x128xf32>
    %1548 = tpu.matmul %1540, %1216, %cst_492 {dimension_numbers = #tpu.dot_dimension_numbers<[1], [0], [0], [1], [0, 0, 1, 1], [], []>} : vector<2x16xf32>, vector<16x128xf32>, vector<2x128xf32> -> vector<2x128xf32>
    %1549 = arith.addf %1547, %1548 : vector<2x128xf32>
    %cst_493 = arith.constant dense<0.000000e+00> : vector<2x128xf32>
    %1550 = tpu.matmul %1542, %1218, %cst_493 {dimension_numbers = #tpu.dot_dimension_numbers<[1], [0], [0], [1], [0, 0, 1, 1], [], []>} : vector<2x16xf32>, vector<16x128xf32>, vector<2x128xf32> -> vector<2x128xf32>
    %1551 = arith.addf %1549, %1550 : vector<2x128xf32>
    %1552 = math.tanh %1551 : vector<2x128xf32>
    %1553 = vector.broadcast %78 : vector<1x128xf32> to vector<2x128xf32>
    %1554 = arith.mulf %1553, %1552 : vector<2x128xf32>
    %1555 = vector.broadcast %81 : vector<1x128xf32> to vector<2x128xf32>
    %1556 = arith.addf %1554, %1555 : vector<2x128xf32>
    %1557 = vector.extract_strided_slice %1556 {offsets = [0, 0], sizes = [2, 16], strides = [1, 1]} : vector<2x128xf32> to vector<2x16xf32>
    %1558 = vector.extract_strided_slice %1556 {offsets = [0, 16], sizes = [2, 16], strides = [1, 1]} : vector<2x128xf32> to vector<2x16xf32>
    %1559 = vector.extract_strided_slice %1556 {offsets = [0, 32], sizes = [2, 16], strides = [1, 1]} : vector<2x128xf32> to vector<2x16xf32>
    %1560 = vector.extract_strided_slice %1556 {offsets = [0, 48], sizes = [2, 16], strides = [1, 1]} : vector<2x128xf32> to vector<2x16xf32>
    %1561 = vector.extract_strided_slice %1556 {offsets = [0, 64], sizes = [2, 16], strides = [1, 1]} : vector<2x128xf32> to vector<2x16xf32>
    %1562 = vector.extract_strided_slice %1556 {offsets = [0, 80], sizes = [2, 16], strides = [1, 1]} : vector<2x128xf32> to vector<2x16xf32>
    %1563 = vector.extract_strided_slice %1556 {offsets = [0, 96], sizes = [2, 16], strides = [1, 1]} : vector<2x128xf32> to vector<2x16xf32>
    %1564 = vector.extract_strided_slice %1556 {offsets = [0, 112], sizes = [2, 16], strides = [1, 1]} : vector<2x128xf32> to vector<2x16xf32>
    %1565 = arith.mulf %1558, %1535 : vector<2x16xf32>
    %1566 = arith.mulf %1557, %1560 : vector<2x16xf32>
    %1567 = arith.addf %1565, %1566 : vector<2x16xf32>
    %1568 = arith.mulf %1562, %1538 : vector<2x16xf32>
    %1569 = arith.mulf %1561, %1564 : vector<2x16xf32>
    %1570 = arith.addf %1568, %1569 : vector<2x16xf32>
    %1571 = math.tanh %1567 : vector<2x16xf32>
    %1572 = arith.mulf %1559, %1571 : vector<2x16xf32>
    %1573 = math.tanh %1570 : vector<2x16xf32>
    %1574 = arith.mulf %1563, %1573 : vector<2x16xf32>
    %c22_494 = arith.constant 22 : index
    %c0_495 = arith.constant 0 : index
    %1575 = vector.load %arg19[%c22_494, %c0_495] : memref<32x128xf32, #tpu.memory_space<vmem>>, vector<2x128xf32>
    %c8_496 = arith.constant 8 : index
    %c0_497 = arith.constant 0 : index
    %1576 = vector.load %arg19[%c8_496, %c0_497] : memref<32x128xf32, #tpu.memory_space<vmem>>, vector<2x128xf32>
    %1577 = vector.shape_cast %83 : vector<1x128xi1> to vector<1x128xi1>
    %1578 = vector.broadcast %1577 : vector<1x128xi1> to vector<2x128xi1>
    %1579 = arith.select %1578, %1575, %1576 : vector<2x128xi1>, vector<2x128xf32>
    %cst_498 = arith.constant dense<0.000000e+00> : vector<2x128xf32>
    %1580 = tpu.matmul %1572, %1216, %cst_498 {dimension_numbers = #tpu.dot_dimension_numbers<[1], [0], [0], [1], [0, 0, 1, 1], [], []>} : vector<2x16xf32>, vector<16x128xf32>, vector<2x128xf32> -> vector<2x128xf32>
    %1581 = arith.addf %1579, %1580 : vector<2x128xf32>
    %cst_499 = arith.constant dense<0.000000e+00> : vector<2x128xf32>
    %1582 = tpu.matmul %1574, %1218, %cst_499 {dimension_numbers = #tpu.dot_dimension_numbers<[1], [0], [0], [1], [0, 0, 1, 1], [], []>} : vector<2x16xf32>, vector<16x128xf32>, vector<2x128xf32> -> vector<2x128xf32>
    %1583 = arith.addf %1581, %1582 : vector<2x128xf32>
    %1584 = math.tanh %1583 : vector<2x128xf32>
    %1585 = vector.broadcast %78 : vector<1x128xf32> to vector<2x128xf32>
    %1586 = arith.mulf %1585, %1584 : vector<2x128xf32>
    %1587 = vector.broadcast %81 : vector<1x128xf32> to vector<2x128xf32>
    %1588 = arith.addf %1586, %1587 : vector<2x128xf32>
    %1589 = vector.extract_strided_slice %1588 {offsets = [0, 0], sizes = [2, 16], strides = [1, 1]} : vector<2x128xf32> to vector<2x16xf32>
    %1590 = vector.extract_strided_slice %1588 {offsets = [0, 16], sizes = [2, 16], strides = [1, 1]} : vector<2x128xf32> to vector<2x16xf32>
    %1591 = vector.extract_strided_slice %1588 {offsets = [0, 32], sizes = [2, 16], strides = [1, 1]} : vector<2x128xf32> to vector<2x16xf32>
    %1592 = vector.extract_strided_slice %1588 {offsets = [0, 48], sizes = [2, 16], strides = [1, 1]} : vector<2x128xf32> to vector<2x16xf32>
    %1593 = vector.extract_strided_slice %1588 {offsets = [0, 64], sizes = [2, 16], strides = [1, 1]} : vector<2x128xf32> to vector<2x16xf32>
    %1594 = vector.extract_strided_slice %1588 {offsets = [0, 80], sizes = [2, 16], strides = [1, 1]} : vector<2x128xf32> to vector<2x16xf32>
    %1595 = vector.extract_strided_slice %1588 {offsets = [0, 96], sizes = [2, 16], strides = [1, 1]} : vector<2x128xf32> to vector<2x16xf32>
    %1596 = vector.extract_strided_slice %1588 {offsets = [0, 112], sizes = [2, 16], strides = [1, 1]} : vector<2x128xf32> to vector<2x16xf32>
    %1597 = arith.mulf %1590, %1567 : vector<2x16xf32>
    %1598 = arith.mulf %1589, %1592 : vector<2x16xf32>
    %1599 = arith.addf %1597, %1598 : vector<2x16xf32>
    %1600 = arith.mulf %1594, %1570 : vector<2x16xf32>
    %1601 = arith.mulf %1593, %1596 : vector<2x16xf32>
    %1602 = arith.addf %1600, %1601 : vector<2x16xf32>
    %1603 = math.tanh %1599 : vector<2x16xf32>
    %1604 = arith.mulf %1591, %1603 : vector<2x16xf32>
    %1605 = math.tanh %1602 : vector<2x16xf32>
    %1606 = arith.mulf %1595, %1605 : vector<2x16xf32>
    %c24_500 = arith.constant 24 : index
    %c0_501 = arith.constant 0 : index
    %1607 = vector.load %arg19[%c24_500, %c0_501] : memref<32x128xf32, #tpu.memory_space<vmem>>, vector<2x128xf32>
    %c6_502 = arith.constant 6 : index
    %c0_503 = arith.constant 0 : index
    %1608 = vector.load %arg19[%c6_502, %c0_503] : memref<32x128xf32, #tpu.memory_space<vmem>>, vector<2x128xf32>
    %1609 = vector.shape_cast %83 : vector<1x128xi1> to vector<1x128xi1>
    %1610 = vector.broadcast %1609 : vector<1x128xi1> to vector<2x128xi1>
    %1611 = arith.select %1610, %1607, %1608 : vector<2x128xi1>, vector<2x128xf32>
    %cst_504 = arith.constant dense<0.000000e+00> : vector<2x128xf32>
    %1612 = tpu.matmul %1604, %1216, %cst_504 {dimension_numbers = #tpu.dot_dimension_numbers<[1], [0], [0], [1], [0, 0, 1, 1], [], []>} : vector<2x16xf32>, vector<16x128xf32>, vector<2x128xf32> -> vector<2x128xf32>
    %1613 = arith.addf %1611, %1612 : vector<2x128xf32>
    %cst_505 = arith.constant dense<0.000000e+00> : vector<2x128xf32>
    %1614 = tpu.matmul %1606, %1218, %cst_505 {dimension_numbers = #tpu.dot_dimension_numbers<[1], [0], [0], [1], [0, 0, 1, 1], [], []>} : vector<2x16xf32>, vector<16x128xf32>, vector<2x128xf32> -> vector<2x128xf32>
    %1615 = arith.addf %1613, %1614 : vector<2x128xf32>
    %1616 = math.tanh %1615 : vector<2x128xf32>
    %1617 = vector.broadcast %78 : vector<1x128xf32> to vector<2x128xf32>
    %1618 = arith.mulf %1617, %1616 : vector<2x128xf32>
    %1619 = vector.broadcast %81 : vector<1x128xf32> to vector<2x128xf32>
    %1620 = arith.addf %1618, %1619 : vector<2x128xf32>
    %1621 = vector.extract_strided_slice %1620 {offsets = [0, 0], sizes = [2, 16], strides = [1, 1]} : vector<2x128xf32> to vector<2x16xf32>
    %1622 = vector.extract_strided_slice %1620 {offsets = [0, 16], sizes = [2, 16], strides = [1, 1]} : vector<2x128xf32> to vector<2x16xf32>
    %1623 = vector.extract_strided_slice %1620 {offsets = [0, 32], sizes = [2, 16], strides = [1, 1]} : vector<2x128xf32> to vector<2x16xf32>
    %1624 = vector.extract_strided_slice %1620 {offsets = [0, 48], sizes = [2, 16], strides = [1, 1]} : vector<2x128xf32> to vector<2x16xf32>
    %1625 = vector.extract_strided_slice %1620 {offsets = [0, 64], sizes = [2, 16], strides = [1, 1]} : vector<2x128xf32> to vector<2x16xf32>
    %1626 = vector.extract_strided_slice %1620 {offsets = [0, 80], sizes = [2, 16], strides = [1, 1]} : vector<2x128xf32> to vector<2x16xf32>
    %1627 = vector.extract_strided_slice %1620 {offsets = [0, 96], sizes = [2, 16], strides = [1, 1]} : vector<2x128xf32> to vector<2x16xf32>
    %1628 = vector.extract_strided_slice %1620 {offsets = [0, 112], sizes = [2, 16], strides = [1, 1]} : vector<2x128xf32> to vector<2x16xf32>
    %1629 = arith.mulf %1622, %1599 : vector<2x16xf32>
    %1630 = arith.mulf %1621, %1624 : vector<2x16xf32>
    %1631 = arith.addf %1629, %1630 : vector<2x16xf32>
    %1632 = arith.mulf %1626, %1602 : vector<2x16xf32>
    %1633 = arith.mulf %1625, %1628 : vector<2x16xf32>
    %1634 = arith.addf %1632, %1633 : vector<2x16xf32>
    %1635 = math.tanh %1631 : vector<2x16xf32>
    %1636 = arith.mulf %1623, %1635 : vector<2x16xf32>
    %1637 = math.tanh %1634 : vector<2x16xf32>
    %1638 = arith.mulf %1627, %1637 : vector<2x16xf32>
    %c26_506 = arith.constant 26 : index
    %c0_507 = arith.constant 0 : index
    %1639 = vector.load %arg19[%c26_506, %c0_507] : memref<32x128xf32, #tpu.memory_space<vmem>>, vector<2x128xf32>
    %c4_508 = arith.constant 4 : index
    %c0_509 = arith.constant 0 : index
    %1640 = vector.load %arg19[%c4_508, %c0_509] : memref<32x128xf32, #tpu.memory_space<vmem>>, vector<2x128xf32>
    %1641 = vector.shape_cast %83 : vector<1x128xi1> to vector<1x128xi1>
    %1642 = vector.broadcast %1641 : vector<1x128xi1> to vector<2x128xi1>
    %1643 = arith.select %1642, %1639, %1640 : vector<2x128xi1>, vector<2x128xf32>
    %cst_510 = arith.constant dense<0.000000e+00> : vector<2x128xf32>
    %1644 = tpu.matmul %1636, %1216, %cst_510 {dimension_numbers = #tpu.dot_dimension_numbers<[1], [0], [0], [1], [0, 0, 1, 1], [], []>} : vector<2x16xf32>, vector<16x128xf32>, vector<2x128xf32> -> vector<2x128xf32>
    %1645 = arith.addf %1643, %1644 : vector<2x128xf32>
    %cst_511 = arith.constant dense<0.000000e+00> : vector<2x128xf32>
    %1646 = tpu.matmul %1638, %1218, %cst_511 {dimension_numbers = #tpu.dot_dimension_numbers<[1], [0], [0], [1], [0, 0, 1, 1], [], []>} : vector<2x16xf32>, vector<16x128xf32>, vector<2x128xf32> -> vector<2x128xf32>
    %1647 = arith.addf %1645, %1646 : vector<2x128xf32>
    %1648 = math.tanh %1647 : vector<2x128xf32>
    %1649 = vector.broadcast %78 : vector<1x128xf32> to vector<2x128xf32>
    %1650 = arith.mulf %1649, %1648 : vector<2x128xf32>
    %1651 = vector.broadcast %81 : vector<1x128xf32> to vector<2x128xf32>
    %1652 = arith.addf %1650, %1651 : vector<2x128xf32>
    %1653 = vector.extract_strided_slice %1652 {offsets = [0, 0], sizes = [2, 16], strides = [1, 1]} : vector<2x128xf32> to vector<2x16xf32>
    %1654 = vector.extract_strided_slice %1652 {offsets = [0, 16], sizes = [2, 16], strides = [1, 1]} : vector<2x128xf32> to vector<2x16xf32>
    %1655 = vector.extract_strided_slice %1652 {offsets = [0, 32], sizes = [2, 16], strides = [1, 1]} : vector<2x128xf32> to vector<2x16xf32>
    %1656 = vector.extract_strided_slice %1652 {offsets = [0, 48], sizes = [2, 16], strides = [1, 1]} : vector<2x128xf32> to vector<2x16xf32>
    %1657 = vector.extract_strided_slice %1652 {offsets = [0, 64], sizes = [2, 16], strides = [1, 1]} : vector<2x128xf32> to vector<2x16xf32>
    %1658 = vector.extract_strided_slice %1652 {offsets = [0, 80], sizes = [2, 16], strides = [1, 1]} : vector<2x128xf32> to vector<2x16xf32>
    %1659 = vector.extract_strided_slice %1652 {offsets = [0, 96], sizes = [2, 16], strides = [1, 1]} : vector<2x128xf32> to vector<2x16xf32>
    %1660 = vector.extract_strided_slice %1652 {offsets = [0, 112], sizes = [2, 16], strides = [1, 1]} : vector<2x128xf32> to vector<2x16xf32>
    %1661 = arith.mulf %1654, %1631 : vector<2x16xf32>
    %1662 = arith.mulf %1653, %1656 : vector<2x16xf32>
    %1663 = arith.addf %1661, %1662 : vector<2x16xf32>
    %1664 = arith.mulf %1658, %1634 : vector<2x16xf32>
    %1665 = arith.mulf %1657, %1660 : vector<2x16xf32>
    %1666 = arith.addf %1664, %1665 : vector<2x16xf32>
    %1667 = math.tanh %1663 : vector<2x16xf32>
    %1668 = arith.mulf %1655, %1667 : vector<2x16xf32>
    %1669 = math.tanh %1666 : vector<2x16xf32>
    %1670 = arith.mulf %1659, %1669 : vector<2x16xf32>
    %c28_512 = arith.constant 28 : index
    %c0_513 = arith.constant 0 : index
    %1671 = vector.load %arg19[%c28_512, %c0_513] : memref<32x128xf32, #tpu.memory_space<vmem>>, vector<2x128xf32>
    %c2_514 = arith.constant 2 : index
    %c0_515 = arith.constant 0 : index
    %1672 = vector.load %arg19[%c2_514, %c0_515] : memref<32x128xf32, #tpu.memory_space<vmem>>, vector<2x128xf32>
    %1673 = vector.shape_cast %83 : vector<1x128xi1> to vector<1x128xi1>
    %1674 = vector.broadcast %1673 : vector<1x128xi1> to vector<2x128xi1>
    %1675 = arith.select %1674, %1671, %1672 : vector<2x128xi1>, vector<2x128xf32>
    %cst_516 = arith.constant dense<0.000000e+00> : vector<2x128xf32>
    %1676 = tpu.matmul %1668, %1216, %cst_516 {dimension_numbers = #tpu.dot_dimension_numbers<[1], [0], [0], [1], [0, 0, 1, 1], [], []>} : vector<2x16xf32>, vector<16x128xf32>, vector<2x128xf32> -> vector<2x128xf32>
    %1677 = arith.addf %1675, %1676 : vector<2x128xf32>
    %cst_517 = arith.constant dense<0.000000e+00> : vector<2x128xf32>
    %1678 = tpu.matmul %1670, %1218, %cst_517 {dimension_numbers = #tpu.dot_dimension_numbers<[1], [0], [0], [1], [0, 0, 1, 1], [], []>} : vector<2x16xf32>, vector<16x128xf32>, vector<2x128xf32> -> vector<2x128xf32>
    %1679 = arith.addf %1677, %1678 : vector<2x128xf32>
    %1680 = math.tanh %1679 : vector<2x128xf32>
    %1681 = vector.broadcast %78 : vector<1x128xf32> to vector<2x128xf32>
    %1682 = arith.mulf %1681, %1680 : vector<2x128xf32>
    %1683 = vector.broadcast %81 : vector<1x128xf32> to vector<2x128xf32>
    %1684 = arith.addf %1682, %1683 : vector<2x128xf32>
    %1685 = vector.extract_strided_slice %1684 {offsets = [0, 0], sizes = [2, 16], strides = [1, 1]} : vector<2x128xf32> to vector<2x16xf32>
    %1686 = vector.extract_strided_slice %1684 {offsets = [0, 16], sizes = [2, 16], strides = [1, 1]} : vector<2x128xf32> to vector<2x16xf32>
    %1687 = vector.extract_strided_slice %1684 {offsets = [0, 32], sizes = [2, 16], strides = [1, 1]} : vector<2x128xf32> to vector<2x16xf32>
    %1688 = vector.extract_strided_slice %1684 {offsets = [0, 48], sizes = [2, 16], strides = [1, 1]} : vector<2x128xf32> to vector<2x16xf32>
    %1689 = vector.extract_strided_slice %1684 {offsets = [0, 64], sizes = [2, 16], strides = [1, 1]} : vector<2x128xf32> to vector<2x16xf32>
    %1690 = vector.extract_strided_slice %1684 {offsets = [0, 80], sizes = [2, 16], strides = [1, 1]} : vector<2x128xf32> to vector<2x16xf32>
    %1691 = vector.extract_strided_slice %1684 {offsets = [0, 96], sizes = [2, 16], strides = [1, 1]} : vector<2x128xf32> to vector<2x16xf32>
    %1692 = vector.extract_strided_slice %1684 {offsets = [0, 112], sizes = [2, 16], strides = [1, 1]} : vector<2x128xf32> to vector<2x16xf32>
    %1693 = arith.mulf %1686, %1663 : vector<2x16xf32>
    %1694 = arith.mulf %1685, %1688 : vector<2x16xf32>
    %1695 = arith.addf %1693, %1694 : vector<2x16xf32>
    %1696 = arith.mulf %1690, %1666 : vector<2x16xf32>
    %1697 = arith.mulf %1689, %1692 : vector<2x16xf32>
    %1698 = arith.addf %1696, %1697 : vector<2x16xf32>
    %1699 = math.tanh %1695 : vector<2x16xf32>
    %1700 = arith.mulf %1687, %1699 : vector<2x16xf32>
    %1701 = math.tanh %1698 : vector<2x16xf32>
    %1702 = arith.mulf %1691, %1701 : vector<2x16xf32>
    %c30_518 = arith.constant 30 : index
    %c0_519 = arith.constant 0 : index
    %1703 = vector.load %arg19[%c30_518, %c0_519] : memref<32x128xf32, #tpu.memory_space<vmem>>, vector<2x128xf32>
    %c0_520 = arith.constant 0 : index
    %c0_521 = arith.constant 0 : index
    %1704 = vector.load %arg19[%c0_520, %c0_521] : memref<32x128xf32, #tpu.memory_space<vmem>>, vector<2x128xf32>
    %1705 = vector.shape_cast %83 : vector<1x128xi1> to vector<1x128xi1>
    %1706 = vector.broadcast %1705 : vector<1x128xi1> to vector<2x128xi1>
    %1707 = arith.select %1706, %1703, %1704 : vector<2x128xi1>, vector<2x128xf32>
    %cst_522 = arith.constant dense<0.000000e+00> : vector<2x128xf32>
    %1708 = tpu.matmul %1700, %1216, %cst_522 {dimension_numbers = #tpu.dot_dimension_numbers<[1], [0], [0], [1], [0, 0, 1, 1], [], []>} : vector<2x16xf32>, vector<16x128xf32>, vector<2x128xf32> -> vector<2x128xf32>
    %1709 = arith.addf %1707, %1708 : vector<2x128xf32>
    %cst_523 = arith.constant dense<0.000000e+00> : vector<2x128xf32>
    %1710 = tpu.matmul %1702, %1218, %cst_523 {dimension_numbers = #tpu.dot_dimension_numbers<[1], [0], [0], [1], [0, 0, 1, 1], [], []>} : vector<2x16xf32>, vector<16x128xf32>, vector<2x128xf32> -> vector<2x128xf32>
    %1711 = arith.addf %1709, %1710 : vector<2x128xf32>
    %1712 = math.tanh %1711 : vector<2x128xf32>
    %1713 = vector.broadcast %78 : vector<1x128xf32> to vector<2x128xf32>
    %1714 = arith.mulf %1713, %1712 : vector<2x128xf32>
    %1715 = vector.broadcast %81 : vector<1x128xf32> to vector<2x128xf32>
    %1716 = arith.addf %1714, %1715 : vector<2x128xf32>
    %1717 = vector.extract_strided_slice %1716 {offsets = [0, 0], sizes = [2, 16], strides = [1, 1]} : vector<2x128xf32> to vector<2x16xf32>
    %1718 = vector.extract_strided_slice %1716 {offsets = [0, 16], sizes = [2, 16], strides = [1, 1]} : vector<2x128xf32> to vector<2x16xf32>
    %1719 = vector.extract_strided_slice %1716 {offsets = [0, 32], sizes = [2, 16], strides = [1, 1]} : vector<2x128xf32> to vector<2x16xf32>
    %1720 = vector.extract_strided_slice %1716 {offsets = [0, 48], sizes = [2, 16], strides = [1, 1]} : vector<2x128xf32> to vector<2x16xf32>
    %1721 = arith.mulf %1718, %1695 : vector<2x16xf32>
    %1722 = arith.mulf %1717, %1720 : vector<2x16xf32>
    %1723 = arith.addf %1721, %1722 : vector<2x16xf32>
    %1724 = math.tanh %1723 : vector<2x16xf32>
    %1725 = arith.mulf %1719, %1724 : vector<2x16xf32>
    %c0_524 = arith.constant 0 : index
    %c0_525 = arith.constant 0 : index
    %1726 = vector.load %arg11[%c0_524, %c0_525] : memref<32x64xf32, #tpu.memory_space<vmem>>, vector<32x64xf32>
    %1727 = vector.extract_strided_slice %1726 {offsets = [0, 0], sizes = [16, 64], strides = [1, 1]} : vector<32x64xf32> to vector<16x64xf32>
    %cst_526 = arith.constant dense<0.000000e+00> : vector<2x64xf32>
    %1728 = tpu.matmul %1725, %1727, %cst_526 {dimension_numbers = #tpu.dot_dimension_numbers<[1], [0], [0], [1], [0, 0, 1, 1], [], []>} : vector<2x16xf32>, vector<16x64xf32>, vector<2x64xf32> -> vector<2x64xf32>
    %1729 = vector.extract_strided_slice %1726 {offsets = [16, 0], sizes = [16, 64], strides = [1, 1]} : vector<32x64xf32> to vector<16x64xf32>
    %cst_527 = arith.constant dense<0.000000e+00> : vector<2x64xf32>
    %1730 = tpu.matmul %1254, %1729, %cst_527 {dimension_numbers = #tpu.dot_dimension_numbers<[1], [0], [0], [1], [0, 0, 1, 1], [], []>} : vector<2x16xf32>, vector<16x64xf32>, vector<2x64xf32> -> vector<2x64xf32>
    %1731 = arith.addf %1728, %1730 : vector<2x64xf32>
    %c0_528 = arith.constant 0 : index
    %c0_529 = arith.constant 0 : index
    %1732 = vector.load %arg12[%c0_528, %c0_529] : memref<1x64xf32, #tpu.memory_space<vmem>>, vector<1x64xf32>
    %1733 = vector.broadcast %1732 : vector<1x64xf32> to vector<2x64xf32>
    %1734 = arith.addf %1731, %1733 : vector<2x64xf32>
    %cst_530 = arith.constant 0.000000e+00 : f32
    %1735 = vector.broadcast %cst_530 : f32 to vector<2x64xf32>
    %1736 = arith.maximumf %1734, %1735 : vector<2x64xf32>
    %c0_531 = arith.constant 0 : index
    %c0_532 = arith.constant 0 : index
    %1737 = vector.load %arg13[%c0_531, %c0_532] : memref<64x16xf32, #tpu.memory_space<vmem>>, vector<64x16xf32>
    %cst_533 = arith.constant dense<0.000000e+00> : vector<2x16xf32>
    %1738 = tpu.matmul %1736, %1737, %cst_533 {dimension_numbers = #tpu.dot_dimension_numbers<[1], [0], [0], [1], [0, 0, 1, 1], [], []>} : vector<2x64xf32>, vector<64x16xf32>, vector<2x16xf32> -> vector<2x16xf32>
    %c0_534 = arith.constant 0 : index
    %c0_535 = arith.constant 0 : index
    %1739 = vector.load %arg14[%c0_534, %c0_535] : memref<1x16xf32, #tpu.memory_space<vmem>>, vector<1x16xf32>
    %1740 = vector.broadcast %1739 : vector<1x16xf32> to vector<2x16xf32>
    %1741 = arith.addf %1738, %1740 : vector<2x16xf32>
    %cst_536 = arith.constant 0.000000e+00 : f32
    %1742 = vector.broadcast %cst_536 : f32 to vector<2x16xf32>
    %1743 = arith.maximumf %1741, %1742 : vector<2x16xf32>
    %c0_537 = arith.constant 0 : index
    %c0_538 = arith.constant 0 : index
    %1744 = vector.load %arg15[%c0_537, %c0_538] : memref<16x2xf32, #tpu.memory_space<vmem>>, vector<16x2xf32>
    %cst_539 = arith.constant dense<0.000000e+00> : vector<2x2xf32>
    %1745 = tpu.matmul %1743, %1744, %cst_539 {dimension_numbers = #tpu.dot_dimension_numbers<[1], [0], [0], [1], [0, 0, 1, 1], [], []>} : vector<2x16xf32>, vector<16x2xf32>, vector<2x2xf32> -> vector<2x2xf32>
    %c0_540 = arith.constant 0 : index
    %c0_541 = arith.constant 0 : index
    %1746 = vector.load %arg16[%c0_540, %c0_541] : memref<1x2xf32, #tpu.memory_space<vmem>>, vector<1x2xf32>
    %1747 = vector.broadcast %1746 : vector<1x2xf32> to vector<2x2xf32>
    %1748 = arith.addf %1745, %1747 : vector<2x2xf32>
    %c0_542 = arith.constant 0 : index
    %c0_543 = arith.constant 0 : index
    %1749 = vector.load %arg17[%c0_542, %c0_543] : memref<2x2xf32, #tpu.memory_space<vmem>>, vector<2x2xf32>
    tpu.vector_store %arg17[%c0_542, %c0_543], %1748 {strides = array<i32>} : memref<2x2xf32, #tpu.memory_space<vmem>>, vector<2x2xf32>,
    return
  }
  func.func @transform_0(%arg0: i32) -> (i32, i32) {
    %c0_i32 = arith.constant 0 : i32
    %c0_i32_0 = arith.constant 0 : i32
    %c0_i32_1 = arith.constant 0 : i32
    return %c0_i32, %c0_i32_0 : i32, i32
  }
  func.func @transform_1(%arg0: i32) -> (i32, i32, i32) {
    %c0_i32 = arith.constant 0 : i32
    %c0_i32_0 = arith.constant 0 : i32
    %c0_i32_1 = arith.constant 0 : i32
    %c0_i32_2 = arith.constant 0 : i32
    return %c0_i32, %c0_i32_0, %c0_i32_1 : i32, i32, i32
  }
  func.func @transform_2(%arg0: i32) -> (i32, i32) {
    %c0_i32 = arith.constant 0 : i32
    %c0_i32_0 = arith.constant 0 : i32
    %c0_i32_1 = arith.constant 0 : i32
    return %c0_i32, %c0_i32_0 : i32, i32
  }
  func.func @transform_3(%arg0: i32) -> (i32, i32, i32) {
    %c0_i32 = arith.constant 0 : i32
    %c0_i32_0 = arith.constant 0 : i32
    %c0_i32_1 = arith.constant 0 : i32
    %c0_i32_2 = arith.constant 0 : i32
    return %c0_i32, %c0_i32_0, %c0_i32_1 : i32, i32, i32
  }
  func.func @transform_4(%arg0: i32) -> (i32, i32) {
    %c0_i32 = arith.constant 0 : i32
    %c0_i32_0 = arith.constant 0 : i32
    %c0_i32_1 = arith.constant 0 : i32
    return %c0_i32, %c0_i32_0 : i32, i32
  }
  func.func @transform_5(%arg0: i32) -> (i32, i32, i32) {
    %c0_i32 = arith.constant 0 : i32
    %c0_i32_0 = arith.constant 0 : i32
    %c0_i32_1 = arith.constant 0 : i32
    %c0_i32_2 = arith.constant 0 : i32
    return %c0_i32, %c0_i32_0, %c0_i32_1 : i32, i32, i32
  }
  func.func @transform_6(%arg0: i32) -> (i32, i32) {
    %c0_i32 = arith.constant 0 : i32
    %c0_i32_0 = arith.constant 0 : i32
    %c0_i32_1 = arith.constant 0 : i32
    return %c0_i32, %c0_i32_0 : i32, i32
  }
  func.func @transform_7(%arg0: i32) -> (i32, i32, i32) {
    %c0_i32 = arith.constant 0 : i32
    %c0_i32_0 = arith.constant 0 : i32
    %c0_i32_1 = arith.constant 0 : i32
    %c0_i32_2 = arith.constant 0 : i32
    return %c0_i32, %c0_i32_0, %c0_i32_1 : i32, i32, i32
  }
  func.func @transform_8(%arg0: i32) -> (i32, i32, i32, i32) {
    %c0_i32 = arith.constant 0 : i32
    %c0_i32_0 = arith.constant 0 : i32
    %c0_i32_1 = arith.constant 0 : i32
    %c0_i32_2 = arith.constant 0 : i32
    %c0_i32_3 = arith.constant 0 : i32
    return %c0_i32, %c0_i32_0, %c0_i32_1, %c0_i32_2 : i32, i32, i32, i32
  }
  func.func @transform_9(%arg0: i32) -> (i32, i32, i32) {
    %c0_i32 = arith.constant 0 : i32
    %c0_i32_0 = arith.constant 0 : i32
    %c0_i32_1 = arith.constant 0 : i32
    %c0_i32_2 = arith.constant 0 : i32
    return %c0_i32, %c0_i32_0, %c0_i32_1 : i32, i32, i32
  }
  func.func @transform_10(%arg0: i32) -> (i32, i32) {
    %c0_i32 = arith.constant 0 : i32
    %c0_i32_0 = arith.constant 0 : i32
    %c0_i32_1 = arith.constant 0 : i32
    return %c0_i32, %c0_i32_0 : i32, i32
  }
  func.func @transform_11(%arg0: i32) -> (i32, i32) {
    %c0_i32 = arith.constant 0 : i32
    %c0_i32_0 = arith.constant 0 : i32
    %c0_i32_1 = arith.constant 0 : i32
    return %c0_i32, %c0_i32_0 : i32, i32
  }
  func.func @transform_12(%arg0: i32) -> (i32, i32) {
    %c0_i32 = arith.constant 0 : i32
    %c0_i32_0 = arith.constant 0 : i32
    %c0_i32_1 = arith.constant 0 : i32
    return %c0_i32, %c0_i32_0 : i32, i32
  }
  func.func @transform_13(%arg0: i32) -> (i32, i32) {
    %c0_i32 = arith.constant 0 : i32
    %c0_i32_0 = arith.constant 0 : i32
    %c0_i32_1 = arith.constant 0 : i32
    return %c0_i32, %c0_i32_0 : i32, i32
  }
  func.func @transform_14(%arg0: i32) -> (i32, i32) {
    %c0_i32 = arith.constant 0 : i32
    %c0_i32_0 = arith.constant 0 : i32
    %c0_i32_1 = arith.constant 0 : i32
    return %c0_i32, %c0_i32_0 : i32, i32
  }
  func.func @transform_15(%arg0: i32) -> (i32, i32) {
    %c0_i32 = arith.constant 0 : i32
    %c0_i32_0 = arith.constant 0 : i32
    %c0_i32_1 = arith.constant 0 : i32
    return %c0_i32, %c0_i32_0 : i32, i32
  }
  func.func @transform_16(%arg0: i32) -> (i32, i32) {
    %c0_i32 = arith.constant 0 : i32
    %c0_i32_0 = arith.constant 0 : i32
    %c0_i32_1 = arith.constant 0 : i32
    return %c0_i32, %c0_i32_0 : i32, i32
  }
}

</mosaic_0001>

<llo_original>
// kernel: tpu_custom_call.1
$region0: #{tpu_custom_call.1}
  #allocation0 [shape = 'u32[]', space=smem, size = 0x4, offset = 0x4, fixed_abs, tag = 'smem constant byte address 0x4 - core index']
  #allocation1 [shape = 'u32[72,128]{1,0:T(1,128)}', space=vmem, size = 0x9000, scoped, tag = 'internal scratch']
  #allocation2 [shape = 'f32[32,32]{1,0:T(8,128)}', space=vmem, size = 0x4000, scoped, tag = 'scratch operand']
  #allocation3 [shape = 'f32[32,128]{1,0:T(8,128)}', space=vmem, size = 0x4000, scoped, tag = 'scratch operand']
  %s0 = inlined_call_operand.vmem [shape: f32[32,8], index: 0, kind: input, shape index: {}]
  %s1 = inlined_call_operand.vmem [shape: f32[3,8,8], index: 1, kind: input, shape index: {}]
  %s2 = inlined_call_operand.vmem [shape: f32[1,8], index: 2, kind: input, shape index: {}]
  %s3 = inlined_call_operand.vmem [shape: f32[3,8,32], index: 3, kind: input, shape index: {}]
  %s4 = inlined_call_operand.vmem [shape: f32[1,32], index: 4, kind: input, shape index: {}]
  %s5 = inlined_call_operand.vmem [shape: f32[3,32,8], index: 5, kind: input, shape index: {}]
  %s6 = inlined_call_operand.vmem [shape: f32[1,8], index: 6, kind: input, shape index: {}]
  %s7 = inlined_call_operand.vmem [shape: f32[3,32,128], index: 7, kind: input, shape index: {}]
  %s8 = inlined_call_operand.hbm [shape: f32[3,2,16,128], index: 8, kind: input, shape index: {}]
  %s9 = inlined_call_operand.vmem [shape: f32[3,1,128], index: 9, kind: input, shape index: {}]
  %s10 = inlined_call_operand.vmem [shape: f32[32,64], index: 10, kind: input, shape index: {}]
  %s11 = inlined_call_operand.vmem [shape: f32[1,64], index: 11, kind: input, shape index: {}]
  %s12 = inlined_call_operand.vmem [shape: f32[64,16], index: 12, kind: input, shape index: {}]
  %s13 = inlined_call_operand.vmem [shape: f32[1,16], index: 13, kind: input, shape index: {}]
  %s14 = inlined_call_operand.vmem [shape: f32[16,2], index: 14, kind: input, shape index: {}]
  %s15 = inlined_call_operand.vmem [shape: f32[1,2], index: 15, kind: input, shape index: {}]
  %s16 = inlined_call_operand.hbm [shape: f32[2,2], index: 16, kind: output, shape index: {}]
  %s17 = sld [smem:[#allocation0]]
  $region78: #{tpu_custom_call.1} parent=0
    _
  %s19 = ssub.s32 1, %s17
  %s20 = scalar_select 0, %s19, %s17
  $region1: #{tpu_custom_call.1} parent=0
    #allocation4 [shape = 'u8[49152]{0}', space=vmem, size = 0xc000, scoped, tag = 'input window, operand 8, single buffered']
    #allocation5 [shape = 's32[1]{0}', space=sflag, size = 0x4, scoped, tag = 'scoped memory for tpu_custom_call.1']
    #allocation6 [shape = 's32[1]{0}', space=sflag, size = 0x4, scoped, tag = 'scoped memory for tpu_custom_call.1']
    #allocation7 [shape = 'u8[1024]{0}', space=vmem, size = 0x400, scoped, tag = 'output window, operand 0, single buffered']
    %21 = vsyncpa [#allocation5], 0
    %22 = vsyncpa [#allocation6], 0
    // Predicated region
    $region2: #{tpu_custom_call.1} parent=1 // pred_check
      _
    $region3: #{tpu_custom_call.1} parent=1 // pred_check_branch
      %24 = sbr.rel (0) target = $region5
    $region4: #{tpu_custom_call.1} parent=1 // pred_region
      _
    $region5: #{tpu_custom_call.1} parent=1 // pred_fallthru
      _
    // Predicated region
    $region6: #{tpu_custom_call.1} parent=1 // pred_check
      _
    $region7: #{tpu_custom_call.1} parent=1 // pred_check_branch
      %26 = sbr.rel (0) target = $region9
    $region8: #{tpu_custom_call.1} parent=1 // pred_region
      _
    $region9: #{tpu_custom_call.1} parent=1 // pred_fallthru
      _
    // Predicated region
    $region10: #{tpu_custom_call.1} parent=1 // pred_check
      _
    $region11: #{tpu_custom_call.1} parent=1 // pred_check_branch
      %28 = sbr.rel (0) target = $region13
    $region12: #{tpu_custom_call.1} parent=1 // pred_region
      _
    $region13: #{tpu_custom_call.1} parent=1 // pred_fallthru
      _
    // Predicated region
    $region14: #{tpu_custom_call.1} parent=1 // pred_check
      _
    $region15: #{tpu_custom_call.1} parent=1 // pred_check_branch
      %30 = sbr.rel (0) target = $region17
    $region16: #{tpu_custom_call.1} parent=1 // pred_region
      _
    $region17: #{tpu_custom_call.1} parent=1 // pred_fallthru
      _
    // Predicated region
    $region18: #{tpu_custom_call.1} parent=1 // pred_check
      _
    $region19: #{tpu_custom_call.1} parent=1 // pred_check_branch
      %32 = sbr.rel (0) target = $region21
    $region20: #{tpu_custom_call.1} parent=1 // pred_region
      _
    $region21: #{tpu_custom_call.1} parent=1 // pred_fallthru
      _
    // Predicated region
    $region22: #{tpu_custom_call.1} parent=1 // pred_check
      _
    $region23: #{tpu_custom_call.1} parent=1 // pred_check_branch
      %34 = sbr.rel (0) target = $region25
    $region24: #{tpu_custom_call.1} parent=1 // pred_region
      _
    $region25: #{tpu_custom_call.1} parent=1 // pred_fallthru
      _
    // Predicated region
    $region26: #{tpu_custom_call.1} parent=1 // pred_check
      _
    $region27: #{tpu_custom_call.1} parent=1 // pred_check_branch
      %36 = sbr.rel (0) target = $region29
    $region28: #{tpu_custom_call.1} parent=1 // pred_region
      _
    $region29: #{tpu_custom_call.1} parent=1 // pred_fallthru
      _
    // Predicated region
    $region30: #{tpu_custom_call.1} parent=1 // pred_check
      _
    $region31: #{tpu_custom_call.1} parent=1 // pred_check_branch
      %38 = sbr.rel (0) target = $region33
    $region32: #{tpu_custom_call.1} parent=1 // pred_region
      _
    $region33: #{tpu_custom_call.1} parent=1 // pred_fallthru
      _
    // Predicated region
    $region34: #{tpu_custom_call.1} parent=1 // pred_check
      _
    $region35: #{tpu_custom_call.1} parent=1 // pred_check_branch
      %40 = sbr.rel (0) target = $region37
    $region36: #{tpu_custom_call.1} parent=1 // pred_region
      %42 = vsyncadd [#allocation5], 0
      %s43 = sshll.u32 %s8, 4
      %s44 = int_to_ptr.hbm [resolvable:$true] %s43
      %s45 = sshll.u32 [#allocation4], 4
      %s46 = int_to_ptr.vmem [resolvable:$true] %s45
      %51 = dma.hbm_to_vmem [thread:$0]  %s44, 1536, %s46, [#allocation5], 128, 128, 8
    $region37: #{tpu_custom_call.1} parent=1 // pred_fallthru
      _
    // Predicated region
    $region38: #{tpu_custom_call.1} parent=1 // pred_check
      _
    $region39: #{tpu_custom_call.1} parent=1 // pred_check_branch
      %53 = sbr.rel (0) target = $region41
    $region40: #{tpu_custom_call.1} parent=1 // pred_region
      _
    $region41: #{tpu_custom_call.1} parent=1 // pred_fallthru
      _
    // Predicated region
    $region42: #{tpu_custom_call.1} parent=1 // pred_check
      _
    $region43: #{tpu_custom_call.1} parent=1 // pred_check_branch
      %55 = sbr.rel (0) target = $region45
    $region44: #{tpu_custom_call.1} parent=1 // pred_region
      _
    $region45: #{tpu_custom_call.1} parent=1 // pred_fallthru
      _
    // Predicated region
    $region46: #{tpu_custom_call.1} parent=1 // pred_check
      _
    $region47: #{tpu_custom_call.1} parent=1 // pred_check_branch
      %57 = sbr.rel (0) target = $region49
    $region48: #{tpu_custom_call.1} parent=1 // pred_region
      _
    $region49: #{tpu_custom_call.1} parent=1 // pred_fallthru
      _
    // Predicated region
    $region50: #{tpu_custom_call.1} parent=1 // pred_check
      _
    $region51: #{tpu_custom_call.1} parent=1 // pred_check_branch
      %59 = sbr.rel (0) target = $region53
    $region52: #{tpu_custom_call.1} parent=1 // pred_region
      _
    $region53: #{tpu_custom_call.1} parent=1 // pred_fallthru
      _
    // Predicated region
    $region54: #{tpu_custom_call.1} parent=1 // pred_check
      _
    $region55: #{tpu_custom_call.1} parent=1 // pred_check_branch
      %61 = sbr.rel (0) target = $region57
    $region56: #{tpu_custom_call.1} parent=1 // pred_region
      _
    $region57: #{tpu_custom_call.1} parent=1 // pred_fallthru
      _
    // Predicated region
    $region58: #{tpu_custom_call.1} parent=1 // pred_check
      _
    $region59: #{tpu_custom_call.1} parent=1 // pred_check_branch
      %63 = sbr.rel (0) target = $region61
    $region60: #{tpu_custom_call.1} parent=1 // pred_region
      _
    $region61: #{tpu_custom_call.1} parent=1 // pred_fallthru
      _
    // Predicated region
    $region62: #{tpu_custom_call.1} parent=1 // pred_check
      _
    $region63: #{tpu_custom_call.1} parent=1 // pred_check_branch
      %65 = sbr.rel (0) target = $region65
    $region64: #{tpu_custom_call.1} parent=1 // pred_region
      _
    $region65: #{tpu_custom_call.1} parent=1 // pred_fallthru
      _
    // Predicated region
    $region66: #{tpu_custom_call.1} parent=1 // pred_check
      _
    $region67: #{tpu_custom_call.1} parent=1 // pred_check_branch
      %67 = sbr.rel (0) target = $region69
    $region68: #{tpu_custom_call.1} parent=1 // pred_region
      %69 = dma.done [#allocation5], 1536
    $region69: #{tpu_custom_call.1} parent=1 // pred_fallthru
      _
    %v70 = vlaneseq
    %v71 = vshrl.u32 %v70, 7
    %v72 = vadd.s32 %v71, 8
    %v73 = vadd.s32 %v71, 16
    %v74 = vadd.s32 %v71, 24
    %v75 = vlaneseq
    %v76 = vand.u32 %v75, 127
    %v77 = vsub.s32 %v71, 2
    %v78 = vsub.s32 %v72, 2
    %v79 = vsub.s32 %v73, 2
    %v80 = vsub.s32 %v74, 2
    %vm81 = vcmp.eq.s32.totalorder %v76, %v77
    %vm82 = vcmp.eq.s32.totalorder %v76, %v78
    %vm83 = vcmp.eq.s32.totalorder %v76, %v79
    %vm84 = vcmp.eq.s32.totalorder %v76, %v80
    %v85 = vsel %vm81, 1, 0
    %v86 = vsel %vm82, 1, 0
    %v87 = vsel %vm83, 1, 0
    %v88 = vsel %vm84, 1, 0
    %v89 = vcvt.s32.f32 %v85
    %v90 = vcvt.s32.f32 %v86
    %v91 = vcvt.s32.f32 %v87
    %v92 = vcvt.s32.f32 %v88
    %v93 = vadd.s32 %v71, 2
    %v94 = vadd.s32 %v72, 2
    %v95 = vadd.s32 %v73, 2
    %v96 = vadd.s32 %v74, 2
    %vm97 = vcmp.eq.s32.totalorder %v76, %v93
    %vm98 = vcmp.eq.s32.totalorder %v76, %v94
    %vm99 = vcmp.eq.s32.totalorder %v76, %v95
    %vm100 = vcmp.eq.s32.totalorder %v76, %v96
    %v101 = vsel %vm97, 1, 0
    %v102 = vsel %vm98, 1, 0
    %v103 = vsel %vm99, 1, 0
    %v104 = vsel %vm100, 1, 0
    %v105 = vcvt.s32.f32 %v101
    %v106 = vcvt.s32.f32 %v102
    %v107 = vcvt.s32.f32 %v103
    %v108 = vcvt.s32.f32 %v104
    %v109 = vld [vmem:[%s0] sm:$0xff]
    %v110 = vld [vmem:[%s0 + $0x8] sm:$0xff]
    %v111 = vld [vmem:[%s0 + $0x10] sm:$0xff]
    %v112 = vld [vmem:[%s0 + $0x18] sm:$0xff]
    %vm113 = vcmask 261120
    %v115 = vsel %vm113, %v89, 0
    %v118 = vsel %vm113, %v90, 0
    %v121 = vsel %vm113, %v91, 0
    %v124 = vsel %vm113, %v92, 0
    %126 = vmatpush.msra.mxu0 0.0
    %127 = vmatpush.msra.mxu0 0.0
    %128 = vmatpush.msra.mxu0 0.0
    %129 = vmatpush.msra.mxu0 0.0
    %130 = vmatpush.msra.mxu0 0.0
    %131 = vmatpush.msra.mxu0 0.0
    %132 = vmatpush.msra.mxu0 0.0
    %133 = vmatpush.msra.mxu0 0.0
    %134 = vmatpush.msra.mxu0 0.0
    %135 = vmatpush.msra.mxu0 0.0
    %136 = vmatpush.msra.mxu0 0.0
    %137 = vmatpush.msra.mxu0 0.0
    %138 = vmatpush.msra.mxu0 %v112
    %139 = vmatpush.msra.mxu0 %v111
    %140 = vmatpush.msra.mxu0 %v110
    %141 = vmatpush.msra.mxu0 %v109
    %142 = vmatmul.f32.gmra.mxu0 %v115
    %v143 = vpop.f32.mrf.mxu0
    %v144 = vadd.f32 0.0, %v143
    %145 = vmatmul.f32.gmra.mxu0 %v118
    %v146 = vpop.f32.mrf.mxu0
    %v147 = vadd.f32 0.0, %v146
    %148 = vmatmul.f32.gmra.mxu0 %v121
    %v149 = vpop.f32.mrf.mxu0
    %v150 = vadd.f32 0.0, %v149
    %151 = vmatmul.f32.gmra.mxu0 %v124
    %v152 = vpop.f32.mrf.mxu0
    %v153 = vadd.f32 0.0, %v152
    %154 = vdwg.mxu0
    %v156 = vsel %vm113, %v105, 0
    %v159 = vsel %vm113, %v106, 0
    %v162 = vsel %vm113, %v107, 0
    %v165 = vsel %vm113, %v108, 0
    %167 = vmatpush.msra.mxu0 0.0
    %168 = vmatpush.msra.mxu0 0.0
    %169 = vmatpush.msra.mxu0 0.0
    %170 = vmatpush.msra.mxu0 0.0
    %171 = vmatpush.msra.mxu0 0.0
    %172 = vmatpush.msra.mxu0 0.0
    %173 = vmatpush.msra.mxu0 0.0
    %174 = vmatpush.msra.mxu0 0.0
    %175 = vmatpush.msra.mxu0 0.0
    %176 = vmatpush.msra.mxu0 0.0
    %177 = vmatpush.msra.mxu0 0.0
    %178 = vmatpush.msra.mxu0 0.0
    %179 = vmatpush.msra.mxu0 %v112
    %180 = vmatpush.msra.mxu0 %v111
    %181 = vmatpush.msra.mxu0 %v110
    %182 = vmatpush.msra.mxu0 %v109
    %183 = vmatmul.f32.gmra.mxu0 %v156
    %v184 = vpop.f32.mrf.mxu0
    %v185 = vadd.f32 0.0, %v184
    %186 = vmatmul.f32.gmra.mxu0 %v159
    %v187 = vpop.f32.mrf.mxu0
    %v188 = vadd.f32 0.0, %v187
    %189 = vmatmul.f32.gmra.mxu0 %v162
    %v190 = vpop.f32.mrf.mxu0
    %v191 = vadd.f32 0.0, %v190
    %192 = vmatmul.f32.gmra.mxu0 %v165
    %v193 = vpop.f32.mrf.mxu0
    %v194 = vadd.f32 0.0, %v193
    %195 = vdwg.mxu0
    %v196 = vld [vmem:[%s1] sm:$0xff]
    %s197 = scalar_lea.vmem %s1, 8
    %v198 = vld [vmem:[%s197] sm:$0xff]
    %vm199 = vcmask 64512
    %v201 = vsel %vm199, %v109, 0
    %v204 = vsel %vm199, %v110, 0
    %v207 = vsel %vm199, %v111, 0
    %v210 = vsel %vm199, %v112, 0
    %212 = vmatpush.msra.mxu0 0.0
    %213 = vmatpush.msra.mxu0 0.0
    %214 = vmatpush.msra.mxu0 0.0
    %215 = vmatpush.msra.mxu0 0.0
    %216 = vmatpush.msra.mxu0 0.0
    %217 = vmatpush.msra.mxu0 0.0
    %218 = vmatpush.msra.mxu0 0.0
    %219 = vmatpush.msra.mxu0 0.0
    %220 = vmatpush.msra.mxu0 0.0
    %221 = vmatpush.msra.mxu0 0.0
    %222 = vmatpush.msra.mxu0 0.0
    %223 = vmatpush.msra.mxu0 0.0
    %224 = vmatpush.msra.mxu0 0.0
    %225 = vmatpush.msra.mxu0 0.0
    %226 = vmatpush.msra.mxu0 0.0
    %227 = vmatpush.msra.mxu0 %v198
    %228 = vmatmul.f32.gmra.mxu0 %v201
    %v229 = vpop.f32.mrf.mxu0
    %v230 = vadd.f32 0.0, %v229
    %231 = vmatmul.f32.gmra.mxu0 %v204
    %v232 = vpop.f32.mrf.mxu0
    %v233 = vadd.f32 0.0, %v232
    %234 = vmatmul.f32.gmra.mxu0 %v207
    %v235 = vpop.f32.mrf.mxu0
    %v236 = vadd.f32 0.0, %v235
    %237 = vmatmul.f32.gmra.mxu0 %v210
    %v238 = vpop.f32.mrf.mxu0
    %v239 = vadd.f32 0.0, %v238
    %240 = vdwg.mxu0
    %v242 = vsel %vm199, %v144, 0
    %v245 = vsel %vm199, %v147, 0
    %v248 = vsel %vm199, %v150, 0
    %v251 = vsel %vm199, %v153, 0
    %253 = vmatpush.msra.mxu0 0.0
    %254 = vmatpush.msra.mxu0 0.0
    %255 = vmatpush.msra.mxu0 0.0
    %256 = vmatpush.msra.mxu0 0.0
    %257 = vmatpush.msra.mxu0 0.0
    %258 = vmatpush.msra.mxu0 0.0
    %259 = vmatpush.msra.mxu0 0.0
    %260 = vmatpush.msra.mxu0 0.0
    %261 = vmatpush.msra.mxu0 0.0
    %262 = vmatpush.msra.mxu0 0.0
    %263 = vmatpush.msra.mxu0 0.0
    %264 = vmatpush.msra.mxu0 0.0
    %265 = vmatpush.msra.mxu0 0.0
    %266 = vmatpush.msra.mxu0 0.0
    %267 = vmatpush.msra.mxu0 0.0
    %268 = vmatpush.msra.mxu0 %v196
    %269 = vmatmul.f32.gmra.mxu0 %v242
    %v270 = vpop.f32.mrf.mxu0
    %v271 = vadd.f32 %v230, %v270
    %272 = vmatmul.f32.gmra.mxu0 %v245
    %v273 = vpop.f32.mrf.mxu0
    %v274 = vadd.f32 %v233, %v273
    %275 = vmatmul.f32.gmra.mxu0 %v248
    %v276 = vpop.f32.mrf.mxu0
    %v277 = vadd.f32 %v236, %v276
    %278 = vmatmul.f32.gmra.mxu0 %v251
    %v279 = vpop.f32.mrf.mxu0
    %v280 = vadd.f32 %v239, %v279
    %281 = vdwg.mxu0
    %s282 = scalar_lea.vmem %s1, 16
    %v283 = vld [vmem:[%s282] sm:$0xff]
    %v285 = vsel %vm199, %v185, 0
    %v288 = vsel %vm199, %v188, 0
    %v291 = vsel %vm199, %v191, 0
    %v294 = vsel %vm199, %v194, 0
    %296 = vmatpush.msra.mxu0 0.0
    %297 = vmatpush.msra.mxu0 0.0
    %298 = vmatpush.msra.mxu0 0.0
    %299 = vmatpush.msra.mxu0 0.0
    %300 = vmatpush.msra.mxu0 0.0
    %301 = vmatpush.msra.mxu0 0.0
    %302 = vmatpush.msra.mxu0 0.0
    %303 = vmatpush.msra.mxu0 0.0
    %304 = vmatpush.msra.mxu0 0.0
    %305 = vmatpush.msra.mxu0 0.0
    %306 = vmatpush.msra.mxu0 0.0
    %307 = vmatpush.msra.mxu0 0.0
    %308 = vmatpush.msra.mxu0 0.0
    %309 = vmatpush.msra.mxu0 0.0
    %310 = vmatpush.msra.mxu0 0.0
    %311 = vmatpush.msra.mxu0 %v283
    %312 = vmatmul.f32.gmra.mxu0 %v285
    %v313 = vpop.f32.mrf.mxu0
    %v314 = vadd.f32 0.0, %v313
    %315 = vmatmul.f32.gmra.mxu0 %v288
    %v316 = vpop.f32.mrf.mxu0
    %v317 = vadd.f32 0.0, %v316
    %318 = vmatmul.f32.gmra.mxu0 %v291
    %v319 = vpop.f32.mrf.mxu0
    %v320 = vadd.f32 0.0, %v319
    %321 = vmatmul.f32.gmra.mxu0 %v294
    %v322 = vpop.f32.mrf.mxu0
    %v323 = vadd.f32 0.0, %v322
    %324 = vdwg.mxu0
    %v325 = vadd.f32 %v271, %v314
    %v326 = vadd.f32 %v274, %v317
    %v327 = vadd.f32 %v277, %v320
    %v328 = vadd.f32 %v280, %v323
    %v329 = vld [vmem:[%s2] sm:$0x1]
    %v331 = vperm.slane %v329, 0
    %v333 = vadd.f32 %v325, %v331
    %v334 = vadd.f32 %v326, %v331
    %v335 = vadd.f32 %v327, %v331
    %v336 = vadd.f32 %v328, %v331
    %v337 = vmax.f32 %v333, 0.0
    %v338 = vmax.f32 %v334, 0.0
    %v339 = vmax.f32 %v335, 0.0
    %v340 = vmax.f32 %v336, 0.0
    %341 = vmatpush.msra.mxu0 0.0
    %342 = vmatpush.msra.mxu0 0.0
    %343 = vmatpush.msra.mxu0 0.0
    %344 = vmatpush.msra.mxu0 0.0
    %345 = vmatpush.msra.mxu0 0.0
    %346 = vmatpush.msra.mxu0 0.0
    %347 = vmatpush.msra.mxu0 0.0
    %348 = vmatpush.msra.mxu0 0.0
    %349 = vmatpush.msra.mxu0 0.0
    %350 = vmatpush.msra.mxu0 0.0
    %351 = vmatpush.msra.mxu0 0.0
    %352 = vmatpush.msra.mxu0 0.0
    %353 = vmatpush.msra.mxu0 %v340
    %354 = vmatpush.msra.mxu0 %v339
    %355 = vmatpush.msra.mxu0 %v338
    %356 = vmatpush.msra.mxu0 %v337
    %357 = vmatmul.f32.gmra.mxu0 %v115
    %v358 = vpop.f32.mrf.mxu0
    %v359 = vadd.f32 0.0, %v358
    %360 = vmatmul.f32.gmra.mxu0 %v118
    %v361 = vpop.f32.mrf.mxu0
    %v362 = vadd.f32 0.0, %v361
    %363 = vmatmul.f32.gmra.mxu0 %v121
    %v364 = vpop.f32.mrf.mxu0
    %v365 = vadd.f32 0.0, %v364
    %366 = vmatmul.f32.gmra.mxu0 %v124
    %v367 = vpop.f32.mrf.mxu0
    %v368 = vadd.f32 0.0, %v367
    %369 = vdwg.mxu0
    %370 = vmatpush.msra.mxu0 0.0
    %371 = vmatpush.msra.mxu0 0.0
    %372 = vmatpush.msra.mxu0 0.0
    %373 = vmatpush.msra.mxu0 0.0
    %374 = vmatpush.msra.mxu0 0.0
    %375 = vmatpush.msra.mxu0 0.0
    %376 = vmatpush.msra.mxu0 0.0
    %377 = vmatpush.msra.mxu0 0.0
    %378 = vmatpush.msra.mxu0 0.0
    %379 = vmatpush.msra.mxu0 0.0
    %380 = vmatpush.msra.mxu0 0.0
    %381 = vmatpush.msra.mxu0 0.0
    %382 = vmatpush.msra.mxu0 %v340
    %383 = vmatpush.msra.mxu0 %v339
    %384 = vmatpush.msra.mxu0 %v338
    %385 = vmatpush.msra.mxu0 %v337
    %386 = vmatmul.f32.gmra.mxu0 %v156
    %v387 = vpop.f32.mrf.mxu0
    %v388 = vadd.f32 0.0, %v387
    %389 = vmatmul.f32.gmra.mxu0 %v159
    %v390 = vpop.f32.mrf.mxu0
    %v391 = vadd.f32 0.0, %v390
    %392 = vmatmul.f32.gmra.mxu0 %v162
    %v393 = vpop.f32.mrf.mxu0
    %v394 = vadd.f32 0.0, %v393
    %395 = vmatmul.f32.gmra.mxu0 %v165
    %v396 = vpop.f32.mrf.mxu0
    %v397 = vadd.f32 0.0, %v396
    %398 = vdwg.mxu0
    %v399 = vld [vmem:[%s3] sm:$0xff]
    %s400 = scalar_lea.vmem %s3, 8
    %v401 = vld [vmem:[%s400] sm:$0xff]
    %v403 = vsel %vm199, %v337, 0
    %v406 = vsel %vm199, %v338, 0
    %v409 = vsel %vm199, %v339, 0
    %v412 = vsel %vm199, %v340, 0
    %414 = vmatpush.msra.mxu0 0.0
    %415 = vmatpush.msra.mxu0 0.0
    %416 = vmatpush.msra.mxu0 0.0
    %417 = vmatpush.msra.mxu0 0.0
    %418 = vmatpush.msra.mxu0 0.0
    %419 = vmatpush.msra.mxu0 0.0
    %420 = vmatpush.msra.mxu0 0.0
    %421 = vmatpush.msra.mxu0 0.0
    %422 = vmatpush.msra.mxu0 0.0
    %423 = vmatpush.msra.mxu0 0.0
    %424 = vmatpush.msra.mxu0 0.0
    %425 = vmatpush.msra.mxu0 0.0
    %426 = vmatpush.msra.mxu0 0.0
    %427 = vmatpush.msra.mxu0 0.0
    %428 = vmatpush.msra.mxu0 0.0
    %429 = vmatpush.msra.mxu0 %v401
    %430 = vmatmul.f32.gmra.mxu0 %v403
    %v431 = vpop.f32.mrf.mxu0
    %v432 = vadd.f32 0.0, %v431
    %433 = vmatmul.f32.gmra.mxu0 %v406
    %v434 = vpop.f32.mrf.mxu0
    %v435 = vadd.f32 0.0, %v434
    %436 = vmatmul.f32.gmra.mxu0 %v409
    %v437 = vpop.f32.mrf.mxu0
    %v438 = vadd.f32 0.0, %v437
    %439 = vmatmul.f32.gmra.mxu0 %v412
    %v440 = vpop.f32.mrf.mxu0
    %v441 = vadd.f32 0.0, %v440
    %442 = vdwg.mxu0
    %v444 = vsel %vm199, %v359, 0
    %v447 = vsel %vm199, %v362, 0
    %v450 = vsel %vm199, %v365, 0
    %v453 = vsel %vm199, %v368, 0
    %455 = vmatpush.msra.mxu0 0.0
    %456 = vmatpush.msra.mxu0 0.0
    %457 = vmatpush.msra.mxu0 0.0
    %458 = vmatpush.msra.mxu0 0.0
    %459 = vmatpush.msra.mxu0 0.0
    %460 = vmatpush.msra.mxu0 0.0
    %461 = vmatpush.msra.mxu0 0.0
    %462 = vmatpush.msra.mxu0 0.0
    %463 = vmatpush.msra.mxu0 0.0
    %464 = vmatpush.msra.mxu0 0.0
    %465 = vmatpush.msra.mxu0 0.0
    %466 = vmatpush.msra.mxu0 0.0
    %467 = vmatpush.msra.mxu0 0.0
    %468 = vmatpush.msra.mxu0 0.0
    %469 = vmatpush.msra.mxu0 0.0
    %470 = vmatpush.msra.mxu0 %v399
    %471 = vmatmul.f32.gmra.mxu0 %v444
    %v472 = vpop.f32.mrf.mxu0
    %v473 = vadd.f32 %v432, %v472
    %474 = vmatmul.f32.gmra.mxu0 %v447
    %v475 = vpop.f32.mrf.mxu0
    %v476 = vadd.f32 %v435, %v475
    %477 = vmatmul.f32.gmra.mxu0 %v450
    %v478 = vpop.f32.mrf.mxu0
    %v479 = vadd.f32 %v438, %v478
    %480 = vmatmul.f32.gmra.mxu0 %v453
    %v481 = vpop.f32.mrf.mxu0
    %v482 = vadd.f32 %v441, %v481
    %483 = vdwg.mxu0
    %s484 = scalar_lea.vmem %s3, 16
    %v485 = vld [vmem:[%s484] sm:$0xff]
    %v487 = vsel %vm199, %v388, 0
    %v490 = vsel %vm199, %v391, 0
    %v493 = vsel %vm199, %v394, 0
    %v496 = vsel %vm199, %v397, 0
    %498 = vmatpush.msra.mxu0 0.0
    %499 = vmatpush.msra.mxu0 0.0
    %500 = vmatpush.msra.mxu0 0.0
    %501 = vmatpush.msra.mxu0 0.0
    %502 = vmatpush.msra.mxu0 0.0
    %503 = vmatpush.msra.mxu0 0.0
    %504 = vmatpush.msra.mxu0 0.0
    %505 = vmatpush.msra.mxu0 0.0
    %506 = vmatpush.msra.mxu0 0.0
    %507 = vmatpush.msra.mxu0 0.0
    %508 = vmatpush.msra.mxu0 0.0
    %509 = vmatpush.msra.mxu0 0.0
    %510 = vmatpush.msra.mxu0 0.0
    %511 = vmatpush.msra.mxu0 0.0
    %512 = vmatpush.msra.mxu0 0.0
    %513 = vmatpush.msra.mxu0 %v485
    %514 = vmatmul.f32.gmra.mxu0 %v487
    %v515 = vpop.f32.mrf.mxu0
    %v516 = vadd.f32 0.0, %v515
    %517 = vmatmul.f32.gmra.mxu0 %v490
    %v518 = vpop.f32.mrf.mxu0
    %v519 = vadd.f32 0.0, %v518
    %520 = vmatmul.f32.gmra.mxu0 %v493
    %v521 = vpop.f32.mrf.mxu0
    %v522 = vadd.f32 0.0, %v521
    %523 = vmatmul.f32.gmra.mxu0 %v496
    %v524 = vpop.f32.mrf.mxu0
    %v525 = vadd.f32 0.0, %v524
    %526 = vdwg.mxu0
    %v527 = vadd.f32 %v473, %v516
    %v528 = vadd.f32 %v476, %v519
    %v529 = vadd.f32 %v479, %v522
    %v530 = vadd.f32 %v482, %v525
    %v531 = vld [vmem:[%s4] sm:$0x1]
    %v533 = vperm.slane %v531, 0
    %v535 = vadd.f32 %v527, %v533
    %v536 = vadd.f32 %v528, %v533
    %v537 = vadd.f32 %v529, %v533
    %v538 = vadd.f32 %v530, %v533
    %v539 = vmax.f32 %v535, 0.0
    %v540 = vmax.f32 %v536, 0.0
    %v541 = vmax.f32 %v537, 0.0
    %v542 = vmax.f32 %v538, 0.0
    %543 = vmatpush.msra.mxu0 0.0
    %544 = vmatpush.msra.mxu0 0.0
    %545 = vmatpush.msra.mxu0 0.0
    %546 = vmatpush.msra.mxu0 0.0
    %547 = vmatpush.msra.mxu0 0.0
    %548 = vmatpush.msra.mxu0 0.0
    %549 = vmatpush.msra.mxu0 0.0
    %550 = vmatpush.msra.mxu0 0.0
    %551 = vmatpush.msra.mxu0 0.0
    %552 = vmatpush.msra.mxu0 0.0
    %553 = vmatpush.msra.mxu0 0.0
    %554 = vmatpush.msra.mxu0 0.0
    %555 = vmatpush.msra.mxu0 %v542
    %556 = vmatpush.msra.mxu0 %v541
    %557 = vmatpush.msra.mxu0 %v540
    %558 = vmatpush.msra.mxu0 %v539
    %559 = vmatmul.f32.gmra.mxu0 %v115
    %v560 = vpop.f32.mrf.mxu0
    %v561 = vadd.f32 0.0, %v560
    %562 = vmatmul.f32.gmra.mxu0 %v118
    %v563 = vpop.f32.mrf.mxu0
    %v564 = vadd.f32 0.0, %v563
    %565 = vmatmul.f32.gmra.mxu0 %v121
    %v566 = vpop.f32.mrf.mxu0
    %v567 = vadd.f32 0.0, %v566
    %568 = vmatmul.f32.gmra.mxu0 %v124
    %v569 = vpop.f32.mrf.mxu0
    %v570 = vadd.f32 0.0, %v569
    %571 = vdwg.mxu0
    %572 = vmatpush.msra.mxu0 0.0
    %573 = vmatpush.msra.mxu0 0.0
    %574 = vmatpush.msra.mxu0 0.0
    %575 = vmatpush.msra.mxu0 0.0
    %576 = vmatpush.msra.mxu0 0.0
    %577 = vmatpush.msra.mxu0 0.0
    %578 = vmatpush.msra.mxu0 0.0
    %579 = vmatpush.msra.mxu0 0.0
    %580 = vmatpush.msra.mxu0 0.0
    %581 = vmatpush.msra.mxu0 0.0
    %582 = vmatpush.msra.mxu0 0.0
    %583 = vmatpush.msra.mxu0 0.0
    %584 = vmatpush.msra.mxu0 %v542
    %585 = vmatpush.msra.mxu0 %v541
    %586 = vmatpush.msra.mxu0 %v540
    %587 = vmatpush.msra.mxu0 %v539
    %588 = vmatmul.f32.gmra.mxu0 %v156
    %v589 = vpop.f32.mrf.mxu0
    %v590 = vadd.f32 0.0, %v589
    %591 = vmatmul.f32.gmra.mxu0 %v159
    %v592 = vpop.f32.mrf.mxu0
    %v593 = vadd.f32 0.0, %v592
    %594 = vmatmul.f32.gmra.mxu0 %v162
    %v595 = vpop.f32.mrf.mxu0
    %v596 = vadd.f32 0.0, %v595
    %597 = vmatmul.f32.gmra.mxu0 %v165
    %v598 = vpop.f32.mrf.mxu0
    %v599 = vadd.f32 0.0, %v598
    %600 = vdwg.mxu0
    %v601 = vld [vmem:[%s5] sm:$0xff]
    %v602 = vld [vmem:[%s5 + $0x8] sm:$0xff]
    %v603 = vld [vmem:[%s5 + $0x10] sm:$0xff]
    %v604 = vld [vmem:[%s5 + $0x18] sm:$0xff]
    %s605 = scalar_lea.vmem %s5, 32
    %v606 = vld [vmem:[%s605] sm:$0xff]
    %v607 = vld [vmem:[%s605 + $0x8] sm:$0xff]
    %v608 = vld [vmem:[%s605 + $0x10] sm:$0xff]
    %v609 = vld [vmem:[%s605 + $0x18] sm:$0xff]
    %v611 = vsel %vm113, %v539, 0
    %v614 = vsel %vm113, %v540, 0
    %v617 = vsel %vm113, %v541, 0
    %v620 = vsel %vm113, %v542, 0
    %622 = vmatpush.msra.mxu0 0.0
    %623 = vmatpush.msra.mxu0 0.0
    %624 = vmatpush.msra.mxu0 0.0
    %625 = vmatpush.msra.mxu0 0.0
    %626 = vmatpush.msra.mxu0 0.0
    %627 = vmatpush.msra.mxu0 0.0
    %628 = vmatpush.msra.mxu0 0.0
    %629 = vmatpush.msra.mxu0 0.0
    %630 = vmatpush.msra.mxu0 0.0
    %631 = vmatpush.msra.mxu0 0.0
    %632 = vmatpush.msra.mxu0 0.0
    %633 = vmatpush.msra.mxu0 0.0
    %634 = vmatpush.msra.mxu0 %v609
    %635 = vmatpush.msra.mxu0 %v608
    %636 = vmatpush.msra.mxu0 %v607
    %637 = vmatpush.msra.mxu0 %v606
    %638 = vmatmul.f32.gmra.mxu0 %v611
    %v639 = vpop.f32.mrf.mxu0
    %v640 = vadd.f32 0.0, %v639
    %641 = vmatmul.f32.gmra.mxu0 %v614
    %v642 = vpop.f32.mrf.mxu0
    %v643 = vadd.f32 0.0, %v642
    %644 = vmatmul.f32.gmra.mxu0 %v617
    %v645 = vpop.f32.mrf.mxu0
    %v646 = vadd.f32 0.0, %v645
    %647 = vmatmul.f32.gmra.mxu0 %v620
    %v648 = vpop.f32.mrf.mxu0
    %v649 = vadd.f32 0.0, %v648
    %650 = vdwg.mxu0
    %v652 = vsel %vm113, %v561, 0
    %v655 = vsel %vm113, %v564, 0
    %v658 = vsel %vm113, %v567, 0
    %v661 = vsel %vm113, %v570, 0
    %663 = vmatpush.msra.mxu0 0.0
    %664 = vmatpush.msra.mxu0 0.0
    %665 = vmatpush.msra.mxu0 0.0
    %666 = vmatpush.msra.mxu0 0.0
    %667 = vmatpush.msra.mxu0 0.0
    %668 = vmatpush.msra.mxu0 0.0
    %669 = vmatpush.msra.mxu0 0.0
    %670 = vmatpush.msra.mxu0 0.0
    %671 = vmatpush.msra.mxu0 0.0
    %672 = vmatpush.msra.mxu0 0.0
    %673 = vmatpush.msra.mxu0 0.0
    %674 = vmatpush.msra.mxu0 0.0
    %675 = vmatpush.msra.mxu0 %v604
    %676 = vmatpush.msra.mxu0 %v603
    %677 = vmatpush.msra.mxu0 %v602
    %678 = vmatpush.msra.mxu0 %v601
    %679 = vmatmul.f32.gmra.mxu0 %v652
    %v680 = vpop.f32.mrf.mxu0
    %v681 = vadd.f32 %v640, %v680
    %682 = vmatmul.f32.gmra.mxu0 %v655
    %v683 = vpop.f32.mrf.mxu0
    %v684 = vadd.f32 %v643, %v683
    %685 = vmatmul.f32.gmra.mxu0 %v658
    %v686 = vpop.f32.mrf.mxu0
    %v687 = vadd.f32 %v646, %v686
    %688 = vmatmul.f32.gmra.mxu0 %v661
    %v689 = vpop.f32.mrf.mxu0
    %v690 = vadd.f32 %v649, %v689
    %691 = vdwg.mxu0
    %s692 = scalar_lea.vmem %s5, 64
    %v693 = vld [vmem:[%s692] sm:$0xff]
    %v694 = vld [vmem:[%s692 + $0x8] sm:$0xff]
    %v695 = vld [vmem:[%s692 + $0x10] sm:$0xff]
    %v696 = vld [vmem:[%s692 + $0x18] sm:$0xff]
    %v698 = vsel %vm113, %v590, 0
    %v701 = vsel %vm113, %v593, 0
    %v704 = vsel %vm113, %v596, 0
    %v707 = vsel %vm113, %v599, 0
    %709 = vmatpush.msra.mxu0 0.0
    %710 = vmatpush.msra.mxu0 0.0
    %711 = vmatpush.msra.mxu0 0.0
    %712 = vmatpush.msra.mxu0 0.0
    %713 = vmatpush.msra.mxu0 0.0
    %714 = vmatpush.msra.mxu0 0.0
    %715 = vmatpush.msra.mxu0 0.0
    %716 = vmatpush.msra.mxu0 0.0
    %717 = vmatpush.msra.mxu0 0.0
    %718 = vmatpush.msra.mxu0 0.0
    %719 = vmatpush.msra.mxu0 0.0
    %720 = vmatpush.msra.mxu0 0.0
    %721 = vmatpush.msra.mxu0 %v696
    %722 = vmatpush.msra.mxu0 %v695
    %723 = vmatpush.msra.mxu0 %v694
    %724 = vmatpush.msra.mxu0 %v693
    %725 = vmatmul.f32.gmra.mxu0 %v698
    %v726 = vpop.f32.mrf.mxu0
    %v727 = vadd.f32 0.0, %v726
    %728 = vmatmul.f32.gmra.mxu0 %v701
    %v729 = vpop.f32.mrf.mxu0
    %v730 = vadd.f32 0.0, %v729
    %731 = vmatmul.f32.gmra.mxu0 %v704
    %v732 = vpop.f32.mrf.mxu0
    %v733 = vadd.f32 0.0, %v732
    %734 = vmatmul.f32.gmra.mxu0 %v707
    %v735 = vpop.f32.mrf.mxu0
    %v736 = vadd.f32 0.0, %v735
    %737 = vdwg.mxu0
    %v738 = vadd.f32 %v681, %v727
    %v739 = vadd.f32 %v684, %v730
    %v740 = vadd.f32 %v687, %v733
    %v741 = vadd.f32 %v690, %v736
    %v742 = vld [vmem:[%s6] sm:$0x1]
    %v744 = vperm.slane %v742, 0
    %v746 = vadd.f32 %v738, %v744
    %v747 = vadd.f32 %v739, %v744
    %v748 = vadd.f32 %v740, %v744
    %v749 = vadd.f32 %v741, %v744
    %v750 = vmax.f32 %v746, 0.0
    %v751 = vmax.f32 %v747, 0.0
    %v752 = vmax.f32 %v748, 0.0
    %v753 = vmax.f32 %v749, 0.0
    %vm754 = vcmp.lt.s32.totalorder %v76, 48
    %vm755 = vcmp.ge.s32.totalorder %v76, 64
    %vm756 = vcmp.lt.s32.totalorder %v76, 112
    %vm757 = vmand %vm755, %vm756
    %vm758 = vmor %vm754, %vm757
    %v759 = vsel %vm758, 0.5, 1.0
    %v760 = vsel %vm758, 0.5, 0.0
    %vm761 = vcmp.lt.s32.totalorder %v76, 64
    %v762 = vld [vmem:[%s7] sm:$0xff]
    %v763 = vld [vmem:[%s9] sm:$0x1]
    %v765 = vperm.slane %v763, 0
    %v768 = vsel %vm199, %v750, 0
    %v771 = vsel %vm199, %v751, 0
    %v774 = vsel %vm199, %v752, 0
    %v777 = vsel %vm199, %v753, 0
    %779 = vmatpush.msra.mxu0 0.0
    %780 = vmatpush.msra.mxu0 0.0
    %781 = vmatpush.msra.mxu0 0.0
    %782 = vmatpush.msra.mxu0 0.0
    %783 = vmatpush.msra.mxu0 0.0
    %784 = vmatpush.msra.mxu0 0.0
    %785 = vmatpush.msra.mxu0 0.0
    %786 = vmatpush.msra.mxu0 0.0
    %787 = vmatpush.msra.mxu0 0.0
    %788 = vmatpush.msra.mxu0 0.0
    %789 = vmatpush.msra.mxu0 0.0
    %790 = vmatpush.msra.mxu0 0.0
    %791 = vmatpush.msra.mxu0 0.0
    %792 = vmatpush.msra.mxu0 0.0
    %793 = vmatpush.msra.mxu0 0.0
    %794 = vmatpush.msra.mxu0 %v762
    %795 = vmatmul.f32.gmra.mxu0 %v768
    %v796 = vpop.f32.mrf.mxu0
    %v797 = vadd.f32 %v765, %v796
    %798 = vmatmul.f32.gmra.mxu0 %v771
    %v799 = vpop.f32.mrf.mxu0
    %v800 = vadd.f32 %v765, %v799
    %801 = vmatmul.f32.gmra.mxu0 %v774
    %v802 = vpop.f32.mrf.mxu0
    %v803 = vadd.f32 %v765, %v802
    %804 = vmatmul.f32.gmra.mxu0 %v777
    %v805 = vpop.f32.mrf.mxu0
    %v806 = vadd.f32 %v765, %v805
    %807 = vdwg.mxu0
    %808 = vst [vmem:[#allocation3] sm:$0xff] %v797
    %809 = vst [vmem:[#allocation3 + $0x8] sm:$0xff] %v800
    %810 = vst [vmem:[#allocation3 + $0x10] sm:$0xff] %v803
    %811 = vst [vmem:[#allocation3 + $0x18] sm:$0xff] %v806
    %v812 = vld [vmem:[#allocation4] sm:$0xff]
    %v813 = vld [vmem:[#allocation4 + $0x8] sm:$0xff]
    %s814 = scalar_lea.vmem [#allocation4], 16
    %v815 = vld [vmem:[%s814] sm:$0xff]
    %v816 = vld [vmem:[%s814 + $0x8] sm:$0xff]
    %v817 = vld [vmem:[#allocation3] sm:$0x3]
    %v818 = vld [vmem:[#allocation3 + $0x1e] sm:$0x3]
    %v819 = vsel %vm761, 1, 0
    %vm820 = vcmp.eq.s32.totalorder %v819, 1
    %v821 = vsel %vm820, %v817, %v818
    %vm822 = vcmask 130048
    %v824 = vsel %vm822, 0.0, 0
    %826 = vmatpush.msra.mxu0 0.0
    %827 = vmatpush.msra.mxu0 0.0
    %828 = vmatpush.msra.mxu0 0.0
    %829 = vmatpush.msra.mxu0 0.0
    %830 = vmatpush.msra.mxu0 0.0
    %831 = vmatpush.msra.mxu0 0.0
    %832 = vmatpush.msra.mxu0 0.0
    %833 = vmatpush.msra.mxu0 0.0
    %834 = vmatpush.msra.mxu0 0.0
    %835 = vmatpush.msra.mxu0 0.0
    %836 = vmatpush.msra.mxu0 0.0
    %837 = vmatpush.msra.mxu0 0.0
    %838 = vmatpush.msra.mxu0 0.0
    %839 = vmatpush.msra.mxu0 0.0
    %840 = vmatpush.msra.mxu0 %v813
    %841 = vmatpush.msra.mxu0 %v812
    %842 = vmatmul.f32.gmra.mxu0 %v824
    %v843 = vpop.f32.mrf.mxu0
    %v844 = vadd.f32 0.0, %v843
    %845 = vdwg.mxu0
    %v846 = vadd.f32 %v821, %v844
    %847 = vmatpush.msra.mxu0 0.0
    %848 = vmatpush.msra.mxu0 0.0
    %849 = vmatpush.msra.mxu0 0.0
    %850 = vmatpush.msra.mxu0 0.0
    %851 = vmatpush.msra.mxu0 0.0
    %852 = vmatpush.msra.mxu0 0.0
    %853 = vmatpush.msra.mxu0 0.0
    %854 = vmatpush.msra.mxu0 0.0
    %855 = vmatpush.msra.mxu0 0.0
    %856 = vmatpush.msra.mxu0 0.0
    %857 = vmatpush.msra.mxu0 0.0
    %858 = vmatpush.msra.mxu0 0.0
    %859 = vmatpush.msra.mxu0 0.0
    %860 = vmatpush.msra.mxu0 0.0
    %861 = vmatpush.msra.mxu0 %v816
    %862 = vmatpush.msra.mxu0 %v815
    %863 = vmatmul.f32.gmra.mxu0 %v824
    %v864 = vpop.f32.mrf.mxu0
    %v865 = vadd.f32 0.0, %v864
    %866 = vdwg.mxu0
    %v867 = vadd.f32 %v846, %v865
    %v868 = vtanh.pop %v867
    %v869 = vmul.f32 %v759, %v868
    %v870 = vadd.f32 %v869, %v760
    %v871 = vmul.f32 %v870, 0.0
    %873 = vrot.lane.b32.xlu0 %v870, 80
    %v874 = vpop.permute.xlu0 %873
    %v876 = vmul.f32 %v870, %v874
    %878 = vrot.lane.b32.xlu0 %v876, 16
    %v879 = vpop.permute.xlu0 %878
    %v881 = vadd.f32 %v871, %v879
    %v882 = vtanh.pop %v881
    %884 = vrot.lane.b32.xlu0 %v882, 16
    %v885 = vpop.permute.xlu0 %884
    %v887 = vmul.f32 %v870, %v885
    %889 = vrot.lane.b32.xlu0 %v887, 96
    %v890 = vpop.permute.xlu0 %889
    %vm892 = vcmask 123904
    %893 = vst.msk [vmem:[#allocation2] sm:$0x3] %vm892, %v890
    %894 = vrot.lane.b32.xlu0 %v887, 48
    %v895 = vpop.permute.xlu0 %894
    %vm897 = vcmask 255104
    %898 = vst.msk [vmem:[#allocation2 + $0x1e] sm:$0x3] %vm897, %v895
    %v899 = vld [vmem:[#allocation3 + $0x2] sm:$0x3]
    %v900 = vld [vmem:[#allocation3 + $0x1c] sm:$0x3]
    %v901 = vsel %vm820, %v899, %v900
    %v902 = vsel %vm822, %v890, 0
    %904 = vmatpush.msra.mxu0 0.0
    %905 = vmatpush.msra.mxu0 0.0
    %906 = vmatpush.msra.mxu0 0.0
    %907 = vmatpush.msra.mxu0 0.0
    %908 = vmatpush.msra.mxu0 0.0
    %909 = vmatpush.msra.mxu0 0.0
    %910 = vmatpush.msra.mxu0 0.0
    %911 = vmatpush.msra.mxu0 0.0
    %912 = vmatpush.msra.mxu0 0.0
    %913 = vmatpush.msra.mxu0 0.0
    %914 = vmatpush.msra.mxu0 0.0
    %915 = vmatpush.msra.mxu0 0.0
    %916 = vmatpush.msra.mxu0 0.0
    %917 = vmatpush.msra.mxu0 0.0
    %918 = vmatpush.msra.mxu0 %v813
    %919 = vmatpush.msra.mxu0 %v812
    %920 = vmatmul.f32.gmra.mxu0 %v902
    %v921 = vpop.f32.mrf.mxu0
    %v922 = vadd.f32 0.0, %v921
    %923 = vdwg.mxu0
    %v924 = vadd.f32 %v901, %v922
    %925 = vrot.lane.b32.xlu0 %v887, 32
    %v926 = vpop.permute.xlu0 %925
    %v927 = vsel %vm822, %v926, 0
    %929 = vmatpush.msra.mxu0 0.0
    %930 = vmatpush.msra.mxu0 0.0
    %931 = vmatpush.msra.mxu0 0.0
    %932 = vmatpush.msra.mxu0 0.0
    %933 = vmatpush.msra.mxu0 0.0
    %934 = vmatpush.msra.mxu0 0.0
    %935 = vmatpush.msra.mxu0 0.0
    %936 = vmatpush.msra.mxu0 0.0
    %937 = vmatpush.msra.mxu0 0.0
    %938 = vmatpush.msra.mxu0 0.0
    %939 = vmatpush.msra.mxu0 0.0
    %940 = vmatpush.msra.mxu0 0.0
    %941 = vmatpush.msra.mxu0 0.0
    %942 = vmatpush.msra.mxu0 0.0
    %943 = vmatpush.msra.mxu0 %v816
    %944 = vmatpush.msra.mxu0 %v815
    %945 = vmatmul.f32.gmra.mxu0 %v927
    %v946 = vpop.f32.mrf.mxu0
    %v947 = vadd.f32 0.0, %v946
    %948 = vdwg.mxu0
    %v949 = vadd.f32 %v924, %v947
    %v950 = vtanh.pop %v949
    %v951 = vmul.f32 %v759, %v950
    %v952 = vadd.f32 %v951, %v760
    %v953 = vmul.f32 %v952, %v881
    %955 = vrot.lane.b32.xlu0 %v952, 80
    %v956 = vpop.permute.xlu0 %955
    %v958 = vmul.f32 %v952, %v956
    %960 = vrot.lane.b32.xlu0 %v958, 16
    %v961 = vpop.permute.xlu0 %960
    %v963 = vadd.f32 %v953, %v961
    %v964 = vtanh.pop %v963
    %966 = vrot.lane.b32.xlu0 %v964, 16
    %v967 = vpop.permute.xlu0 %966
    %v969 = vmul.f32 %v952, %v967
    %971 = vrot.lane.b32.xlu0 %v969, 96
    %v972 = vpop.permute.xlu0 %971
    %974 = vst.msk [vmem:[#allocation2 + $0x2] sm:$0x3] %vm892, %v972
    %975 = vrot.lane.b32.xlu0 %v969, 48
    %v976 = vpop.permute.xlu0 %975
    %978 = vst.msk [vmem:[#allocation2 + $0x1c] sm:$0x3] %vm897, %v976
    %v979 = vld [vmem:[#allocation3 + $0x4] sm:$0x3]
    %v980 = vld [vmem:[#allocation3 + $0x1a] sm:$0x3]
    %v981 = vsel %vm820, %v979, %v980
    %v982 = vsel %vm822, %v972, 0
    %984 = vmatpush.msra.mxu0 0.0
    %985 = vmatpush.msra.mxu0 0.0
    %986 = vmatpush.msra.mxu0 0.0
    %987 = vmatpush.msra.mxu0 0.0
    %988 = vmatpush.msra.mxu0 0.0
    %989 = vmatpush.msra.mxu0 0.0
    %990 = vmatpush.msra.mxu0 0.0
    %991 = vmatpush.msra.mxu0 0.0
    %992 = vmatpush.msra.mxu0 0.0
    %993 = vmatpush.msra.mxu0 0.0
    %994 = vmatpush.msra.mxu0 0.0
    %995 = vmatpush.msra.mxu0 0.0
    %996 = vmatpush.msra.mxu0 0.0
    %997 = vmatpush.msra.mxu0 0.0
    %998 = vmatpush.msra.mxu0 %v813
    %999 = vmatpush.msra.mxu0 %v812
    %1000 = vmatmul.f32.gmra.mxu0 %v982
    %v1001 = vpop.f32.mrf.mxu0
    %v1002 = vadd.f32 0.0, %v1001
    %1003 = vdwg.mxu0
    %v1004 = vadd.f32 %v981, %v1002
    %1005 = vrot.lane.b32.xlu0 %v969, 32
    %v1006 = vpop.permute.xlu0 %1005
    %v1007 = vsel %vm822, %v1006, 0
    %1009 = vmatpush.msra.mxu0 0.0
    %1010 = vmatpush.msra.mxu0 0.0
    %1011 = vmatpush.msra.mxu0 0.0
    %1012 = vmatpush.msra.mxu0 0.0
    %1013 = vmatpush.msra.mxu0 0.0
    %1014 = vmatpush.msra.mxu0 0.0
    %1015 = vmatpush.msra.mxu0 0.0
    %1016 = vmatpush.msra.mxu0 0.0
    %1017 = vmatpush.msra.mxu0 0.0
    %1018 = vmatpush.msra.mxu0 0.0
    %1019 = vmatpush.msra.mxu0 0.0
    %1020 = vmatpush.msra.mxu0 0.0
    %1021 = vmatpush.msra.mxu0 0.0
    %1022 = vmatpush.msra.mxu0 0.0
    %1023 = vmatpush.msra.mxu0 %v816
    %1024 = vmatpush.msra.mxu0 %v815
    %1025 = vmatmul.f32.gmra.mxu0 %v1007
    %v1026 = vpop.f32.mrf.mxu0
    %v1027 = vadd.f32 0.0, %v1026
    %1028 = vdwg.mxu0
    %v1029 = vadd.f32 %v1004, %v1027
    %v1030 = vtanh.pop %v1029
    %v1031 = vmul.f32 %v759, %v1030
    %v1032 = vadd.f32 %v1031, %v760
    %v1033 = vmul.f32 %v1032, %v963
    %1035 = vrot.lane.b32.xlu0 %v1032, 80
    %v1036 = vpop.permute.xlu0 %1035
    %v1038 = vmul.f32 %v1032, %v1036
    %1040 = vrot.lane.b32.xlu0 %v1038, 16
    %v1041 = vpop.permute.xlu0 %1040
    %v1043 = vadd.f32 %v1033, %v1041
    %v1044 = vtanh.pop %v1043
    %1046 = vrot.lane.b32.xlu0 %v1044, 16
    %v1047 = vpop.permute.xlu0 %1046
    %v1049 = vmul.f32 %v1032, %v1047
    %1051 = vrot.lane.b32.xlu0 %v1049, 96
    %v1052 = vpop.permute.xlu0 %1051
    %1054 = vst.msk [vmem:[#allocation2 + $0x4] sm:$0x3] %vm892, %v1052
    %1055 = vrot.lane.b32.xlu0 %v1049, 48
    %v1056 = vpop.permute.xlu0 %1055
    %1058 = vst.msk [vmem:[#allocation2 + $0x1a] sm:$0x3] %vm897, %v1056
    %v1059 = vld [vmem:[#allocation3 + $0x6] sm:$0x3]
    %v1060 = vld [vmem:[#allocation3 + $0x18] sm:$0x3]
    %v1061 = vsel %vm820, %v1059, %v1060
    %v1062 = vsel %vm822, %v1052, 0
    %1064 = vmatpush.msra.mxu0 0.0
    %1065 = vmatpush.msra.mxu0 0.0
    %1066 = vmatpush.msra.mxu0 0.0
    %1067 = vmatpush.msra.mxu0 0.0
    %1068 = vmatpush.msra.mxu0 0.0
    %1069 = vmatpush.msra.mxu0 0.0
    %1070 = vmatpush.msra.mxu0 0.0
    %1071 = vmatpush.msra.mxu0 0.0
    %1072 = vmatpush.msra.mxu0 0.0
    %1073 = vmatpush.msra.mxu0 0.0
    %1074 = vmatpush.msra.mxu0 0.0
    %1075 = vmatpush.msra.mxu0 0.0
    %1076 = vmatpush.msra.mxu0 0.0
    %1077 = vmatpush.msra.mxu0 0.0
    %1078 = vmatpush.msra.mxu0 %v813
    %1079 = vmatpush.msra.mxu0 %v812
    %1080 = vmatmul.f32.gmra.mxu0 %v1062
    %v1081 = vpop.f32.mrf.mxu0
    %v1082 = vadd.f32 0.0, %v1081
    %1083 = vdwg.mxu0
    %v1084 = vadd.f32 %v1061, %v1082
    %1085 = vrot.lane.b32.xlu0 %v1049, 32
    %v1086 = vpop.permute.xlu0 %1085
    %v1087 = vsel %vm822, %v1086, 0
    %1089 = vmatpush.msra.mxu0 0.0
    %1090 = vmatpush.msra.mxu0 0.0
    %1091 = vmatpush.msra.mxu0 0.0
    %1092 = vmatpush.msra.mxu0 0.0
    %1093 = vmatpush.msra.mxu0 0.0
    %1094 = vmatpush.msra.mxu0 0.0
    %1095 = vmatpush.msra.mxu0 0.0
    %1096 = vmatpush.msra.mxu0 0.0
    %1097 = vmatpush.msra.mxu0 0.0
    %1098 = vmatpush.msra.mxu0 0.0
    %1099 = vmatpush.msra.mxu0 0.0
    %1100 = vmatpush.msra.mxu0 0.0
    %1101 = vmatpush.msra.mxu0 0.0
    %1102 = vmatpush.msra.mxu0 0.0
    %1103 = vmatpush.msra.mxu0 %v816
    %1104 = vmatpush.msra.mxu0 %v815
    %1105 = vmatmul.f32.gmra.mxu0 %v1087
    %v1106 = vpop.f32.mrf.mxu0
    %v1107 = vadd.f32 0.0, %v1106
    %1108 = vdwg.mxu0
    %v1109 = vadd.f32 %v1084, %v1107
    %v1110 = vtanh.pop %v1109
    %v1111 = vmul.f32 %v759, %v1110
    %v1112 = vadd.f32 %v1111, %v760
    %v1113 = vmul.f32 %v1112, %v1043
    %1115 = vrot.lane.b32.xlu0 %v1112, 80
    %v1116 = vpop.permute.xlu0 %1115
    %v1118 = vmul.f32 %v1112, %v1116
    %1120 = vrot.lane.b32.xlu0 %v1118, 16
    %v1121 = vpop.permute.xlu0 %1120
    %v1123 = vadd.f32 %v1113, %v1121
    %v1124 = vtanh.pop %v1123
    %1126 = vrot.lane.b32.xlu0 %v1124, 16
    %v1127 = vpop.permute.xlu0 %1126
    %v1129 = vmul.f32 %v1112, %v1127
    %1131 = vrot.lane.b32.xlu0 %v1129, 96
    %v1132 = vpop.permute.xlu0 %1131
    %1134 = vst.msk [vmem:[#allocation2 + $0x6] sm:$0x3] %vm892, %v1132
    %1135 = vrot.lane.b32.xlu0 %v1129, 48
    %v1136 = vpop.permute.xlu0 %1135
    %1138 = vst.msk [vmem:[#allocation2 + $0x18] sm:$0x3] %vm897, %v1136
    %v1139 = vld [vmem:[#allocation3 + $0x8] sm:$0x3]
    %v1140 = vld [vmem:[#allocation3 + $0x16] sm:$0x3]
    %v1141 = vsel %vm820, %v1139, %v1140
    %v1142 = vsel %vm822, %v1132, 0
    %1144 = vmatpush.msra.mxu0 0.0
    %1145 = vmatpush.msra.mxu0 0.0
    %1146 = vmatpush.msra.mxu0 0.0
    %1147 = vmatpush.msra.mxu0 0.0
    %1148 = vmatpush.msra.mxu0 0.0
    %1149 = vmatpush.msra.mxu0 0.0
    %1150 = vmatpush.msra.mxu0 0.0
    %1151 = vmatpush.msra.mxu0 0.0
    %1152 = vmatpush.msra.mxu0 0.0
    %1153 = vmatpush.msra.mxu0 0.0
    %1154 = vmatpush.msra.mxu0 0.0
    %1155 = vmatpush.msra.mxu0 0.0
    %1156 = vmatpush.msra.mxu0 0.0
    %1157 = vmatpush.msra.mxu0 0.0
    %1158 = vmatpush.msra.mxu0 %v813
    %1159 = vmatpush.msra.mxu0 %v812
    %1160 = vmatmul.f32.gmra.mxu0 %v1142
    %v1161 = vpop.f32.mrf.mxu0
    %v1162 = vadd.f32 0.0, %v1161
    %1163 = vdwg.mxu0
    %v1164 = vadd.f32 %v1141, %v1162
    %1165 = vrot.lane.b32.xlu0 %v1129, 32
    %v1166 = vpop.permute.xlu0 %1165
    %v1167 = vsel %vm822, %v1166, 0
    %1169 = vmatpush.msra.mxu0 0.0
    %1170 = vmatpush.msra.mxu0 0.0
    %1171 = vmatpush.msra.mxu0 0.0
    %1172 = vmatpush.msra.mxu0 0.0
    %1173 = vmatpush.msra.mxu0 0.0
    %1174 = vmatpush.msra.mxu0 0.0
    %1175 = vmatpush.msra.mxu0 0.0
    %1176 = vmatpush.msra.mxu0 0.0
    %1177 = vmatpush.msra.mxu0 0.0
    %1178 = vmatpush.msra.mxu0 0.0
    %1179 = vmatpush.msra.mxu0 0.0
    %1180 = vmatpush.msra.mxu0 0.0
    %1181 = vmatpush.msra.mxu0 0.0
    %1182 = vmatpush.msra.mxu0 0.0
    %1183 = vmatpush.msra.mxu0 %v816
    %1184 = vmatpush.msra.mxu0 %v815
    %1185 = vmatmul.f32.gmra.mxu0 %v1167
    %v1186 = vpop.f32.mrf.mxu0
    %v1187 = vadd.f32 0.0, %v1186
    %1188 = vdwg.mxu0
    %v1189 = vadd.f32 %v1164, %v1187
    %v1190 = vtanh.pop %v1189
    %v1191 = vmul.f32 %v759, %v1190
    %v1192 = vadd.f32 %v1191, %v760
    %v1193 = vmul.f32 %v1192, %v1123
    %1195 = vrot.lane.b32.xlu0 %v1192, 80
    %v1196 = vpop.permute.xlu0 %1195
    %v1198 = vmul.f32 %v1192, %v1196
    %1200 = vrot.lane.b32.xlu0 %v1198, 16
    %v1201 = vpop.permute.xlu0 %1200
    %v1203 = vadd.f32 %v1193, %v1201
    %v1204 = vtanh.pop %v1203
    %1206 = vrot.lane.b32.xlu0 %v1204, 16
    %v1207 = vpop.permute.xlu0 %1206
    %v1209 = vmul.f32 %v1192, %v1207
    %1211 = vrot.lane.b32.xlu0 %v1209, 96
    %v1212 = vpop.permute.xlu0 %1211
    %1214 = vst.msk [vmem:[#allocation2 + $0x8] sm:$0x3] %vm892, %v1212
    %1215 = vrot.lane.b32.xlu0 %v1209, 48
    %v1216 = vpop.permute.xlu0 %1215
    %1218 = vst.msk [vmem:[#allocation2 + $0x16] sm:$0x3] %vm897, %v1216
    %v1219 = vld [vmem:[#allocation3 + $0xa] sm:$0x3]
    %v1220 = vld [vmem:[#allocation3 + $0x14] sm:$0x3]
    %v1221 = vsel %vm820, %v1219, %v1220
    %v1222 = vsel %vm822, %v1212, 0
    %1224 = vmatpush.msra.mxu0 0.0
    %1225 = vmatpush.msra.mxu0 0.0
    %1226 = vmatpush.msra.mxu0 0.0
    %1227 = vmatpush.msra.mxu0 0.0
    %1228 = vmatpush.msra.mxu0 0.0
    %1229 = vmatpush.msra.mxu0 0.0
    %1230 = vmatpush.msra.mxu0 0.0
    %1231 = vmatpush.msra.mxu0 0.0
    %1232 = vmatpush.msra.mxu0 0.0
    %1233 = vmatpush.msra.mxu0 0.0
    %1234 = vmatpush.msra.mxu0 0.0
    %1235 = vmatpush.msra.mxu0 0.0
    %1236 = vmatpush.msra.mxu0 0.0
    %1237 = vmatpush.msra.mxu0 0.0
    %1238 = vmatpush.msra.mxu0 %v813
    %1239 = vmatpush.msra.mxu0 %v812
    %1240 = vmatmul.f32.gmra.mxu0 %v1222
    %v1241 = vpop.f32.mrf.mxu0
    %v1242 = vadd.f32 0.0, %v1241
    %1243 = vdwg.mxu0
    %v1244 = vadd.f32 %v1221, %v1242
    %1245 = vrot.lane.b32.xlu0 %v1209, 32
    %v1246 = vpop.permute.xlu0 %1245
    %v1247 = vsel %vm822, %v1246, 0
    %1249 = vmatpush.msra.mxu0 0.0
    %1250 = vmatpush.msra.mxu0 0.0
    %1251 = vmatpush.msra.mxu0 0.0
    %1252 = vmatpush.msra.mxu0 0.0
    %1253 = vmatpush.msra.mxu0 0.0
    %1254 = vmatpush.msra.mxu0 0.0
    %1255 = vmatpush.msra.mxu0 0.0
    %1256 = vmatpush.msra.mxu0 0.0
    %1257 = vmatpush.msra.mxu0 0.0
    %1258 = vmatpush.msra.mxu0 0.0
    %1259 = vmatpush.msra.mxu0 0.0
    %1260 = vmatpush.msra.mxu0 0.0
    %1261 = vmatpush.msra.mxu0 0.0
    %1262 = vmatpush.msra.mxu0 0.0
    %1263 = vmatpush.msra.mxu0 %v816
    %1264 = vmatpush.msra.mxu0 %v815
    %1265 = vmatmul.f32.gmra.mxu0 %v1247
    %v1266 = vpop.f32.mrf.mxu0
    %v1267 = vadd.f32 0.0, %v1266
    %1268 = vdwg.mxu0
    %v1269 = vadd.f32 %v1244, %v1267
    %v1270 = vtanh.pop %v1269
    %v1271 = vmul.f32 %v759, %v1270
    %v1272 = vadd.f32 %v1271, %v760
    %v1273 = vmul.f32 %v1272, %v1203
    %1275 = vrot.lane.b32.xlu0 %v1272, 80
    %v1276 = vpop.permute.xlu0 %1275
    %v1278 = vmul.f32 %v1272, %v1276
    %1280 = vrot.lane.b32.xlu0 %v1278, 16
    %v1281 = vpop.permute.xlu0 %1280
    %v1283 = vadd.f32 %v1273, %v1281
    %v1284 = vtanh.pop %v1283
    %1286 = vrot.lane.b32.xlu0 %v1284, 16
    %v1287 = vpop.permute.xlu0 %1286
    %v1289 = vmul.f32 %v1272, %v1287
    %1291 = vrot.lane.b32.xlu0 %v1289, 96
    %v1292 = vpop.permute.xlu0 %1291
    %1294 = vst.msk [vmem:[#allocation2 + $0xa] sm:$0x3] %vm892, %v1292
    %1295 = vrot.lane.b32.xlu0 %v1289, 48
    %v1296 = vpop.permute.xlu0 %1295
    %1298 = vst.msk [vmem:[#allocation2 + $0x14] sm:$0x3] %vm897, %v1296
    %v1299 = vld [vmem:[#allocation3 + $0xc] sm:$0x3]
    %v1300 = vld [vmem:[#allocation3 + $0x12] sm:$0x3]
    %v1301 = vsel %vm820, %v1299, %v1300
    %v1302 = vsel %vm822, %v1292, 0
    %1304 = vmatpush.msra.mxu0 0.0
    %1305 = vmatpush.msra.mxu0 0.0
    %1306 = vmatpush.msra.mxu0 0.0
    %1307 = vmatpush.msra.mxu0 0.0
    %1308 = vmatpush.msra.mxu0 0.0
    %1309 = vmatpush.msra.mxu0 0.0
    %1310 = vmatpush.msra.mxu0 0.0
    %1311 = vmatpush.msra.mxu0 0.0
    %1312 = vmatpush.msra.mxu0 0.0
    %1313 = vmatpush.msra.mxu0 0.0
    %1314 = vmatpush.msra.mxu0 0.0
    %1315 = vmatpush.msra.mxu0 0.0
    %1316 = vmatpush.msra.mxu0 0.0
    %1317 = vmatpush.msra.mxu0 0.0
    %1318 = vmatpush.msra.mxu0 %v813
    %1319 = vmatpush.msra.mxu0 %v812
    %1320 = vmatmul.f32.gmra.mxu0 %v1302
    %v1321 = vpop.f32.mrf.mxu0
    %v1322 = vadd.f32 0.0, %v1321
    %1323 = vdwg.mxu0
    %v1324 = vadd.f32 %v1301, %v1322
    %1325 = vrot.lane.b32.xlu0 %v1289, 32
    %v1326 = vpop.permute.xlu0 %1325
    %v1327 = vsel %vm822, %v1326, 0
    %1329 = vmatpush.msra.mxu0 0.0
    %1330 = vmatpush.msra.mxu0 0.0
    %1331 = vmatpush.msra.mxu0 0.0
    %1332 = vmatpush.msra.mxu0 0.0
    %1333 = vmatpush.msra.mxu0 0.0
    %1334 = vmatpush.msra.mxu0 0.0
    %1335 = vmatpush.msra.mxu0 0.0
    %1336 = vmatpush.msra.mxu0 0.0
    %1337 = vmatpush.msra.mxu0 0.0
    %1338 = vmatpush.msra.mxu0 0.0
    %1339 = vmatpush.msra.mxu0 0.0
    %1340 = vmatpush.msra.mxu0 0.0
    %1341 = vmatpush.msra.mxu0 0.0
    %1342 = vmatpush.msra.mxu0 0.0
    %1343 = vmatpush.msra.mxu0 %v816
    %1344 = vmatpush.msra.mxu0 %v815
    %1345 = vmatmul.f32.gmra.mxu0 %v1327
    %v1346 = vpop.f32.mrf.mxu0
    %v1347 = vadd.f32 0.0, %v1346
    %1348 = vdwg.mxu0
    %v1349 = vadd.f32 %v1324, %v1347
    %v1350 = vtanh.pop %v1349
    %v1351 = vmul.f32 %v759, %v1350
    %v1352 = vadd.f32 %v1351, %v760
    %v1353 = vmul.f32 %v1352, %v1283
    %1355 = vrot.lane.b32.xlu0 %v1352, 80
    %v1356 = vpop.permute.xlu0 %1355
    %v1358 = vmul.f32 %v1352, %v1356
    %1360 = vrot.lane.b32.xlu0 %v1358, 16
    %v1361 = vpop.permute.xlu0 %1360
    %v1363 = vadd.f32 %v1353, %v1361
    %v1364 = vtanh.pop %v1363
    %1366 = vrot.lane.b32.xlu0 %v1364, 16
    %v1367 = vpop.permute.xlu0 %1366
    %v1369 = vmul.f32 %v1352, %v1367
    %1371 = vrot.lane.b32.xlu0 %v1369, 96
    %v1372 = vpop.permute.xlu0 %1371
    %1374 = vst.msk [vmem:[#allocation2 + $0xc] sm:$0x3] %vm892, %v1372
    %1375 = vrot.lane.b32.xlu0 %v1369, 48
    %v1376 = vpop.permute.xlu0 %1375
    %1378 = vst.msk [vmem:[#allocation2 + $0x12] sm:$0x3] %vm897, %v1376
    %v1379 = vld [vmem:[#allocation3 + $0xe] sm:$0x3]
    %v1380 = vld [vmem:[#allocation3 + $0x10] sm:$0x3]
    %v1381 = vsel %vm820, %v1379, %v1380
    %v1382 = vsel %vm822, %v1372, 0
    %1384 = vmatpush.msra.mxu0 0.0
    %1385 = vmatpush.msra.mxu0 0.0
    %1386 = vmatpush.msra.mxu0 0.0
    %1387 = vmatpush.msra.mxu0 0.0
    %1388 = vmatpush.msra.mxu0 0.0
    %1389 = vmatpush.msra.mxu0 0.0
    %1390 = vmatpush.msra.mxu0 0.0
    %1391 = vmatpush.msra.mxu0 0.0
    %1392 = vmatpush.msra.mxu0 0.0
    %1393 = vmatpush.msra.mxu0 0.0
    %1394 = vmatpush.msra.mxu0 0.0
    %1395 = vmatpush.msra.mxu0 0.0
    %1396 = vmatpush.msra.mxu0 0.0
    %1397 = vmatpush.msra.mxu0 0.0
    %1398 = vmatpush.msra.mxu0 %v813
    %1399 = vmatpush.msra.mxu0 %v812
    %1400 = vmatmul.f32.gmra.mxu0 %v1382
    %v1401 = vpop.f32.mrf.mxu0
    %v1402 = vadd.f32 0.0, %v1401
    %1403 = vdwg.mxu0
    %v1404 = vadd.f32 %v1381, %v1402
    %1405 = vrot.lane.b32.xlu0 %v1369, 32
    %v1406 = vpop.permute.xlu0 %1405
    %v1407 = vsel %vm822, %v1406, 0
    %1409 = vmatpush.msra.mxu0 0.0
    %1410 = vmatpush.msra.mxu0 0.0
    %1411 = vmatpush.msra.mxu0 0.0
    %1412 = vmatpush.msra.mxu0 0.0
    %1413 = vmatpush.msra.mxu0 0.0
    %1414 = vmatpush.msra.mxu0 0.0
    %1415 = vmatpush.msra.mxu0 0.0
    %1416 = vmatpush.msra.mxu0 0.0
    %1417 = vmatpush.msra.mxu0 0.0
    %1418 = vmatpush.msra.mxu0 0.0
    %1419 = vmatpush.msra.mxu0 0.0
    %1420 = vmatpush.msra.mxu0 0.0
    %1421 = vmatpush.msra.mxu0 0.0
    %1422 = vmatpush.msra.mxu0 0.0
    %1423 = vmatpush.msra.mxu0 %v816
    %1424 = vmatpush.msra.mxu0 %v815
    %1425 = vmatmul.f32.gmra.mxu0 %v1407
    %v1426 = vpop.f32.mrf.mxu0
    %v1427 = vadd.f32 0.0, %v1426
    %1428 = vdwg.mxu0
    %v1429 = vadd.f32 %v1404, %v1427
    %v1430 = vtanh.pop %v1429
    %v1431 = vmul.f32 %v759, %v1430
    %v1432 = vadd.f32 %v1431, %v760
    %v1433 = vmul.f32 %v1432, %v1363
    %1435 = vrot.lane.b32.xlu0 %v1432, 80
    %v1436 = vpop.permute.xlu0 %1435
    %v1438 = vmul.f32 %v1432, %v1436
    %1440 = vrot.lane.b32.xlu0 %v1438, 16
    %v1441 = vpop.permute.xlu0 %1440
    %v1443 = vadd.f32 %v1433, %v1441
    %v1444 = vtanh.pop %v1443
    %1446 = vrot.lane.b32.xlu0 %v1444, 16
    %v1447 = vpop.permute.xlu0 %1446
    %v1449 = vmul.f32 %v1432, %v1447
    %1451 = vrot.lane.b32.xlu0 %v1449, 96
    %v1452 = vpop.permute.xlu0 %1451
    %1454 = vst.msk [vmem:[#allocation2 + $0xe] sm:$0x3] %vm892, %v1452
    %1455 = vrot.lane.b32.xlu0 %v1449, 48
    %v1456 = vpop.permute.xlu0 %1455
    %1458 = vst.msk [vmem:[#allocation2 + $0x10] sm:$0x3] %vm897, %v1456
    %v1459 = vld [vmem:[#allocation3 + $0x10] sm:$0x3]
    %v1460 = vld [vmem:[#allocation3 + $0xe] sm:$0x3]
    %v1461 = vsel %vm820, %v1459, %v1460
    %v1462 = vsel %vm822, %v1452, 0
    %1464 = vmatpush.msra.mxu0 0.0
    %1465 = vmatpush.msra.mxu0 0.0
    %1466 = vmatpush.msra.mxu0 0.0
    %1467 = vmatpush.msra.mxu0 0.0
    %1468 = vmatpush.msra.mxu0 0.0
    %1469 = vmatpush.msra.mxu0 0.0
    %1470 = vmatpush.msra.mxu0 0.0
    %1471 = vmatpush.msra.mxu0 0.0
    %1472 = vmatpush.msra.mxu0 0.0
    %1473 = vmatpush.msra.mxu0 0.0
    %1474 = vmatpush.msra.mxu0 0.0
    %1475 = vmatpush.msra.mxu0 0.0
    %1476 = vmatpush.msra.mxu0 0.0
    %1477 = vmatpush.msra.mxu0 0.0
    %1478 = vmatpush.msra.mxu0 %v813
    %1479 = vmatpush.msra.mxu0 %v812
    %1480 = vmatmul.f32.gmra.mxu0 %v1462
    %v1481 = vpop.f32.mrf.mxu0
    %v1482 = vadd.f32 0.0, %v1481
    %1483 = vdwg.mxu0
    %v1484 = vadd.f32 %v1461, %v1482
    %1485 = vrot.lane.b32.xlu0 %v1449, 32
    %v1486 = vpop.permute.xlu0 %1485
    %v1487 = vsel %vm822, %v1486, 0
    %1489 = vmatpush.msra.mxu0 0.0
    %1490 = vmatpush.msra.mxu0 0.0
    %1491 = vmatpush.msra.mxu0 0.0
    %1492 = vmatpush.msra.mxu0 0.0
    %1493 = vmatpush.msra.mxu0 0.0
    %1494 = vmatpush.msra.mxu0 0.0
    %1495 = vmatpush.msra.mxu0 0.0
    %1496 = vmatpush.msra.mxu0 0.0
    %1497 = vmatpush.msra.mxu0 0.0
    %1498 = vmatpush.msra.mxu0 0.0
    %1499 = vmatpush.msra.mxu0 0.0
    %1500 = vmatpush.msra.mxu0 0.0
    %1501 = vmatpush.msra.mxu0 0.0
    %1502 = vmatpush.msra.mxu0 0.0
    %1503 = vmatpush.msra.mxu0 %v816
    %1504 = vmatpush.msra.mxu0 %v815
    %1505 = vmatmul.f32.gmra.mxu0 %v1487
    %v1506 = vpop.f32.mrf.mxu0
    %v1507 = vadd.f32 0.0, %v1506
    %1508 = vdwg.mxu0
    %v1509 = vadd.f32 %v1484, %v1507
    %v1510 = vtanh.pop %v1509
    %v1511 = vmul.f32 %v759, %v1510
    %v1512 = vadd.f32 %v1511, %v760
    %v1513 = vmul.f32 %v1512, %v1443
    %1515 = vrot.lane.b32.xlu0 %v1512, 80
    %v1516 = vpop.permute.xlu0 %1515
    %v1518 = vmul.f32 %v1512, %v1516
    %1520 = vrot.lane.b32.xlu0 %v1518, 16
    %v1521 = vpop.permute.xlu0 %1520
    %v1523 = vadd.f32 %v1513, %v1521
    %v1524 = vtanh.pop %v1523
    %1526 = vrot.lane.b32.xlu0 %v1524, 16
    %v1527 = vpop.permute.xlu0 %1526
    %v1529 = vmul.f32 %v1512, %v1527
    %1531 = vrot.lane.b32.xlu0 %v1529, 96
    %v1532 = vpop.permute.xlu0 %1531
    %1534 = vst.msk [vmem:[#allocation2 + $0x10] sm:$0x3] %vm892, %v1532
    %1535 = vrot.lane.b32.xlu0 %v1529, 48
    %v1536 = vpop.permute.xlu0 %1535
    %1538 = vst.msk [vmem:[#allocation2 + $0xe] sm:$0x3] %vm897, %v1536
    %v1539 = vld [vmem:[#allocation3 + $0x12] sm:$0x3]
    %v1540 = vld [vmem:[#allocation3 + $0xc] sm:$0x3]
    %v1541 = vsel %vm820, %v1539, %v1540
    %v1542 = vsel %vm822, %v1532, 0
    %1544 = vmatpush.msra.mxu0 0.0
    %1545 = vmatpush.msra.mxu0 0.0
    %1546 = vmatpush.msra.mxu0 0.0
    %1547 = vmatpush.msra.mxu0 0.0
    %1548 = vmatpush.msra.mxu0 0.0
    %1549 = vmatpush.msra.mxu0 0.0
    %1550 = vmatpush.msra.mxu0 0.0
    %1551 = vmatpush.msra.mxu0 0.0
    %1552 = vmatpush.msra.mxu0 0.0
    %1553 = vmatpush.msra.mxu0 0.0
    %1554 = vmatpush.msra.mxu0 0.0
    %1555 = vmatpush.msra.mxu0 0.0
    %1556 = vmatpush.msra.mxu0 0.0
    %1557 = vmatpush.msra.mxu0 0.0
    %1558 = vmatpush.msra.mxu0 %v813
    %1559 = vmatpush.msra.mxu0 %v812
    %1560 = vmatmul.f32.gmra.mxu0 %v1542
    %v1561 = vpop.f32.mrf.mxu0
    %v1562 = vadd.f32 0.0, %v1561
    %1563 = vdwg.mxu0
    %v1564 = vadd.f32 %v1541, %v1562
    %1565 = vrot.lane.b32.xlu0 %v1529, 32
    %v1566 = vpop.permute.xlu0 %1565
    %v1567 = vsel %vm822, %v1566, 0
    %1569 = vmatpush.msra.mxu0 0.0
    %1570 = vmatpush.msra.mxu0 0.0
    %1571 = vmatpush.msra.mxu0 0.0
    %1572 = vmatpush.msra.mxu0 0.0
    %1573 = vmatpush.msra.mxu0 0.0
    %1574 = vmatpush.msra.mxu0 0.0
    %1575 = vmatpush.msra.mxu0 0.0
    %1576 = vmatpush.msra.mxu0 0.0
    %1577 = vmatpush.msra.mxu0 0.0
    %1578 = vmatpush.msra.mxu0 0.0
    %1579 = vmatpush.msra.mxu0 0.0
    %1580 = vmatpush.msra.mxu0 0.0
    %1581 = vmatpush.msra.mxu0 0.0
    %1582 = vmatpush.msra.mxu0 0.0
    %1583 = vmatpush.msra.mxu0 %v816
    %1584 = vmatpush.msra.mxu0 %v815
    %1585 = vmatmul.f32.gmra.mxu0 %v1567
    %v1586 = vpop.f32.mrf.mxu0
    %v1587 = vadd.f32 0.0, %v1586
    %1588 = vdwg.mxu0
    %v1589 = vadd.f32 %v1564, %v1587
    %v1590 = vtanh.pop %v1589
    %v1591 = vmul.f32 %v759, %v1590
    %v1592 = vadd.f32 %v1591, %v760
    %v1593 = vmul.f32 %v1592, %v1523
    %1595 = vrot.lane.b32.xlu0 %v1592, 80
    %v1596 = vpop.permute.xlu0 %1595
    %v1598 = vmul.f32 %v1592, %v1596
    %1600 = vrot.lane.b32.xlu0 %v1598, 16
    %v1601 = vpop.permute.xlu0 %1600
    %v1603 = vadd.f32 %v1593, %v1601
    %v1604 = vtanh.pop %v1603
    %1606 = vrot.lane.b32.xlu0 %v1604, 16
    %v1607 = vpop.permute.xlu0 %1606
    %v1609 = vmul.f32 %v1592, %v1607
    %1611 = vrot.lane.b32.xlu0 %v1609, 96
    %v1612 = vpop.permute.xlu0 %1611
    %1614 = vst.msk [vmem:[#allocation2 + $0x12] sm:$0x3] %vm892, %v1612
    %1615 = vrot.lane.b32.xlu0 %v1609, 48
    %v1616 = vpop.permute.xlu0 %1615
    %1618 = vst.msk [vmem:[#allocation2 + $0xc] sm:$0x3] %vm897, %v1616
    %v1619 = vld [vmem:[#allocation3 + $0x14] sm:$0x3]
    %v1620 = vld [vmem:[#allocation3 + $0xa] sm:$0x3]
    %v1621 = vsel %vm820, %v1619, %v1620
    %v1622 = vsel %vm822, %v1612, 0
    %1624 = vmatpush.msra.mxu0 0.0
    %1625 = vmatpush.msra.mxu0 0.0
    %1626 = vmatpush.msra.mxu0 0.0
    %1627 = vmatpush.msra.mxu0 0.0
    %1628 = vmatpush.msra.mxu0 0.0
    %1629 = vmatpush.msra.mxu0 0.0
    %1630 = vmatpush.msra.mxu0 0.0
    %1631 = vmatpush.msra.mxu0 0.0
    %1632 = vmatpush.msra.mxu0 0.0
    %1633 = vmatpush.msra.mxu0 0.0
    %1634 = vmatpush.msra.mxu0 0.0
    %1635 = vmatpush.msra.mxu0 0.0
    %1636 = vmatpush.msra.mxu0 0.0
    %1637 = vmatpush.msra.mxu0 0.0
    %1638 = vmatpush.msra.mxu0 %v813
    %1639 = vmatpush.msra.mxu0 %v812
    %1640 = vmatmul.f32.gmra.mxu0 %v1622
    %v1641 = vpop.f32.mrf.mxu0
    %v1642 = vadd.f32 0.0, %v1641
    %1643 = vdwg.mxu0
    %v1644 = vadd.f32 %v1621, %v1642
    %1645 = vrot.lane.b32.xlu0 %v1609, 32
    %v1646 = vpop.permute.xlu0 %1645
    %v1647 = vsel %vm822, %v1646, 0
    %1649 = vmatpush.msra.mxu0 0.0
    %1650 = vmatpush.msra.mxu0 0.0
    %1651 = vmatpush.msra.mxu0 0.0
    %1652 = vmatpush.msra.mxu0 0.0
    %1653 = vmatpush.msra.mxu0 0.0
    %1654 = vmatpush.msra.mxu0 0.0
    %1655 = vmatpush.msra.mxu0 0.0
    %1656 = vmatpush.msra.mxu0 0.0
    %1657 = vmatpush.msra.mxu0 0.0
    %1658 = vmatpush.msra.mxu0 0.0
    %1659 = vmatpush.msra.mxu0 0.0
    %1660 = vmatpush.msra.mxu0 0.0
    %1661 = vmatpush.msra.mxu0 0.0
    %1662 = vmatpush.msra.mxu0 0.0
    %1663 = vmatpush.msra.mxu0 %v816
    %1664 = vmatpush.msra.mxu0 %v815
    %1665 = vmatmul.f32.gmra.mxu0 %v1647
    %v1666 = vpop.f32.mrf.mxu0
    %v1667 = vadd.f32 0.0, %v1666
    %1668 = vdwg.mxu0
    %v1669 = vadd.f32 %v1644, %v1667
    %v1670 = vtanh.pop %v1669
    %v1671 = vmul.f32 %v759, %v1670
    %v1672 = vadd.f32 %v1671, %v760
    %v1673 = vmul.f32 %v1672, %v1603
    %1675 = vrot.lane.b32.xlu0 %v1672, 80
    %v1676 = vpop.permute.xlu0 %1675
    %v1678 = vmul.f32 %v1672, %v1676
    %1680 = vrot.lane.b32.xlu0 %v1678, 16
    %v1681 = vpop.permute.xlu0 %1680
    %v1683 = vadd.f32 %v1673, %v1681
    %v1684 = vtanh.pop %v1683
    %1686 = vrot.lane.b32.xlu0 %v1684, 16
    %v1687 = vpop.permute.xlu0 %1686
    %v1689 = vmul.f32 %v1672, %v1687
    %1691 = vrot.lane.b32.xlu0 %v1689, 96
    %v1692 = vpop.permute.xlu0 %1691
    %1694 = vst.msk [vmem:[#allocation2 + $0x14] sm:$0x3] %vm892, %v1692
    %1695 = vrot.lane.b32.xlu0 %v1689, 48
    %v1696 = vpop.permute.xlu0 %1695
    %1698 = vst.msk [vmem:[#allocation2 + $0xa] sm:$0x3] %vm897, %v1696
    %v1699 = vld [vmem:[#allocation3 + $0x16] sm:$0x3]
    %v1700 = vld [vmem:[#allocation3 + $0x8] sm:$0x3]
    %v1701 = vsel %vm820, %v1699, %v1700
    %v1702 = vsel %vm822, %v1692, 0
    %1704 = vmatpush.msra.mxu0 0.0
    %1705 = vmatpush.msra.mxu0 0.0
    %1706 = vmatpush.msra.mxu0 0.0
    %1707 = vmatpush.msra.mxu0 0.0
    %1708 = vmatpush.msra.mxu0 0.0
    %1709 = vmatpush.msra.mxu0 0.0
    %1710 = vmatpush.msra.mxu0 0.0
    %1711 = vmatpush.msra.mxu0 0.0
    %1712 = vmatpush.msra.mxu0 0.0
    %1713 = vmatpush.msra.mxu0 0.0
    %1714 = vmatpush.msra.mxu0 0.0
    %1715 = vmatpush.msra.mxu0 0.0
    %1716 = vmatpush.msra.mxu0 0.0
    %1717 = vmatpush.msra.mxu0 0.0
    %1718 = vmatpush.msra.mxu0 %v813
    %1719 = vmatpush.msra.mxu0 %v812
    %1720 = vmatmul.f32.gmra.mxu0 %v1702
    %v1721 = vpop.f32.mrf.mxu0
    %v1722 = vadd.f32 0.0, %v1721
    %1723 = vdwg.mxu0
    %v1724 = vadd.f32 %v1701, %v1722
    %1725 = vrot.lane.b32.xlu0 %v1689, 32
    %v1726 = vpop.permute.xlu0 %1725
    %v1727 = vsel %vm822, %v1726, 0
    %1729 = vmatpush.msra.mxu0 0.0
    %1730 = vmatpush.msra.mxu0 0.0
    %1731 = vmatpush.msra.mxu0 0.0
    %1732 = vmatpush.msra.mxu0 0.0
    %1733 = vmatpush.msra.mxu0 0.0
    %1734 = vmatpush.msra.mxu0 0.0
    %1735 = vmatpush.msra.mxu0 0.0
    %1736 = vmatpush.msra.mxu0 0.0
    %1737 = vmatpush.msra.mxu0 0.0
    %1738 = vmatpush.msra.mxu0 0.0
    %1739 = vmatpush.msra.mxu0 0.0
    %1740 = vmatpush.msra.mxu0 0.0
    %1741 = vmatpush.msra.mxu0 0.0
    %1742 = vmatpush.msra.mxu0 0.0
    %1743 = vmatpush.msra.mxu0 %v816
    %1744 = vmatpush.msra.mxu0 %v815
    %1745 = vmatmul.f32.gmra.mxu0 %v1727
    %v1746 = vpop.f32.mrf.mxu0
    %v1747 = vadd.f32 0.0, %v1746
    %1748 = vdwg.mxu0
    %v1749 = vadd.f32 %v1724, %v1747
    %v1750 = vtanh.pop %v1749
    %v1751 = vmul.f32 %v759, %v1750
    %v1752 = vadd.f32 %v1751, %v760
    %v1753 = vmul.f32 %v1752, %v1683
    %1755 = vrot.lane.b32.xlu0 %v1752, 80
    %v1756 = vpop.permute.xlu0 %1755
    %v1758 = vmul.f32 %v1752, %v1756
    %1760 = vrot.lane.b32.xlu0 %v1758, 16
    %v1761 = vpop.permute.xlu0 %1760
    %v1763 = vadd.f32 %v1753, %v1761
    %v1764 = vtanh.pop %v1763
    %1766 = vrot.lane.b32.xlu0 %v1764, 16
    %v1767 = vpop.permute.xlu0 %1766
    %v1769 = vmul.f32 %v1752, %v1767
    %1771 = vrot.lane.b32.xlu0 %v1769, 96
    %v1772 = vpop.permute.xlu0 %1771
    %1774 = vst.msk [vmem:[#allocation2 + $0x16] sm:$0x3] %vm892, %v1772
    %1775 = vrot.lane.b32.xlu0 %v1769, 48
    %v1776 = vpop.permute.xlu0 %1775
    %1778 = vst.msk [vmem:[#allocation2 + $0x8] sm:$0x3] %vm897, %v1776
    %v1779 = vld [vmem:[#allocation3 + $0x18] sm:$0x3]
    %v1780 = vld [vmem:[#allocation3 + $0x6] sm:$0x3]
    %v1781 = vsel %vm820, %v1779, %v1780
    %v1782 = vsel %vm822, %v1772, 0
    %1784 = vmatpush.msra.mxu0 0.0
    %1785 = vmatpush.msra.mxu0 0.0
    %1786 = vmatpush.msra.mxu0 0.0
    %1787 = vmatpush.msra.mxu0 0.0
    %1788 = vmatpush.msra.mxu0 0.0
    %1789 = vmatpush.msra.mxu0 0.0
    %1790 = vmatpush.msra.mxu0 0.0
    %1791 = vmatpush.msra.mxu0 0.0
    %1792 = vmatpush.msra.mxu0 0.0
    %1793 = vmatpush.msra.mxu0 0.0
    %1794 = vmatpush.msra.mxu0 0.0
    %1795 = vmatpush.msra.mxu0 0.0
    %1796 = vmatpush.msra.mxu0 0.0
    %1797 = vmatpush.msra.mxu0 0.0
    %1798 = vmatpush.msra.mxu0 %v813
    %1799 = vmatpush.msra.mxu0 %v812
    %1800 = vmatmul.f32.gmra.mxu0 %v1782
    %v1801 = vpop.f32.mrf.mxu0
    %v1802 = vadd.f32 0.0, %v1801
    %1803 = vdwg.mxu0
    %v1804 = vadd.f32 %v1781, %v1802
    %1805 = vrot.lane.b32.xlu0 %v1769, 32
    %v1806 = vpop.permute.xlu0 %1805
    %v1807 = vsel %vm822, %v1806, 0
    %1809 = vmatpush.msra.mxu0 0.0
    %1810 = vmatpush.msra.mxu0 0.0
    %1811 = vmatpush.msra.mxu0 0.0
    %1812 = vmatpush.msra.mxu0 0.0
    %1813 = vmatpush.msra.mxu0 0.0
    %1814 = vmatpush.msra.mxu0 0.0
    %1815 = vmatpush.msra.mxu0 0.0
    %1816 = vmatpush.msra.mxu0 0.0
    %1817 = vmatpush.msra.mxu0 0.0
    %1818 = vmatpush.msra.mxu0 0.0
    %1819 = vmatpush.msra.mxu0 0.0
    %1820 = vmatpush.msra.mxu0 0.0
    %1821 = vmatpush.msra.mxu0 0.0
    %1822 = vmatpush.msra.mxu0 0.0
    %1823 = vmatpush.msra.mxu0 %v816
    %1824 = vmatpush.msra.mxu0 %v815
    %1825 = vmatmul.f32.gmra.mxu0 %v1807
    %v1826 = vpop.f32.mrf.mxu0
    %v1827 = vadd.f32 0.0, %v1826
    %1828 = vdwg.mxu0
    %v1829 = vadd.f32 %v1804, %v1827
    %v1830 = vtanh.pop %v1829
    %v1831 = vmul.f32 %v759, %v1830
    %v1832 = vadd.f32 %v1831, %v760
    %v1833 = vmul.f32 %v1832, %v1763
    %1835 = vrot.lane.b32.xlu0 %v1832, 80
    %v1836 = vpop.permute.xlu0 %1835
    %v1838 = vmul.f32 %v1832, %v1836
    %1840 = vrot.lane.b32.xlu0 %v1838, 16
    %v1841 = vpop.permute.xlu0 %1840
    %v1843 = vadd.f32 %v1833, %v1841
    %v1844 = vtanh.pop %v1843
    %1846 = vrot.lane.b32.xlu0 %v1844, 16
    %v1847 = vpop.permute.xlu0 %1846
    %v1849 = vmul.f32 %v1832, %v1847
    %1851 = vrot.lane.b32.xlu0 %v1849, 96
    %v1852 = vpop.permute.xlu0 %1851
    %1854 = vst.msk [vmem:[#allocation2 + $0x18] sm:$0x3] %vm892, %v1852
    %1855 = vrot.lane.b32.xlu0 %v1849, 48
    %v1856 = vpop.permute.xlu0 %1855
    %1858 = vst.msk [vmem:[#allocation2 + $0x6] sm:$0x3] %vm897, %v1856
    %v1859 = vld [vmem:[#allocation3 + $0x1a] sm:$0x3]
    %v1860 = vld [vmem:[#allocation3 + $0x4] sm:$0x3]
    %v1861 = vsel %vm820, %v1859, %v1860
    %v1862 = vsel %vm822, %v1852, 0
    %1864 = vmatpush.msra.mxu0 0.0
    %1865 = vmatpush.msra.mxu0 0.0
    %1866 = vmatpush.msra.mxu0 0.0
    %1867 = vmatpush.msra.mxu0 0.0
    %1868 = vmatpush.msra.mxu0 0.0
    %1869 = vmatpush.msra.mxu0 0.0
    %1870 = vmatpush.msra.mxu0 0.0
    %1871 = vmatpush.msra.mxu0 0.0
    %1872 = vmatpush.msra.mxu0 0.0
    %1873 = vmatpush.msra.mxu0 0.0
    %1874 = vmatpush.msra.mxu0 0.0
    %1875 = vmatpush.msra.mxu0 0.0
    %1876 = vmatpush.msra.mxu0 0.0
    %1877 = vmatpush.msra.mxu0 0.0
    %1878 = vmatpush.msra.mxu0 %v813
    %1879 = vmatpush.msra.mxu0 %v812
    %1880 = vmatmul.f32.gmra.mxu0 %v1862
    %v1881 = vpop.f32.mrf.mxu0
    %v1882 = vadd.f32 0.0, %v1881
    %1883 = vdwg.mxu0
    %v1884 = vadd.f32 %v1861, %v1882
    %1885 = vrot.lane.b32.xlu0 %v1849, 32
    %v1886 = vpop.permute.xlu0 %1885
    %v1887 = vsel %vm822, %v1886, 0
    %1889 = vmatpush.msra.mxu0 0.0
    %1890 = vmatpush.msra.mxu0 0.0
    %1891 = vmatpush.msra.mxu0 0.0
    %1892 = vmatpush.msra.mxu0 0.0
    %1893 = vmatpush.msra.mxu0 0.0
    %1894 = vmatpush.msra.mxu0 0.0
    %1895 = vmatpush.msra.mxu0 0.0
    %1896 = vmatpush.msra.mxu0 0.0
    %1897 = vmatpush.msra.mxu0 0.0
    %1898 = vmatpush.msra.mxu0 0.0
    %1899 = vmatpush.msra.mxu0 0.0
    %1900 = vmatpush.msra.mxu0 0.0
    %1901 = vmatpush.msra.mxu0 0.0
    %1902 = vmatpush.msra.mxu0 0.0
    %1903 = vmatpush.msra.mxu0 %v816
    %1904 = vmatpush.msra.mxu0 %v815
    %1905 = vmatmul.f32.gmra.mxu0 %v1887
    %v1906 = vpop.f32.mrf.mxu0
    %v1907 = vadd.f32 0.0, %v1906
    %1908 = vdwg.mxu0
    %v1909 = vadd.f32 %v1884, %v1907
    %v1910 = vtanh.pop %v1909
    %v1911 = vmul.f32 %v759, %v1910
    %v1912 = vadd.f32 %v1911, %v760
    %v1913 = vmul.f32 %v1912, %v1843
    %1915 = vrot.lane.b32.xlu0 %v1912, 80
    %v1916 = vpop.permute.xlu0 %1915
    %v1918 = vmul.f32 %v1912, %v1916
    %1920 = vrot.lane.b32.xlu0 %v1918, 16
    %v1921 = vpop.permute.xlu0 %1920
    %v1923 = vadd.f32 %v1913, %v1921
    %v1924 = vtanh.pop %v1923
    %1926 = vrot.lane.b32.xlu0 %v1924, 16
    %v1927 = vpop.permute.xlu0 %1926
    %v1929 = vmul.f32 %v1912, %v1927
    %1931 = vrot.lane.b32.xlu0 %v1929, 96
    %v1932 = vpop.permute.xlu0 %1931
    %1934 = vst.msk [vmem:[#allocation2 + $0x1a] sm:$0x3] %vm892, %v1932
    %1935 = vrot.lane.b32.xlu0 %v1929, 48
    %v1936 = vpop.permute.xlu0 %1935
    %1938 = vst.msk [vmem:[#allocation2 + $0x4] sm:$0x3] %vm897, %v1936
    %v1939 = vld [vmem:[#allocation3 + $0x1c] sm:$0x3]
    %v1940 = vld [vmem:[#allocation3 + $0x2] sm:$0x3]
    %v1941 = vsel %vm820, %v1939, %v1940
    %v1942 = vsel %vm822, %v1932, 0
    %1944 = vmatpush.msra.mxu0 0.0
    %1945 = vmatpush.msra.mxu0 0.0
    %1946 = vmatpush.msra.mxu0 0.0
    %1947 = vmatpush.msra.mxu0 0.0
    %1948 = vmatpush.msra.mxu0 0.0
    %1949 = vmatpush.msra.mxu0 0.0
    %1950 = vmatpush.msra.mxu0 0.0
    %1951 = vmatpush.msra.mxu0 0.0
    %1952 = vmatpush.msra.mxu0 0.0
    %1953 = vmatpush.msra.mxu0 0.0
    %1954 = vmatpush.msra.mxu0 0.0
    %1955 = vmatpush.msra.mxu0 0.0
    %1956 = vmatpush.msra.mxu0 0.0
    %1957 = vmatpush.msra.mxu0 0.0
    %1958 = vmatpush.msra.mxu0 %v813
    %1959 = vmatpush.msra.mxu0 %v812
    %1960 = vmatmul.f32.gmra.mxu0 %v1942
    %v1961 = vpop.f32.mrf.mxu0
    %v1962 = vadd.f32 0.0, %v1961
    %1963 = vdwg.mxu0
    %v1964 = vadd.f32 %v1941, %v1962
    %1965 = vrot.lane.b32.xlu0 %v1929, 32
    %v1966 = vpop.permute.xlu0 %1965
    %v1967 = vsel %vm822, %v1966, 0
    %1969 = vmatpush.msra.mxu0 0.0
    %1970 = vmatpush.msra.mxu0 0.0
    %1971 = vmatpush.msra.mxu0 0.0
    %1972 = vmatpush.msra.mxu0 0.0
    %1973 = vmatpush.msra.mxu0 0.0
    %1974 = vmatpush.msra.mxu0 0.0
    %1975 = vmatpush.msra.mxu0 0.0
    %1976 = vmatpush.msra.mxu0 0.0
    %1977 = vmatpush.msra.mxu0 0.0
    %1978 = vmatpush.msra.mxu0 0.0
    %1979 = vmatpush.msra.mxu0 0.0
    %1980 = vmatpush.msra.mxu0 0.0
    %1981 = vmatpush.msra.mxu0 0.0
    %1982 = vmatpush.msra.mxu0 0.0
    %1983 = vmatpush.msra.mxu0 %v816
    %1984 = vmatpush.msra.mxu0 %v815
    %1985 = vmatmul.f32.gmra.mxu0 %v1967
    %v1986 = vpop.f32.mrf.mxu0
    %v1987 = vadd.f32 0.0, %v1986
    %1988 = vdwg.mxu0
    %v1989 = vadd.f32 %v1964, %v1987
    %v1990 = vtanh.pop %v1989
    %v1991 = vmul.f32 %v759, %v1990
    %v1992 = vadd.f32 %v1991, %v760
    %v1993 = vmul.f32 %v1992, %v1923
    %1995 = vrot.lane.b32.xlu0 %v1992, 80
    %v1996 = vpop.permute.xlu0 %1995
    %v1998 = vmul.f32 %v1992, %v1996
    %2000 = vrot.lane.b32.xlu0 %v1998, 16
    %v2001 = vpop.permute.xlu0 %2000
    %v2003 = vadd.f32 %v1993, %v2001
    %v2004 = vtanh.pop %v2003
    %2006 = vrot.lane.b32.xlu0 %v2004, 16
    %v2007 = vpop.permute.xlu0 %2006
    %v2009 = vmul.f32 %v1992, %v2007
    %2011 = vrot.lane.b32.xlu0 %v2009, 96
    %v2012 = vpop.permute.xlu0 %2011
    %2014 = vst.msk [vmem:[#allocation2 + $0x1c] sm:$0x3] %vm892, %v2012
    %2015 = vrot.lane.b32.xlu0 %v2009, 48
    %v2016 = vpop.permute.xlu0 %2015
    %2018 = vst.msk [vmem:[#allocation2 + $0x2] sm:$0x3] %vm897, %v2016
    %v2019 = vld [vmem:[#allocation3 + $0x1e] sm:$0x3]
    %v2020 = vld [vmem:[#allocation3] sm:$0x3]
    %v2021 = vsel %vm820, %v2019, %v2020
    %v2022 = vsel %vm822, %v2012, 0
    %2024 = vmatpush.msra.mxu0 0.0
    %2025 = vmatpush.msra.mxu0 0.0
    %2026 = vmatpush.msra.mxu0 0.0
    %2027 = vmatpush.msra.mxu0 0.0
    %2028 = vmatpush.msra.mxu0 0.0
    %2029 = vmatpush.msra.mxu0 0.0
    %2030 = vmatpush.msra.mxu0 0.0
    %2031 = vmatpush.msra.mxu0 0.0
    %2032 = vmatpush.msra.mxu0 0.0
    %2033 = vmatpush.msra.mxu0 0.0
    %2034 = vmatpush.msra.mxu0 0.0
    %2035 = vmatpush.msra.mxu0 0.0
    %2036 = vmatpush.msra.mxu0 0.0
    %2037 = vmatpush.msra.mxu0 0.0
    %2038 = vmatpush.msra.mxu0 %v813
    %2039 = vmatpush.msra.mxu0 %v812
    %2040 = vmatmul.f32.gmra.mxu0 %v2022
    %v2041 = vpop.f32.mrf.mxu0
    %v2042 = vadd.f32 0.0, %v2041
    %2043 = vdwg.mxu0
    %v2044 = vadd.f32 %v2021, %v2042
    %2045 = vrot.lane.b32.xlu0 %v2009, 32
    %v2046 = vpop.permute.xlu0 %2045
    %v2047 = vsel %vm822, %v2046, 0
    %2049 = vmatpush.msra.mxu0 0.0
    %2050 = vmatpush.msra.mxu0 0.0
    %2051 = vmatpush.msra.mxu0 0.0
    %2052 = vmatpush.msra.mxu0 0.0
    %2053 = vmatpush.msra.mxu0 0.0
    %2054 = vmatpush.msra.mxu0 0.0
    %2055 = vmatpush.msra.mxu0 0.0
    %2056 = vmatpush.msra.mxu0 0.0
    %2057 = vmatpush.msra.mxu0 0.0
    %2058 = vmatpush.msra.mxu0 0.0
    %2059 = vmatpush.msra.mxu0 0.0
    %2060 = vmatpush.msra.mxu0 0.0
    %2061 = vmatpush.msra.mxu0 0.0
    %2062 = vmatpush.msra.mxu0 0.0
    %2063 = vmatpush.msra.mxu0 %v816
    %2064 = vmatpush.msra.mxu0 %v815
    %2065 = vmatmul.f32.gmra.mxu0 %v2047
    %v2066 = vpop.f32.mrf.mxu0
    %v2067 = vadd.f32 0.0, %v2066
    %2068 = vdwg.mxu0
    %v2069 = vadd.f32 %v2044, %v2067
    %v2070 = vtanh.pop %v2069
    %v2071 = vmul.f32 %v759, %v2070
    %v2072 = vadd.f32 %v2071, %v760
    %v2073 = vmul.f32 %v2072, %v2003
    %2075 = vrot.lane.b32.xlu0 %v2072, 80
    %v2076 = vpop.permute.xlu0 %2075
    %v2078 = vmul.f32 %v2072, %v2076
    %2080 = vrot.lane.b32.xlu0 %v2078, 16
    %v2081 = vpop.permute.xlu0 %2080
    %v2083 = vadd.f32 %v2073, %v2081
    %v2084 = vtanh.pop %v2083
    %2086 = vrot.lane.b32.xlu0 %v2084, 16
    %v2087 = vpop.permute.xlu0 %2086
    %v2089 = vmul.f32 %v2072, %v2087
    %2091 = vrot.lane.b32.xlu0 %v2089, 96
    %v2092 = vpop.permute.xlu0 %2091
    %2094 = vst.msk [vmem:[#allocation2 + $0x1e] sm:$0x3] %vm892, %v2092
    %2095 = vrot.lane.b32.xlu0 %v2089, 48
    %v2096 = vpop.permute.xlu0 %2095
    %2098 = vst.msk [vmem:[#allocation2] sm:$0x3] %vm897, %v2096
    %v2099 = vld [vmem:[#allocation2] sm:$0xff]
    %v2100 = vld [vmem:[#allocation2 + $0x8] sm:$0xff]
    %v2101 = vld [vmem:[#allocation2 + $0x10] sm:$0xff]
    %v2102 = vld [vmem:[#allocation2 + $0x18] sm:$0xff]
    %s2103 = scalar_lea.vmem %s7, 32
    %v2104 = vld [vmem:[%s2103] sm:$0xff]
    %v2105 = vld [vmem:[%s2103 + $0x8] sm:$0xff]
    %v2106 = vld [vmem:[%s2103 + $0x10] sm:$0xff]
    %v2107 = vld [vmem:[%s2103 + $0x18] sm:$0xff]
    %s2108 = scalar_lea.vmem %s9, 1
    %v2109 = vld [vmem:[%s2108] sm:$0x1]
    %v2111 = vperm.slane %v2109, 0
    %v2114 = vsel %vm113, %v2099, 0
    %v2117 = vsel %vm113, %v2100, 0
    %v2120 = vsel %vm113, %v2101, 0
    %v2123 = vsel %vm113, %v2102, 0
    %2125 = vmatpush.msra.mxu0 0.0
    %2126 = vmatpush.msra.mxu0 0.0
    %2127 = vmatpush.msra.mxu0 0.0
    %2128 = vmatpush.msra.mxu0 0.0
    %2129 = vmatpush.msra.mxu0 0.0
    %2130 = vmatpush.msra.mxu0 0.0
    %2131 = vmatpush.msra.mxu0 0.0
    %2132 = vmatpush.msra.mxu0 0.0
    %2133 = vmatpush.msra.mxu0 0.0
    %2134 = vmatpush.msra.mxu0 0.0
    %2135 = vmatpush.msra.mxu0 0.0
    %2136 = vmatpush.msra.mxu0 0.0
    %2137 = vmatpush.msra.mxu0 %v2107
    %2138 = vmatpush.msra.mxu0 %v2106
    %2139 = vmatpush.msra.mxu0 %v2105
    %2140 = vmatpush.msra.mxu0 %v2104
    %2141 = vmatmul.f32.gmra.mxu0 %v2114
    %v2142 = vpop.f32.mrf.mxu0
    %v2143 = vadd.f32 %v2111, %v2142
    %2144 = vmatmul.f32.gmra.mxu0 %v2117
    %v2145 = vpop.f32.mrf.mxu0
    %v2146 = vadd.f32 %v2111, %v2145
    %2147 = vmatmul.f32.gmra.mxu0 %v2120
    %v2148 = vpop.f32.mrf.mxu0
    %v2149 = vadd.f32 %v2111, %v2148
    %2150 = vmatmul.f32.gmra.mxu0 %v2123
    %v2151 = vpop.f32.mrf.mxu0
    %v2152 = vadd.f32 %v2111, %v2151
    %2153 = vdwg.mxu0
    %2154 = vst [vmem:[#allocation3] sm:$0xff] %v2143
    %2155 = vst [vmem:[#allocation3 + $0x8] sm:$0xff] %v2146
    %2156 = vst [vmem:[#allocation3 + $0x10] sm:$0xff] %v2149
    %2157 = vst [vmem:[#allocation3 + $0x18] sm:$0xff] %v2152
    %s2158 = scalar_lea.vmem [#allocation4], 32
    %v2159 = vld [vmem:[%s2158] sm:$0xff]
    %v2160 = vld [vmem:[%s2158 + $0x8] sm:$0xff]
    %s2161 = scalar_lea.vmem [#allocation4], 48
    %v2162 = vld [vmem:[%s2161] sm:$0xff]
    %v2163 = vld [vmem:[%s2161 + $0x8] sm:$0xff]
    %v2164 = vld [vmem:[#allocation3] sm:$0x3]
    %v2165 = vld [vmem:[#allocation3 + $0x1e] sm:$0x3]
    %v2166 = vsel %vm820, %v2164, %v2165
    %2167 = vmatpush.msra.mxu0 0.0
    %2168 = vmatpush.msra.mxu0 0.0
    %2169 = vmatpush.msra.mxu0 0.0
    %2170 = vmatpush.msra.mxu0 0.0
    %2171 = vmatpush.msra.mxu0 0.0
    %2172 = vmatpush.msra.mxu0 0.0
    %2173 = vmatpush.msra.mxu0 0.0
    %2174 = vmatpush.msra.mxu0 0.0
    %2175 = vmatpush.msra.mxu0 0.0
    %2176 = vmatpush.msra.mxu0 0.0
    %2177 = vmatpush.msra.mxu0 0.0
    %2178 = vmatpush.msra.mxu0 0.0
    %2179 = vmatpush.msra.mxu0 0.0
    %2180 = vmatpush.msra.mxu0 0.0
    %2181 = vmatpush.msra.mxu0 %v2160
    %2182 = vmatpush.msra.mxu0 %v2159
    %2183 = vmatmul.f32.gmra.mxu0 %v824
    %v2184 = vpop.f32.mrf.mxu0
    %v2185 = vadd.f32 0.0, %v2184
    %2186 = vdwg.mxu0
    %v2187 = vadd.f32 %v2166, %v2185
    %2188 = vmatpush.msra.mxu0 0.0
    %2189 = vmatpush.msra.mxu0 0.0
    %2190 = vmatpush.msra.mxu0 0.0
    %2191 = vmatpush.msra.mxu0 0.0
    %2192 = vmatpush.msra.mxu0 0.0
    %2193 = vmatpush.msra.mxu0 0.0
    %2194 = vmatpush.msra.mxu0 0.0
    %2195 = vmatpush.msra.mxu0 0.0
    %2196 = vmatpush.msra.mxu0 0.0
    %2197 = vmatpush.msra.mxu0 0.0
    %2198 = vmatpush.msra.mxu0 0.0
    %2199 = vmatpush.msra.mxu0 0.0
    %2200 = vmatpush.msra.mxu0 0.0
    %2201 = vmatpush.msra.mxu0 0.0
    %2202 = vmatpush.msra.mxu0 %v2163
    %2203 = vmatpush.msra.mxu0 %v2162
    %2204 = vmatmul.f32.gmra.mxu0 %v824
    %v2205 = vpop.f32.mrf.mxu0
    %v2206 = vadd.f32 0.0, %v2205
    %2207 = vdwg.mxu0
    %v2208 = vadd.f32 %v2187, %v2206
    %v2209 = vtanh.pop %v2208
    %v2210 = vmul.f32 %v759, %v2209
    %v2211 = vadd.f32 %v2210, %v760
    %v2212 = vmul.f32 %v2211, 0.0
    %2214 = vrot.lane.b32.xlu0 %v2211, 80
    %v2215 = vpop.permute.xlu0 %2214
    %v2217 = vmul.f32 %v2211, %v2215
    %2219 = vrot.lane.b32.xlu0 %v2217, 16
    %v2220 = vpop.permute.xlu0 %2219
    %v2222 = vadd.f32 %v2212, %v2220
    %v2223 = vtanh.pop %v2222
    %2225 = vrot.lane.b32.xlu0 %v2223, 16
    %v2226 = vpop.permute.xlu0 %2225
    %v2228 = vmul.f32 %v2211, %v2226
    %2230 = vrot.lane.b32.xlu0 %v2228, 96
    %v2231 = vpop.permute.xlu0 %2230
    %2233 = vst.msk [vmem:[#allocation2] sm:$0x3] %vm892, %v2231
    %2234 = vrot.lane.b32.xlu0 %v2228, 48
    %v2235 = vpop.permute.xlu0 %2234
    %2237 = vst.msk [vmem:[#allocation2 + $0x1e] sm:$0x3] %vm897, %v2235
    %v2238 = vld [vmem:[#allocation3 + $0x2] sm:$0x3]
    %v2239 = vld [vmem:[#allocation3 + $0x1c] sm:$0x3]
    %v2240 = vsel %vm820, %v2238, %v2239
    %v2241 = vsel %vm822, %v2231, 0
    %2243 = vmatpush.msra.mxu0 0.0
    %2244 = vmatpush.msra.mxu0 0.0
    %2245 = vmatpush.msra.mxu0 0.0
    %2246 = vmatpush.msra.mxu0 0.0
    %2247 = vmatpush.msra.mxu0 0.0
    %2248 = vmatpush.msra.mxu0 0.0
    %2249 = vmatpush.msra.mxu0 0.0
    %2250 = vmatpush.msra.mxu0 0.0
    %2251 = vmatpush.msra.mxu0 0.0
    %2252 = vmatpush.msra.mxu0 0.0
    %2253 = vmatpush.msra.mxu0 0.0
    %2254 = vmatpush.msra.mxu0 0.0
    %2255 = vmatpush.msra.mxu0 0.0
    %2256 = vmatpush.msra.mxu0 0.0
    %2257 = vmatpush.msra.mxu0 %v2160
    %2258 = vmatpush.msra.mxu0 %v2159
    %2259 = vmatmul.f32.gmra.mxu0 %v2241
    %v2260 = vpop.f32.mrf.mxu0
    %v2261 = vadd.f32 0.0, %v2260
    %2262 = vdwg.mxu0
    %v2263 = vadd.f32 %v2240, %v2261
    %2264 = vrot.lane.b32.xlu0 %v2228, 32
    %v2265 = vpop.permute.xlu0 %2264
    %v2266 = vsel %vm822, %v2265, 0
    %2268 = vmatpush.msra.mxu0 0.0
    %2269 = vmatpush.msra.mxu0 0.0
    %2270 = vmatpush.msra.mxu0 0.0
    %2271 = vmatpush.msra.mxu0 0.0
    %2272 = vmatpush.msra.mxu0 0.0
    %2273 = vmatpush.msra.mxu0 0.0
    %2274 = vmatpush.msra.mxu0 0.0
    %2275 = vmatpush.msra.mxu0 0.0
    %2276 = vmatpush.msra.mxu0 0.0
    %2277 = vmatpush.msra.mxu0 0.0
    %2278 = vmatpush.msra.mxu0 0.0
    %2279 = vmatpush.msra.mxu0 0.0
    %2280 = vmatpush.msra.mxu0 0.0
    %2281 = vmatpush.msra.mxu0 0.0
    %2282 = vmatpush.msra.mxu0 %v2163
    %2283 = vmatpush.msra.mxu0 %v2162
    %2284 = vmatmul.f32.gmra.mxu0 %v2266
    %v2285 = vpop.f32.mrf.mxu0
    %v2286 = vadd.f32 0.0, %v2285
    %2287 = vdwg.mxu0
    %v2288 = vadd.f32 %v2263, %v2286
    %v2289 = vtanh.pop %v2288
    %v2290 = vmul.f32 %v759, %v2289
    %v2291 = vadd.f32 %v2290, %v760
    %v2292 = vmul.f32 %v2291, %v2222
    %2294 = vrot.lane.b32.xlu0 %v2291, 80
    %v2295 = vpop.permute.xlu0 %2294
    %v2297 = vmul.f32 %v2291, %v2295
    %2299 = vrot.lane.b32.xlu0 %v2297, 16
    %v2300 = vpop.permute.xlu0 %2299
    %v2302 = vadd.f32 %v2292, %v2300
    %v2303 = vtanh.pop %v2302
    %2305 = vrot.lane.b32.xlu0 %v2303, 16
    %v2306 = vpop.permute.xlu0 %2305
    %v2308 = vmul.f32 %v2291, %v2306
    %2310 = vrot.lane.b32.xlu0 %v2308, 96
    %v2311 = vpop.permute.xlu0 %2310
    %2313 = vst.msk [vmem:[#allocation2 + $0x2] sm:$0x3] %vm892, %v2311
    %2314 = vrot.lane.b32.xlu0 %v2308, 48
    %v2315 = vpop.permute.xlu0 %2314
    %2317 = vst.msk [vmem:[#allocation2 + $0x1c] sm:$0x3] %vm897, %v2315
    %v2318 = vld [vmem:[#allocation3 + $0x4] sm:$0x3]
    %v2319 = vld [vmem:[#allocation3 + $0x1a] sm:$0x3]
    %v2320 = vsel %vm820, %v2318, %v2319
    %v2321 = vsel %vm822, %v2311, 0
    %2323 = vmatpush.msra.mxu0 0.0
    %2324 = vmatpush.msra.mxu0 0.0
    %2325 = vmatpush.msra.mxu0 0.0
    %2326 = vmatpush.msra.mxu0 0.0
    %2327 = vmatpush.msra.mxu0 0.0
    %2328 = vmatpush.msra.mxu0 0.0
    %2329 = vmatpush.msra.mxu0 0.0
    %2330 = vmatpush.msra.mxu0 0.0
    %2331 = vmatpush.msra.mxu0 0.0
    %2332 = vmatpush.msra.mxu0 0.0
    %2333 = vmatpush.msra.mxu0 0.0
    %2334 = vmatpush.msra.mxu0 0.0
    %2335 = vmatpush.msra.mxu0 0.0
    %2336 = vmatpush.msra.mxu0 0.0
    %2337 = vmatpush.msra.mxu0 %v2160
    %2338 = vmatpush.msra.mxu0 %v2159
    %2339 = vmatmul.f32.gmra.mxu0 %v2321
    %v2340 = vpop.f32.mrf.mxu0
    %v2341 = vadd.f32 0.0, %v2340
    %2342 = vdwg.mxu0
    %v2343 = vadd.f32 %v2320, %v2341
    %2344 = vrot.lane.b32.xlu0 %v2308, 32
    %v2345 = vpop.permute.xlu0 %2344
    %v2346 = vsel %vm822, %v2345, 0
    %2348 = vmatpush.msra.mxu0 0.0
    %2349 = vmatpush.msra.mxu0 0.0
    %2350 = vmatpush.msra.mxu0 0.0
    %2351 = vmatpush.msra.mxu0 0.0
    %2352 = vmatpush.msra.mxu0 0.0
    %2353 = vmatpush.msra.mxu0 0.0
    %2354 = vmatpush.msra.mxu0 0.0
    %2355 = vmatpush.msra.mxu0 0.0
    %2356 = vmatpush.msra.mxu0 0.0
    %2357 = vmatpush.msra.mxu0 0.0
    %2358 = vmatpush.msra.mxu0 0.0
    %2359 = vmatpush.msra.mxu0 0.0
    %2360 = vmatpush.msra.mxu0 0.0
    %2361 = vmatpush.msra.mxu0 0.0
    %2362 = vmatpush.msra.mxu0 %v2163
    %2363 = vmatpush.msra.mxu0 %v2162
    %2364 = vmatmul.f32.gmra.mxu0 %v2346
    %v2365 = vpop.f32.mrf.mxu0
    %v2366 = vadd.f32 0.0, %v2365
    %2367 = vdwg.mxu0
    %v2368 = vadd.f32 %v2343, %v2366
    %v2369 = vtanh.pop %v2368
    %v2370 = vmul.f32 %v759, %v2369
    %v2371 = vadd.f32 %v2370, %v760
    %v2372 = vmul.f32 %v2371, %v2302
    %2374 = vrot.lane.b32.xlu0 %v2371, 80
    %v2375 = vpop.permute.xlu0 %2374
    %v2377 = vmul.f32 %v2371, %v2375
    %2379 = vrot.lane.b32.xlu0 %v2377, 16
    %v2380 = vpop.permute.xlu0 %2379
    %v2382 = vadd.f32 %v2372, %v2380
    %v2383 = vtanh.pop %v2382
    %2385 = vrot.lane.b32.xlu0 %v2383, 16
    %v2386 = vpop.permute.xlu0 %2385
    %v2388 = vmul.f32 %v2371, %v2386
    %2390 = vrot.lane.b32.xlu0 %v2388, 96
    %v2391 = vpop.permute.xlu0 %2390
    %2393 = vst.msk [vmem:[#allocation2 + $0x4] sm:$0x3] %vm892, %v2391
    %2394 = vrot.lane.b32.xlu0 %v2388, 48
    %v2395 = vpop.permute.xlu0 %2394
    %2397 = vst.msk [vmem:[#allocation2 + $0x1a] sm:$0x3] %vm897, %v2395
    %v2398 = vld [vmem:[#allocation3 + $0x6] sm:$0x3]
    %v2399 = vld [vmem:[#allocation3 + $0x18] sm:$0x3]
    %v2400 = vsel %vm820, %v2398, %v2399
    %v2401 = vsel %vm822, %v2391, 0
    %2403 = vmatpush.msra.mxu0 0.0
    %2404 = vmatpush.msra.mxu0 0.0
    %2405 = vmatpush.msra.mxu0 0.0
    %2406 = vmatpush.msra.mxu0 0.0
    %2407 = vmatpush.msra.mxu0 0.0
    %2408 = vmatpush.msra.mxu0 0.0
    %2409 = vmatpush.msra.mxu0 0.0
    %2410 = vmatpush.msra.mxu0 0.0
    %2411 = vmatpush.msra.mxu0 0.0
    %2412 = vmatpush.msra.mxu0 0.0
    %2413 = vmatpush.msra.mxu0 0.0
    %2414 = vmatpush.msra.mxu0 0.0
    %2415 = vmatpush.msra.mxu0 0.0
    %2416 = vmatpush.msra.mxu0 0.0
    %2417 = vmatpush.msra.mxu0 %v2160
    %2418 = vmatpush.msra.mxu0 %v2159
    %2419 = vmatmul.f32.gmra.mxu0 %v2401
    %v2420 = vpop.f32.mrf.mxu0
    %v2421 = vadd.f32 0.0, %v2420
    %2422 = vdwg.mxu0
    %v2423 = vadd.f32 %v2400, %v2421
    %2424 = vrot.lane.b32.xlu0 %v2388, 32
    %v2425 = vpop.permute.xlu0 %2424
    %v2426 = vsel %vm822, %v2425, 0
    %2428 = vmatpush.msra.mxu0 0.0
    %2429 = vmatpush.msra.mxu0 0.0
    %2430 = vmatpush.msra.mxu0 0.0
    %2431 = vmatpush.msra.mxu0 0.0
    %2432 = vmatpush.msra.mxu0 0.0
    %2433 = vmatpush.msra.mxu0 0.0
    %2434 = vmatpush.msra.mxu0 0.0
    %2435 = vmatpush.msra.mxu0 0.0
    %2436 = vmatpush.msra.mxu0 0.0
    %2437 = vmatpush.msra.mxu0 0.0
    %2438 = vmatpush.msra.mxu0 0.0
    %2439 = vmatpush.msra.mxu0 0.0
    %2440 = vmatpush.msra.mxu0 0.0
    %2441 = vmatpush.msra.mxu0 0.0
    %2442 = vmatpush.msra.mxu0 %v2163
    %2443 = vmatpush.msra.mxu0 %v2162
    %2444 = vmatmul.f32.gmra.mxu0 %v2426
    %v2445 = vpop.f32.mrf.mxu0
    %v2446 = vadd.f32 0.0, %v2445
    %2447 = vdwg.mxu0
    %v2448 = vadd.f32 %v2423, %v2446
    %v2449 = vtanh.pop %v2448
    %v2450 = vmul.f32 %v759, %v2449
    %v2451 = vadd.f32 %v2450, %v760
    %v2452 = vmul.f32 %v2451, %v2382
    %2454 = vrot.lane.b32.xlu0 %v2451, 80
    %v2455 = vpop.permute.xlu0 %2454
    %v2457 = vmul.f32 %v2451, %v2455
    %2459 = vrot.lane.b32.xlu0 %v2457, 16
    %v2460 = vpop.permute.xlu0 %2459
    %v2462 = vadd.f32 %v2452, %v2460
    %v2463 = vtanh.pop %v2462
    %2465 = vrot.lane.b32.xlu0 %v2463, 16
    %v2466 = vpop.permute.xlu0 %2465
    %v2468 = vmul.f32 %v2451, %v2466
    %2470 = vrot.lane.b32.xlu0 %v2468, 96
    %v2471 = vpop.permute.xlu0 %2470
    %2473 = vst.msk [vmem:[#allocation2 + $0x6] sm:$0x3] %vm892, %v2471
    %2474 = vrot.lane.b32.xlu0 %v2468, 48
    %v2475 = vpop.permute.xlu0 %2474
    %2477 = vst.msk [vmem:[#allocation2 + $0x18] sm:$0x3] %vm897, %v2475
    %v2478 = vld [vmem:[#allocation3 + $0x8] sm:$0x3]
    %v2479 = vld [vmem:[#allocation3 + $0x16] sm:$0x3]
    %v2480 = vsel %vm820, %v2478, %v2479
    %v2481 = vsel %vm822, %v2471, 0
    %2483 = vmatpush.msra.mxu0 0.0
    %2484 = vmatpush.msra.mxu0 0.0
    %2485 = vmatpush.msra.mxu0 0.0
    %2486 = vmatpush.msra.mxu0 0.0
    %2487 = vmatpush.msra.mxu0 0.0
    %2488 = vmatpush.msra.mxu0 0.0
    %2489 = vmatpush.msra.mxu0 0.0
    %2490 = vmatpush.msra.mxu0 0.0
    %2491 = vmatpush.msra.mxu0 0.0
    %2492 = vmatpush.msra.mxu0 0.0
    %2493 = vmatpush.msra.mxu0 0.0
    %2494 = vmatpush.msra.mxu0 0.0
    %2495 = vmatpush.msra.mxu0 0.0
    %2496 = vmatpush.msra.mxu0 0.0
    %2497 = vmatpush.msra.mxu0 %v2160
    %2498 = vmatpush.msra.mxu0 %v2159
    %2499 = vmatmul.f32.gmra.mxu0 %v2481
    %v2500 = vpop.f32.mrf.mxu0
    %v2501 = vadd.f32 0.0, %v2500
    %2502 = vdwg.mxu0
    %v2503 = vadd.f32 %v2480, %v2501
    %2504 = vrot.lane.b32.xlu0 %v2468, 32
    %v2505 = vpop.permute.xlu0 %2504
    %v2506 = vsel %vm822, %v2505, 0
    %2508 = vmatpush.msra.mxu0 0.0
    %2509 = vmatpush.msra.mxu0 0.0
    %2510 = vmatpush.msra.mxu0 0.0
    %2511 = vmatpush.msra.mxu0 0.0
    %2512 = vmatpush.msra.mxu0 0.0
    %2513 = vmatpush.msra.mxu0 0.0
    %2514 = vmatpush.msra.mxu0 0.0
    %2515 = vmatpush.msra.mxu0 0.0
    %2516 = vmatpush.msra.mxu0 0.0
    %2517 = vmatpush.msra.mxu0 0.0
    %2518 = vmatpush.msra.mxu0 0.0
    %2519 = vmatpush.msra.mxu0 0.0
    %2520 = vmatpush.msra.mxu0 0.0
    %2521 = vmatpush.msra.mxu0 0.0
    %2522 = vmatpush.msra.mxu0 %v2163
    %2523 = vmatpush.msra.mxu0 %v2162
    %2524 = vmatmul.f32.gmra.mxu0 %v2506
    %v2525 = vpop.f32.mrf.mxu0
    %v2526 = vadd.f32 0.0, %v2525
    %2527 = vdwg.mxu0
    %v2528 = vadd.f32 %v2503, %v2526
    %v2529 = vtanh.pop %v2528
    %v2530 = vmul.f32 %v759, %v2529
    %v2531 = vadd.f32 %v2530, %v760
    %v2532 = vmul.f32 %v2531, %v2462
    %2534 = vrot.lane.b32.xlu0 %v2531, 80
    %v2535 = vpop.permute.xlu0 %2534
    %v2537 = vmul.f32 %v2531, %v2535
    %2539 = vrot.lane.b32.xlu0 %v2537, 16
    %v2540 = vpop.permute.xlu0 %2539
    %v2542 = vadd.f32 %v2532, %v2540
    %v2543 = vtanh.pop %v2542
    %2545 = vrot.lane.b32.xlu0 %v2543, 16
    %v2546 = vpop.permute.xlu0 %2545
    %v2548 = vmul.f32 %v2531, %v2546
    %2550 = vrot.lane.b32.xlu0 %v2548, 96
    %v2551 = vpop.permute.xlu0 %2550
    %2553 = vst.msk [vmem:[#allocation2 + $0x8] sm:$0x3] %vm892, %v2551
    %2554 = vrot.lane.b32.xlu0 %v2548, 48
    %v2555 = vpop.permute.xlu0 %2554
    %2557 = vst.msk [vmem:[#allocation2 + $0x16] sm:$0x3] %vm897, %v2555
    %v2558 = vld [vmem:[#allocation3 + $0xa] sm:$0x3]
    %v2559 = vld [vmem:[#allocation3 + $0x14] sm:$0x3]
    %v2560 = vsel %vm820, %v2558, %v2559
    %v2561 = vsel %vm822, %v2551, 0
    %2563 = vmatpush.msra.mxu0 0.0
    %2564 = vmatpush.msra.mxu0 0.0
    %2565 = vmatpush.msra.mxu0 0.0
    %2566 = vmatpush.msra.mxu0 0.0
    %2567 = vmatpush.msra.mxu0 0.0
    %2568 = vmatpush.msra.mxu0 0.0
    %2569 = vmatpush.msra.mxu0 0.0
    %2570 = vmatpush.msra.mxu0 0.0
    %2571 = vmatpush.msra.mxu0 0.0
    %2572 = vmatpush.msra.mxu0 0.0
    %2573 = vmatpush.msra.mxu0 0.0
    %2574 = vmatpush.msra.mxu0 0.0
    %2575 = vmatpush.msra.mxu0 0.0
    %2576 = vmatpush.msra.mxu0 0.0
    %2577 = vmatpush.msra.mxu0 %v2160
    %2578 = vmatpush.msra.mxu0 %v2159
    %2579 = vmatmul.f32.gmra.mxu0 %v2561
    %v2580 = vpop.f32.mrf.mxu0
    %v2581 = vadd.f32 0.0, %v2580
    %2582 = vdwg.mxu0
    %v2583 = vadd.f32 %v2560, %v2581
    %2584 = vrot.lane.b32.xlu0 %v2548, 32
    %v2585 = vpop.permute.xlu0 %2584
    %v2586 = vsel %vm822, %v2585, 0
    %2588 = vmatpush.msra.mxu0 0.0
    %2589 = vmatpush.msra.mxu0 0.0
    %2590 = vmatpush.msra.mxu0 0.0
    %2591 = vmatpush.msra.mxu0 0.0
    %2592 = vmatpush.msra.mxu0 0.0
    %2593 = vmatpush.msra.mxu0 0.0
    %2594 = vmatpush.msra.mxu0 0.0
    %2595 = vmatpush.msra.mxu0 0.0
    %2596 = vmatpush.msra.mxu0 0.0
    %2597 = vmatpush.msra.mxu0 0.0
    %2598 = vmatpush.msra.mxu0 0.0
    %2599 = vmatpush.msra.mxu0 0.0
    %2600 = vmatpush.msra.mxu0 0.0
    %2601 = vmatpush.msra.mxu0 0.0
    %2602 = vmatpush.msra.mxu0 %v2163
    %2603 = vmatpush.msra.mxu0 %v2162
    %2604 = vmatmul.f32.gmra.mxu0 %v2586
    %v2605 = vpop.f32.mrf.mxu0
    %v2606 = vadd.f32 0.0, %v2605
    %2607 = vdwg.mxu0
    %v2608 = vadd.f32 %v2583, %v2606
    %v2609 = vtanh.pop %v2608
    %v2610 = vmul.f32 %v759, %v2609
    %v2611 = vadd.f32 %v2610, %v760
    %v2612 = vmul.f32 %v2611, %v2542
    %2614 = vrot.lane.b32.xlu0 %v2611, 80
    %v2615 = vpop.permute.xlu0 %2614
    %v2617 = vmul.f32 %v2611, %v2615
    %2619 = vrot.lane.b32.xlu0 %v2617, 16
    %v2620 = vpop.permute.xlu0 %2619
    %v2622 = vadd.f32 %v2612, %v2620
    %v2623 = vtanh.pop %v2622
    %2625 = vrot.lane.b32.xlu0 %v2623, 16
    %v2626 = vpop.permute.xlu0 %2625
    %v2628 = vmul.f32 %v2611, %v2626
    %2630 = vrot.lane.b32.xlu0 %v2628, 96
    %v2631 = vpop.permute.xlu0 %2630
    %2633 = vst.msk [vmem:[#allocation2 + $0xa] sm:$0x3] %vm892, %v2631
    %2634 = vrot.lane.b32.xlu0 %v2628, 48
    %v2635 = vpop.permute.xlu0 %2634
    %2637 = vst.msk [vmem:[#allocation2 + $0x14] sm:$0x3] %vm897, %v2635
    %v2638 = vld [vmem:[#allocation3 + $0xc] sm:$0x3]
    %v2639 = vld [vmem:[#allocation3 + $0x12] sm:$0x3]
    %v2640 = vsel %vm820, %v2638, %v2639
    %v2641 = vsel %vm822, %v2631, 0
    %2643 = vmatpush.msra.mxu0 0.0
    %2644 = vmatpush.msra.mxu0 0.0
    %2645 = vmatpush.msra.mxu0 0.0
    %2646 = vmatpush.msra.mxu0 0.0
    %2647 = vmatpush.msra.mxu0 0.0
    %2648 = vmatpush.msra.mxu0 0.0
    %2649 = vmatpush.msra.mxu0 0.0
    %2650 = vmatpush.msra.mxu0 0.0
    %2651 = vmatpush.msra.mxu0 0.0
    %2652 = vmatpush.msra.mxu0 0.0
    %2653 = vmatpush.msra.mxu0 0.0
    %2654 = vmatpush.msra.mxu0 0.0
    %2655 = vmatpush.msra.mxu0 0.0
    %2656 = vmatpush.msra.mxu0 0.0
    %2657 = vmatpush.msra.mxu0 %v2160
    %2658 = vmatpush.msra.mxu0 %v2159
    %2659 = vmatmul.f32.gmra.mxu0 %v2641
    %v2660 = vpop.f32.mrf.mxu0
    %v2661 = vadd.f32 0.0, %v2660
    %2662 = vdwg.mxu0
    %v2663 = vadd.f32 %v2640, %v2661
    %2664 = vrot.lane.b32.xlu0 %v2628, 32
    %v2665 = vpop.permute.xlu0 %2664
    %v2666 = vsel %vm822, %v2665, 0
    %2668 = vmatpush.msra.mxu0 0.0
    %2669 = vmatpush.msra.mxu0 0.0
    %2670 = vmatpush.msra.mxu0 0.0
    %2671 = vmatpush.msra.mxu0 0.0
    %2672 = vmatpush.msra.mxu0 0.0
    %2673 = vmatpush.msra.mxu0 0.0
    %2674 = vmatpush.msra.mxu0 0.0
    %2675 = vmatpush.msra.mxu0 0.0
    %2676 = vmatpush.msra.mxu0 0.0
    %2677 = vmatpush.msra.mxu0 0.0
    %2678 = vmatpush.msra.mxu0 0.0
    %2679 = vmatpush.msra.mxu0 0.0
    %2680 = vmatpush.msra.mxu0 0.0
    %2681 = vmatpush.msra.mxu0 0.0
    %2682 = vmatpush.msra.mxu0 %v2163
    %2683 = vmatpush.msra.mxu0 %v2162
    %2684 = vmatmul.f32.gmra.mxu0 %v2666
    %v2685 = vpop.f32.mrf.mxu0
    %v2686 = vadd.f32 0.0, %v2685
    %2687 = vdwg.mxu0
    %v2688 = vadd.f32 %v2663, %v2686
    %v2689 = vtanh.pop %v2688
    %v2690 = vmul.f32 %v759, %v2689
    %v2691 = vadd.f32 %v2690, %v760
    %v2692 = vmul.f32 %v2691, %v2622
    %2694 = vrot.lane.b32.xlu0 %v2691, 80
    %v2695 = vpop.permute.xlu0 %2694
    %v2697 = vmul.f32 %v2691, %v2695
    %2699 = vrot.lane.b32.xlu0 %v2697, 16
    %v2700 = vpop.permute.xlu0 %2699
    %v2702 = vadd.f32 %v2692, %v2700
    %v2703 = vtanh.pop %v2702
    %2705 = vrot.lane.b32.xlu0 %v2703, 16
    %v2706 = vpop.permute.xlu0 %2705
    %v2708 = vmul.f32 %v2691, %v2706
    %2710 = vrot.lane.b32.xlu0 %v2708, 96
    %v2711 = vpop.permute.xlu0 %2710
    %2713 = vst.msk [vmem:[#allocation2 + $0xc] sm:$0x3] %vm892, %v2711
    %2714 = vrot.lane.b32.xlu0 %v2708, 48
    %v2715 = vpop.permute.xlu0 %2714
    %2717 = vst.msk [vmem:[#allocation2 + $0x12] sm:$0x3] %vm897, %v2715
    %v2718 = vld [vmem:[#allocation3 + $0xe] sm:$0x3]
    %v2719 = vld [vmem:[#allocation3 + $0x10] sm:$0x3]
    %v2720 = vsel %vm820, %v2718, %v2719
    %v2721 = vsel %vm822, %v2711, 0
    %2723 = vmatpush.msra.mxu0 0.0
    %2724 = vmatpush.msra.mxu0 0.0
    %2725 = vmatpush.msra.mxu0 0.0
    %2726 = vmatpush.msra.mxu0 0.0
    %2727 = vmatpush.msra.mxu0 0.0
    %2728 = vmatpush.msra.mxu0 0.0
    %2729 = vmatpush.msra.mxu0 0.0
    %2730 = vmatpush.msra.mxu0 0.0
    %2731 = vmatpush.msra.mxu0 0.0
    %2732 = vmatpush.msra.mxu0 0.0
    %2733 = vmatpush.msra.mxu0 0.0
    %2734 = vmatpush.msra.mxu0 0.0
    %2735 = vmatpush.msra.mxu0 0.0
    %2736 = vmatpush.msra.mxu0 0.0
    %2737 = vmatpush.msra.mxu0 %v2160
    %2738 = vmatpush.msra.mxu0 %v2159
    %2739 = vmatmul.f32.gmra.mxu0 %v2721
    %v2740 = vpop.f32.mrf.mxu0
    %v2741 = vadd.f32 0.0, %v2740
    %2742 = vdwg.mxu0
    %v2743 = vadd.f32 %v2720, %v2741
    %2744 = vrot.lane.b32.xlu0 %v2708, 32
    %v2745 = vpop.permute.xlu0 %2744
    %v2746 = vsel %vm822, %v2745, 0
    %2748 = vmatpush.msra.mxu0 0.0
    %2749 = vmatpush.msra.mxu0 0.0
    %2750 = vmatpush.msra.mxu0 0.0
    %2751 = vmatpush.msra.mxu0 0.0
    %2752 = vmatpush.msra.mxu0 0.0
    %2753 = vmatpush.msra.mxu0 0.0
    %2754 = vmatpush.msra.mxu0 0.0
    %2755 = vmatpush.msra.mxu0 0.0
    %2756 = vmatpush.msra.mxu0 0.0
    %2757 = vmatpush.msra.mxu0 0.0
    %2758 = vmatpush.msra.mxu0 0.0
    %2759 = vmatpush.msra.mxu0 0.0
    %2760 = vmatpush.msra.mxu0 0.0
    %2761 = vmatpush.msra.mxu0 0.0
    %2762 = vmatpush.msra.mxu0 %v2163
    %2763 = vmatpush.msra.mxu0 %v2162
    %2764 = vmatmul.f32.gmra.mxu0 %v2746
    %v2765 = vpop.f32.mrf.mxu0
    %v2766 = vadd.f32 0.0, %v2765
    %2767 = vdwg.mxu0
    %v2768 = vadd.f32 %v2743, %v2766
    %v2769 = vtanh.pop %v2768
    %v2770 = vmul.f32 %v759, %v2769
    %v2771 = vadd.f32 %v2770, %v760
    %v2772 = vmul.f32 %v2771, %v2702
    %2774 = vrot.lane.b32.xlu0 %v2771, 80
    %v2775 = vpop.permute.xlu0 %2774
    %v2777 = vmul.f32 %v2771, %v2775
    %2779 = vrot.lane.b32.xlu0 %v2777, 16
    %v2780 = vpop.permute.xlu0 %2779
    %v2782 = vadd.f32 %v2772, %v2780
    %v2783 = vtanh.pop %v2782
    %2785 = vrot.lane.b32.xlu0 %v2783, 16
    %v2786 = vpop.permute.xlu0 %2785
    %v2788 = vmul.f32 %v2771, %v2786
    %2790 = vrot.lane.b32.xlu0 %v2788, 96
    %v2791 = vpop.permute.xlu0 %2790
    %2793 = vst.msk [vmem:[#allocation2 + $0xe] sm:$0x3] %vm892, %v2791
    %2794 = vrot.lane.b32.xlu0 %v2788, 48
    %v2795 = vpop.permute.xlu0 %2794
    %2797 = vst.msk [vmem:[#allocation2 + $0x10] sm:$0x3] %vm897, %v2795
    %v2798 = vld [vmem:[#allocation3 + $0x10] sm:$0x3]
    %v2799 = vld [vmem:[#allocation3 + $0xe] sm:$0x3]
    %v2800 = vsel %vm820, %v2798, %v2799
    %v2801 = vsel %vm822, %v2791, 0
    %2803 = vmatpush.msra.mxu0 0.0
    %2804 = vmatpush.msra.mxu0 0.0
    %2805 = vmatpush.msra.mxu0 0.0
    %2806 = vmatpush.msra.mxu0 0.0
    %2807 = vmatpush.msra.mxu0 0.0
    %2808 = vmatpush.msra.mxu0 0.0
    %2809 = vmatpush.msra.mxu0 0.0
    %2810 = vmatpush.msra.mxu0 0.0
    %2811 = vmatpush.msra.mxu0 0.0
    %2812 = vmatpush.msra.mxu0 0.0
    %2813 = vmatpush.msra.mxu0 0.0
    %2814 = vmatpush.msra.mxu0 0.0
    %2815 = vmatpush.msra.mxu0 0.0
    %2816 = vmatpush.msra.mxu0 0.0
    %2817 = vmatpush.msra.mxu0 %v2160
    %2818 = vmatpush.msra.mxu0 %v2159
    %2819 = vmatmul.f32.gmra.mxu0 %v2801
    %v2820 = vpop.f32.mrf.mxu0
    %v2821 = vadd.f32 0.0, %v2820
    %2822 = vdwg.mxu0
    %v2823 = vadd.f32 %v2800, %v2821
    %2824 = vrot.lane.b32.xlu0 %v2788, 32
    %v2825 = vpop.permute.xlu0 %2824
    %v2826 = vsel %vm822, %v2825, 0
    %2828 = vmatpush.msra.mxu0 0.0
    %2829 = vmatpush.msra.mxu0 0.0
    %2830 = vmatpush.msra.mxu0 0.0
    %2831 = vmatpush.msra.mxu0 0.0
    %2832 = vmatpush.msra.mxu0 0.0
    %2833 = vmatpush.msra.mxu0 0.0
    %2834 = vmatpush.msra.mxu0 0.0
    %2835 = vmatpush.msra.mxu0 0.0
    %2836 = vmatpush.msra.mxu0 0.0
    %2837 = vmatpush.msra.mxu0 0.0
    %2838 = vmatpush.msra.mxu0 0.0
    %2839 = vmatpush.msra.mxu0 0.0
    %2840 = vmatpush.msra.mxu0 0.0
    %2841 = vmatpush.msra.mxu0 0.0
    %2842 = vmatpush.msra.mxu0 %v2163
    %2843 = vmatpush.msra.mxu0 %v2162
    %2844 = vmatmul.f32.gmra.mxu0 %v2826
    %v2845 = vpop.f32.mrf.mxu0
    %v2846 = vadd.f32 0.0, %v2845
    %2847 = vdwg.mxu0
    %v2848 = vadd.f32 %v2823, %v2846
    %v2849 = vtanh.pop %v2848
    %v2850 = vmul.f32 %v759, %v2849
    %v2851 = vadd.f32 %v2850, %v760
    %v2852 = vmul.f32 %v2851, %v2782
    %2854 = vrot.lane.b32.xlu0 %v2851, 80
    %v2855 = vpop.permute.xlu0 %2854
    %v2857 = vmul.f32 %v2851, %v2855
    %2859 = vrot.lane.b32.xlu0 %v2857, 16
    %v2860 = vpop.permute.xlu0 %2859
    %v2862 = vadd.f32 %v2852, %v2860
    %v2863 = vtanh.pop %v2862
    %2865 = vrot.lane.b32.xlu0 %v2863, 16
    %v2866 = vpop.permute.xlu0 %2865
    %v2868 = vmul.f32 %v2851, %v2866
    %2870 = vrot.lane.b32.xlu0 %v2868, 96
    %v2871 = vpop.permute.xlu0 %2870
    %2873 = vst.msk [vmem:[#allocation2 + $0x10] sm:$0x3] %vm892, %v2871
    %2874 = vrot.lane.b32.xlu0 %v2868, 48
    %v2875 = vpop.permute.xlu0 %2874
    %2877 = vst.msk [vmem:[#allocation2 + $0xe] sm:$0x3] %vm897, %v2875
    %v2878 = vld [vmem:[#allocation3 + $0x12] sm:$0x3]
    %v2879 = vld [vmem:[#allocation3 + $0xc] sm:$0x3]
    %v2880 = vsel %vm820, %v2878, %v2879
    %v2881 = vsel %vm822, %v2871, 0
    %2883 = vmatpush.msra.mxu0 0.0
    %2884 = vmatpush.msra.mxu0 0.0
    %2885 = vmatpush.msra.mxu0 0.0
    %2886 = vmatpush.msra.mxu0 0.0
    %2887 = vmatpush.msra.mxu0 0.0
    %2888 = vmatpush.msra.mxu0 0.0
    %2889 = vmatpush.msra.mxu0 0.0
    %2890 = vmatpush.msra.mxu0 0.0
    %2891 = vmatpush.msra.mxu0 0.0
    %2892 = vmatpush.msra.mxu0 0.0
    %2893 = vmatpush.msra.mxu0 0.0
    %2894 = vmatpush.msra.mxu0 0.0
    %2895 = vmatpush.msra.mxu0 0.0
    %2896 = vmatpush.msra.mxu0 0.0
    %2897 = vmatpush.msra.mxu0 %v2160
    %2898 = vmatpush.msra.mxu0 %v2159
    %2899 = vmatmul.f32.gmra.mxu0 %v2881
    %v2900 = vpop.f32.mrf.mxu0
    %v2901 = vadd.f32 0.0, %v2900
    %2902 = vdwg.mxu0
    %v2903 = vadd.f32 %v2880, %v2901
    %2904 = vrot.lane.b32.xlu0 %v2868, 32
    %v2905 = vpop.permute.xlu0 %2904
    %v2906 = vsel %vm822, %v2905, 0
    %2908 = vmatpush.msra.mxu0 0.0
    %2909 = vmatpush.msra.mxu0 0.0
    %2910 = vmatpush.msra.mxu0 0.0
    %2911 = vmatpush.msra.mxu0 0.0
    %2912 = vmatpush.msra.mxu0 0.0
    %2913 = vmatpush.msra.mxu0 0.0
    %2914 = vmatpush.msra.mxu0 0.0
    %2915 = vmatpush.msra.mxu0 0.0
    %2916 = vmatpush.msra.mxu0 0.0
    %2917 = vmatpush.msra.mxu0 0.0
    %2918 = vmatpush.msra.mxu0 0.0
    %2919 = vmatpush.msra.mxu0 0.0
    %2920 = vmatpush.msra.mxu0 0.0
    %2921 = vmatpush.msra.mxu0 0.0
    %2922 = vmatpush.msra.mxu0 %v2163
    %2923 = vmatpush.msra.mxu0 %v2162
    %2924 = vmatmul.f32.gmra.mxu0 %v2906
    %v2925 = vpop.f32.mrf.mxu0
    %v2926 = vadd.f32 0.0, %v2925
    %2927 = vdwg.mxu0
    %v2928 = vadd.f32 %v2903, %v2926
    %v2929 = vtanh.pop %v2928
    %v2930 = vmul.f32 %v759, %v2929
    %v2931 = vadd.f32 %v2930, %v760
    %v2932 = vmul.f32 %v2931, %v2862
    %2934 = vrot.lane.b32.xlu0 %v2931, 80
    %v2935 = vpop.permute.xlu0 %2934
    %v2937 = vmul.f32 %v2931, %v2935
    %2939 = vrot.lane.b32.xlu0 %v2937, 16
    %v2940 = vpop.permute.xlu0 %2939
    %v2942 = vadd.f32 %v2932, %v2940
    %v2943 = vtanh.pop %v2942
    %2945 = vrot.lane.b32.xlu0 %v2943, 16
    %v2946 = vpop.permute.xlu0 %2945
    %v2948 = vmul.f32 %v2931, %v2946
    %2950 = vrot.lane.b32.xlu0 %v2948, 96
    %v2951 = vpop.permute.xlu0 %2950
    %2953 = vst.msk [vmem:[#allocation2 + $0x12] sm:$0x3] %vm892, %v2951
    %2954 = vrot.lane.b32.xlu0 %v2948, 48
    %v2955 = vpop.permute.xlu0 %2954
    %2957 = vst.msk [vmem:[#allocation2 + $0xc] sm:$0x3] %vm897, %v2955
    %v2958 = vld [vmem:[#allocation3 + $0x14] sm:$0x3]
    %v2959 = vld [vmem:[#allocation3 + $0xa] sm:$0x3]
    %v2960 = vsel %vm820, %v2958, %v2959
    %v2961 = vsel %vm822, %v2951, 0
    %2963 = vmatpush.msra.mxu0 0.0
    %2964 = vmatpush.msra.mxu0 0.0
    %2965 = vmatpush.msra.mxu0 0.0
    %2966 = vmatpush.msra.mxu0 0.0
    %2967 = vmatpush.msra.mxu0 0.0
    %2968 = vmatpush.msra.mxu0 0.0
    %2969 = vmatpush.msra.mxu0 0.0
    %2970 = vmatpush.msra.mxu0 0.0
    %2971 = vmatpush.msra.mxu0 0.0
    %2972 = vmatpush.msra.mxu0 0.0
    %2973 = vmatpush.msra.mxu0 0.0
    %2974 = vmatpush.msra.mxu0 0.0
    %2975 = vmatpush.msra.mxu0 0.0
    %2976 = vmatpush.msra.mxu0 0.0
    %2977 = vmatpush.msra.mxu0 %v2160
    %2978 = vmatpush.msra.mxu0 %v2159
    %2979 = vmatmul.f32.gmra.mxu0 %v2961
    %v2980 = vpop.f32.mrf.mxu0
    %v2981 = vadd.f32 0.0, %v2980
    %2982 = vdwg.mxu0
    %v2983 = vadd.f32 %v2960, %v2981
    %2984 = vrot.lane.b32.xlu0 %v2948, 32
    %v2985 = vpop.permute.xlu0 %2984
    %v2986 = vsel %vm822, %v2985, 0
    %2988 = vmatpush.msra.mxu0 0.0
    %2989 = vmatpush.msra.mxu0 0.0
    %2990 = vmatpush.msra.mxu0 0.0
    %2991 = vmatpush.msra.mxu0 0.0
    %2992 = vmatpush.msra.mxu0 0.0
    %2993 = vmatpush.msra.mxu0 0.0
    %2994 = vmatpush.msra.mxu0 0.0
    %2995 = vmatpush.msra.mxu0 0.0
    %2996 = vmatpush.msra.mxu0 0.0
    %2997 = vmatpush.msra.mxu0 0.0
    %2998 = vmatpush.msra.mxu0 0.0
    %2999 = vmatpush.msra.mxu0 0.0
    %3000 = vmatpush.msra.mxu0 0.0
    %3001 = vmatpush.msra.mxu0 0.0
    %3002 = vmatpush.msra.mxu0 %v2163
    %3003 = vmatpush.msra.mxu0 %v2162
    %3004 = vmatmul.f32.gmra.mxu0 %v2986
    %v3005 = vpop.f32.mrf.mxu0
    %v3006 = vadd.f32 0.0, %v3005
    %3007 = vdwg.mxu0
    %v3008 = vadd.f32 %v2983, %v3006
    %v3009 = vtanh.pop %v3008
    %v3010 = vmul.f32 %v759, %v3009
    %v3011 = vadd.f32 %v3010, %v760
    %v3012 = vmul.f32 %v3011, %v2942
    %3014 = vrot.lane.b32.xlu0 %v3011, 80
    %v3015 = vpop.permute.xlu0 %3014
    %v3017 = vmul.f32 %v3011, %v3015
    %3019 = vrot.lane.b32.xlu0 %v3017, 16
    %v3020 = vpop.permute.xlu0 %3019
    %v3022 = vadd.f32 %v3012, %v3020
    %v3023 = vtanh.pop %v3022
    %3025 = vrot.lane.b32.xlu0 %v3023, 16
    %v3026 = vpop.permute.xlu0 %3025
    %v3028 = vmul.f32 %v3011, %v3026
    %3030 = vrot.lane.b32.xlu0 %v3028, 96
    %v3031 = vpop.permute.xlu0 %3030
    %3033 = vst.msk [vmem:[#allocation2 + $0x14] sm:$0x3] %vm892, %v3031
    %3034 = vrot.lane.b32.xlu0 %v3028, 48
    %v3035 = vpop.permute.xlu0 %3034
    %3037 = vst.msk [vmem:[#allocation2 + $0xa] sm:$0x3] %vm897, %v3035
    %v3038 = vld [vmem:[#allocation3 + $0x16] sm:$0x3]
    %v3039 = vld [vmem:[#allocation3 + $0x8] sm:$0x3]
    %v3040 = vsel %vm820, %v3038, %v3039
    %v3041 = vsel %vm822, %v3031, 0
    %3043 = vmatpush.msra.mxu0 0.0
    %3044 = vmatpush.msra.mxu0 0.0
    %3045 = vmatpush.msra.mxu0 0.0
    %3046 = vmatpush.msra.mxu0 0.0
    %3047 = vmatpush.msra.mxu0 0.0
    %3048 = vmatpush.msra.mxu0 0.0
    %3049 = vmatpush.msra.mxu0 0.0
    %3050 = vmatpush.msra.mxu0 0.0
    %3051 = vmatpush.msra.mxu0 0.0
    %3052 = vmatpush.msra.mxu0 0.0
    %3053 = vmatpush.msra.mxu0 0.0
    %3054 = vmatpush.msra.mxu0 0.0
    %3055 = vmatpush.msra.mxu0 0.0
    %3056 = vmatpush.msra.mxu0 0.0
    %3057 = vmatpush.msra.mxu0 %v2160
    %3058 = vmatpush.msra.mxu0 %v2159
    %3059 = vmatmul.f32.gmra.mxu0 %v3041
    %v3060 = vpop.f32.mrf.mxu0
    %v3061 = vadd.f32 0.0, %v3060
    %3062 = vdwg.mxu0
    %v3063 = vadd.f32 %v3040, %v3061
    %3064 = vrot.lane.b32.xlu0 %v3028, 32
    %v3065 = vpop.permute.xlu0 %3064
    %v3066 = vsel %vm822, %v3065, 0
    %3068 = vmatpush.msra.mxu0 0.0
    %3069 = vmatpush.msra.mxu0 0.0
    %3070 = vmatpush.msra.mxu0 0.0
    %3071 = vmatpush.msra.mxu0 0.0
    %3072 = vmatpush.msra.mxu0 0.0
    %3073 = vmatpush.msra.mxu0 0.0
    %3074 = vmatpush.msra.mxu0 0.0
    %3075 = vmatpush.msra.mxu0 0.0
    %3076 = vmatpush.msra.mxu0 0.0
    %3077 = vmatpush.msra.mxu0 0.0
    %3078 = vmatpush.msra.mxu0 0.0
    %3079 = vmatpush.msra.mxu0 0.0
    %3080 = vmatpush.msra.mxu0 0.0
    %3081 = vmatpush.msra.mxu0 0.0
    %3082 = vmatpush.msra.mxu0 %v2163
    %3083 = vmatpush.msra.mxu0 %v2162
    %3084 = vmatmul.f32.gmra.mxu0 %v3066
    %v3085 = vpop.f32.mrf.mxu0
    %v3086 = vadd.f32 0.0, %v3085
    %3087 = vdwg.mxu0
    %v3088 = vadd.f32 %v3063, %v3086
    %v3089 = vtanh.pop %v3088
    %v3090 = vmul.f32 %v759, %v3089
    %v3091 = vadd.f32 %v3090, %v760
    %v3092 = vmul.f32 %v3091, %v3022
    %3094 = vrot.lane.b32.xlu0 %v3091, 80
    %v3095 = vpop.permute.xlu0 %3094
    %v3097 = vmul.f32 %v3091, %v3095
    %3099 = vrot.lane.b32.xlu0 %v3097, 16
    %v3100 = vpop.permute.xlu0 %3099
    %v3102 = vadd.f32 %v3092, %v3100
    %v3103 = vtanh.pop %v3102
    %3105 = vrot.lane.b32.xlu0 %v3103, 16
    %v3106 = vpop.permute.xlu0 %3105
    %v3108 = vmul.f32 %v3091, %v3106
    %3110 = vrot.lane.b32.xlu0 %v3108, 96
    %v3111 = vpop.permute.xlu0 %3110
    %3113 = vst.msk [vmem:[#allocation2 + $0x16] sm:$0x3] %vm892, %v3111
    %3114 = vrot.lane.b32.xlu0 %v3108, 48
    %v3115 = vpop.permute.xlu0 %3114
    %3117 = vst.msk [vmem:[#allocation2 + $0x8] sm:$0x3] %vm897, %v3115
    %v3118 = vld [vmem:[#allocation3 + $0x18] sm:$0x3]
    %v3119 = vld [vmem:[#allocation3 + $0x6] sm:$0x3]
    %v3120 = vsel %vm820, %v3118, %v3119
    %v3121 = vsel %vm822, %v3111, 0
    %3123 = vmatpush.msra.mxu0 0.0
    %3124 = vmatpush.msra.mxu0 0.0
    %3125 = vmatpush.msra.mxu0 0.0
    %3126 = vmatpush.msra.mxu0 0.0
    %3127 = vmatpush.msra.mxu0 0.0
    %3128 = vmatpush.msra.mxu0 0.0
    %3129 = vmatpush.msra.mxu0 0.0
    %3130 = vmatpush.msra.mxu0 0.0
    %3131 = vmatpush.msra.mxu0 0.0
    %3132 = vmatpush.msra.mxu0 0.0
    %3133 = vmatpush.msra.mxu0 0.0
    %3134 = vmatpush.msra.mxu0 0.0
    %3135 = vmatpush.msra.mxu0 0.0
    %3136 = vmatpush.msra.mxu0 0.0
    %3137 = vmatpush.msra.mxu0 %v2160
    %3138 = vmatpush.msra.mxu0 %v2159
    %3139 = vmatmul.f32.gmra.mxu0 %v3121
    %v3140 = vpop.f32.mrf.mxu0
    %v3141 = vadd.f32 0.0, %v3140
    %3142 = vdwg.mxu0
    %v3143 = vadd.f32 %v3120, %v3141
    %3144 = vrot.lane.b32.xlu0 %v3108, 32
    %v3145 = vpop.permute.xlu0 %3144
    %v3146 = vsel %vm822, %v3145, 0
    %3148 = vmatpush.msra.mxu0 0.0
    %3149 = vmatpush.msra.mxu0 0.0
    %3150 = vmatpush.msra.mxu0 0.0
    %3151 = vmatpush.msra.mxu0 0.0
    %3152 = vmatpush.msra.mxu0 0.0
    %3153 = vmatpush.msra.mxu0 0.0
    %3154 = vmatpush.msra.mxu0 0.0
    %3155 = vmatpush.msra.mxu0 0.0
    %3156 = vmatpush.msra.mxu0 0.0
    %3157 = vmatpush.msra.mxu0 0.0
    %3158 = vmatpush.msra.mxu0 0.0
    %3159 = vmatpush.msra.mxu0 0.0
    %3160 = vmatpush.msra.mxu0 0.0
    %3161 = vmatpush.msra.mxu0 0.0
    %3162 = vmatpush.msra.mxu0 %v2163
    %3163 = vmatpush.msra.mxu0 %v2162
    %3164 = vmatmul.f32.gmra.mxu0 %v3146
    %v3165 = vpop.f32.mrf.mxu0
    %v3166 = vadd.f32 0.0, %v3165
    %3167 = vdwg.mxu0
    %v3168 = vadd.f32 %v3143, %v3166
    %v3169 = vtanh.pop %v3168
    %v3170 = vmul.f32 %v759, %v3169
    %v3171 = vadd.f32 %v3170, %v760
    %v3172 = vmul.f32 %v3171, %v3102
    %3174 = vrot.lane.b32.xlu0 %v3171, 80
    %v3175 = vpop.permute.xlu0 %3174
    %v3177 = vmul.f32 %v3171, %v3175
    %3179 = vrot.lane.b32.xlu0 %v3177, 16
    %v3180 = vpop.permute.xlu0 %3179
    %v3182 = vadd.f32 %v3172, %v3180
    %v3183 = vtanh.pop %v3182
    %3185 = vrot.lane.b32.xlu0 %v3183, 16
    %v3186 = vpop.permute.xlu0 %3185
    %v3188 = vmul.f32 %v3171, %v3186
    %3190 = vrot.lane.b32.xlu0 %v3188, 96
    %v3191 = vpop.permute.xlu0 %3190
    %3193 = vst.msk [vmem:[#allocation2 + $0x18] sm:$0x3] %vm892, %v3191
    %3194 = vrot.lane.b32.xlu0 %v3188, 48
    %v3195 = vpop.permute.xlu0 %3194
    %3197 = vst.msk [vmem:[#allocation2 + $0x6] sm:$0x3] %vm897, %v3195
    %v3198 = vld [vmem:[#allocation3 + $0x1a] sm:$0x3]
    %v3199 = vld [vmem:[#allocation3 + $0x4] sm:$0x3]
    %v3200 = vsel %vm820, %v3198, %v3199
    %v3201 = vsel %vm822, %v3191, 0
    %3203 = vmatpush.msra.mxu0 0.0
    %3204 = vmatpush.msra.mxu0 0.0
    %3205 = vmatpush.msra.mxu0 0.0
    %3206 = vmatpush.msra.mxu0 0.0
    %3207 = vmatpush.msra.mxu0 0.0
    %3208 = vmatpush.msra.mxu0 0.0
    %3209 = vmatpush.msra.mxu0 0.0
    %3210 = vmatpush.msra.mxu0 0.0
    %3211 = vmatpush.msra.mxu0 0.0
    %3212 = vmatpush.msra.mxu0 0.0
    %3213 = vmatpush.msra.mxu0 0.0
    %3214 = vmatpush.msra.mxu0 0.0
    %3215 = vmatpush.msra.mxu0 0.0
    %3216 = vmatpush.msra.mxu0 0.0
    %3217 = vmatpush.msra.mxu0 %v2160
    %3218 = vmatpush.msra.mxu0 %v2159
    %3219 = vmatmul.f32.gmra.mxu0 %v3201
    %v3220 = vpop.f32.mrf.mxu0
    %v3221 = vadd.f32 0.0, %v3220
    %3222 = vdwg.mxu0
    %v3223 = vadd.f32 %v3200, %v3221
    %3224 = vrot.lane.b32.xlu0 %v3188, 32
    %v3225 = vpop.permute.xlu0 %3224
    %v3226 = vsel %vm822, %v3225, 0
    %3228 = vmatpush.msra.mxu0 0.0
    %3229 = vmatpush.msra.mxu0 0.0
    %3230 = vmatpush.msra.mxu0 0.0
    %3231 = vmatpush.msra.mxu0 0.0
    %3232 = vmatpush.msra.mxu0 0.0
    %3233 = vmatpush.msra.mxu0 0.0
    %3234 = vmatpush.msra.mxu0 0.0
    %3235 = vmatpush.msra.mxu0 0.0
    %3236 = vmatpush.msra.mxu0 0.0
    %3237 = vmatpush.msra.mxu0 0.0
    %3238 = vmatpush.msra.mxu0 0.0
    %3239 = vmatpush.msra.mxu0 0.0
    %3240 = vmatpush.msra.mxu0 0.0
    %3241 = vmatpush.msra.mxu0 0.0
    %3242 = vmatpush.msra.mxu0 %v2163
    %3243 = vmatpush.msra.mxu0 %v2162
    %3244 = vmatmul.f32.gmra.mxu0 %v3226
    %v3245 = vpop.f32.mrf.mxu0
    %v3246 = vadd.f32 0.0, %v3245
    %3247 = vdwg.mxu0
    %v3248 = vadd.f32 %v3223, %v3246
    %v3249 = vtanh.pop %v3248
    %v3250 = vmul.f32 %v759, %v3249
    %v3251 = vadd.f32 %v3250, %v760
    %v3252 = vmul.f32 %v3251, %v3182
    %3254 = vrot.lane.b32.xlu0 %v3251, 80
    %v3255 = vpop.permute.xlu0 %3254
    %v3257 = vmul.f32 %v3251, %v3255
    %3259 = vrot.lane.b32.xlu0 %v3257, 16
    %v3260 = vpop.permute.xlu0 %3259
    %v3262 = vadd.f32 %v3252, %v3260
    %v3263 = vtanh.pop %v3262
    %3265 = vrot.lane.b32.xlu0 %v3263, 16
    %v3266 = vpop.permute.xlu0 %3265
    %v3268 = vmul.f32 %v3251, %v3266
    %3270 = vrot.lane.b32.xlu0 %v3268, 96
    %v3271 = vpop.permute.xlu0 %3270
    %3273 = vst.msk [vmem:[#allocation2 + $0x1a] sm:$0x3] %vm892, %v3271
    %3274 = vrot.lane.b32.xlu0 %v3268, 48
    %v3275 = vpop.permute.xlu0 %3274
    %3277 = vst.msk [vmem:[#allocation2 + $0x4] sm:$0x3] %vm897, %v3275
    %v3278 = vld [vmem:[#allocation3 + $0x1c] sm:$0x3]
    %v3279 = vld [vmem:[#allocation3 + $0x2] sm:$0x3]
    %v3280 = vsel %vm820, %v3278, %v3279
    %v3281 = vsel %vm822, %v3271, 0
    %3283 = vmatpush.msra.mxu0 0.0
    %3284 = vmatpush.msra.mxu0 0.0
    %3285 = vmatpush.msra.mxu0 0.0
    %3286 = vmatpush.msra.mxu0 0.0
    %3287 = vmatpush.msra.mxu0 0.0
    %3288 = vmatpush.msra.mxu0 0.0
    %3289 = vmatpush.msra.mxu0 0.0
    %3290 = vmatpush.msra.mxu0 0.0
    %3291 = vmatpush.msra.mxu0 0.0
    %3292 = vmatpush.msra.mxu0 0.0
    %3293 = vmatpush.msra.mxu0 0.0
    %3294 = vmatpush.msra.mxu0 0.0
    %3295 = vmatpush.msra.mxu0 0.0
    %3296 = vmatpush.msra.mxu0 0.0
    %3297 = vmatpush.msra.mxu0 %v2160
    %3298 = vmatpush.msra.mxu0 %v2159
    %3299 = vmatmul.f32.gmra.mxu0 %v3281
    %v3300 = vpop.f32.mrf.mxu0
    %v3301 = vadd.f32 0.0, %v3300
    %3302 = vdwg.mxu0
    %v3303 = vadd.f32 %v3280, %v3301
    %3304 = vrot.lane.b32.xlu0 %v3268, 32
    %v3305 = vpop.permute.xlu0 %3304
    %v3306 = vsel %vm822, %v3305, 0
    %3308 = vmatpush.msra.mxu0 0.0
    %3309 = vmatpush.msra.mxu0 0.0
    %3310 = vmatpush.msra.mxu0 0.0
    %3311 = vmatpush.msra.mxu0 0.0
    %3312 = vmatpush.msra.mxu0 0.0
    %3313 = vmatpush.msra.mxu0 0.0
    %3314 = vmatpush.msra.mxu0 0.0
    %3315 = vmatpush.msra.mxu0 0.0
    %3316 = vmatpush.msra.mxu0 0.0
    %3317 = vmatpush.msra.mxu0 0.0
    %3318 = vmatpush.msra.mxu0 0.0
    %3319 = vmatpush.msra.mxu0 0.0
    %3320 = vmatpush.msra.mxu0 0.0
    %3321 = vmatpush.msra.mxu0 0.0
    %3322 = vmatpush.msra.mxu0 %v2163
    %3323 = vmatpush.msra.mxu0 %v2162
    %3324 = vmatmul.f32.gmra.mxu0 %v3306
    %v3325 = vpop.f32.mrf.mxu0
    %v3326 = vadd.f32 0.0, %v3325
    %3327 = vdwg.mxu0
    %v3328 = vadd.f32 %v3303, %v3326
    %v3329 = vtanh.pop %v3328
    %v3330 = vmul.f32 %v759, %v3329
    %v3331 = vadd.f32 %v3330, %v760
    %v3332 = vmul.f32 %v3331, %v3262
    %3334 = vrot.lane.b32.xlu0 %v3331, 80
    %v3335 = vpop.permute.xlu0 %3334
    %v3337 = vmul.f32 %v3331, %v3335
    %3339 = vrot.lane.b32.xlu0 %v3337, 16
    %v3340 = vpop.permute.xlu0 %3339
    %v3342 = vadd.f32 %v3332, %v3340
    %v3343 = vtanh.pop %v3342
    %3345 = vrot.lane.b32.xlu0 %v3343, 16
    %v3346 = vpop.permute.xlu0 %3345
    %v3348 = vmul.f32 %v3331, %v3346
    %3350 = vrot.lane.b32.xlu0 %v3348, 96
    %v3351 = vpop.permute.xlu0 %3350
    %3353 = vst.msk [vmem:[#allocation2 + $0x1c] sm:$0x3] %vm892, %v3351
    %3354 = vrot.lane.b32.xlu0 %v3348, 48
    %v3355 = vpop.permute.xlu0 %3354
    %3357 = vst.msk [vmem:[#allocation2 + $0x2] sm:$0x3] %vm897, %v3355
    %v3358 = vld [vmem:[#allocation3 + $0x1e] sm:$0x3]
    %v3359 = vld [vmem:[#allocation3] sm:$0x3]
    %v3360 = vsel %vm820, %v3358, %v3359
    %v3361 = vsel %vm822, %v3351, 0
    %3363 = vmatpush.msra.mxu0 0.0
    %3364 = vmatpush.msra.mxu0 0.0
    %3365 = vmatpush.msra.mxu0 0.0
    %3366 = vmatpush.msra.mxu0 0.0
    %3367 = vmatpush.msra.mxu0 0.0
    %3368 = vmatpush.msra.mxu0 0.0
    %3369 = vmatpush.msra.mxu0 0.0
    %3370 = vmatpush.msra.mxu0 0.0
    %3371 = vmatpush.msra.mxu0 0.0
    %3372 = vmatpush.msra.mxu0 0.0
    %3373 = vmatpush.msra.mxu0 0.0
    %3374 = vmatpush.msra.mxu0 0.0
    %3375 = vmatpush.msra.mxu0 0.0
    %3376 = vmatpush.msra.mxu0 0.0
    %3377 = vmatpush.msra.mxu0 %v2160
    %3378 = vmatpush.msra.mxu0 %v2159
    %3379 = vmatmul.f32.gmra.mxu0 %v3361
    %v3380 = vpop.f32.mrf.mxu0
    %v3381 = vadd.f32 0.0, %v3380
    %3382 = vdwg.mxu0
    %v3383 = vadd.f32 %v3360, %v3381
    %3384 = vrot.lane.b32.xlu0 %v3348, 32
    %v3385 = vpop.permute.xlu0 %3384
    %v3386 = vsel %vm822, %v3385, 0
    %3388 = vmatpush.msra.mxu0 0.0
    %3389 = vmatpush.msra.mxu0 0.0
    %3390 = vmatpush.msra.mxu0 0.0
    %3391 = vmatpush.msra.mxu0 0.0
    %3392 = vmatpush.msra.mxu0 0.0
    %3393 = vmatpush.msra.mxu0 0.0
    %3394 = vmatpush.msra.mxu0 0.0
    %3395 = vmatpush.msra.mxu0 0.0
    %3396 = vmatpush.msra.mxu0 0.0
    %3397 = vmatpush.msra.mxu0 0.0
    %3398 = vmatpush.msra.mxu0 0.0
    %3399 = vmatpush.msra.mxu0 0.0
    %3400 = vmatpush.msra.mxu0 0.0
    %3401 = vmatpush.msra.mxu0 0.0
    %3402 = vmatpush.msra.mxu0 %v2163
    %3403 = vmatpush.msra.mxu0 %v2162
    %3404 = vmatmul.f32.gmra.mxu0 %v3386
    %v3405 = vpop.f32.mrf.mxu0
    %v3406 = vadd.f32 0.0, %v3405
    %3407 = vdwg.mxu0
    %v3408 = vadd.f32 %v3383, %v3406
    %v3409 = vtanh.pop %v3408
    %v3410 = vmul.f32 %v759, %v3409
    %v3411 = vadd.f32 %v3410, %v760
    %v3412 = vmul.f32 %v3411, %v3342
    %3414 = vrot.lane.b32.xlu0 %v3411, 80
    %v3415 = vpop.permute.xlu0 %3414
    %v3417 = vmul.f32 %v3411, %v3415
    %3419 = vrot.lane.b32.xlu0 %v3417, 16
    %v3420 = vpop.permute.xlu0 %3419
    %v3422 = vadd.f32 %v3412, %v3420
    %v3423 = vtanh.pop %v3422
    %3425 = vrot.lane.b32.xlu0 %v3423, 16
    %v3426 = vpop.permute.xlu0 %3425
    %v3428 = vmul.f32 %v3411, %v3426
    %3430 = vrot.lane.b32.xlu0 %v3428, 96
    %v3431 = vpop.permute.xlu0 %3430
    %3433 = vst.msk [vmem:[#allocation2 + $0x1e] sm:$0x3] %vm892, %v3431
    %3434 = vrot.lane.b32.xlu0 %v3428, 48
    %v3435 = vpop.permute.xlu0 %3434
    %3437 = vst.msk [vmem:[#allocation2] sm:$0x3] %vm897, %v3435
    %v3438 = vld [vmem:[#allocation2] sm:$0xff]
    %v3439 = vld [vmem:[#allocation2 + $0x8] sm:$0xff]
    %v3440 = vld [vmem:[#allocation2 + $0x10] sm:$0xff]
    %v3441 = vld [vmem:[#allocation2 + $0x18] sm:$0xff]
    %s3442 = scalar_lea.vmem %s7, 64
    %v3443 = vld [vmem:[%s3442] sm:$0xff]
    %v3444 = vld [vmem:[%s3442 + $0x8] sm:$0xff]
    %v3445 = vld [vmem:[%s3442 + $0x10] sm:$0xff]
    %v3446 = vld [vmem:[%s3442 + $0x18] sm:$0xff]
    %s3447 = scalar_lea.vmem %s9, 2
    %v3448 = vld [vmem:[%s3447] sm:$0x1]
    %v3450 = vperm.slane %v3448, 0
    %v3453 = vsel %vm113, %v3438, 0
    %v3456 = vsel %vm113, %v3439, 0
    %v3459 = vsel %vm113, %v3440, 0
    %v3462 = vsel %vm113, %v3441, 0
    %3464 = vmatpush.msra.mxu0 0.0
    %3465 = vmatpush.msra.mxu0 0.0
    %3466 = vmatpush.msra.mxu0 0.0
    %3467 = vmatpush.msra.mxu0 0.0
    %3468 = vmatpush.msra.mxu0 0.0
    %3469 = vmatpush.msra.mxu0 0.0
    %3470 = vmatpush.msra.mxu0 0.0
    %3471 = vmatpush.msra.mxu0 0.0
    %3472 = vmatpush.msra.mxu0 0.0
    %3473 = vmatpush.msra.mxu0 0.0
    %3474 = vmatpush.msra.mxu0 0.0
    %3475 = vmatpush.msra.mxu0 0.0
    %3476 = vmatpush.msra.mxu0 %v3446
    %3477 = vmatpush.msra.mxu0 %v3445
    %3478 = vmatpush.msra.mxu0 %v3444
    %3479 = vmatpush.msra.mxu0 %v3443
    %3480 = vmatmul.f32.gmra.mxu0 %v3453
    %v3481 = vpop.f32.mrf.mxu0
    %v3482 = vadd.f32 %v3450, %v3481
    %3483 = vmatmul.f32.gmra.mxu0 %v3456
    %v3484 = vpop.f32.mrf.mxu0
    %v3485 = vadd.f32 %v3450, %v3484
    %3486 = vmatmul.f32.gmra.mxu0 %v3459
    %v3487 = vpop.f32.mrf.mxu0
    %v3488 = vadd.f32 %v3450, %v3487
    %3489 = vmatmul.f32.gmra.mxu0 %v3462
    %v3490 = vpop.f32.mrf.mxu0
    %v3491 = vadd.f32 %v3450, %v3490
    %3492 = vdwg.mxu0
    %3493 = vst [vmem:[#allocation3] sm:$0xff] %v3482
    %3494 = vst [vmem:[#allocation3 + $0x8] sm:$0xff] %v3485
    %3495 = vst [vmem:[#allocation3 + $0x10] sm:$0xff] %v3488
    %3496 = vst [vmem:[#allocation3 + $0x18] sm:$0xff] %v3491
    %s3497 = scalar_lea.vmem [#allocation4], 64
    %v3498 = vld [vmem:[%s3497] sm:$0xff]
    %v3499 = vld [vmem:[%s3497 + $0x8] sm:$0xff]
    %s3500 = scalar_lea.vmem [#allocation4], 80
    %v3501 = vld [vmem:[%s3500] sm:$0xff]
    %v3502 = vld [vmem:[%s3500 + $0x8] sm:$0xff]
    %v3503 = vld [vmem:[#allocation3] sm:$0x3]
    %v3504 = vld [vmem:[#allocation3 + $0x1e] sm:$0x3]
    %v3505 = vsel %vm820, %v3503, %v3504
    %3506 = vmatpush.msra.mxu0 0.0
    %3507 = vmatpush.msra.mxu0 0.0
    %3508 = vmatpush.msra.mxu0 0.0
    %3509 = vmatpush.msra.mxu0 0.0
    %3510 = vmatpush.msra.mxu0 0.0
    %3511 = vmatpush.msra.mxu0 0.0
    %3512 = vmatpush.msra.mxu0 0.0
    %3513 = vmatpush.msra.mxu0 0.0
    %3514 = vmatpush.msra.mxu0 0.0
    %3515 = vmatpush.msra.mxu0 0.0
    %3516 = vmatpush.msra.mxu0 0.0
    %3517 = vmatpush.msra.mxu0 0.0
    %3518 = vmatpush.msra.mxu0 0.0
    %3519 = vmatpush.msra.mxu0 0.0
    %3520 = vmatpush.msra.mxu0 %v3499
    %3521 = vmatpush.msra.mxu0 %v3498
    %3522 = vmatmul.f32.gmra.mxu0 %v824
    %v3523 = vpop.f32.mrf.mxu0
    %v3524 = vadd.f32 0.0, %v3523
    %3525 = vdwg.mxu0
    %v3526 = vadd.f32 %v3505, %v3524
    %3527 = vmatpush.msra.mxu0 0.0
    %3528 = vmatpush.msra.mxu0 0.0
    %3529 = vmatpush.msra.mxu0 0.0
    %3530 = vmatpush.msra.mxu0 0.0
    %3531 = vmatpush.msra.mxu0 0.0
    %3532 = vmatpush.msra.mxu0 0.0
    %3533 = vmatpush.msra.mxu0 0.0
    %3534 = vmatpush.msra.mxu0 0.0
    %3535 = vmatpush.msra.mxu0 0.0
    %3536 = vmatpush.msra.mxu0 0.0
    %3537 = vmatpush.msra.mxu0 0.0
    %3538 = vmatpush.msra.mxu0 0.0
    %3539 = vmatpush.msra.mxu0 0.0
    %3540 = vmatpush.msra.mxu0 0.0
    %3541 = vmatpush.msra.mxu0 %v3502
    %3542 = vmatpush.msra.mxu0 %v3501
    %3543 = vmatmul.f32.gmra.mxu0 %v824
    %v3544 = vpop.f32.mrf.mxu0
    %v3545 = vadd.f32 0.0, %v3544
    %3546 = vdwg.mxu0
    %v3547 = vadd.f32 %v3526, %v3545
    %v3548 = vtanh.pop %v3547
    %v3549 = vmul.f32 %v759, %v3548
    %v3550 = vadd.f32 %v3549, %v760
    %v3551 = vmul.f32 %v3550, 0.0
    %3553 = vrot.lane.b32.xlu0 %v3550, 80
    %v3554 = vpop.permute.xlu0 %3553
    %v3556 = vmul.f32 %v3550, %v3554
    %3558 = vrot.lane.b32.xlu0 %v3556, 16
    %v3559 = vpop.permute.xlu0 %3558
    %v3561 = vadd.f32 %v3551, %v3559
    %v3562 = vtanh.pop %v3561
    %3564 = vrot.lane.b32.xlu0 %v3562, 16
    %v3565 = vpop.permute.xlu0 %3564
    %v3567 = vmul.f32 %v3550, %v3565
    %v3568 = vld [vmem:[#allocation3 + $0x2] sm:$0x3]
    %v3569 = vld [vmem:[#allocation3 + $0x1c] sm:$0x3]
    %v3570 = vsel %vm820, %v3568, %v3569
    %3572 = vrot.lane.b32.xlu0 %v3567, 96
    %v3573 = vpop.permute.xlu0 %3572
    %v3574 = vsel %vm822, %v3573, 0
    %3576 = vmatpush.msra.mxu0 0.0
    %3577 = vmatpush.msra.mxu0 0.0
    %3578 = vmatpush.msra.mxu0 0.0
    %3579 = vmatpush.msra.mxu0 0.0
    %3580 = vmatpush.msra.mxu0 0.0
    %3581 = vmatpush.msra.mxu0 0.0
    %3582 = vmatpush.msra.mxu0 0.0
    %3583 = vmatpush.msra.mxu0 0.0
    %3584 = vmatpush.msra.mxu0 0.0
    %3585 = vmatpush.msra.mxu0 0.0
    %3586 = vmatpush.msra.mxu0 0.0
    %3587 = vmatpush.msra.mxu0 0.0
    %3588 = vmatpush.msra.mxu0 0.0
    %3589 = vmatpush.msra.mxu0 0.0
    %3590 = vmatpush.msra.mxu0 %v3499
    %3591 = vmatpush.msra.mxu0 %v3498
    %3592 = vmatmul.f32.gmra.mxu0 %v3574
    %v3593 = vpop.f32.mrf.mxu0
    %v3594 = vadd.f32 0.0, %v3593
    %3595 = vdwg.mxu0
    %v3596 = vadd.f32 %v3570, %v3594
    %3597 = vrot.lane.b32.xlu0 %v3567, 32
    %v3598 = vpop.permute.xlu0 %3597
    %v3599 = vsel %vm822, %v3598, 0
    %3601 = vmatpush.msra.mxu0 0.0
    %3602 = vmatpush.msra.mxu0 0.0
    %3603 = vmatpush.msra.mxu0 0.0
    %3604 = vmatpush.msra.mxu0 0.0
    %3605 = vmatpush.msra.mxu0 0.0
    %3606 = vmatpush.msra.mxu0 0.0
    %3607 = vmatpush.msra.mxu0 0.0
    %3608 = vmatpush.msra.mxu0 0.0
    %3609 = vmatpush.msra.mxu0 0.0
    %3610 = vmatpush.msra.mxu0 0.0
    %3611 = vmatpush.msra.mxu0 0.0
    %3612 = vmatpush.msra.mxu0 0.0
    %3613 = vmatpush.msra.mxu0 0.0
    %3614 = vmatpush.msra.mxu0 0.0
    %3615 = vmatpush.msra.mxu0 %v3502
    %3616 = vmatpush.msra.mxu0 %v3501
    %3617 = vmatmul.f32.gmra.mxu0 %v3599
    %v3618 = vpop.f32.mrf.mxu0
    %v3619 = vadd.f32 0.0, %v3618
    %3620 = vdwg.mxu0
    %v3621 = vadd.f32 %v3596, %v3619
    %v3622 = vtanh.pop %v3621
    %v3623 = vmul.f32 %v759, %v3622
    %v3624 = vadd.f32 %v3623, %v760
    %v3625 = vmul.f32 %v3624, %v3561
    %3627 = vrot.lane.b32.xlu0 %v3624, 80
    %v3628 = vpop.permute.xlu0 %3627
    %v3630 = vmul.f32 %v3624, %v3628
    %3632 = vrot.lane.b32.xlu0 %v3630, 16
    %v3633 = vpop.permute.xlu0 %3632
    %v3635 = vadd.f32 %v3625, %v3633
    %v3636 = vtanh.pop %v3635
    %3638 = vrot.lane.b32.xlu0 %v3636, 16
    %v3639 = vpop.permute.xlu0 %3638
    %v3641 = vmul.f32 %v3624, %v3639
    %v3642 = vld [vmem:[#allocation3 + $0x4] sm:$0x3]
    %v3643 = vld [vmem:[#allocation3 + $0x1a] sm:$0x3]
    %v3644 = vsel %vm820, %v3642, %v3643
    %3646 = vrot.lane.b32.xlu0 %v3641, 96
    %v3647 = vpop.permute.xlu0 %3646
    %v3648 = vsel %vm822, %v3647, 0
    %3650 = vmatpush.msra.mxu0 0.0
    %3651 = vmatpush.msra.mxu0 0.0
    %3652 = vmatpush.msra.mxu0 0.0
    %3653 = vmatpush.msra.mxu0 0.0
    %3654 = vmatpush.msra.mxu0 0.0
    %3655 = vmatpush.msra.mxu0 0.0
    %3656 = vmatpush.msra.mxu0 0.0
    %3657 = vmatpush.msra.mxu0 0.0
    %3658 = vmatpush.msra.mxu0 0.0
    %3659 = vmatpush.msra.mxu0 0.0
    %3660 = vmatpush.msra.mxu0 0.0
    %3661 = vmatpush.msra.mxu0 0.0
    %3662 = vmatpush.msra.mxu0 0.0
    %3663 = vmatpush.msra.mxu0 0.0
    %3664 = vmatpush.msra.mxu0 %v3499
    %3665 = vmatpush.msra.mxu0 %v3498
    %3666 = vmatmul.f32.gmra.mxu0 %v3648
    %v3667 = vpop.f32.mrf.mxu0
    %v3668 = vadd.f32 0.0, %v3667
    %3669 = vdwg.mxu0
    %v3670 = vadd.f32 %v3644, %v3668
    %3671 = vrot.lane.b32.xlu0 %v3641, 32
    %v3672 = vpop.permute.xlu0 %3671
    %v3673 = vsel %vm822, %v3672, 0
    %3675 = vmatpush.msra.mxu0 0.0
    %3676 = vmatpush.msra.mxu0 0.0
    %3677 = vmatpush.msra.mxu0 0.0
    %3678 = vmatpush.msra.mxu0 0.0
    %3679 = vmatpush.msra.mxu0 0.0
    %3680 = vmatpush.msra.mxu0 0.0
    %3681 = vmatpush.msra.mxu0 0.0
    %3682 = vmatpush.msra.mxu0 0.0
    %3683 = vmatpush.msra.mxu0 0.0
    %3684 = vmatpush.msra.mxu0 0.0
    %3685 = vmatpush.msra.mxu0 0.0
    %3686 = vmatpush.msra.mxu0 0.0
    %3687 = vmatpush.msra.mxu0 0.0
    %3688 = vmatpush.msra.mxu0 0.0
    %3689 = vmatpush.msra.mxu0 %v3502
    %3690 = vmatpush.msra.mxu0 %v3501
    %3691 = vmatmul.f32.gmra.mxu0 %v3673
    %v3692 = vpop.f32.mrf.mxu0
    %v3693 = vadd.f32 0.0, %v3692
    %3694 = vdwg.mxu0
    %v3695 = vadd.f32 %v3670, %v3693
    %v3696 = vtanh.pop %v3695
    %v3697 = vmul.f32 %v759, %v3696
    %v3698 = vadd.f32 %v3697, %v760
    %v3699 = vmul.f32 %v3698, %v3635
    %3701 = vrot.lane.b32.xlu0 %v3698, 80
    %v3702 = vpop.permute.xlu0 %3701
    %v3704 = vmul.f32 %v3698, %v3702
    %3706 = vrot.lane.b32.xlu0 %v3704, 16
    %v3707 = vpop.permute.xlu0 %3706
    %v3709 = vadd.f32 %v3699, %v3707
    %v3710 = vtanh.pop %v3709
    %3712 = vrot.lane.b32.xlu0 %v3710, 16
    %v3713 = vpop.permute.xlu0 %3712
    %v3715 = vmul.f32 %v3698, %v3713
    %v3716 = vld [vmem:[#allocation3 + $0x6] sm:$0x3]
    %v3717 = vld [vmem:[#allocation3 + $0x18] sm:$0x3]
    %v3718 = vsel %vm820, %v3716, %v3717
    %3720 = vrot.lane.b32.xlu0 %v3715, 96
    %v3721 = vpop.permute.xlu0 %3720
    %v3722 = vsel %vm822, %v3721, 0
    %3724 = vmatpush.msra.mxu0 0.0
    %3725 = vmatpush.msra.mxu0 0.0
    %3726 = vmatpush.msra.mxu0 0.0
    %3727 = vmatpush.msra.mxu0 0.0
    %3728 = vmatpush.msra.mxu0 0.0
    %3729 = vmatpush.msra.mxu0 0.0
    %3730 = vmatpush.msra.mxu0 0.0
    %3731 = vmatpush.msra.mxu0 0.0
    %3732 = vmatpush.msra.mxu0 0.0
    %3733 = vmatpush.msra.mxu0 0.0
    %3734 = vmatpush.msra.mxu0 0.0
    %3735 = vmatpush.msra.mxu0 0.0
    %3736 = vmatpush.msra.mxu0 0.0
    %3737 = vmatpush.msra.mxu0 0.0
    %3738 = vmatpush.msra.mxu0 %v3499
    %3739 = vmatpush.msra.mxu0 %v3498
    %3740 = vmatmul.f32.gmra.mxu0 %v3722
    %v3741 = vpop.f32.mrf.mxu0
    %v3742 = vadd.f32 0.0, %v3741
    %3743 = vdwg.mxu0
    %v3744 = vadd.f32 %v3718, %v3742
    %3745 = vrot.lane.b32.xlu0 %v3715, 32
    %v3746 = vpop.permute.xlu0 %3745
    %v3747 = vsel %vm822, %v3746, 0
    %3749 = vmatpush.msra.mxu0 0.0
    %3750 = vmatpush.msra.mxu0 0.0
    %3751 = vmatpush.msra.mxu0 0.0
    %3752 = vmatpush.msra.mxu0 0.0
    %3753 = vmatpush.msra.mxu0 0.0
    %3754 = vmatpush.msra.mxu0 0.0
    %3755 = vmatpush.msra.mxu0 0.0
    %3756 = vmatpush.msra.mxu0 0.0
    %3757 = vmatpush.msra.mxu0 0.0
    %3758 = vmatpush.msra.mxu0 0.0
    %3759 = vmatpush.msra.mxu0 0.0
    %3760 = vmatpush.msra.mxu0 0.0
    %3761 = vmatpush.msra.mxu0 0.0
    %3762 = vmatpush.msra.mxu0 0.0
    %3763 = vmatpush.msra.mxu0 %v3502
    %3764 = vmatpush.msra.mxu0 %v3501
    %3765 = vmatmul.f32.gmra.mxu0 %v3747
    %v3766 = vpop.f32.mrf.mxu0
    %v3767 = vadd.f32 0.0, %v3766
    %3768 = vdwg.mxu0
    %v3769 = vadd.f32 %v3744, %v3767
    %v3770 = vtanh.pop %v3769
    %v3771 = vmul.f32 %v759, %v3770
    %v3772 = vadd.f32 %v3771, %v760
    %v3773 = vmul.f32 %v3772, %v3709
    %3775 = vrot.lane.b32.xlu0 %v3772, 80
    %v3776 = vpop.permute.xlu0 %3775
    %v3778 = vmul.f32 %v3772, %v3776
    %3780 = vrot.lane.b32.xlu0 %v3778, 16
    %v3781 = vpop.permute.xlu0 %3780
    %v3783 = vadd.f32 %v3773, %v3781
    %v3784 = vtanh.pop %v3783
    %3786 = vrot.lane.b32.xlu0 %v3784, 16
    %v3787 = vpop.permute.xlu0 %3786
    %v3789 = vmul.f32 %v3772, %v3787
    %v3790 = vld [vmem:[#allocation3 + $0x8] sm:$0x3]
    %v3791 = vld [vmem:[#allocation3 + $0x16] sm:$0x3]
    %v3792 = vsel %vm820, %v3790, %v3791
    %3794 = vrot.lane.b32.xlu0 %v3789, 96
    %v3795 = vpop.permute.xlu0 %3794
    %v3796 = vsel %vm822, %v3795, 0
    %3798 = vmatpush.msra.mxu0 0.0
    %3799 = vmatpush.msra.mxu0 0.0
    %3800 = vmatpush.msra.mxu0 0.0
    %3801 = vmatpush.msra.mxu0 0.0
    %3802 = vmatpush.msra.mxu0 0.0
    %3803 = vmatpush.msra.mxu0 0.0
    %3804 = vmatpush.msra.mxu0 0.0
    %3805 = vmatpush.msra.mxu0 0.0
    %3806 = vmatpush.msra.mxu0 0.0
    %3807 = vmatpush.msra.mxu0 0.0
    %3808 = vmatpush.msra.mxu0 0.0
    %3809 = vmatpush.msra.mxu0 0.0
    %3810 = vmatpush.msra.mxu0 0.0
    %3811 = vmatpush.msra.mxu0 0.0
    %3812 = vmatpush.msra.mxu0 %v3499
    %3813 = vmatpush.msra.mxu0 %v3498
    %3814 = vmatmul.f32.gmra.mxu0 %v3796
    %v3815 = vpop.f32.mrf.mxu0
    %v3816 = vadd.f32 0.0, %v3815
    %3817 = vdwg.mxu0
    %v3818 = vadd.f32 %v3792, %v3816
    %3819 = vrot.lane.b32.xlu0 %v3789, 32
    %v3820 = vpop.permute.xlu0 %3819
    %v3821 = vsel %vm822, %v3820, 0
    %3823 = vmatpush.msra.mxu0 0.0
    %3824 = vmatpush.msra.mxu0 0.0
    %3825 = vmatpush.msra.mxu0 0.0
    %3826 = vmatpush.msra.mxu0 0.0
    %3827 = vmatpush.msra.mxu0 0.0
    %3828 = vmatpush.msra.mxu0 0.0
    %3829 = vmatpush.msra.mxu0 0.0
    %3830 = vmatpush.msra.mxu0 0.0
    %3831 = vmatpush.msra.mxu0 0.0
    %3832 = vmatpush.msra.mxu0 0.0
    %3833 = vmatpush.msra.mxu0 0.0
    %3834 = vmatpush.msra.mxu0 0.0
    %3835 = vmatpush.msra.mxu0 0.0
    %3836 = vmatpush.msra.mxu0 0.0
    %3837 = vmatpush.msra.mxu0 %v3502
    %3838 = vmatpush.msra.mxu0 %v3501
    %3839 = vmatmul.f32.gmra.mxu0 %v3821
    %v3840 = vpop.f32.mrf.mxu0
    %v3841 = vadd.f32 0.0, %v3840
    %3842 = vdwg.mxu0
    %v3843 = vadd.f32 %v3818, %v3841
    %v3844 = vtanh.pop %v3843
    %v3845 = vmul.f32 %v759, %v3844
    %v3846 = vadd.f32 %v3845, %v760
    %v3847 = vmul.f32 %v3846, %v3783
    %3849 = vrot.lane.b32.xlu0 %v3846, 80
    %v3850 = vpop.permute.xlu0 %3849
    %v3852 = vmul.f32 %v3846, %v3850
    %3854 = vrot.lane.b32.xlu0 %v3852, 16
    %v3855 = vpop.permute.xlu0 %3854
    %v3857 = vadd.f32 %v3847, %v3855
    %v3858 = vtanh.pop %v3857
    %3860 = vrot.lane.b32.xlu0 %v3858, 16
    %v3861 = vpop.permute.xlu0 %3860
    %v3863 = vmul.f32 %v3846, %v3861
    %v3864 = vld [vmem:[#allocation3 + $0xa] sm:$0x3]
    %v3865 = vld [vmem:[#allocation3 + $0x14] sm:$0x3]
    %v3866 = vsel %vm820, %v3864, %v3865
    %3868 = vrot.lane.b32.xlu0 %v3863, 96
    %v3869 = vpop.permute.xlu0 %3868
    %v3870 = vsel %vm822, %v3869, 0
    %3872 = vmatpush.msra.mxu0 0.0
    %3873 = vmatpush.msra.mxu0 0.0
    %3874 = vmatpush.msra.mxu0 0.0
    %3875 = vmatpush.msra.mxu0 0.0
    %3876 = vmatpush.msra.mxu0 0.0
    %3877 = vmatpush.msra.mxu0 0.0
    %3878 = vmatpush.msra.mxu0 0.0
    %3879 = vmatpush.msra.mxu0 0.0
    %3880 = vmatpush.msra.mxu0 0.0
    %3881 = vmatpush.msra.mxu0 0.0
    %3882 = vmatpush.msra.mxu0 0.0
    %3883 = vmatpush.msra.mxu0 0.0
    %3884 = vmatpush.msra.mxu0 0.0
    %3885 = vmatpush.msra.mxu0 0.0
    %3886 = vmatpush.msra.mxu0 %v3499
    %3887 = vmatpush.msra.mxu0 %v3498
    %3888 = vmatmul.f32.gmra.mxu0 %v3870
    %v3889 = vpop.f32.mrf.mxu0
    %v3890 = vadd.f32 0.0, %v3889
    %3891 = vdwg.mxu0
    %v3892 = vadd.f32 %v3866, %v3890
    %3893 = vrot.lane.b32.xlu0 %v3863, 32
    %v3894 = vpop.permute.xlu0 %3893
    %v3895 = vsel %vm822, %v3894, 0
    %3897 = vmatpush.msra.mxu0 0.0
    %3898 = vmatpush.msra.mxu0 0.0
    %3899 = vmatpush.msra.mxu0 0.0
    %3900 = vmatpush.msra.mxu0 0.0
    %3901 = vmatpush.msra.mxu0 0.0
    %3902 = vmatpush.msra.mxu0 0.0
    %3903 = vmatpush.msra.mxu0 0.0
    %3904 = vmatpush.msra.mxu0 0.0
    %3905 = vmatpush.msra.mxu0 0.0
    %3906 = vmatpush.msra.mxu0 0.0
    %3907 = vmatpush.msra.mxu0 0.0
    %3908 = vmatpush.msra.mxu0 0.0
    %3909 = vmatpush.msra.mxu0 0.0
    %3910 = vmatpush.msra.mxu0 0.0
    %3911 = vmatpush.msra.mxu0 %v3502
    %3912 = vmatpush.msra.mxu0 %v3501
    %3913 = vmatmul.f32.gmra.mxu0 %v3895
    %v3914 = vpop.f32.mrf.mxu0
    %v3915 = vadd.f32 0.0, %v3914
    %3916 = vdwg.mxu0
    %v3917 = vadd.f32 %v3892, %v3915
    %v3918 = vtanh.pop %v3917
    %v3919 = vmul.f32 %v759, %v3918
    %v3920 = vadd.f32 %v3919, %v760
    %v3921 = vmul.f32 %v3920, %v3857
    %3923 = vrot.lane.b32.xlu0 %v3920, 80
    %v3924 = vpop.permute.xlu0 %3923
    %v3926 = vmul.f32 %v3920, %v3924
    %3928 = vrot.lane.b32.xlu0 %v3926, 16
    %v3929 = vpop.permute.xlu0 %3928
    %v3931 = vadd.f32 %v3921, %v3929
    %v3932 = vtanh.pop %v3931
    %3934 = vrot.lane.b32.xlu0 %v3932, 16
    %v3935 = vpop.permute.xlu0 %3934
    %v3937 = vmul.f32 %v3920, %v3935
    %v3938 = vld [vmem:[#allocation3 + $0xc] sm:$0x3]
    %v3939 = vld [vmem:[#allocation3 + $0x12] sm:$0x3]
    %v3940 = vsel %vm820, %v3938, %v3939
    %3942 = vrot.lane.b32.xlu0 %v3937, 96
    %v3943 = vpop.permute.xlu0 %3942
    %v3944 = vsel %vm822, %v3943, 0
    %3946 = vmatpush.msra.mxu0 0.0
    %3947 = vmatpush.msra.mxu0 0.0
    %3948 = vmatpush.msra.mxu0 0.0
    %3949 = vmatpush.msra.mxu0 0.0
    %3950 = vmatpush.msra.mxu0 0.0
    %3951 = vmatpush.msra.mxu0 0.0
    %3952 = vmatpush.msra.mxu0 0.0
    %3953 = vmatpush.msra.mxu0 0.0
    %3954 = vmatpush.msra.mxu0 0.0
    %3955 = vmatpush.msra.mxu0 0.0
    %3956 = vmatpush.msra.mxu0 0.0
    %3957 = vmatpush.msra.mxu0 0.0
    %3958 = vmatpush.msra.mxu0 0.0
    %3959 = vmatpush.msra.mxu0 0.0
    %3960 = vmatpush.msra.mxu0 %v3499
    %3961 = vmatpush.msra.mxu0 %v3498
    %3962 = vmatmul.f32.gmra.mxu0 %v3944
    %v3963 = vpop.f32.mrf.mxu0
    %v3964 = vadd.f32 0.0, %v3963
    %3965 = vdwg.mxu0
    %v3966 = vadd.f32 %v3940, %v3964
    %3967 = vrot.lane.b32.xlu0 %v3937, 32
    %v3968 = vpop.permute.xlu0 %3967
    %v3969 = vsel %vm822, %v3968, 0
    %3971 = vmatpush.msra.mxu0 0.0
    %3972 = vmatpush.msra.mxu0 0.0
    %3973 = vmatpush.msra.mxu0 0.0
    %3974 = vmatpush.msra.mxu0 0.0
    %3975 = vmatpush.msra.mxu0 0.0
    %3976 = vmatpush.msra.mxu0 0.0
    %3977 = vmatpush.msra.mxu0 0.0
    %3978 = vmatpush.msra.mxu0 0.0
    %3979 = vmatpush.msra.mxu0 0.0
    %3980 = vmatpush.msra.mxu0 0.0
    %3981 = vmatpush.msra.mxu0 0.0
    %3982 = vmatpush.msra.mxu0 0.0
    %3983 = vmatpush.msra.mxu0 0.0
    %3984 = vmatpush.msra.mxu0 0.0
    %3985 = vmatpush.msra.mxu0 %v3502
    %3986 = vmatpush.msra.mxu0 %v3501
    %3987 = vmatmul.f32.gmra.mxu0 %v3969
    %v3988 = vpop.f32.mrf.mxu0
    %v3989 = vadd.f32 0.0, %v3988
    %3990 = vdwg.mxu0
    %v3991 = vadd.f32 %v3966, %v3989
    %v3992 = vtanh.pop %v3991
    %v3993 = vmul.f32 %v759, %v3992
    %v3994 = vadd.f32 %v3993, %v760
    %v3995 = vmul.f32 %v3994, %v3931
    %3997 = vrot.lane.b32.xlu0 %v3994, 80
    %v3998 = vpop.permute.xlu0 %3997
    %v4000 = vmul.f32 %v3994, %v3998
    %4002 = vrot.lane.b32.xlu0 %v4000, 16
    %v4003 = vpop.permute.xlu0 %4002
    %v4005 = vadd.f32 %v3995, %v4003
    %v4006 = vtanh.pop %v4005
    %4008 = vrot.lane.b32.xlu0 %v4006, 16
    %v4009 = vpop.permute.xlu0 %4008
    %v4011 = vmul.f32 %v3994, %v4009
    %v4012 = vld [vmem:[#allocation3 + $0xe] sm:$0x3]
    %v4013 = vld [vmem:[#allocation3 + $0x10] sm:$0x3]
    %v4014 = vsel %vm820, %v4012, %v4013
    %4016 = vrot.lane.b32.xlu0 %v4011, 96
    %v4017 = vpop.permute.xlu0 %4016
    %v4018 = vsel %vm822, %v4017, 0
    %4020 = vmatpush.msra.mxu0 0.0
    %4021 = vmatpush.msra.mxu0 0.0
    %4022 = vmatpush.msra.mxu0 0.0
    %4023 = vmatpush.msra.mxu0 0.0
    %4024 = vmatpush.msra.mxu0 0.0
    %4025 = vmatpush.msra.mxu0 0.0
    %4026 = vmatpush.msra.mxu0 0.0
    %4027 = vmatpush.msra.mxu0 0.0
    %4028 = vmatpush.msra.mxu0 0.0
    %4029 = vmatpush.msra.mxu0 0.0
    %4030 = vmatpush.msra.mxu0 0.0
    %4031 = vmatpush.msra.mxu0 0.0
    %4032 = vmatpush.msra.mxu0 0.0
    %4033 = vmatpush.msra.mxu0 0.0
    %4034 = vmatpush.msra.mxu0 %v3499
    %4035 = vmatpush.msra.mxu0 %v3498
    %4036 = vmatmul.f32.gmra.mxu0 %v4018
    %v4037 = vpop.f32.mrf.mxu0
    %v4038 = vadd.f32 0.0, %v4037
    %4039 = vdwg.mxu0
    %v4040 = vadd.f32 %v4014, %v4038
    %4041 = vrot.lane.b32.xlu0 %v4011, 32
    %v4042 = vpop.permute.xlu0 %4041
    %v4043 = vsel %vm822, %v4042, 0
    %4045 = vmatpush.msra.mxu0 0.0
    %4046 = vmatpush.msra.mxu0 0.0
    %4047 = vmatpush.msra.mxu0 0.0
    %4048 = vmatpush.msra.mxu0 0.0
    %4049 = vmatpush.msra.mxu0 0.0
    %4050 = vmatpush.msra.mxu0 0.0
    %4051 = vmatpush.msra.mxu0 0.0
    %4052 = vmatpush.msra.mxu0 0.0
    %4053 = vmatpush.msra.mxu0 0.0
    %4054 = vmatpush.msra.mxu0 0.0
    %4055 = vmatpush.msra.mxu0 0.0
    %4056 = vmatpush.msra.mxu0 0.0
    %4057 = vmatpush.msra.mxu0 0.0
    %4058 = vmatpush.msra.mxu0 0.0
    %4059 = vmatpush.msra.mxu0 %v3502
    %4060 = vmatpush.msra.mxu0 %v3501
    %4061 = vmatmul.f32.gmra.mxu0 %v4043
    %v4062 = vpop.f32.mrf.mxu0
    %v4063 = vadd.f32 0.0, %v4062
    %4064 = vdwg.mxu0
    %v4065 = vadd.f32 %v4040, %v4063
    %v4066 = vtanh.pop %v4065
    %v4067 = vmul.f32 %v759, %v4066
    %v4068 = vadd.f32 %v4067, %v760
    %v4069 = vmul.f32 %v4068, %v4005
    %4071 = vrot.lane.b32.xlu0 %v4068, 80
    %v4072 = vpop.permute.xlu0 %4071
    %v4074 = vmul.f32 %v4068, %v4072
    %4076 = vrot.lane.b32.xlu0 %v4074, 16
    %v4077 = vpop.permute.xlu0 %4076
    %v4079 = vadd.f32 %v4069, %v4077
    %v4080 = vtanh.pop %v4079
    %4082 = vrot.lane.b32.xlu0 %v4080, 16
    %v4083 = vpop.permute.xlu0 %4082
    %v4085 = vmul.f32 %v4068, %v4083
    %v4086 = vsel %vm820, %v4013, %v4012
    %4088 = vrot.lane.b32.xlu0 %v4085, 96
    %v4089 = vpop.permute.xlu0 %4088
    %v4090 = vsel %vm822, %v4089, 0
    %4092 = vmatpush.msra.mxu0 0.0
    %4093 = vmatpush.msra.mxu0 0.0
    %4094 = vmatpush.msra.mxu0 0.0
    %4095 = vmatpush.msra.mxu0 0.0
    %4096 = vmatpush.msra.mxu0 0.0
    %4097 = vmatpush.msra.mxu0 0.0
    %4098 = vmatpush.msra.mxu0 0.0
    %4099 = vmatpush.msra.mxu0 0.0
    %4100 = vmatpush.msra.mxu0 0.0
    %4101 = vmatpush.msra.mxu0 0.0
    %4102 = vmatpush.msra.mxu0 0.0
    %4103 = vmatpush.msra.mxu0 0.0
    %4104 = vmatpush.msra.mxu0 0.0
    %4105 = vmatpush.msra.mxu0 0.0
    %4106 = vmatpush.msra.mxu0 %v3499
    %4107 = vmatpush.msra.mxu0 %v3498
    %4108 = vmatmul.f32.gmra.mxu0 %v4090
    %v4109 = vpop.f32.mrf.mxu0
    %v4110 = vadd.f32 0.0, %v4109
    %4111 = vdwg.mxu0
    %v4112 = vadd.f32 %v4086, %v4110
    %4113 = vrot.lane.b32.xlu0 %v4085, 32
    %v4114 = vpop.permute.xlu0 %4113
    %v4115 = vsel %vm822, %v4114, 0
    %4117 = vmatpush.msra.mxu0 0.0
    %4118 = vmatpush.msra.mxu0 0.0
    %4119 = vmatpush.msra.mxu0 0.0
    %4120 = vmatpush.msra.mxu0 0.0
    %4121 = vmatpush.msra.mxu0 0.0
    %4122 = vmatpush.msra.mxu0 0.0
    %4123 = vmatpush.msra.mxu0 0.0
    %4124 = vmatpush.msra.mxu0 0.0
    %4125 = vmatpush.msra.mxu0 0.0
    %4126 = vmatpush.msra.mxu0 0.0
    %4127 = vmatpush.msra.mxu0 0.0
    %4128 = vmatpush.msra.mxu0 0.0
    %4129 = vmatpush.msra.mxu0 0.0
    %4130 = vmatpush.msra.mxu0 0.0
    %4131 = vmatpush.msra.mxu0 %v3502
    %4132 = vmatpush.msra.mxu0 %v3501
    %4133 = vmatmul.f32.gmra.mxu0 %v4115
    %v4134 = vpop.f32.mrf.mxu0
    %v4135 = vadd.f32 0.0, %v4134
    %4136 = vdwg.mxu0
    %v4137 = vadd.f32 %v4112, %v4135
    %v4138 = vtanh.pop %v4137
    %v4139 = vmul.f32 %v759, %v4138
    %v4140 = vadd.f32 %v4139, %v760
    %v4141 = vmul.f32 %v4140, %v4079
    %4143 = vrot.lane.b32.xlu0 %v4140, 80
    %v4144 = vpop.permute.xlu0 %4143
    %v4146 = vmul.f32 %v4140, %v4144
    %4148 = vrot.lane.b32.xlu0 %v4146, 16
    %v4149 = vpop.permute.xlu0 %4148
    %v4151 = vadd.f32 %v4141, %v4149
    %v4152 = vtanh.pop %v4151
    %4154 = vrot.lane.b32.xlu0 %v4152, 16
    %v4155 = vpop.permute.xlu0 %4154
    %v4157 = vmul.f32 %v4140, %v4155
    %v4158 = vsel %vm820, %v3939, %v3938
    %4160 = vrot.lane.b32.xlu0 %v4157, 96
    %v4161 = vpop.permute.xlu0 %4160
    %v4162 = vsel %vm822, %v4161, 0
    %4164 = vmatpush.msra.mxu0 0.0
    %4165 = vmatpush.msra.mxu0 0.0
    %4166 = vmatpush.msra.mxu0 0.0
    %4167 = vmatpush.msra.mxu0 0.0
    %4168 = vmatpush.msra.mxu0 0.0
    %4169 = vmatpush.msra.mxu0 0.0
    %4170 = vmatpush.msra.mxu0 0.0
    %4171 = vmatpush.msra.mxu0 0.0
    %4172 = vmatpush.msra.mxu0 0.0
    %4173 = vmatpush.msra.mxu0 0.0
    %4174 = vmatpush.msra.mxu0 0.0
    %4175 = vmatpush.msra.mxu0 0.0
    %4176 = vmatpush.msra.mxu0 0.0
    %4177 = vmatpush.msra.mxu0 0.0
    %4178 = vmatpush.msra.mxu0 %v3499
    %4179 = vmatpush.msra.mxu0 %v3498
    %4180 = vmatmul.f32.gmra.mxu0 %v4162
    %v4181 = vpop.f32.mrf.mxu0
    %v4182 = vadd.f32 0.0, %v4181
    %4183 = vdwg.mxu0
    %v4184 = vadd.f32 %v4158, %v4182
    %4185 = vrot.lane.b32.xlu0 %v4157, 32
    %v4186 = vpop.permute.xlu0 %4185
    %v4187 = vsel %vm822, %v4186, 0
    %4189 = vmatpush.msra.mxu0 0.0
    %4190 = vmatpush.msra.mxu0 0.0
    %4191 = vmatpush.msra.mxu0 0.0
    %4192 = vmatpush.msra.mxu0 0.0
    %4193 = vmatpush.msra.mxu0 0.0
    %4194 = vmatpush.msra.mxu0 0.0
    %4195 = vmatpush.msra.mxu0 0.0
    %4196 = vmatpush.msra.mxu0 0.0
    %4197 = vmatpush.msra.mxu0 0.0
    %4198 = vmatpush.msra.mxu0 0.0
    %4199 = vmatpush.msra.mxu0 0.0
    %4200 = vmatpush.msra.mxu0 0.0
    %4201 = vmatpush.msra.mxu0 0.0
    %4202 = vmatpush.msra.mxu0 0.0
    %4203 = vmatpush.msra.mxu0 %v3502
    %4204 = vmatpush.msra.mxu0 %v3501
    %4205 = vmatmul.f32.gmra.mxu0 %v4187
    %v4206 = vpop.f32.mrf.mxu0
    %v4207 = vadd.f32 0.0, %v4206
    %4208 = vdwg.mxu0
    %v4209 = vadd.f32 %v4184, %v4207
    %v4210 = vtanh.pop %v4209
    %v4211 = vmul.f32 %v759, %v4210
    %v4212 = vadd.f32 %v4211, %v760
    %v4213 = vmul.f32 %v4212, %v4151
    %4215 = vrot.lane.b32.xlu0 %v4212, 80
    %v4216 = vpop.permute.xlu0 %4215
    %v4218 = vmul.f32 %v4212, %v4216
    %4220 = vrot.lane.b32.xlu0 %v4218, 16
    %v4221 = vpop.permute.xlu0 %4220
    %v4223 = vadd.f32 %v4213, %v4221
    %v4224 = vtanh.pop %v4223
    %4226 = vrot.lane.b32.xlu0 %v4224, 16
    %v4227 = vpop.permute.xlu0 %4226
    %v4229 = vmul.f32 %v4212, %v4227
    %v4230 = vsel %vm820, %v3865, %v3864
    %4232 = vrot.lane.b32.xlu0 %v4229, 96
    %v4233 = vpop.permute.xlu0 %4232
    %v4234 = vsel %vm822, %v4233, 0
    %4236 = vmatpush.msra.mxu0 0.0
    %4237 = vmatpush.msra.mxu0 0.0
    %4238 = vmatpush.msra.mxu0 0.0
    %4239 = vmatpush.msra.mxu0 0.0
    %4240 = vmatpush.msra.mxu0 0.0
    %4241 = vmatpush.msra.mxu0 0.0
    %4242 = vmatpush.msra.mxu0 0.0
    %4243 = vmatpush.msra.mxu0 0.0
    %4244 = vmatpush.msra.mxu0 0.0
    %4245 = vmatpush.msra.mxu0 0.0
    %4246 = vmatpush.msra.mxu0 0.0
    %4247 = vmatpush.msra.mxu0 0.0
    %4248 = vmatpush.msra.mxu0 0.0
    %4249 = vmatpush.msra.mxu0 0.0
    %4250 = vmatpush.msra.mxu0 %v3499
    %4251 = vmatpush.msra.mxu0 %v3498
    %4252 = vmatmul.f32.gmra.mxu0 %v4234
    %v4253 = vpop.f32.mrf.mxu0
    %v4254 = vadd.f32 0.0, %v4253
    %4255 = vdwg.mxu0
    %v4256 = vadd.f32 %v4230, %v4254
    %4257 = vrot.lane.b32.xlu0 %v4229, 32
    %v4258 = vpop.permute.xlu0 %4257
    %v4259 = vsel %vm822, %v4258, 0
    %4261 = vmatpush.msra.mxu0 0.0
    %4262 = vmatpush.msra.mxu0 0.0
    %4263 = vmatpush.msra.mxu0 0.0
    %4264 = vmatpush.msra.mxu0 0.0
    %4265 = vmatpush.msra.mxu0 0.0
    %4266 = vmatpush.msra.mxu0 0.0
    %4267 = vmatpush.msra.mxu0 0.0
    %4268 = vmatpush.msra.mxu0 0.0
    %4269 = vmatpush.msra.mxu0 0.0
    %4270 = vmatpush.msra.mxu0 0.0
    %4271 = vmatpush.msra.mxu0 0.0
    %4272 = vmatpush.msra.mxu0 0.0
    %4273 = vmatpush.msra.mxu0 0.0
    %4274 = vmatpush.msra.mxu0 0.0
    %4275 = vmatpush.msra.mxu0 %v3502
    %4276 = vmatpush.msra.mxu0 %v3501
    %4277 = vmatmul.f32.gmra.mxu0 %v4259
    %v4278 = vpop.f32.mrf.mxu0
    %v4279 = vadd.f32 0.0, %v4278
    %4280 = vdwg.mxu0
    %v4281 = vadd.f32 %v4256, %v4279
    %v4282 = vtanh.pop %v4281
    %v4283 = vmul.f32 %v759, %v4282
    %v4284 = vadd.f32 %v4283, %v760
    %v4285 = vmul.f32 %v4284, %v4223
    %4287 = vrot.lane.b32.xlu0 %v4284, 80
    %v4288 = vpop.permute.xlu0 %4287
    %v4290 = vmul.f32 %v4284, %v4288
    %4292 = vrot.lane.b32.xlu0 %v4290, 16
    %v4293 = vpop.permute.xlu0 %4292
    %v4295 = vadd.f32 %v4285, %v4293
    %v4296 = vtanh.pop %v4295
    %4298 = vrot.lane.b32.xlu0 %v4296, 16
    %v4299 = vpop.permute.xlu0 %4298
    %v4301 = vmul.f32 %v4284, %v4299
    %v4302 = vsel %vm820, %v3791, %v3790
    %4304 = vrot.lane.b32.xlu0 %v4301, 96
    %v4305 = vpop.permute.xlu0 %4304
    %v4306 = vsel %vm822, %v4305, 0
    %4308 = vmatpush.msra.mxu0 0.0
    %4309 = vmatpush.msra.mxu0 0.0
    %4310 = vmatpush.msra.mxu0 0.0
    %4311 = vmatpush.msra.mxu0 0.0
    %4312 = vmatpush.msra.mxu0 0.0
    %4313 = vmatpush.msra.mxu0 0.0
    %4314 = vmatpush.msra.mxu0 0.0
    %4315 = vmatpush.msra.mxu0 0.0
    %4316 = vmatpush.msra.mxu0 0.0
    %4317 = vmatpush.msra.mxu0 0.0
    %4318 = vmatpush.msra.mxu0 0.0
    %4319 = vmatpush.msra.mxu0 0.0
    %4320 = vmatpush.msra.mxu0 0.0
    %4321 = vmatpush.msra.mxu0 0.0
    %4322 = vmatpush.msra.mxu0 %v3499
    %4323 = vmatpush.msra.mxu0 %v3498
    %4324 = vmatmul.f32.gmra.mxu0 %v4306
    %v4325 = vpop.f32.mrf.mxu0
    %v4326 = vadd.f32 0.0, %v4325
    %4327 = vdwg.mxu0
    %v4328 = vadd.f32 %v4302, %v4326
    %4329 = vrot.lane.b32.xlu0 %v4301, 32
    %v4330 = vpop.permute.xlu0 %4329
    %v4331 = vsel %vm822, %v4330, 0
    %4333 = vmatpush.msra.mxu0 0.0
    %4334 = vmatpush.msra.mxu0 0.0
    %4335 = vmatpush.msra.mxu0 0.0
    %4336 = vmatpush.msra.mxu0 0.0
    %4337 = vmatpush.msra.mxu0 0.0
    %4338 = vmatpush.msra.mxu0 0.0
    %4339 = vmatpush.msra.mxu0 0.0
    %4340 = vmatpush.msra.mxu0 0.0
    %4341 = vmatpush.msra.mxu0 0.0
    %4342 = vmatpush.msra.mxu0 0.0
    %4343 = vmatpush.msra.mxu0 0.0
    %4344 = vmatpush.msra.mxu0 0.0
    %4345 = vmatpush.msra.mxu0 0.0
    %4346 = vmatpush.msra.mxu0 0.0
    %4347 = vmatpush.msra.mxu0 %v3502
    %4348 = vmatpush.msra.mxu0 %v3501
    %4349 = vmatmul.f32.gmra.mxu0 %v4331
    %v4350 = vpop.f32.mrf.mxu0
    %v4351 = vadd.f32 0.0, %v4350
    %4352 = vdwg.mxu0
    %v4353 = vadd.f32 %v4328, %v4351
    %v4354 = vtanh.pop %v4353
    %v4355 = vmul.f32 %v759, %v4354
    %v4356 = vadd.f32 %v4355, %v760
    %v4357 = vmul.f32 %v4356, %v4295
    %4359 = vrot.lane.b32.xlu0 %v4356, 80
    %v4360 = vpop.permute.xlu0 %4359
    %v4362 = vmul.f32 %v4356, %v4360
    %4364 = vrot.lane.b32.xlu0 %v4362, 16
    %v4365 = vpop.permute.xlu0 %4364
    %v4367 = vadd.f32 %v4357, %v4365
    %v4368 = vtanh.pop %v4367
    %4370 = vrot.lane.b32.xlu0 %v4368, 16
    %v4371 = vpop.permute.xlu0 %4370
    %v4373 = vmul.f32 %v4356, %v4371
    %v4374 = vsel %vm820, %v3717, %v3716
    %4376 = vrot.lane.b32.xlu0 %v4373, 96
    %v4377 = vpop.permute.xlu0 %4376
    %v4378 = vsel %vm822, %v4377, 0
    %4380 = vmatpush.msra.mxu0 0.0
    %4381 = vmatpush.msra.mxu0 0.0
    %4382 = vmatpush.msra.mxu0 0.0
    %4383 = vmatpush.msra.mxu0 0.0
    %4384 = vmatpush.msra.mxu0 0.0
    %4385 = vmatpush.msra.mxu0 0.0
    %4386 = vmatpush.msra.mxu0 0.0
    %4387 = vmatpush.msra.mxu0 0.0
    %4388 = vmatpush.msra.mxu0 0.0
    %4389 = vmatpush.msra.mxu0 0.0
    %4390 = vmatpush.msra.mxu0 0.0
    %4391 = vmatpush.msra.mxu0 0.0
    %4392 = vmatpush.msra.mxu0 0.0
    %4393 = vmatpush.msra.mxu0 0.0
    %4394 = vmatpush.msra.mxu0 %v3499
    %4395 = vmatpush.msra.mxu0 %v3498
    %4396 = vmatmul.f32.gmra.mxu0 %v4378
    %v4397 = vpop.f32.mrf.mxu0
    %v4398 = vadd.f32 0.0, %v4397
    %4399 = vdwg.mxu0
    %v4400 = vadd.f32 %v4374, %v4398
    %4401 = vrot.lane.b32.xlu0 %v4373, 32
    %v4402 = vpop.permute.xlu0 %4401
    %v4403 = vsel %vm822, %v4402, 0
    %4405 = vmatpush.msra.mxu0 0.0
    %4406 = vmatpush.msra.mxu0 0.0
    %4407 = vmatpush.msra.mxu0 0.0
    %4408 = vmatpush.msra.mxu0 0.0
    %4409 = vmatpush.msra.mxu0 0.0
    %4410 = vmatpush.msra.mxu0 0.0
    %4411 = vmatpush.msra.mxu0 0.0
    %4412 = vmatpush.msra.mxu0 0.0
    %4413 = vmatpush.msra.mxu0 0.0
    %4414 = vmatpush.msra.mxu0 0.0
    %4415 = vmatpush.msra.mxu0 0.0
    %4416 = vmatpush.msra.mxu0 0.0
    %4417 = vmatpush.msra.mxu0 0.0
    %4418 = vmatpush.msra.mxu0 0.0
    %4419 = vmatpush.msra.mxu0 %v3502
    %4420 = vmatpush.msra.mxu0 %v3501
    %4421 = vmatmul.f32.gmra.mxu0 %v4403
    %v4422 = vpop.f32.mrf.mxu0
    %v4423 = vadd.f32 0.0, %v4422
    %4424 = vdwg.mxu0
    %v4425 = vadd.f32 %v4400, %v4423
    %v4426 = vtanh.pop %v4425
    %v4427 = vmul.f32 %v759, %v4426
    %v4428 = vadd.f32 %v4427, %v760
    %v4429 = vmul.f32 %v4428, %v4367
    %4431 = vrot.lane.b32.xlu0 %v4428, 80
    %v4432 = vpop.permute.xlu0 %4431
    %v4434 = vmul.f32 %v4428, %v4432
    %4436 = vrot.lane.b32.xlu0 %v4434, 16
    %v4437 = vpop.permute.xlu0 %4436
    %v4439 = vadd.f32 %v4429, %v4437
    %v4440 = vtanh.pop %v4439
    %4442 = vrot.lane.b32.xlu0 %v4440, 16
    %v4443 = vpop.permute.xlu0 %4442
    %v4445 = vmul.f32 %v4428, %v4443
    %v4446 = vsel %vm820, %v3643, %v3642
    %4448 = vrot.lane.b32.xlu0 %v4445, 96
    %v4449 = vpop.permute.xlu0 %4448
    %v4450 = vsel %vm822, %v4449, 0
    %4452 = vmatpush.msra.mxu0 0.0
    %4453 = vmatpush.msra.mxu0 0.0
    %4454 = vmatpush.msra.mxu0 0.0
    %4455 = vmatpush.msra.mxu0 0.0
    %4456 = vmatpush.msra.mxu0 0.0
    %4457 = vmatpush.msra.mxu0 0.0
    %4458 = vmatpush.msra.mxu0 0.0
    %4459 = vmatpush.msra.mxu0 0.0
    %4460 = vmatpush.msra.mxu0 0.0
    %4461 = vmatpush.msra.mxu0 0.0
    %4462 = vmatpush.msra.mxu0 0.0
    %4463 = vmatpush.msra.mxu0 0.0
    %4464 = vmatpush.msra.mxu0 0.0
    %4465 = vmatpush.msra.mxu0 0.0
    %4466 = vmatpush.msra.mxu0 %v3499
    %4467 = vmatpush.msra.mxu0 %v3498
    %4468 = vmatmul.f32.gmra.mxu0 %v4450
    %v4469 = vpop.f32.mrf.mxu0
    %v4470 = vadd.f32 0.0, %v4469
    %4471 = vdwg.mxu0
    %v4472 = vadd.f32 %v4446, %v4470
    %4473 = vrot.lane.b32.xlu0 %v4445, 32
    %v4474 = vpop.permute.xlu0 %4473
    %v4475 = vsel %vm822, %v4474, 0
    %4477 = vmatpush.msra.mxu0 0.0
    %4478 = vmatpush.msra.mxu0 0.0
    %4479 = vmatpush.msra.mxu0 0.0
    %4480 = vmatpush.msra.mxu0 0.0
    %4481 = vmatpush.msra.mxu0 0.0
    %4482 = vmatpush.msra.mxu0 0.0
    %4483 = vmatpush.msra.mxu0 0.0
    %4484 = vmatpush.msra.mxu0 0.0
    %4485 = vmatpush.msra.mxu0 0.0
    %4486 = vmatpush.msra.mxu0 0.0
    %4487 = vmatpush.msra.mxu0 0.0
    %4488 = vmatpush.msra.mxu0 0.0
    %4489 = vmatpush.msra.mxu0 0.0
    %4490 = vmatpush.msra.mxu0 0.0
    %4491 = vmatpush.msra.mxu0 %v3502
    %4492 = vmatpush.msra.mxu0 %v3501
    %4493 = vmatmul.f32.gmra.mxu0 %v4475
    %v4494 = vpop.f32.mrf.mxu0
    %v4495 = vadd.f32 0.0, %v4494
    %4496 = vdwg.mxu0
    %v4497 = vadd.f32 %v4472, %v4495
    %v4498 = vtanh.pop %v4497
    %v4499 = vmul.f32 %v759, %v4498
    %v4500 = vadd.f32 %v4499, %v760
    %v4501 = vmul.f32 %v4500, %v4439
    %4503 = vrot.lane.b32.xlu0 %v4500, 80
    %v4504 = vpop.permute.xlu0 %4503
    %v4506 = vmul.f32 %v4500, %v4504
    %4508 = vrot.lane.b32.xlu0 %v4506, 16
    %v4509 = vpop.permute.xlu0 %4508
    %v4511 = vadd.f32 %v4501, %v4509
    %v4512 = vtanh.pop %v4511
    %4514 = vrot.lane.b32.xlu0 %v4512, 16
    %v4515 = vpop.permute.xlu0 %4514
    %v4517 = vmul.f32 %v4500, %v4515
    %v4518 = vsel %vm820, %v3569, %v3568
    %4520 = vrot.lane.b32.xlu0 %v4517, 96
    %v4521 = vpop.permute.xlu0 %4520
    %v4522 = vsel %vm822, %v4521, 0
    %4524 = vmatpush.msra.mxu0 0.0
    %4525 = vmatpush.msra.mxu0 0.0
    %4526 = vmatpush.msra.mxu0 0.0
    %4527 = vmatpush.msra.mxu0 0.0
    %4528 = vmatpush.msra.mxu0 0.0
    %4529 = vmatpush.msra.mxu0 0.0
    %4530 = vmatpush.msra.mxu0 0.0
    %4531 = vmatpush.msra.mxu0 0.0
    %4532 = vmatpush.msra.mxu0 0.0
    %4533 = vmatpush.msra.mxu0 0.0
    %4534 = vmatpush.msra.mxu0 0.0
    %4535 = vmatpush.msra.mxu0 0.0
    %4536 = vmatpush.msra.mxu0 0.0
    %4537 = vmatpush.msra.mxu0 0.0
    %4538 = vmatpush.msra.mxu0 %v3499
    %4539 = vmatpush.msra.mxu0 %v3498
    %4540 = vmatmul.f32.gmra.mxu0 %v4522
    %v4541 = vpop.f32.mrf.mxu0
    %v4542 = vadd.f32 0.0, %v4541
    %4543 = vdwg.mxu0
    %v4544 = vadd.f32 %v4518, %v4542
    %4545 = vrot.lane.b32.xlu0 %v4517, 32
    %v4546 = vpop.permute.xlu0 %4545
    %v4547 = vsel %vm822, %v4546, 0
    %4549 = vmatpush.msra.mxu0 0.0
    %4550 = vmatpush.msra.mxu0 0.0
    %4551 = vmatpush.msra.mxu0 0.0
    %4552 = vmatpush.msra.mxu0 0.0
    %4553 = vmatpush.msra.mxu0 0.0
    %4554 = vmatpush.msra.mxu0 0.0
    %4555 = vmatpush.msra.mxu0 0.0
    %4556 = vmatpush.msra.mxu0 0.0
    %4557 = vmatpush.msra.mxu0 0.0
    %4558 = vmatpush.msra.mxu0 0.0
    %4559 = vmatpush.msra.mxu0 0.0
    %4560 = vmatpush.msra.mxu0 0.0
    %4561 = vmatpush.msra.mxu0 0.0
    %4562 = vmatpush.msra.mxu0 0.0
    %4563 = vmatpush.msra.mxu0 %v3502
    %4564 = vmatpush.msra.mxu0 %v3501
    %4565 = vmatmul.f32.gmra.mxu0 %v4547
    %v4566 = vpop.f32.mrf.mxu0
    %v4567 = vadd.f32 0.0, %v4566
    %4568 = vdwg.mxu0
    %v4569 = vadd.f32 %v4544, %v4567
    %v4570 = vtanh.pop %v4569
    %v4571 = vmul.f32 %v759, %v4570
    %v4572 = vadd.f32 %v4571, %v760
    %v4573 = vmul.f32 %v4572, %v4511
    %4575 = vrot.lane.b32.xlu0 %v4572, 80
    %v4576 = vpop.permute.xlu0 %4575
    %v4578 = vmul.f32 %v4572, %v4576
    %4580 = vrot.lane.b32.xlu0 %v4578, 16
    %v4581 = vpop.permute.xlu0 %4580
    %v4583 = vadd.f32 %v4573, %v4581
    %v4584 = vtanh.pop %v4583
    %4586 = vrot.lane.b32.xlu0 %v4584, 16
    %v4587 = vpop.permute.xlu0 %4586
    %v4589 = vmul.f32 %v4572, %v4587
    %v4590 = vsel %vm820, %v3504, %v3503
    %4592 = vrot.lane.b32.xlu0 %v4589, 96
    %v4593 = vpop.permute.xlu0 %4592
    %v4594 = vsel %vm822, %v4593, 0
    %4596 = vmatpush.msra.mxu0 0.0
    %4597 = vmatpush.msra.mxu0 0.0
    %4598 = vmatpush.msra.mxu0 0.0
    %4599 = vmatpush.msra.mxu0 0.0
    %4600 = vmatpush.msra.mxu0 0.0
    %4601 = vmatpush.msra.mxu0 0.0
    %4602 = vmatpush.msra.mxu0 0.0
    %4603 = vmatpush.msra.mxu0 0.0
    %4604 = vmatpush.msra.mxu0 0.0
    %4605 = vmatpush.msra.mxu0 0.0
    %4606 = vmatpush.msra.mxu0 0.0
    %4607 = vmatpush.msra.mxu0 0.0
    %4608 = vmatpush.msra.mxu0 0.0
    %4609 = vmatpush.msra.mxu0 0.0
    %4610 = vmatpush.msra.mxu0 %v3499
    %4611 = vmatpush.msra.mxu0 %v3498
    %4612 = vmatmul.f32.gmra.mxu0 %v4594
    %v4613 = vpop.f32.mrf.mxu0
    %v4614 = vadd.f32 0.0, %v4613
    %4615 = vdwg.mxu0
    %v4616 = vadd.f32 %v4590, %v4614
    %4617 = vrot.lane.b32.xlu0 %v4589, 32
    %v4618 = vpop.permute.xlu0 %4617
    %v4619 = vsel %vm822, %v4618, 0
    %4621 = vmatpush.msra.mxu0 0.0
    %4622 = vmatpush.msra.mxu0 0.0
    %4623 = vmatpush.msra.mxu0 0.0
    %4624 = vmatpush.msra.mxu0 0.0
    %4625 = vmatpush.msra.mxu0 0.0
    %4626 = vmatpush.msra.mxu0 0.0
    %4627 = vmatpush.msra.mxu0 0.0
    %4628 = vmatpush.msra.mxu0 0.0
    %4629 = vmatpush.msra.mxu0 0.0
    %4630 = vmatpush.msra.mxu0 0.0
    %4631 = vmatpush.msra.mxu0 0.0
    %4632 = vmatpush.msra.mxu0 0.0
    %4633 = vmatpush.msra.mxu0 0.0
    %4634 = vmatpush.msra.mxu0 0.0
    %4635 = vmatpush.msra.mxu0 %v3502
    %4636 = vmatpush.msra.mxu0 %v3501
    %4637 = vmatmul.f32.gmra.mxu0 %v4619
    %v4638 = vpop.f32.mrf.mxu0
    %v4639 = vadd.f32 0.0, %v4638
    %4640 = vdwg.mxu0
    %v4641 = vadd.f32 %v4616, %v4639
    %v4642 = vtanh.pop %v4641
    %v4643 = vmul.f32 %v759, %v4642
    %v4644 = vadd.f32 %v4643, %v760
    %v4645 = vmul.f32 %v4644, %v4583
    %4647 = vrot.lane.b32.xlu0 %v4644, 80
    %v4648 = vpop.permute.xlu0 %4647
    %v4650 = vmul.f32 %v4644, %v4648
    %4652 = vrot.lane.b32.xlu0 %v4650, 16
    %v4653 = vpop.permute.xlu0 %4652
    %v4655 = vadd.f32 %v4645, %v4653
    %v4656 = vtanh.pop %v4655
    %4658 = vrot.lane.b32.xlu0 %v4656, 16
    %v4659 = vpop.permute.xlu0 %4658
    %v4661 = vmul.f32 %v4644, %v4659
    %v4662 = vld [vmem:[%s10] sm:$0xff]
    %v4663 = vld [vmem:[%s10 + $0x8] sm:$0xff]
    %v4664 = vld [vmem:[%s10 + $0x10] sm:$0xff]
    %v4665 = vld [vmem:[%s10 + $0x18] sm:$0xff]
    %4666 = vmatpush.msra.mxu0 0.0
    %4667 = vmatpush.msra.mxu0 0.0
    %4668 = vmatpush.msra.mxu0 0.0
    %4669 = vmatpush.msra.mxu0 0.0
    %4670 = vmatpush.msra.mxu0 0.0
    %4671 = vmatpush.msra.mxu0 0.0
    %4672 = vmatpush.msra.mxu0 0.0
    %4673 = vmatpush.msra.mxu0 0.0
    %4674 = vmatpush.msra.mxu0 0.0
    %4675 = vmatpush.msra.mxu0 0.0
    %4676 = vmatpush.msra.mxu0 0.0
    %4677 = vmatpush.msra.mxu0 0.0
    %4678 = vmatpush.msra.mxu0 0.0
    %4679 = vmatpush.msra.mxu0 0.0
    %4680 = vmatpush.msra.mxu0 %v4665
    %4681 = vmatpush.msra.mxu0 %v4664
    %4682 = vmatmul.f32.gmra.mxu0 %v3599
    %v4683 = vpop.f32.mrf.mxu0
    %v4684 = vadd.f32 0.0, %v4683
    %4685 = vdwg.mxu0
    %4687 = vrot.lane.b32.xlu0 %v4661, 96
    %v4688 = vpop.permute.xlu0 %4687
    %v4689 = vsel %vm822, %v4688, 0
    %4691 = vmatpush.msra.mxu0 0.0
    %4692 = vmatpush.msra.mxu0 0.0
    %4693 = vmatpush.msra.mxu0 0.0
    %4694 = vmatpush.msra.mxu0 0.0
    %4695 = vmatpush.msra.mxu0 0.0
    %4696 = vmatpush.msra.mxu0 0.0
    %4697 = vmatpush.msra.mxu0 0.0
    %4698 = vmatpush.msra.mxu0 0.0
    %4699 = vmatpush.msra.mxu0 0.0
    %4700 = vmatpush.msra.mxu0 0.0
    %4701 = vmatpush.msra.mxu0 0.0
    %4702 = vmatpush.msra.mxu0 0.0
    %4703 = vmatpush.msra.mxu0 0.0
    %4704 = vmatpush.msra.mxu0 0.0
    %4705 = vmatpush.msra.mxu0 %v4663
    %4706 = vmatpush.msra.mxu0 %v4662
    %4707 = vmatmul.f32.gmra.mxu0 %v4689
    %v4708 = vpop.f32.mrf.mxu0
    %v4709 = vadd.f32 %v4684, %v4708
    %4710 = vdwg.mxu0
    %v4711 = vld [vmem:[%s11] sm:$0x1]
    %v4713 = vperm.slane %v4711, 0
    %v4715 = vadd.f32 %v4709, %v4713
    %v4716 = vmax.f32 %v4715, 0.0
    %v4717 = vld [vmem:[%s12] sm:$0xff]
    %v4718 = vld [vmem:[%s12 + $0x8] sm:$0xff]
    %v4719 = vld [vmem:[%s12 + $0x10] sm:$0xff]
    %v4720 = vld [vmem:[%s12 + $0x18] sm:$0xff]
    %v4721 = vld [vmem:[%s12 + $0x20] sm:$0xff]
    %v4722 = vld [vmem:[%s12 + $0x28] sm:$0xff]
    %v4723 = vld [vmem:[%s12 + $0x30] sm:$0xff]
    %v4724 = vld [vmem:[%s12 + $0x38] sm:$0xff]
    %v4725 = vld [vmem:[%s13] sm:$0x1]
    %v4727 = vperm.slane %v4725, 0
    %vm4729 = vcmask 523264
    %v4731 = vsel %vm4729, %v4716, 0
    %4733 = vmatpush.msra.mxu0 0.0
    %4734 = vmatpush.msra.mxu0 0.0
    %4735 = vmatpush.msra.mxu0 0.0
    %4736 = vmatpush.msra.mxu0 0.0
    %4737 = vmatpush.msra.mxu0 0.0
    %4738 = vmatpush.msra.mxu0 0.0
    %4739 = vmatpush.msra.mxu0 0.0
    %4740 = vmatpush.msra.mxu0 0.0
    %4741 = vmatpush.msra.mxu0 %v4724
    %4742 = vmatpush.msra.mxu0 %v4723
    %4743 = vmatpush.msra.mxu0 %v4722
    %4744 = vmatpush.msra.mxu0 %v4721
    %4745 = vmatpush.msra.mxu0 %v4720
    %4746 = vmatpush.msra.mxu0 %v4719
    %4747 = vmatpush.msra.mxu0 %v4718
    %4748 = vmatpush.msra.mxu0 %v4717
    %4749 = vmatmul.f32.gmra.mxu0 %v4731
    %v4750 = vpop.f32.mrf.mxu0
    %v4751 = vadd.f32 %v4727, %v4750
    %4752 = vdwg.mxu0
    %v4753 = vmax.f32 %v4751, 0.0
    %v4754 = vld [vmem:[%s14] sm:$0xff]
    %v4755 = vld [vmem:[%s14 + $0x8] sm:$0xff]
    %v4756 = vld [vmem:[%s15] sm:$0x1]
    %v4758 = vperm.slane %v4756, 0
    %v4761 = vsel %vm822, %v4753, 0
    %4763 = vmatpush.msra.mxu0 0.0
    %4764 = vmatpush.msra.mxu0 0.0
    %4765 = vmatpush.msra.mxu0 0.0
    %4766 = vmatpush.msra.mxu0 0.0
    %4767 = vmatpush.msra.mxu0 0.0
    %4768 = vmatpush.msra.mxu0 0.0
    %4769 = vmatpush.msra.mxu0 0.0
    %4770 = vmatpush.msra.mxu0 0.0
    %4771 = vmatpush.msra.mxu0 0.0
    %4772 = vmatpush.msra.mxu0 0.0
    %4773 = vmatpush.msra.mxu0 0.0
    %4774 = vmatpush.msra.mxu0 0.0
    %4775 = vmatpush.msra.mxu0 0.0
    %4776 = vmatpush.msra.mxu0 0.0
    %4777 = vmatpush.msra.mxu0 %v4755
    %4778 = vmatpush.msra.mxu0 %v4754
    %4779 = vmatmul.f32.gmra.mxu0 %v4761
    %v4780 = vpop.f32.mrf.mxu0
    %v4781 = vadd.f32 %v4758, %v4780
    %4782 = vdwg.mxu0
    %vm4783 = vcmask 9216
    %4784 = vst.msk [vmem:[#allocation7] sm:$0x3] %vm4783, %v4781
    // Predicated region
    $region70: #{tpu_custom_call.1} parent=1 // pred_check
      _
    $region71: #{tpu_custom_call.1} parent=1 // pred_check_branch
      %4786 = sbr.rel (0) target = $region73
    $region72: #{tpu_custom_call.1} parent=1 // pred_region
      %4788 = vsyncadd [#allocation6], 0
      %s4790 = sshll.u32 [#allocation7], 4
      %s4791 = int_to_ptr.vmem [resolvable:$true] %s4790
      %s4792 = sshll.u32 %s16, 4
      %s4793 = int_to_ptr.hbm [resolvable:$true] %s4792
      %4795 = dma.vmem_to_hbm [thread:$0]  %s4791, 32, %s4793, [#allocation6]
    $region73: #{tpu_custom_call.1} parent=1 // pred_fallthru
      _
    // Predicated region
    $region74: #{tpu_custom_call.1} parent=1 // pred_check
      _
    $region75: #{tpu_custom_call.1} parent=1 // pred_check_branch
      %4797 = sbr.rel (0) target = $region77
    $region76: #{tpu_custom_call.1} parent=1 // pred_region
      %4799 = dma.done [#allocation6], 32
    $region77: #{tpu_custom_call.1} parent=1 // pred_fallthru
      _
    %4800 = vsyncpa [#allocation5], 1
    %4801 = vsyncpa [#allocation6], 1

</llo_original>
